<compile_context>
chip_gen: v7x
topology: tpu7x:2x2x1
jax: 0.10.0
libtpu: 0.0.40
codegen_flags: <defaults>
</compile_context>

<pallas_src>
import jax
import jax.numpy as jnp
from jax.experimental import pallas as pl
from jax.experimental.pallas import tpu as pltpu

# --- model hyper-parameters (match v2.py) ---
dropout_p = 0.2            # unused (eval mode)
n_embd = 32
block_size = 8
n_head = 4
n_layer = 4
vocab_size = 65            # tiny-Shakespeare-sized charset (`text` not available here)
head_size = n_embd // n_head

C, HS, NH, L, LANE = n_embd, head_size, n_head, n_layer, 128


# --------------------------- slab layout (host + kernel agree) ---------------------------

def _layout(NT):
    """Row offsets of every parameter block inside the (rows, 128) f32 slab."""
    order = [("tok_t", C),        # (C, 128)  token table transposed, vocab padded to 128
             ("pos", NT),         # (NT, C)   B-tiled position embeddings
             ("mask", NT)]        # (NT, NT)  block-diagonal causal additive mask (-1e30)
    for l in range(L):
        order += [(f"vec{l}", 8),             # rows: ln1_s, ln1_b, b_proj, ln2_s, ln2_b, b_ff2, b_ff1
                  (f"qkv_t{l}", 3 * NH * HS), # 12 stacked (HS, C) blocks: (k,q,v) per head, transposed
                  (f"proj{l}", C),            # (C, C)   w_proj
                  (f"ff1{l}", C),             # (C, 4C)  w_ff1
                  (f"ff2_t{l}", C)]           # (C, 4C)  w_ff2 transposed
    order += [("vecf", 8),        # rows: lnf_s, lnf_b, b_lm (vocab-padded to 128)
              ("w_lm", C)]        # (C, 128) lm_head weight, vocab padded
    off, r, padded = {}, 0, []
    for name, rows in order:
        rp = -(-rows // 8) * 8    # 8-row (sublane-tile) alignment
        off[name] = r
        padded.append((name, rp))
        r += rp
    return off, padded, r


def pack_params(params, B, T):
    """One-time host-side packing of all params into a single lane-dense (rows,128) slab."""
    NT = B * T
    p = {k: jnp.asarray(v, jnp.float32) for k, v in params.items()}
    V = p["tok_table"].shape[0]
    assert V <= LANE and T <= block_size

    arrs = {}
    arrs["tok_t"] = p["tok_table"].T                             # (C, V)
    arrs["pos"] = jnp.tile(p["pos_table"][:T], (B, 1))           # (NT, C)
    r = jnp.arange(NT)
    allowed = (r[:, None] // T == r[None, :] // T) & (r[None, :] % T <= r[:, None] % T)
    arrs["mask"] = jnp.where(allowed, 0.0, -1e30).astype(jnp.float32)   # finite, f32-safe

    for l in range(L):
        vec = jnp.zeros((8, LANE), jnp.float32)
        vec = vec.at[0, :C].set(p["ln1_s"][l])
        vec = vec.at[1, :C].set(p["ln1_b"][l])
        vec = vec.at[2, :C].set(p["b_proj"][l])
        vec = vec.at[3, :C].set(p["ln2_s"][l])
        vec = vec.at[4, :C].set(p["ln2_b"][l])
        vec = vec.at[5, :C].set(p["b_ff2"][l])
        vec = vec.at[6, :4 * C].set(p["b_ff1"][l])
        arrs[f"vec{l}"] = vec

        qkv = jnp.zeros((3 * NH * HS, C), jnp.float32)
        for hd in range(NH):
            qkv = qkv.at[(3 * hd + 0) * HS:(3 * hd + 1) * HS].set(p["w_key"][l, hd].T)
            qkv = qkv.at[(3 * hd + 1) * HS:(3 * hd + 2) * HS].set(p["w_query"][l, hd].T)
            qkv = qkv.at[(3 * hd + 2) * HS:(3 * hd + 3) * HS].set(p["w_value"][l, hd].T)
        arrs[f"qkv_t{l}"] = qkv
        arrs[f"proj{l}"] = p["w_proj"][l]
        arrs[f"ff1{l}"] = p["w_ff1"][l]
        arrs[f"ff2_t{l}"] = p["w_ff2"][l].T

    vecf = jnp.zeros((8, LANE), jnp.float32)
    vecf = vecf.at[0, :C].set(p["lnf_s"])
    vecf = vecf.at[1, :C].set(p["lnf_b"])
    vecf = vecf.at[2, :V].set(p["b_lm"])
    arrs["vecf"] = vecf
    arrs["w_lm"] = p["w_lm"]                                     # (C, V) -> lanes 0:V

    _, padded, total_rows = _layout(NT)
    blocks = []
    for name, rp in padded:
        a = arrs[name]
        buf = jnp.zeros((rp, LANE), jnp.float32).at[:a.shape[0], :a.shape[1]].set(a)
        blocks.append(buf)
    slab = jnp.concatenate(blocks, axis=0)
    assert slab.shape == (total_rows, LANE)
    return slab


# --------------------------- Pallas kernel ---------------------------

def build_forward(B, T, V):
    NT = B * T
    off, _, _ = _layout(NT)

    def kernel(idx_ref, slab_ref, logits_ref):
        f32 = jnp.float32

        def blk(name, rows, width):
            r0 = off[name]
            return slab_ref[r0:r0 + rows, 0:width]

        def vrow(name, row, width=C):
            r0 = off[name] + row
            return slab_ref[r0:r0 + 1, 0:width]            # (1, width) broadcast row

        def matmul_t(a, bt):
            # a:(m,k) contracted with bt:(n,k) -> (m,n); MXU A@B^T, no XLU transpose.
            return jax.lax.dot_general(a, bt, (((1,), (1,)), ((), ())),
                                       preferred_element_type=f32)

        def layer_norm(h, s, b):
            mu = jnp.mean(h, axis=-1, keepdims=True)
            d = h - mu
            var = jnp.mean(d * d, axis=-1, keepdims=True)
            return d * jax.lax.rsqrt(var + 1e-5) * s + b

        # ---- embeddings: lane-padded (NT,128) one-hot @ tok_table^T (MXU, no gather) ----
        ids = idx_ref[...]                                           # (NT, 1) int32
        viota = jax.lax.broadcasted_iota(jnp.int32, (NT, LANE), 1)
        onehot = (viota == ids).astype(f32)                          # (NT, 128)
        x = matmul_t(onehot, blk("tok_t", C, LANE))                  # (NT, C)
        x = x + blk("pos", NT, C)                                    # + position embedding

        mask_bias = blk("mask", NT, NT)                              # finite additive causal mask
        scale = C ** -0.5   # matches the module: C ** -0.5 (n_embd), NOT head_size ** -0.5

        for l in range(L):                                           # static unroll, L = 4
            vname = f"vec{l}"
            # ---- multi-head causal self-attention ----
            h = layer_norm(x, vrow(vname, 0), vrow(vname, 1))
            q0 = off[f"qkv_t{l}"]
            p0 = off[f"proj{l}"]
            sa = None
            for hd in range(NH):
                wk_t = slab_ref[q0 + (3 * hd + 0) * HS: q0 + (3 * hd + 1) * HS, 0:C]
                wq_t = slab_ref[q0 + (3 * hd + 1) * HS: q0 + (3 * hd + 2) * HS, 0:C]
                wv_t = slab_ref[q0 + (3 * hd + 2) * HS: q0 + (3 * hd + 3) * HS, 0:C]
                k = matmul_t(h, wk_t)                                # (NT, HS), lane 0 aligned
                q = matmul_t(h, wq_t)
                v = matmul_t(h, wv_t)
                s = matmul_t(q, k) * scale + mask_bias               # (NT, NT)
                m = jnp.max(s, axis=-1, keepdims=True)
                p = jnp.exp(s - m)
                p = p / jnp.sum(p, axis=-1, keepdims=True)
                # attention dropout: identity (eval mode)
                o = jnp.dot(p, v, preferred_element_type=f32)        # (NT, HS)
                # concat(heads) @ w_proj  ==  sum_h  o_h @ w_proj[h*HS:(h+1)*HS, :]
                wp = slab_ref[p0 + hd * HS: p0 + (hd + 1) * HS, 0:C]
                contrib = jnp.dot(o, wp, preferred_element_type=f32)
                sa = contrib if sa is None else sa + contrib
            x = x + sa + vrow(vname, 2)                              # + b_proj (proj dropout = identity)

            # ---- feed-forward ----
            h2 = layer_norm(x, vrow(vname, 3), vrow(vname, 4))
            f = jnp.dot(h2, blk(f"ff1{l}", C, 4 * C),
                        preferred_element_type=f32) + vrow(vname, 6, 4 * C)
            f = jnp.maximum(f, 0.0)
            x = x + matmul_t(f, blk(f"ff2_t{l}", C, 4 * C)) + vrow(vname, 5)  # ffn dropout = identity

        # ---- final LayerNorm + lm_head (vocab padded to 128 -> lane-dense store) ----
        xf = layer_norm(x, vrow("vecf", 0), vrow("vecf", 1))
        logits = jnp.dot(xf, blk("w_lm", C, LANE),
                         preferred_element_type=f32) + vrow("vecf", 2, LANE)
        logits_ref[...] = logits

    call = pl.pallas_call(
        kernel,
        out_shape=jax.ShapeDtypeStruct((NT, LANE), jnp.float32),
        in_specs=[pl.BlockSpec(memory_space=pltpu.MemorySpace.VMEM),
                  pl.BlockSpec(memory_space=pltpu.MemorySpace.VMEM)],
        out_specs=pl.BlockSpec(memory_space=pltpu.MemorySpace.VMEM),
    )

    @jax.jit
    def forward(idx, slab):
        idx2d = idx.reshape(NT, 1).astype(jnp.int32)
        logits_pad = call(idx2d, slab)                # (NT, 128)
        return logits_pad[:, :V].reshape(B, T, V)     # slice padded vocab lanes on host

    return forward


# --------------------------- pure-JAX reference ---------------------------

def _layer_norm_ref(h, s, b, eps=1e-5):
    mu = jnp.mean(h, axis=-1, keepdims=True)
    var = jnp.mean((h - mu) ** 2, axis=-1, keepdims=True)
    return (h - mu) * jax.lax.rsqrt(var + eps) * s + b


def bigram_lm_reference(idx, p):
    B, T = idx.shape
    x = p["tok_table"][idx] + p["pos_table"][:T]
    tril = jnp.tril(jnp.ones((T, T), bool))
    scale = n_embd ** -0.5
    for l in range(n_layer):
        h = _layer_norm_ref(x, p["ln1_s"][l], p["ln1_b"][l])
        outs = []
        for hd in range(n_head):
            k = h @ p["w_key"][l, hd]
            q = h @ p["w_query"][l, hd]
            v = h @ p["w_value"][l, hd]
            wei = (q @ jnp.swapaxes(k, -1, -2)) * scale
            wei = jnp.where(tril, wei, -jnp.inf)
            wei = jax.nn.softmax(wei, axis=-1)
            outs.append(wei @ v)
        x = x + jnp.concatenate(outs, axis=-1) @ p["w_proj"][l] + p["b_proj"][l]
        h2 = _layer_norm_ref(x, p["ln2_s"][l], p["ln2_b"][l])
        f = jax.nn.relu(h2 @ p["w_ff1"][l] + p["b_ff1"][l])
        x = x + f @ p["w_ff2"][l] + p["b_ff2"][l]
    x = _layer_norm_ref(x, p["lnf_s"], p["lnf_b"])
    return x @ p["w_lm"] + p["b_lm"]


# --------------------------- deterministic init ---------------------------

def init_params(key, V):
    it = iter(jax.random.split(key, 24))

    def unif(shape, fan_in):
        bnd = 1.0 / (fan_in ** 0.5)
        return jax.random.uniform(next(it), shape, jnp.float32, -bnd, bnd)

    def normal(shape, s=0.1):
        return s * jax.random.normal(next(it), shape, jnp.float32)

    return dict(
        tok_table=0.02 * jax.random.normal(next(it), (V, C), jnp.float32),
        pos_table=0.02 * jax.random.normal(next(it), (block_size, C), jnp.float32),
        ln1_s=1.0 + normal((L, C)), ln1_b=normal((L, C)),
        w_key=unif((L, NH, C, HS), C),
        w_query=unif((L, NH, C, HS), C),
        w_value=unif((L, NH, C, HS), C),
        w_proj=unif((L, C, C), C), b_proj=unif((L, C), C),
        ln2_s=1.0 + normal((L, C)), ln2_b=normal((L, C)),
        w_ff1=unif((L, C, 4 * C), C), b_ff1=unif((L, 4 * C), C),
        w_ff2=unif((L, 4 * C, C), 4 * C), b_ff2=unif((L, C), 4 * C),
        lnf_s=1.0 + normal((C,)), lnf_b=normal((C,)),
        w_lm=unif((C, V), C), b_lm=unif((V,), C),
    )


if __name__ == "__main__":
    key = jax.random.PRNGKey(0)
    k_params, k_idx = jax.random.split(key)

    B, T, V = 2, block_size, vocab_size
    params = init_params(k_params, V)
    idx = jax.random.randint(k_idx, (B, T), 0, V, jnp.int32)

    # one-time host-side packing (hoisted out of the per-call path)
    slab = jax.block_until_ready(pack_params(params, B, T))
    forward = build_forward(B, T, V)

    logits = jax.block_until_ready(forward(idx, slab))
    ref = bigram_lm_reference(idx, params)

    assert logits.shape == (B, T, V)
    err = float(jnp.max(jnp.abs(logits - ref)))
    assert err < 2e-3, err

    print("KERNEL_OK")
</pallas_src>

<mosaic_0001>
module attributes {stable_mosaic.version = 11 : i64} {
  func.func @kernel(%arg0: memref<16x1xi32, #tpu.memory_space<vmem>>, %arg1: memref<904x128xf32, #tpu.memory_space<vmem>>, %arg2: memref<16x128xf32, #tpu.memory_space<vmem>>) attributes {dimension_semantics = [], scalar_prefetch = 0 : i64, scratch_operands = 0 : i64, tpu.core_type = #tpu.core_type<tc>} {
    %c0 = arith.constant 0 : index
    %c0_0 = arith.constant 0 : index
    %0 = vector.load %arg0[%c0, %c0_0] : memref<16x1xi32, #tpu.memory_space<vmem>>, vector<16x1xi32>
    %1 = tpu.iota {dimensions = array<i32: 1>} : vector<16x128xi32>
    %2 = vector.broadcast %0 : vector<16x1xi32> to vector<16x128xi32>
    %3 = arith.cmpi eq, %1, %2 : vector<16x128xi32>
    %4 = arith.extui %3 : vector<16x128xi1> to vector<16x128xi32>
    %5 = arith.sitofp %4 : vector<16x128xi32> to vector<16x128xf32>
    %c0_1 = arith.constant 0 : index
    %c0_2 = arith.constant 0 : index
    %6 = vector.load %arg1[%c0_1, %c0_2] : memref<904x128xf32, #tpu.memory_space<vmem>>, vector<32x128xf32>
    %cst = arith.constant dense<0.000000e+00> : vector<16x32xf32>
    %7 = tpu.matmul %5, %6, %cst {dimension_numbers = #tpu.dot_dimension_numbers<[1], [1], [0], [0], [0, 0, 1, 0], [], []>} : vector<16x128xf32>, vector<32x128xf32>, vector<16x32xf32> -> vector<16x32xf32>
    %c32 = arith.constant 32 : index
    %c0_3 = arith.constant 0 : index
    %8 = vector.load %arg1[%c32, %c0_3] : memref<904x128xf32, #tpu.memory_space<vmem>>, vector<16x32xf32>
    %9 = arith.addf %7, %8 : vector<16x32xf32>
    %c48 = arith.constant 48 : index
    %c0_4 = arith.constant 0 : index
    %10 = vector.load %arg1[%c48, %c0_4] : memref<904x128xf32, #tpu.memory_space<vmem>>, vector<16x16xf32>
    %c64 = arith.constant 64 : index
    %c0_5 = arith.constant 0 : index
    %11 = vector.load %arg1[%c64, %c0_5] : memref<904x128xf32, #tpu.memory_space<vmem>>, vector<1x32xf32>
    %c65 = arith.constant 65 : index
    %c0_6 = arith.constant 0 : index
    %12 = vector.load %arg1[%c65, %c0_6] : memref<904x128xf32, #tpu.memory_space<vmem>>, vector<1x32xf32>
    %cst_7 = arith.constant dense<0.000000e+00> : vector<16xf32>
    %13 = vector.multi_reduction <add>, %9, %cst_7 [1] : vector<16x32xf32> to vector<16xf32>
    %14 = vector.shape_cast %13 : vector<16xf32> to vector<16x1xf32>
    %cst_8 = arith.constant 3.200000e+01 : f32
    %15 = vector.broadcast %cst_8 : f32 to vector<16x1xf32>
    %16 = arith.divf %14, %15 : vector<16x1xf32>
    %17 = vector.broadcast %16 : vector<16x1xf32> to vector<16x32xf32>
    %18 = arith.subf %9, %17 : vector<16x32xf32>
    %19 = arith.mulf %18, %18 : vector<16x32xf32>
    %cst_9 = arith.constant dense<0.000000e+00> : vector<16xf32>
    %20 = vector.multi_reduction <add>, %19, %cst_9 [1] : vector<16x32xf32> to vector<16xf32>
    %21 = vector.shape_cast %20 : vector<16xf32> to vector<16x1xf32>
    %cst_10 = arith.constant 3.200000e+01 : f32
    %22 = vector.broadcast %cst_10 : f32 to vector<16x1xf32>
    %23 = arith.divf %21, %22 : vector<16x1xf32>
    %cst_11 = arith.constant 9.99999974E-6 : f32
    %24 = vector.broadcast %cst_11 : f32 to vector<16x1xf32>
    %25 = arith.addf %23, %24 : vector<16x1xf32>
    %26 = math.rsqrt %25 : vector<16x1xf32>
    %27 = vector.broadcast %26 : vector<16x1xf32> to vector<16x32xf32>
    %28 = arith.mulf %18, %27 : vector<16x32xf32>
    %29 = vector.broadcast %11 : vector<1x32xf32> to vector<16x32xf32>
    %30 = arith.mulf %28, %29 : vector<16x32xf32>
    %31 = vector.broadcast %12 : vector<1x32xf32> to vector<16x32xf32>
    %32 = arith.addf %30, %31 : vector<16x32xf32>
    %c72 = arith.constant 72 : index
    %c0_12 = arith.constant 0 : index
    %33 = vector.load %arg1[%c72, %c0_12] : memref<904x128xf32, #tpu.memory_space<vmem>>, vector<8x32xf32>
    %c80 = arith.constant 80 : index
    %c0_13 = arith.constant 0 : index
    %34 = vector.load %arg1[%c80, %c0_13] : memref<904x128xf32, #tpu.memory_space<vmem>>, vector<8x32xf32>
    %c88 = arith.constant 88 : index
    %c0_14 = arith.constant 0 : index
    %35 = vector.load %arg1[%c88, %c0_14] : memref<904x128xf32, #tpu.memory_space<vmem>>, vector<8x32xf32>
    %cst_15 = arith.constant dense<0.000000e+00> : vector<16x8xf32>
    %36 = tpu.matmul %32, %33, %cst_15 {dimension_numbers = #tpu.dot_dimension_numbers<[1], [1], [0], [0], [0, 0, 1, 0], [], []>} : vector<16x32xf32>, vector<8x32xf32>, vector<16x8xf32> -> vector<16x8xf32>
    %cst_16 = arith.constant dense<0.000000e+00> : vector<16x8xf32>
    %37 = tpu.matmul %32, %34, %cst_16 {dimension_numbers = #tpu.dot_dimension_numbers<[1], [1], [0], [0], [0, 0, 1, 0], [], []>} : vector<16x32xf32>, vector<8x32xf32>, vector<16x8xf32> -> vector<16x8xf32>
    %cst_17 = arith.constant dense<0.000000e+00> : vector<16x8xf32>
    %38 = tpu.matmul %32, %35, %cst_17 {dimension_numbers = #tpu.dot_dimension_numbers<[1], [1], [0], [0], [0, 0, 1, 0], [], []>} : vector<16x32xf32>, vector<8x32xf32>, vector<16x8xf32> -> vector<16x8xf32>
    %cst_18 = arith.constant dense<0.000000e+00> : vector<16x16xf32>
    %39 = tpu.matmul %37, %36, %cst_18 {dimension_numbers = #tpu.dot_dimension_numbers<[1], [1], [0], [0], [0, 0, 1, 0], [], []>} : vector<16x8xf32>, vector<16x8xf32>, vector<16x16xf32> -> vector<16x16xf32>
    %cst_19 = arith.constant 0.176776692 : f32
    %40 = vector.broadcast %cst_19 : f32 to vector<16x16xf32>
    %41 = arith.mulf %39, %40 : vector<16x16xf32>
    %42 = arith.addf %41, %10 : vector<16x16xf32>
    %cst_20 = arith.constant dense<0xFF800000> : vector<16xf32>
    %43 = vector.multi_reduction <maximumf>, %42, %cst_20 [1] : vector<16x16xf32> to vector<16xf32>
    %44 = vector.shape_cast %43 : vector<16xf32> to vector<16x1xf32>
    %45 = vector.broadcast %44 : vector<16x1xf32> to vector<16x16xf32>
    %46 = arith.subf %42, %45 : vector<16x16xf32>
    %47 = math.exp %46 : vector<16x16xf32>
    %cst_21 = arith.constant dense<0.000000e+00> : vector<16xf32>
    %48 = vector.multi_reduction <add>, %47, %cst_21 [1] : vector<16x16xf32> to vector<16xf32>
    %49 = vector.shape_cast %48 : vector<16xf32> to vector<16x1xf32>
    %50 = vector.broadcast %49 : vector<16x1xf32> to vector<16x16xf32>
    %51 = arith.divf %47, %50 : vector<16x16xf32>
    %cst_22 = arith.constant dense<0.000000e+00> : vector<16x8xf32>
    %52 = tpu.matmul %51, %38, %cst_22 {dimension_numbers = #tpu.dot_dimension_numbers<[1], [0], [0], [1], [0, 0, 1, 1], [], []>} : vector<16x16xf32>, vector<16x8xf32>, vector<16x8xf32> -> vector<16x8xf32>
    %c168 = arith.constant 168 : index
    %c0_23 = arith.constant 0 : index
    %53 = vector.load %arg1[%c168, %c0_23] : memref<904x128xf32, #tpu.memory_space<vmem>>, vector<8x32xf32>
    %cst_24 = arith.constant dense<0.000000e+00> : vector<16x32xf32>
    %54 = tpu.matmul %52, %53, %cst_24 {dimension_numbers = #tpu.dot_dimension_numbers<[1], [0], [0], [1], [0, 0, 1, 1], [], []>} : vector<16x8xf32>, vector<8x32xf32>, vector<16x32xf32> -> vector<16x32xf32>
    %c96 = arith.constant 96 : index
    %c0_25 = arith.constant 0 : index
    %55 = vector.load %arg1[%c96, %c0_25] : memref<904x128xf32, #tpu.memory_space<vmem>>, vector<8x32xf32>
    %c104 = arith.constant 104 : index
    %c0_26 = arith.constant 0 : index
    %56 = vector.load %arg1[%c104, %c0_26] : memref<904x128xf32, #tpu.memory_space<vmem>>, vector<8x32xf32>
    %c112 = arith.constant 112 : index
    %c0_27 = arith.constant 0 : index
    %57 = vector.load %arg1[%c112, %c0_27] : memref<904x128xf32, #tpu.memory_space<vmem>>, vector<8x32xf32>
    %cst_28 = arith.constant dense<0.000000e+00> : vector<16x8xf32>
    %58 = tpu.matmul %32, %55, %cst_28 {dimension_numbers = #tpu.dot_dimension_numbers<[1], [1], [0], [0], [0, 0, 1, 0], [], []>} : vector<16x32xf32>, vector<8x32xf32>, vector<16x8xf32> -> vector<16x8xf32>
    %cst_29 = arith.constant dense<0.000000e+00> : vector<16x8xf32>
    %59 = tpu.matmul %32, %56, %cst_29 {dimension_numbers = #tpu.dot_dimension_numbers<[1], [1], [0], [0], [0, 0, 1, 0], [], []>} : vector<16x32xf32>, vector<8x32xf32>, vector<16x8xf32> -> vector<16x8xf32>
    %cst_30 = arith.constant dense<0.000000e+00> : vector<16x8xf32>
    %60 = tpu.matmul %32, %57, %cst_30 {dimension_numbers = #tpu.dot_dimension_numbers<[1], [1], [0], [0], [0, 0, 1, 0], [], []>} : vector<16x32xf32>, vector<8x32xf32>, vector<16x8xf32> -> vector<16x8xf32>
    %cst_31 = arith.constant dense<0.000000e+00> : vector<16x16xf32>
    %61 = tpu.matmul %59, %58, %cst_31 {dimension_numbers = #tpu.dot_dimension_numbers<[1], [1], [0], [0], [0, 0, 1, 0], [], []>} : vector<16x8xf32>, vector<16x8xf32>, vector<16x16xf32> -> vector<16x16xf32>
    %cst_32 = arith.constant 0.176776692 : f32
    %62 = vector.broadcast %cst_32 : f32 to vector<16x16xf32>
    %63 = arith.mulf %61, %62 : vector<16x16xf32>
    %64 = arith.addf %63, %10 : vector<16x16xf32>
    %cst_33 = arith.constant dense<0xFF800000> : vector<16xf32>
    %65 = vector.multi_reduction <maximumf>, %64, %cst_33 [1] : vector<16x16xf32> to vector<16xf32>
    %66 = vector.shape_cast %65 : vector<16xf32> to vector<16x1xf32>
    %67 = vector.broadcast %66 : vector<16x1xf32> to vector<16x16xf32>
    %68 = arith.subf %64, %67 : vector<16x16xf32>
    %69 = math.exp %68 : vector<16x16xf32>
    %cst_34 = arith.constant dense<0.000000e+00> : vector<16xf32>
    %70 = vector.multi_reduction <add>, %69, %cst_34 [1] : vector<16x16xf32> to vector<16xf32>
    %71 = vector.shape_cast %70 : vector<16xf32> to vector<16x1xf32>
    %72 = vector.broadcast %71 : vector<16x1xf32> to vector<16x16xf32>
    %73 = arith.divf %69, %72 : vector<16x16xf32>
    %cst_35 = arith.constant dense<0.000000e+00> : vector<16x8xf32>
    %74 = tpu.matmul %73, %60, %cst_35 {dimension_numbers = #tpu.dot_dimension_numbers<[1], [0], [0], [1], [0, 0, 1, 1], [], []>} : vector<16x16xf32>, vector<16x8xf32>, vector<16x8xf32> -> vector<16x8xf32>
    %c176 = arith.constant 176 : index
    %c0_36 = arith.constant 0 : index
    %75 = vector.load %arg1[%c176, %c0_36] : memref<904x128xf32, #tpu.memory_space<vmem>>, vector<8x32xf32>
    %cst_37 = arith.constant dense<0.000000e+00> : vector<16x32xf32>
    %76 = tpu.matmul %74, %75, %cst_37 {dimension_numbers = #tpu.dot_dimension_numbers<[1], [0], [0], [1], [0, 0, 1, 1], [], []>} : vector<16x8xf32>, vector<8x32xf32>, vector<16x32xf32> -> vector<16x32xf32>
    %77 = arith.addf %54, %76 : vector<16x32xf32>
    %c120 = arith.constant 120 : index
    %c0_38 = arith.constant 0 : index
    %78 = vector.load %arg1[%c120, %c0_38] : memref<904x128xf32, #tpu.memory_space<vmem>>, vector<8x32xf32>
    %c128 = arith.constant 128 : index
    %c0_39 = arith.constant 0 : index
    %79 = vector.load %arg1[%c128, %c0_39] : memref<904x128xf32, #tpu.memory_space<vmem>>, vector<8x32xf32>
    %c136 = arith.constant 136 : index
    %c0_40 = arith.constant 0 : index
    %80 = vector.load %arg1[%c136, %c0_40] : memref<904x128xf32, #tpu.memory_space<vmem>>, vector<8x32xf32>
    %cst_41 = arith.constant dense<0.000000e+00> : vector<16x8xf32>
    %81 = tpu.matmul %32, %78, %cst_41 {dimension_numbers = #tpu.dot_dimension_numbers<[1], [1], [0], [0], [0, 0, 1, 0], [], []>} : vector<16x32xf32>, vector<8x32xf32>, vector<16x8xf32> -> vector<16x8xf32>
    %cst_42 = arith.constant dense<0.000000e+00> : vector<16x8xf32>
    %82 = tpu.matmul %32, %79, %cst_42 {dimension_numbers = #tpu.dot_dimension_numbers<[1], [1], [0], [0], [0, 0, 1, 0], [], []>} : vector<16x32xf32>, vector<8x32xf32>, vector<16x8xf32> -> vector<16x8xf32>
    %cst_43 = arith.constant dense<0.000000e+00> : vector<16x8xf32>
    %83 = tpu.matmul %32, %80, %cst_43 {dimension_numbers = #tpu.dot_dimension_numbers<[1], [1], [0], [0], [0, 0, 1, 0], [], []>} : vector<16x32xf32>, vector<8x32xf32>, vector<16x8xf32> -> vector<16x8xf32>
    %cst_44 = arith.constant dense<0.000000e+00> : vector<16x16xf32>
    %84 = tpu.matmul %82, %81, %cst_44 {dimension_numbers = #tpu.dot_dimension_numbers<[1], [1], [0], [0], [0, 0, 1, 0], [], []>} : vector<16x8xf32>, vector<16x8xf32>, vector<16x16xf32> -> vector<16x16xf32>
    %cst_45 = arith.constant 0.176776692 : f32
    %85 = vector.broadcast %cst_45 : f32 to vector<16x16xf32>
    %86 = arith.mulf %84, %85 : vector<16x16xf32>
    %87 = arith.addf %86, %10 : vector<16x16xf32>
    %cst_46 = arith.constant dense<0xFF800000> : vector<16xf32>
    %88 = vector.multi_reduction <maximumf>, %87, %cst_46 [1] : vector<16x16xf32> to vector<16xf32>
    %89 = vector.shape_cast %88 : vector<16xf32> to vector<16x1xf32>
    %90 = vector.broadcast %89 : vector<16x1xf32> to vector<16x16xf32>
    %91 = arith.subf %87, %90 : vector<16x16xf32>
    %92 = math.exp %91 : vector<16x16xf32>
    %cst_47 = arith.constant dense<0.000000e+00> : vector<16xf32>
    %93 = vector.multi_reduction <add>, %92, %cst_47 [1] : vector<16x16xf32> to vector<16xf32>
    %94 = vector.shape_cast %93 : vector<16xf32> to vector<16x1xf32>
    %95 = vector.broadcast %94 : vector<16x1xf32> to vector<16x16xf32>
    %96 = arith.divf %92, %95 : vector<16x16xf32>
    %cst_48 = arith.constant dense<0.000000e+00> : vector<16x8xf32>
    %97 = tpu.matmul %96, %83, %cst_48 {dimension_numbers = #tpu.dot_dimension_numbers<[1], [0], [0], [1], [0, 0, 1, 1], [], []>} : vector<16x16xf32>, vector<16x8xf32>, vector<16x8xf32> -> vector<16x8xf32>
    %c184 = arith.constant 184 : index
    %c0_49 = arith.constant 0 : index
    %98 = vector.load %arg1[%c184, %c0_49] : memref<904x128xf32, #tpu.memory_space<vmem>>, vector<8x32xf32>
    %cst_50 = arith.constant dense<0.000000e+00> : vector<16x32xf32>
    %99 = tpu.matmul %97, %98, %cst_50 {dimension_numbers = #tpu.dot_dimension_numbers<[1], [0], [0], [1], [0, 0, 1, 1], [], []>} : vector<16x8xf32>, vector<8x32xf32>, vector<16x32xf32> -> vector<16x32xf32>
    %100 = arith.addf %77, %99 : vector<16x32xf32>
    %c144 = arith.constant 144 : index
    %c0_51 = arith.constant 0 : index
    %101 = vector.load %arg1[%c144, %c0_51] : memref<904x128xf32, #tpu.memory_space<vmem>>, vector<8x32xf32>
    %c152 = arith.constant 152 : index
    %c0_52 = arith.constant 0 : index
    %102 = vector.load %arg1[%c152, %c0_52] : memref<904x128xf32, #tpu.memory_space<vmem>>, vector<8x32xf32>
    %c160 = arith.constant 160 : index
    %c0_53 = arith.constant 0 : index
    %103 = vector.load %arg1[%c160, %c0_53] : memref<904x128xf32, #tpu.memory_space<vmem>>, vector<8x32xf32>
    %cst_54 = arith.constant dense<0.000000e+00> : vector<16x8xf32>
    %104 = tpu.matmul %32, %101, %cst_54 {dimension_numbers = #tpu.dot_dimension_numbers<[1], [1], [0], [0], [0, 0, 1, 0], [], []>} : vector<16x32xf32>, vector<8x32xf32>, vector<16x8xf32> -> vector<16x8xf32>
    %cst_55 = arith.constant dense<0.000000e+00> : vector<16x8xf32>
    %105 = tpu.matmul %32, %102, %cst_55 {dimension_numbers = #tpu.dot_dimension_numbers<[1], [1], [0], [0], [0, 0, 1, 0], [], []>} : vector<16x32xf32>, vector<8x32xf32>, vector<16x8xf32> -> vector<16x8xf32>
    %cst_56 = arith.constant dense<0.000000e+00> : vector<16x8xf32>
    %106 = tpu.matmul %32, %103, %cst_56 {dimension_numbers = #tpu.dot_dimension_numbers<[1], [1], [0], [0], [0, 0, 1, 0], [], []>} : vector<16x32xf32>, vector<8x32xf32>, vector<16x8xf32> -> vector<16x8xf32>
    %cst_57 = arith.constant dense<0.000000e+00> : vector<16x16xf32>
    %107 = tpu.matmul %105, %104, %cst_57 {dimension_numbers = #tpu.dot_dimension_numbers<[1], [1], [0], [0], [0, 0, 1, 0], [], []>} : vector<16x8xf32>, vector<16x8xf32>, vector<16x16xf32> -> vector<16x16xf32>
    %cst_58 = arith.constant 0.176776692 : f32
    %108 = vector.broadcast %cst_58 : f32 to vector<16x16xf32>
    %109 = arith.mulf %107, %108 : vector<16x16xf32>
    %110 = arith.addf %109, %10 : vector<16x16xf32>
    %cst_59 = arith.constant dense<0xFF800000> : vector<16xf32>
    %111 = vector.multi_reduction <maximumf>, %110, %cst_59 [1] : vector<16x16xf32> to vector<16xf32>
    %112 = vector.shape_cast %111 : vector<16xf32> to vector<16x1xf32>
    %113 = vector.broadcast %112 : vector<16x1xf32> to vector<16x16xf32>
    %114 = arith.subf %110, %113 : vector<16x16xf32>
    %115 = math.exp %114 : vector<16x16xf32>
    %cst_60 = arith.constant dense<0.000000e+00> : vector<16xf32>
    %116 = vector.multi_reduction <add>, %115, %cst_60 [1] : vector<16x16xf32> to vector<16xf32>
    %117 = vector.shape_cast %116 : vector<16xf32> to vector<16x1xf32>
    %118 = vector.broadcast %117 : vector<16x1xf32> to vector<16x16xf32>
    %119 = arith.divf %115, %118 : vector<16x16xf32>
    %cst_61 = arith.constant dense<0.000000e+00> : vector<16x8xf32>
    %120 = tpu.matmul %119, %106, %cst_61 {dimension_numbers = #tpu.dot_dimension_numbers<[1], [0], [0], [1], [0, 0, 1, 1], [], []>} : vector<16x16xf32>, vector<16x8xf32>, vector<16x8xf32> -> vector<16x8xf32>
    %c192 = arith.constant 192 : index
    %c0_62 = arith.constant 0 : index
    %121 = vector.load %arg1[%c192, %c0_62] : memref<904x128xf32, #tpu.memory_space<vmem>>, vector<8x32xf32>
    %cst_63 = arith.constant dense<0.000000e+00> : vector<16x32xf32>
    %122 = tpu.matmul %120, %121, %cst_63 {dimension_numbers = #tpu.dot_dimension_numbers<[1], [0], [0], [1], [0, 0, 1, 1], [], []>} : vector<16x8xf32>, vector<8x32xf32>, vector<16x32xf32> -> vector<16x32xf32>
    %123 = arith.addf %100, %122 : vector<16x32xf32>
    %124 = arith.addf %9, %123 : vector<16x32xf32>
    %c66 = arith.constant 66 : index
    %c0_64 = arith.constant 0 : index
    %125 = vector.load %arg1[%c66, %c0_64] : memref<904x128xf32, #tpu.memory_space<vmem>>, vector<1x32xf32>
    %126 = vector.broadcast %125 : vector<1x32xf32> to vector<16x32xf32>
    %127 = arith.addf %124, %126 : vector<16x32xf32>
    %c67 = arith.constant 67 : index
    %c0_65 = arith.constant 0 : index
    %128 = vector.load %arg1[%c67, %c0_65] : memref<904x128xf32, #tpu.memory_space<vmem>>, vector<1x32xf32>
    %c68 = arith.constant 68 : index
    %c0_66 = arith.constant 0 : index
    %129 = vector.load %arg1[%c68, %c0_66] : memref<904x128xf32, #tpu.memory_space<vmem>>, vector<1x32xf32>
    %cst_67 = arith.constant dense<0.000000e+00> : vector<16xf32>
    %130 = vector.multi_reduction <add>, %127, %cst_67 [1] : vector<16x32xf32> to vector<16xf32>
    %131 = vector.shape_cast %130 : vector<16xf32> to vector<16x1xf32>
    %cst_68 = arith.constant 3.200000e+01 : f32
    %132 = vector.broadcast %cst_68 : f32 to vector<16x1xf32>
    %133 = arith.divf %131, %132 : vector<16x1xf32>
    %134 = vector.broadcast %133 : vector<16x1xf32> to vector<16x32xf32>
    %135 = arith.subf %127, %134 : vector<16x32xf32>
    %136 = arith.mulf %135, %135 : vector<16x32xf32>
    %cst_69 = arith.constant dense<0.000000e+00> : vector<16xf32>
    %137 = vector.multi_reduction <add>, %136, %cst_69 [1] : vector<16x32xf32> to vector<16xf32>
    %138 = vector.shape_cast %137 : vector<16xf32> to vector<16x1xf32>
    %cst_70 = arith.constant 3.200000e+01 : f32
    %139 = vector.broadcast %cst_70 : f32 to vector<16x1xf32>
    %140 = arith.divf %138, %139 : vector<16x1xf32>
    %cst_71 = arith.constant 9.99999974E-6 : f32
    %141 = vector.broadcast %cst_71 : f32 to vector<16x1xf32>
    %142 = arith.addf %140, %141 : vector<16x1xf32>
    %143 = math.rsqrt %142 : vector<16x1xf32>
    %144 = vector.broadcast %143 : vector<16x1xf32> to vector<16x32xf32>
    %145 = arith.mulf %135, %144 : vector<16x32xf32>
    %146 = vector.broadcast %128 : vector<1x32xf32> to vector<16x32xf32>
    %147 = arith.mulf %145, %146 : vector<16x32xf32>
    %148 = vector.broadcast %129 : vector<1x32xf32> to vector<16x32xf32>
    %149 = arith.addf %147, %148 : vector<16x32xf32>
    %c200 = arith.constant 200 : index
    %c0_72 = arith.constant 0 : index
    %150 = vector.load %arg1[%c200, %c0_72] : memref<904x128xf32, #tpu.memory_space<vmem>>, vector<32x128xf32>
    %cst_73 = arith.constant dense<0.000000e+00> : vector<16x128xf32>
    %151 = tpu.matmul %149, %150, %cst_73 {dimension_numbers = #tpu.dot_dimension_numbers<[1], [0], [0], [1], [0, 0, 1, 1], [], []>} : vector<16x32xf32>, vector<32x128xf32>, vector<16x128xf32> -> vector<16x128xf32>
    %c70 = arith.constant 70 : index
    %c0_74 = arith.constant 0 : index
    %152 = vector.load %arg1[%c70, %c0_74] : memref<904x128xf32, #tpu.memory_space<vmem>>, vector<1x128xf32>
    %153 = vector.broadcast %152 : vector<1x128xf32> to vector<16x128xf32>
    %154 = arith.addf %151, %153 : vector<16x128xf32>
    %cst_75 = arith.constant 0.000000e+00 : f32
    %155 = vector.broadcast %cst_75 : f32 to vector<16x128xf32>
    %156 = arith.maximumf %154, %155 : vector<16x128xf32>
    %c232 = arith.constant 232 : index
    %c0_76 = arith.constant 0 : index
    %157 = vector.load %arg1[%c232, %c0_76] : memref<904x128xf32, #tpu.memory_space<vmem>>, vector<32x128xf32>
    %cst_77 = arith.constant dense<0.000000e+00> : vector<16x32xf32>
    %158 = tpu.matmul %156, %157, %cst_77 {dimension_numbers = #tpu.dot_dimension_numbers<[1], [1], [0], [0], [0, 0, 1, 0], [], []>} : vector<16x128xf32>, vector<32x128xf32>, vector<16x32xf32> -> vector<16x32xf32>
    %159 = arith.addf %127, %158 : vector<16x32xf32>
    %c69 = arith.constant 69 : index
    %c0_78 = arith.constant 0 : index
    %160 = vector.load %arg1[%c69, %c0_78] : memref<904x128xf32, #tpu.memory_space<vmem>>, vector<1x32xf32>
    %161 = vector.broadcast %160 : vector<1x32xf32> to vector<16x32xf32>
    %162 = arith.addf %159, %161 : vector<16x32xf32>
    %c264 = arith.constant 264 : index
    %c0_79 = arith.constant 0 : index
    %163 = vector.load %arg1[%c264, %c0_79] : memref<904x128xf32, #tpu.memory_space<vmem>>, vector<1x32xf32>
    %c265 = arith.constant 265 : index
    %c0_80 = arith.constant 0 : index
    %164 = vector.load %arg1[%c265, %c0_80] : memref<904x128xf32, #tpu.memory_space<vmem>>, vector<1x32xf32>
    %cst_81 = arith.constant dense<0.000000e+00> : vector<16xf32>
    %165 = vector.multi_reduction <add>, %162, %cst_81 [1] : vector<16x32xf32> to vector<16xf32>
    %166 = vector.shape_cast %165 : vector<16xf32> to vector<16x1xf32>
    %cst_82 = arith.constant 3.200000e+01 : f32
    %167 = vector.broadcast %cst_82 : f32 to vector<16x1xf32>
    %168 = arith.divf %166, %167 : vector<16x1xf32>
    %169 = vector.broadcast %168 : vector<16x1xf32> to vector<16x32xf32>
    %170 = arith.subf %162, %169 : vector<16x32xf32>
    %171 = arith.mulf %170, %170 : vector<16x32xf32>
    %cst_83 = arith.constant dense<0.000000e+00> : vector<16xf32>
    %172 = vector.multi_reduction <add>, %171, %cst_83 [1] : vector<16x32xf32> to vector<16xf32>
    %173 = vector.shape_cast %172 : vector<16xf32> to vector<16x1xf32>
    %cst_84 = arith.constant 3.200000e+01 : f32
    %174 = vector.broadcast %cst_84 : f32 to vector<16x1xf32>
    %175 = arith.divf %173, %174 : vector<16x1xf32>
    %cst_85 = arith.constant 9.99999974E-6 : f32
    %176 = vector.broadcast %cst_85 : f32 to vector<16x1xf32>
    %177 = arith.addf %175, %176 : vector<16x1xf32>
    %178 = math.rsqrt %177 : vector<16x1xf32>
    %179 = vector.broadcast %178 : vector<16x1xf32> to vector<16x32xf32>
    %180 = arith.mulf %170, %179 : vector<16x32xf32>
    %181 = vector.broadcast %163 : vector<1x32xf32> to vector<16x32xf32>
    %182 = arith.mulf %180, %181 : vector<16x32xf32>
    %183 = vector.broadcast %164 : vector<1x32xf32> to vector<16x32xf32>
    %184 = arith.addf %182, %183 : vector<16x32xf32>
    %c272 = arith.constant 272 : index
    %c0_86 = arith.constant 0 : index
    %185 = vector.load %arg1[%c272, %c0_86] : memref<904x128xf32, #tpu.memory_space<vmem>>, vector<8x32xf32>
    %c280 = arith.constant 280 : index
    %c0_87 = arith.constant 0 : index
    %186 = vector.load %arg1[%c280, %c0_87] : memref<904x128xf32, #tpu.memory_space<vmem>>, vector<8x32xf32>
    %c288 = arith.constant 288 : index
    %c0_88 = arith.constant 0 : index
    %187 = vector.load %arg1[%c288, %c0_88] : memref<904x128xf32, #tpu.memory_space<vmem>>, vector<8x32xf32>
    %cst_89 = arith.constant dense<0.000000e+00> : vector<16x8xf32>
    %188 = tpu.matmul %184, %185, %cst_89 {dimension_numbers = #tpu.dot_dimension_numbers<[1], [1], [0], [0], [0, 0, 1, 0], [], []>} : vector<16x32xf32>, vector<8x32xf32>, vector<16x8xf32> -> vector<16x8xf32>
    %cst_90 = arith.constant dense<0.000000e+00> : vector<16x8xf32>
    %189 = tpu.matmul %184, %186, %cst_90 {dimension_numbers = #tpu.dot_dimension_numbers<[1], [1], [0], [0], [0, 0, 1, 0], [], []>} : vector<16x32xf32>, vector<8x32xf32>, vector<16x8xf32> -> vector<16x8xf32>
    %cst_91 = arith.constant dense<0.000000e+00> : vector<16x8xf32>
    %190 = tpu.matmul %184, %187, %cst_91 {dimension_numbers = #tpu.dot_dimension_numbers<[1], [1], [0], [0], [0, 0, 1, 0], [], []>} : vector<16x32xf32>, vector<8x32xf32>, vector<16x8xf32> -> vector<16x8xf32>
    %cst_92 = arith.constant dense<0.000000e+00> : vector<16x16xf32>
    %191 = tpu.matmul %189, %188, %cst_92 {dimension_numbers = #tpu.dot_dimension_numbers<[1], [1], [0], [0], [0, 0, 1, 0], [], []>} : vector<16x8xf32>, vector<16x8xf32>, vector<16x16xf32> -> vector<16x16xf32>
    %cst_93 = arith.constant 0.176776692 : f32
    %192 = vector.broadcast %cst_93 : f32 to vector<16x16xf32>
    %193 = arith.mulf %191, %192 : vector<16x16xf32>
    %194 = arith.addf %193, %10 : vector<16x16xf32>
    %cst_94 = arith.constant dense<0xFF800000> : vector<16xf32>
    %195 = vector.multi_reduction <maximumf>, %194, %cst_94 [1] : vector<16x16xf32> to vector<16xf32>
    %196 = vector.shape_cast %195 : vector<16xf32> to vector<16x1xf32>
    %197 = vector.broadcast %196 : vector<16x1xf32> to vector<16x16xf32>
    %198 = arith.subf %194, %197 : vector<16x16xf32>
    %199 = math.exp %198 : vector<16x16xf32>
    %cst_95 = arith.constant dense<0.000000e+00> : vector<16xf32>
    %200 = vector.multi_reduction <add>, %199, %cst_95 [1] : vector<16x16xf32> to vector<16xf32>
    %201 = vector.shape_cast %200 : vector<16xf32> to vector<16x1xf32>
    %202 = vector.broadcast %201 : vector<16x1xf32> to vector<16x16xf32>
    %203 = arith.divf %199, %202 : vector<16x16xf32>
    %cst_96 = arith.constant dense<0.000000e+00> : vector<16x8xf32>
    %204 = tpu.matmul %203, %190, %cst_96 {dimension_numbers = #tpu.dot_dimension_numbers<[1], [0], [0], [1], [0, 0, 1, 1], [], []>} : vector<16x16xf32>, vector<16x8xf32>, vector<16x8xf32> -> vector<16x8xf32>
    %c368 = arith.constant 368 : index
    %c0_97 = arith.constant 0 : index
    %205 = vector.load %arg1[%c368, %c0_97] : memref<904x128xf32, #tpu.memory_space<vmem>>, vector<8x32xf32>
    %cst_98 = arith.constant dense<0.000000e+00> : vector<16x32xf32>
    %206 = tpu.matmul %204, %205, %cst_98 {dimension_numbers = #tpu.dot_dimension_numbers<[1], [0], [0], [1], [0, 0, 1, 1], [], []>} : vector<16x8xf32>, vector<8x32xf32>, vector<16x32xf32> -> vector<16x32xf32>
    %c296 = arith.constant 296 : index
    %c0_99 = arith.constant 0 : index
    %207 = vector.load %arg1[%c296, %c0_99] : memref<904x128xf32, #tpu.memory_space<vmem>>, vector<8x32xf32>
    %c304 = arith.constant 304 : index
    %c0_100 = arith.constant 0 : index
    %208 = vector.load %arg1[%c304, %c0_100] : memref<904x128xf32, #tpu.memory_space<vmem>>, vector<8x32xf32>
    %c312 = arith.constant 312 : index
    %c0_101 = arith.constant 0 : index
    %209 = vector.load %arg1[%c312, %c0_101] : memref<904x128xf32, #tpu.memory_space<vmem>>, vector<8x32xf32>
    %cst_102 = arith.constant dense<0.000000e+00> : vector<16x8xf32>
    %210 = tpu.matmul %184, %207, %cst_102 {dimension_numbers = #tpu.dot_dimension_numbers<[1], [1], [0], [0], [0, 0, 1, 0], [], []>} : vector<16x32xf32>, vector<8x32xf32>, vector<16x8xf32> -> vector<16x8xf32>
    %cst_103 = arith.constant dense<0.000000e+00> : vector<16x8xf32>
    %211 = tpu.matmul %184, %208, %cst_103 {dimension_numbers = #tpu.dot_dimension_numbers<[1], [1], [0], [0], [0, 0, 1, 0], [], []>} : vector<16x32xf32>, vector<8x32xf32>, vector<16x8xf32> -> vector<16x8xf32>
    %cst_104 = arith.constant dense<0.000000e+00> : vector<16x8xf32>
    %212 = tpu.matmul %184, %209, %cst_104 {dimension_numbers = #tpu.dot_dimension_numbers<[1], [1], [0], [0], [0, 0, 1, 0], [], []>} : vector<16x32xf32>, vector<8x32xf32>, vector<16x8xf32> -> vector<16x8xf32>
    %cst_105 = arith.constant dense<0.000000e+00> : vector<16x16xf32>
    %213 = tpu.matmul %211, %210, %cst_105 {dimension_numbers = #tpu.dot_dimension_numbers<[1], [1], [0], [0], [0, 0, 1, 0], [], []>} : vector<16x8xf32>, vector<16x8xf32>, vector<16x16xf32> -> vector<16x16xf32>
    %cst_106 = arith.constant 0.176776692 : f32
    %214 = vector.broadcast %cst_106 : f32 to vector<16x16xf32>
    %215 = arith.mulf %213, %214 : vector<16x16xf32>
    %216 = arith.addf %215, %10 : vector<16x16xf32>
    %cst_107 = arith.constant dense<0xFF800000> : vector<16xf32>
    %217 = vector.multi_reduction <maximumf>, %216, %cst_107 [1] : vector<16x16xf32> to vector<16xf32>
    %218 = vector.shape_cast %217 : vector<16xf32> to vector<16x1xf32>
    %219 = vector.broadcast %218 : vector<16x1xf32> to vector<16x16xf32>
    %220 = arith.subf %216, %219 : vector<16x16xf32>
    %221 = math.exp %220 : vector<16x16xf32>
    %cst_108 = arith.constant dense<0.000000e+00> : vector<16xf32>
    %222 = vector.multi_reduction <add>, %221, %cst_108 [1] : vector<16x16xf32> to vector<16xf32>
    %223 = vector.shape_cast %222 : vector<16xf32> to vector<16x1xf32>
    %224 = vector.broadcast %223 : vector<16x1xf32> to vector<16x16xf32>
    %225 = arith.divf %221, %224 : vector<16x16xf32>
    %cst_109 = arith.constant dense<0.000000e+00> : vector<16x8xf32>
    %226 = tpu.matmul %225, %212, %cst_109 {dimension_numbers = #tpu.dot_dimension_numbers<[1], [0], [0], [1], [0, 0, 1, 1], [], []>} : vector<16x16xf32>, vector<16x8xf32>, vector<16x8xf32> -> vector<16x8xf32>
    %c376 = arith.constant 376 : index
    %c0_110 = arith.constant 0 : index
    %227 = vector.load %arg1[%c376, %c0_110] : memref<904x128xf32, #tpu.memory_space<vmem>>, vector<8x32xf32>
    %cst_111 = arith.constant dense<0.000000e+00> : vector<16x32xf32>
    %228 = tpu.matmul %226, %227, %cst_111 {dimension_numbers = #tpu.dot_dimension_numbers<[1], [0], [0], [1], [0, 0, 1, 1], [], []>} : vector<16x8xf32>, vector<8x32xf32>, vector<16x32xf32> -> vector<16x32xf32>
    %229 = arith.addf %206, %228 : vector<16x32xf32>
    %c320 = arith.constant 320 : index
    %c0_112 = arith.constant 0 : index
    %230 = vector.load %arg1[%c320, %c0_112] : memref<904x128xf32, #tpu.memory_space<vmem>>, vector<8x32xf32>
    %c328 = arith.constant 328 : index
    %c0_113 = arith.constant 0 : index
    %231 = vector.load %arg1[%c328, %c0_113] : memref<904x128xf32, #tpu.memory_space<vmem>>, vector<8x32xf32>
    %c336 = arith.constant 336 : index
    %c0_114 = arith.constant 0 : index
    %232 = vector.load %arg1[%c336, %c0_114] : memref<904x128xf32, #tpu.memory_space<vmem>>, vector<8x32xf32>
    %cst_115 = arith.constant dense<0.000000e+00> : vector<16x8xf32>
    %233 = tpu.matmul %184, %230, %cst_115 {dimension_numbers = #tpu.dot_dimension_numbers<[1], [1], [0], [0], [0, 0, 1, 0], [], []>} : vector<16x32xf32>, vector<8x32xf32>, vector<16x8xf32> -> vector<16x8xf32>
    %cst_116 = arith.constant dense<0.000000e+00> : vector<16x8xf32>
    %234 = tpu.matmul %184, %231, %cst_116 {dimension_numbers = #tpu.dot_dimension_numbers<[1], [1], [0], [0], [0, 0, 1, 0], [], []>} : vector<16x32xf32>, vector<8x32xf32>, vector<16x8xf32> -> vector<16x8xf32>
    %cst_117 = arith.constant dense<0.000000e+00> : vector<16x8xf32>
    %235 = tpu.matmul %184, %232, %cst_117 {dimension_numbers = #tpu.dot_dimension_numbers<[1], [1], [0], [0], [0, 0, 1, 0], [], []>} : vector<16x32xf32>, vector<8x32xf32>, vector<16x8xf32> -> vector<16x8xf32>
    %cst_118 = arith.constant dense<0.000000e+00> : vector<16x16xf32>
    %236 = tpu.matmul %234, %233, %cst_118 {dimension_numbers = #tpu.dot_dimension_numbers<[1], [1], [0], [0], [0, 0, 1, 0], [], []>} : vector<16x8xf32>, vector<16x8xf32>, vector<16x16xf32> -> vector<16x16xf32>
    %cst_119 = arith.constant 0.176776692 : f32
    %237 = vector.broadcast %cst_119 : f32 to vector<16x16xf32>
    %238 = arith.mulf %236, %237 : vector<16x16xf32>
    %239 = arith.addf %238, %10 : vector<16x16xf32>
    %cst_120 = arith.constant dense<0xFF800000> : vector<16xf32>
    %240 = vector.multi_reduction <maximumf>, %239, %cst_120 [1] : vector<16x16xf32> to vector<16xf32>
    %241 = vector.shape_cast %240 : vector<16xf32> to vector<16x1xf32>
    %242 = vector.broadcast %241 : vector<16x1xf32> to vector<16x16xf32>
    %243 = arith.subf %239, %242 : vector<16x16xf32>
    %244 = math.exp %243 : vector<16x16xf32>
    %cst_121 = arith.constant dense<0.000000e+00> : vector<16xf32>
    %245 = vector.multi_reduction <add>, %244, %cst_121 [1] : vector<16x16xf32> to vector<16xf32>
    %246 = vector.shape_cast %245 : vector<16xf32> to vector<16x1xf32>
    %247 = vector.broadcast %246 : vector<16x1xf32> to vector<16x16xf32>
    %248 = arith.divf %244, %247 : vector<16x16xf32>
    %cst_122 = arith.constant dense<0.000000e+00> : vector<16x8xf32>
    %249 = tpu.matmul %248, %235, %cst_122 {dimension_numbers = #tpu.dot_dimension_numbers<[1], [0], [0], [1], [0, 0, 1, 1], [], []>} : vector<16x16xf32>, vector<16x8xf32>, vector<16x8xf32> -> vector<16x8xf32>
    %c384 = arith.constant 384 : index
    %c0_123 = arith.constant 0 : index
    %250 = vector.load %arg1[%c384, %c0_123] : memref<904x128xf32, #tpu.memory_space<vmem>>, vector<8x32xf32>
    %cst_124 = arith.constant dense<0.000000e+00> : vector<16x32xf32>
    %251 = tpu.matmul %249, %250, %cst_124 {dimension_numbers = #tpu.dot_dimension_numbers<[1], [0], [0], [1], [0, 0, 1, 1], [], []>} : vector<16x8xf32>, vector<8x32xf32>, vector<16x32xf32> -> vector<16x32xf32>
    %252 = arith.addf %229, %251 : vector<16x32xf32>
    %c344 = arith.constant 344 : index
    %c0_125 = arith.constant 0 : index
    %253 = vector.load %arg1[%c344, %c0_125] : memref<904x128xf32, #tpu.memory_space<vmem>>, vector<8x32xf32>
    %c352 = arith.constant 352 : index
    %c0_126 = arith.constant 0 : index
    %254 = vector.load %arg1[%c352, %c0_126] : memref<904x128xf32, #tpu.memory_space<vmem>>, vector<8x32xf32>
    %c360 = arith.constant 360 : index
    %c0_127 = arith.constant 0 : index
    %255 = vector.load %arg1[%c360, %c0_127] : memref<904x128xf32, #tpu.memory_space<vmem>>, vector<8x32xf32>
    %cst_128 = arith.constant dense<0.000000e+00> : vector<16x8xf32>
    %256 = tpu.matmul %184, %253, %cst_128 {dimension_numbers = #tpu.dot_dimension_numbers<[1], [1], [0], [0], [0, 0, 1, 0], [], []>} : vector<16x32xf32>, vector<8x32xf32>, vector<16x8xf32> -> vector<16x8xf32>
    %cst_129 = arith.constant dense<0.000000e+00> : vector<16x8xf32>
    %257 = tpu.matmul %184, %254, %cst_129 {dimension_numbers = #tpu.dot_dimension_numbers<[1], [1], [0], [0], [0, 0, 1, 0], [], []>} : vector<16x32xf32>, vector<8x32xf32>, vector<16x8xf32> -> vector<16x8xf32>
    %cst_130 = arith.constant dense<0.000000e+00> : vector<16x8xf32>
    %258 = tpu.matmul %184, %255, %cst_130 {dimension_numbers = #tpu.dot_dimension_numbers<[1], [1], [0], [0], [0, 0, 1, 0], [], []>} : vector<16x32xf32>, vector<8x32xf32>, vector<16x8xf32> -> vector<16x8xf32>
    %cst_131 = arith.constant dense<0.000000e+00> : vector<16x16xf32>
    %259 = tpu.matmul %257, %256, %cst_131 {dimension_numbers = #tpu.dot_dimension_numbers<[1], [1], [0], [0], [0, 0, 1, 0], [], []>} : vector<16x8xf32>, vector<16x8xf32>, vector<16x16xf32> -> vector<16x16xf32>
    %cst_132 = arith.constant 0.176776692 : f32
    %260 = vector.broadcast %cst_132 : f32 to vector<16x16xf32>
    %261 = arith.mulf %259, %260 : vector<16x16xf32>
    %262 = arith.addf %261, %10 : vector<16x16xf32>
    %cst_133 = arith.constant dense<0xFF800000> : vector<16xf32>
    %263 = vector.multi_reduction <maximumf>, %262, %cst_133 [1] : vector<16x16xf32> to vector<16xf32>
    %264 = vector.shape_cast %263 : vector<16xf32> to vector<16x1xf32>
    %265 = vector.broadcast %264 : vector<16x1xf32> to vector<16x16xf32>
    %266 = arith.subf %262, %265 : vector<16x16xf32>
    %267 = math.exp %266 : vector<16x16xf32>
    %cst_134 = arith.constant dense<0.000000e+00> : vector<16xf32>
    %268 = vector.multi_reduction <add>, %267, %cst_134 [1] : vector<16x16xf32> to vector<16xf32>
    %269 = vector.shape_cast %268 : vector<16xf32> to vector<16x1xf32>
    %270 = vector.broadcast %269 : vector<16x1xf32> to vector<16x16xf32>
    %271 = arith.divf %267, %270 : vector<16x16xf32>
    %cst_135 = arith.constant dense<0.000000e+00> : vector<16x8xf32>
    %272 = tpu.matmul %271, %258, %cst_135 {dimension_numbers = #tpu.dot_dimension_numbers<[1], [0], [0], [1], [0, 0, 1, 1], [], []>} : vector<16x16xf32>, vector<16x8xf32>, vector<16x8xf32> -> vector<16x8xf32>
    %c392 = arith.constant 392 : index
    %c0_136 = arith.constant 0 : index
    %273 = vector.load %arg1[%c392, %c0_136] : memref<904x128xf32, #tpu.memory_space<vmem>>, vector<8x32xf32>
    %cst_137 = arith.constant dense<0.000000e+00> : vector<16x32xf32>
    %274 = tpu.matmul %272, %273, %cst_137 {dimension_numbers = #tpu.dot_dimension_numbers<[1], [0], [0], [1], [0, 0, 1, 1], [], []>} : vector<16x8xf32>, vector<8x32xf32>, vector<16x32xf32> -> vector<16x32xf32>
    %275 = arith.addf %252, %274 : vector<16x32xf32>
    %276 = arith.addf %162, %275 : vector<16x32xf32>
    %c266 = arith.constant 266 : index
    %c0_138 = arith.constant 0 : index
    %277 = vector.load %arg1[%c266, %c0_138] : memref<904x128xf32, #tpu.memory_space<vmem>>, vector<1x32xf32>
    %278 = vector.broadcast %277 : vector<1x32xf32> to vector<16x32xf32>
    %279 = arith.addf %276, %278 : vector<16x32xf32>
    %c267 = arith.constant 267 : index
    %c0_139 = arith.constant 0 : index
    %280 = vector.load %arg1[%c267, %c0_139] : memref<904x128xf32, #tpu.memory_space<vmem>>, vector<1x32xf32>
    %c268 = arith.constant 268 : index
    %c0_140 = arith.constant 0 : index
    %281 = vector.load %arg1[%c268, %c0_140] : memref<904x128xf32, #tpu.memory_space<vmem>>, vector<1x32xf32>
    %cst_141 = arith.constant dense<0.000000e+00> : vector<16xf32>
    %282 = vector.multi_reduction <add>, %279, %cst_141 [1] : vector<16x32xf32> to vector<16xf32>
    %283 = vector.shape_cast %282 : vector<16xf32> to vector<16x1xf32>
    %cst_142 = arith.constant 3.200000e+01 : f32
    %284 = vector.broadcast %cst_142 : f32 to vector<16x1xf32>
    %285 = arith.divf %283, %284 : vector<16x1xf32>
    %286 = vector.broadcast %285 : vector<16x1xf32> to vector<16x32xf32>
    %287 = arith.subf %279, %286 : vector<16x32xf32>
    %288 = arith.mulf %287, %287 : vector<16x32xf32>
    %cst_143 = arith.constant dense<0.000000e+00> : vector<16xf32>
    %289 = vector.multi_reduction <add>, %288, %cst_143 [1] : vector<16x32xf32> to vector<16xf32>
    %290 = vector.shape_cast %289 : vector<16xf32> to vector<16x1xf32>
    %cst_144 = arith.constant 3.200000e+01 : f32
    %291 = vector.broadcast %cst_144 : f32 to vector<16x1xf32>
    %292 = arith.divf %290, %291 : vector<16x1xf32>
    %cst_145 = arith.constant 9.99999974E-6 : f32
    %293 = vector.broadcast %cst_145 : f32 to vector<16x1xf32>
    %294 = arith.addf %292, %293 : vector<16x1xf32>
    %295 = math.rsqrt %294 : vector<16x1xf32>
    %296 = vector.broadcast %295 : vector<16x1xf32> to vector<16x32xf32>
    %297 = arith.mulf %287, %296 : vector<16x32xf32>
    %298 = vector.broadcast %280 : vector<1x32xf32> to vector<16x32xf32>
    %299 = arith.mulf %297, %298 : vector<16x32xf32>
    %300 = vector.broadcast %281 : vector<1x32xf32> to vector<16x32xf32>
    %301 = arith.addf %299, %300 : vector<16x32xf32>
    %c400 = arith.constant 400 : index
    %c0_146 = arith.constant 0 : index
    %302 = vector.load %arg1[%c400, %c0_146] : memref<904x128xf32, #tpu.memory_space<vmem>>, vector<32x128xf32>
    %cst_147 = arith.constant dense<0.000000e+00> : vector<16x128xf32>
    %303 = tpu.matmul %301, %302, %cst_147 {dimension_numbers = #tpu.dot_dimension_numbers<[1], [0], [0], [1], [0, 0, 1, 1], [], []>} : vector<16x32xf32>, vector<32x128xf32>, vector<16x128xf32> -> vector<16x128xf32>
    %c270 = arith.constant 270 : index
    %c0_148 = arith.constant 0 : index
    %304 = vector.load %arg1[%c270, %c0_148] : memref<904x128xf32, #tpu.memory_space<vmem>>, vector<1x128xf32>
    %305 = vector.broadcast %304 : vector<1x128xf32> to vector<16x128xf32>
    %306 = arith.addf %303, %305 : vector<16x128xf32>
    %cst_149 = arith.constant 0.000000e+00 : f32
    %307 = vector.broadcast %cst_149 : f32 to vector<16x128xf32>
    %308 = arith.maximumf %306, %307 : vector<16x128xf32>
    %c432 = arith.constant 432 : index
    %c0_150 = arith.constant 0 : index
    %309 = vector.load %arg1[%c432, %c0_150] : memref<904x128xf32, #tpu.memory_space<vmem>>, vector<32x128xf32>
    %cst_151 = arith.constant dense<0.000000e+00> : vector<16x32xf32>
    %310 = tpu.matmul %308, %309, %cst_151 {dimension_numbers = #tpu.dot_dimension_numbers<[1], [1], [0], [0], [0, 0, 1, 0], [], []>} : vector<16x128xf32>, vector<32x128xf32>, vector<16x32xf32> -> vector<16x32xf32>
    %311 = arith.addf %279, %310 : vector<16x32xf32>
    %c269 = arith.constant 269 : index
    %c0_152 = arith.constant 0 : index
    %312 = vector.load %arg1[%c269, %c0_152] : memref<904x128xf32, #tpu.memory_space<vmem>>, vector<1x32xf32>
    %313 = vector.broadcast %312 : vector<1x32xf32> to vector<16x32xf32>
    %314 = arith.addf %311, %313 : vector<16x32xf32>
    %c464 = arith.constant 464 : index
    %c0_153 = arith.constant 0 : index
    %315 = vector.load %arg1[%c464, %c0_153] : memref<904x128xf32, #tpu.memory_space<vmem>>, vector<1x32xf32>
    %c465 = arith.constant 465 : index
    %c0_154 = arith.constant 0 : index
    %316 = vector.load %arg1[%c465, %c0_154] : memref<904x128xf32, #tpu.memory_space<vmem>>, vector<1x32xf32>
    %cst_155 = arith.constant dense<0.000000e+00> : vector<16xf32>
    %317 = vector.multi_reduction <add>, %314, %cst_155 [1] : vector<16x32xf32> to vector<16xf32>
    %318 = vector.shape_cast %317 : vector<16xf32> to vector<16x1xf32>
    %cst_156 = arith.constant 3.200000e+01 : f32
    %319 = vector.broadcast %cst_156 : f32 to vector<16x1xf32>
    %320 = arith.divf %318, %319 : vector<16x1xf32>
    %321 = vector.broadcast %320 : vector<16x1xf32> to vector<16x32xf32>
    %322 = arith.subf %314, %321 : vector<16x32xf32>
    %323 = arith.mulf %322, %322 : vector<16x32xf32>
    %cst_157 = arith.constant dense<0.000000e+00> : vector<16xf32>
    %324 = vector.multi_reduction <add>, %323, %cst_157 [1] : vector<16x32xf32> to vector<16xf32>
    %325 = vector.shape_cast %324 : vector<16xf32> to vector<16x1xf32>
    %cst_158 = arith.constant 3.200000e+01 : f32
    %326 = vector.broadcast %cst_158 : f32 to vector<16x1xf32>
    %327 = arith.divf %325, %326 : vector<16x1xf32>
    %cst_159 = arith.constant 9.99999974E-6 : f32
    %328 = vector.broadcast %cst_159 : f32 to vector<16x1xf32>
    %329 = arith.addf %327, %328 : vector<16x1xf32>
    %330 = math.rsqrt %329 : vector<16x1xf32>
    %331 = vector.broadcast %330 : vector<16x1xf32> to vector<16x32xf32>
    %332 = arith.mulf %322, %331 : vector<16x32xf32>
    %333 = vector.broadcast %315 : vector<1x32xf32> to vector<16x32xf32>
    %334 = arith.mulf %332, %333 : vector<16x32xf32>
    %335 = vector.broadcast %316 : vector<1x32xf32> to vector<16x32xf32>
    %336 = arith.addf %334, %335 : vector<16x32xf32>
    %c472 = arith.constant 472 : index
    %c0_160 = arith.constant 0 : index
    %337 = vector.load %arg1[%c472, %c0_160] : memref<904x128xf32, #tpu.memory_space<vmem>>, vector<8x32xf32>
    %c480 = arith.constant 480 : index
    %c0_161 = arith.constant 0 : index
    %338 = vector.load %arg1[%c480, %c0_161] : memref<904x128xf32, #tpu.memory_space<vmem>>, vector<8x32xf32>
    %c488 = arith.constant 488 : index
    %c0_162 = arith.constant 0 : index
    %339 = vector.load %arg1[%c488, %c0_162] : memref<904x128xf32, #tpu.memory_space<vmem>>, vector<8x32xf32>
    %cst_163 = arith.constant dense<0.000000e+00> : vector<16x8xf32>
    %340 = tpu.matmul %336, %337, %cst_163 {dimension_numbers = #tpu.dot_dimension_numbers<[1], [1], [0], [0], [0, 0, 1, 0], [], []>} : vector<16x32xf32>, vector<8x32xf32>, vector<16x8xf32> -> vector<16x8xf32>
    %cst_164 = arith.constant dense<0.000000e+00> : vector<16x8xf32>
    %341 = tpu.matmul %336, %338, %cst_164 {dimension_numbers = #tpu.dot_dimension_numbers<[1], [1], [0], [0], [0, 0, 1, 0], [], []>} : vector<16x32xf32>, vector<8x32xf32>, vector<16x8xf32> -> vector<16x8xf32>
    %cst_165 = arith.constant dense<0.000000e+00> : vector<16x8xf32>
    %342 = tpu.matmul %336, %339, %cst_165 {dimension_numbers = #tpu.dot_dimension_numbers<[1], [1], [0], [0], [0, 0, 1, 0], [], []>} : vector<16x32xf32>, vector<8x32xf32>, vector<16x8xf32> -> vector<16x8xf32>
    %cst_166 = arith.constant dense<0.000000e+00> : vector<16x16xf32>
    %343 = tpu.matmul %341, %340, %cst_166 {dimension_numbers = #tpu.dot_dimension_numbers<[1], [1], [0], [0], [0, 0, 1, 0], [], []>} : vector<16x8xf32>, vector<16x8xf32>, vector<16x16xf32> -> vector<16x16xf32>
    %cst_167 = arith.constant 0.176776692 : f32
    %344 = vector.broadcast %cst_167 : f32 to vector<16x16xf32>
    %345 = arith.mulf %343, %344 : vector<16x16xf32>
    %346 = arith.addf %345, %10 : vector<16x16xf32>
    %cst_168 = arith.constant dense<0xFF800000> : vector<16xf32>
    %347 = vector.multi_reduction <maximumf>, %346, %cst_168 [1] : vector<16x16xf32> to vector<16xf32>
    %348 = vector.shape_cast %347 : vector<16xf32> to vector<16x1xf32>
    %349 = vector.broadcast %348 : vector<16x1xf32> to vector<16x16xf32>
    %350 = arith.subf %346, %349 : vector<16x16xf32>
    %351 = math.exp %350 : vector<16x16xf32>
    %cst_169 = arith.constant dense<0.000000e+00> : vector<16xf32>
    %352 = vector.multi_reduction <add>, %351, %cst_169 [1] : vector<16x16xf32> to vector<16xf32>
    %353 = vector.shape_cast %352 : vector<16xf32> to vector<16x1xf32>
    %354 = vector.broadcast %353 : vector<16x1xf32> to vector<16x16xf32>
    %355 = arith.divf %351, %354 : vector<16x16xf32>
    %cst_170 = arith.constant dense<0.000000e+00> : vector<16x8xf32>
    %356 = tpu.matmul %355, %342, %cst_170 {dimension_numbers = #tpu.dot_dimension_numbers<[1], [0], [0], [1], [0, 0, 1, 1], [], []>} : vector<16x16xf32>, vector<16x8xf32>, vector<16x8xf32> -> vector<16x8xf32>
    %c568 = arith.constant 568 : index
    %c0_171 = arith.constant 0 : index
    %357 = vector.load %arg1[%c568, %c0_171] : memref<904x128xf32, #tpu.memory_space<vmem>>, vector<8x32xf32>
    %cst_172 = arith.constant dense<0.000000e+00> : vector<16x32xf32>
    %358 = tpu.matmul %356, %357, %cst_172 {dimension_numbers = #tpu.dot_dimension_numbers<[1], [0], [0], [1], [0, 0, 1, 1], [], []>} : vector<16x8xf32>, vector<8x32xf32>, vector<16x32xf32> -> vector<16x32xf32>
    %c496 = arith.constant 496 : index
    %c0_173 = arith.constant 0 : index
    %359 = vector.load %arg1[%c496, %c0_173] : memref<904x128xf32, #tpu.memory_space<vmem>>, vector<8x32xf32>
    %c504 = arith.constant 504 : index
    %c0_174 = arith.constant 0 : index
    %360 = vector.load %arg1[%c504, %c0_174] : memref<904x128xf32, #tpu.memory_space<vmem>>, vector<8x32xf32>
    %c512 = arith.constant 512 : index
    %c0_175 = arith.constant 0 : index
    %361 = vector.load %arg1[%c512, %c0_175] : memref<904x128xf32, #tpu.memory_space<vmem>>, vector<8x32xf32>
    %cst_176 = arith.constant dense<0.000000e+00> : vector<16x8xf32>
    %362 = tpu.matmul %336, %359, %cst_176 {dimension_numbers = #tpu.dot_dimension_numbers<[1], [1], [0], [0], [0, 0, 1, 0], [], []>} : vector<16x32xf32>, vector<8x32xf32>, vector<16x8xf32> -> vector<16x8xf32>
    %cst_177 = arith.constant dense<0.000000e+00> : vector<16x8xf32>
    %363 = tpu.matmul %336, %360, %cst_177 {dimension_numbers = #tpu.dot_dimension_numbers<[1], [1], [0], [0], [0, 0, 1, 0], [], []>} : vector<16x32xf32>, vector<8x32xf32>, vector<16x8xf32> -> vector<16x8xf32>
    %cst_178 = arith.constant dense<0.000000e+00> : vector<16x8xf32>
    %364 = tpu.matmul %336, %361, %cst_178 {dimension_numbers = #tpu.dot_dimension_numbers<[1], [1], [0], [0], [0, 0, 1, 0], [], []>} : vector<16x32xf32>, vector<8x32xf32>, vector<16x8xf32> -> vector<16x8xf32>
    %cst_179 = arith.constant dense<0.000000e+00> : vector<16x16xf32>
    %365 = tpu.matmul %363, %362, %cst_179 {dimension_numbers = #tpu.dot_dimension_numbers<[1], [1], [0], [0], [0, 0, 1, 0], [], []>} : vector<16x8xf32>, vector<16x8xf32>, vector<16x16xf32> -> vector<16x16xf32>
    %cst_180 = arith.constant 0.176776692 : f32
    %366 = vector.broadcast %cst_180 : f32 to vector<16x16xf32>
    %367 = arith.mulf %365, %366 : vector<16x16xf32>
    %368 = arith.addf %367, %10 : vector<16x16xf32>
    %cst_181 = arith.constant dense<0xFF800000> : vector<16xf32>
    %369 = vector.multi_reduction <maximumf>, %368, %cst_181 [1] : vector<16x16xf32> to vector<16xf32>
    %370 = vector.shape_cast %369 : vector<16xf32> to vector<16x1xf32>
    %371 = vector.broadcast %370 : vector<16x1xf32> to vector<16x16xf32>
    %372 = arith.subf %368, %371 : vector<16x16xf32>
    %373 = math.exp %372 : vector<16x16xf32>
    %cst_182 = arith.constant dense<0.000000e+00> : vector<16xf32>
    %374 = vector.multi_reduction <add>, %373, %cst_182 [1] : vector<16x16xf32> to vector<16xf32>
    %375 = vector.shape_cast %374 : vector<16xf32> to vector<16x1xf32>
    %376 = vector.broadcast %375 : vector<16x1xf32> to vector<16x16xf32>
    %377 = arith.divf %373, %376 : vector<16x16xf32>
    %cst_183 = arith.constant dense<0.000000e+00> : vector<16x8xf32>
    %378 = tpu.matmul %377, %364, %cst_183 {dimension_numbers = #tpu.dot_dimension_numbers<[1], [0], [0], [1], [0, 0, 1, 1], [], []>} : vector<16x16xf32>, vector<16x8xf32>, vector<16x8xf32> -> vector<16x8xf32>
    %c576 = arith.constant 576 : index
    %c0_184 = arith.constant 0 : index
    %379 = vector.load %arg1[%c576, %c0_184] : memref<904x128xf32, #tpu.memory_space<vmem>>, vector<8x32xf32>
    %cst_185 = arith.constant dense<0.000000e+00> : vector<16x32xf32>
    %380 = tpu.matmul %378, %379, %cst_185 {dimension_numbers = #tpu.dot_dimension_numbers<[1], [0], [0], [1], [0, 0, 1, 1], [], []>} : vector<16x8xf32>, vector<8x32xf32>, vector<16x32xf32> -> vector<16x32xf32>
    %381 = arith.addf %358, %380 : vector<16x32xf32>
    %c520 = arith.constant 520 : index
    %c0_186 = arith.constant 0 : index
    %382 = vector.load %arg1[%c520, %c0_186] : memref<904x128xf32, #tpu.memory_space<vmem>>, vector<8x32xf32>
    %c528 = arith.constant 528 : index
    %c0_187 = arith.constant 0 : index
    %383 = vector.load %arg1[%c528, %c0_187] : memref<904x128xf32, #tpu.memory_space<vmem>>, vector<8x32xf32>
    %c536 = arith.constant 536 : index
    %c0_188 = arith.constant 0 : index
    %384 = vector.load %arg1[%c536, %c0_188] : memref<904x128xf32, #tpu.memory_space<vmem>>, vector<8x32xf32>
    %cst_189 = arith.constant dense<0.000000e+00> : vector<16x8xf32>
    %385 = tpu.matmul %336, %382, %cst_189 {dimension_numbers = #tpu.dot_dimension_numbers<[1], [1], [0], [0], [0, 0, 1, 0], [], []>} : vector<16x32xf32>, vector<8x32xf32>, vector<16x8xf32> -> vector<16x8xf32>
    %cst_190 = arith.constant dense<0.000000e+00> : vector<16x8xf32>
    %386 = tpu.matmul %336, %383, %cst_190 {dimension_numbers = #tpu.dot_dimension_numbers<[1], [1], [0], [0], [0, 0, 1, 0], [], []>} : vector<16x32xf32>, vector<8x32xf32>, vector<16x8xf32> -> vector<16x8xf32>
    %cst_191 = arith.constant dense<0.000000e+00> : vector<16x8xf32>
    %387 = tpu.matmul %336, %384, %cst_191 {dimension_numbers = #tpu.dot_dimension_numbers<[1], [1], [0], [0], [0, 0, 1, 0], [], []>} : vector<16x32xf32>, vector<8x32xf32>, vector<16x8xf32> -> vector<16x8xf32>
    %cst_192 = arith.constant dense<0.000000e+00> : vector<16x16xf32>
    %388 = tpu.matmul %386, %385, %cst_192 {dimension_numbers = #tpu.dot_dimension_numbers<[1], [1], [0], [0], [0, 0, 1, 0], [], []>} : vector<16x8xf32>, vector<16x8xf32>, vector<16x16xf32> -> vector<16x16xf32>
    %cst_193 = arith.constant 0.176776692 : f32
    %389 = vector.broadcast %cst_193 : f32 to vector<16x16xf32>
    %390 = arith.mulf %388, %389 : vector<16x16xf32>
    %391 = arith.addf %390, %10 : vector<16x16xf32>
    %cst_194 = arith.constant dense<0xFF800000> : vector<16xf32>
    %392 = vector.multi_reduction <maximumf>, %391, %cst_194 [1] : vector<16x16xf32> to vector<16xf32>
    %393 = vector.shape_cast %392 : vector<16xf32> to vector<16x1xf32>
    %394 = vector.broadcast %393 : vector<16x1xf32> to vector<16x16xf32>
    %395 = arith.subf %391, %394 : vector<16x16xf32>
    %396 = math.exp %395 : vector<16x16xf32>
    %cst_195 = arith.constant dense<0.000000e+00> : vector<16xf32>
    %397 = vector.multi_reduction <add>, %396, %cst_195 [1] : vector<16x16xf32> to vector<16xf32>
    %398 = vector.shape_cast %397 : vector<16xf32> to vector<16x1xf32>
    %399 = vector.broadcast %398 : vector<16x1xf32> to vector<16x16xf32>
    %400 = arith.divf %396, %399 : vector<16x16xf32>
    %cst_196 = arith.constant dense<0.000000e+00> : vector<16x8xf32>
    %401 = tpu.matmul %400, %387, %cst_196 {dimension_numbers = #tpu.dot_dimension_numbers<[1], [0], [0], [1], [0, 0, 1, 1], [], []>} : vector<16x16xf32>, vector<16x8xf32>, vector<16x8xf32> -> vector<16x8xf32>
    %c584 = arith.constant 584 : index
    %c0_197 = arith.constant 0 : index
    %402 = vector.load %arg1[%c584, %c0_197] : memref<904x128xf32, #tpu.memory_space<vmem>>, vector<8x32xf32>
    %cst_198 = arith.constant dense<0.000000e+00> : vector<16x32xf32>
    %403 = tpu.matmul %401, %402, %cst_198 {dimension_numbers = #tpu.dot_dimension_numbers<[1], [0], [0], [1], [0, 0, 1, 1], [], []>} : vector<16x8xf32>, vector<8x32xf32>, vector<16x32xf32> -> vector<16x32xf32>
    %404 = arith.addf %381, %403 : vector<16x32xf32>
    %c544 = arith.constant 544 : index
    %c0_199 = arith.constant 0 : index
    %405 = vector.load %arg1[%c544, %c0_199] : memref<904x128xf32, #tpu.memory_space<vmem>>, vector<8x32xf32>
    %c552 = arith.constant 552 : index
    %c0_200 = arith.constant 0 : index
    %406 = vector.load %arg1[%c552, %c0_200] : memref<904x128xf32, #tpu.memory_space<vmem>>, vector<8x32xf32>
    %c560 = arith.constant 560 : index
    %c0_201 = arith.constant 0 : index
    %407 = vector.load %arg1[%c560, %c0_201] : memref<904x128xf32, #tpu.memory_space<vmem>>, vector<8x32xf32>
    %cst_202 = arith.constant dense<0.000000e+00> : vector<16x8xf32>
    %408 = tpu.matmul %336, %405, %cst_202 {dimension_numbers = #tpu.dot_dimension_numbers<[1], [1], [0], [0], [0, 0, 1, 0], [], []>} : vector<16x32xf32>, vector<8x32xf32>, vector<16x8xf32> -> vector<16x8xf32>
    %cst_203 = arith.constant dense<0.000000e+00> : vector<16x8xf32>
    %409 = tpu.matmul %336, %406, %cst_203 {dimension_numbers = #tpu.dot_dimension_numbers<[1], [1], [0], [0], [0, 0, 1, 0], [], []>} : vector<16x32xf32>, vector<8x32xf32>, vector<16x8xf32> -> vector<16x8xf32>
    %cst_204 = arith.constant dense<0.000000e+00> : vector<16x8xf32>
    %410 = tpu.matmul %336, %407, %cst_204 {dimension_numbers = #tpu.dot_dimension_numbers<[1], [1], [0], [0], [0, 0, 1, 0], [], []>} : vector<16x32xf32>, vector<8x32xf32>, vector<16x8xf32> -> vector<16x8xf32>
    %cst_205 = arith.constant dense<0.000000e+00> : vector<16x16xf32>
    %411 = tpu.matmul %409, %408, %cst_205 {dimension_numbers = #tpu.dot_dimension_numbers<[1], [1], [0], [0], [0, 0, 1, 0], [], []>} : vector<16x8xf32>, vector<16x8xf32>, vector<16x16xf32> -> vector<16x16xf32>
    %cst_206 = arith.constant 0.176776692 : f32
    %412 = vector.broadcast %cst_206 : f32 to vector<16x16xf32>
    %413 = arith.mulf %411, %412 : vector<16x16xf32>
    %414 = arith.addf %413, %10 : vector<16x16xf32>
    %cst_207 = arith.constant dense<0xFF800000> : vector<16xf32>
    %415 = vector.multi_reduction <maximumf>, %414, %cst_207 [1] : vector<16x16xf32> to vector<16xf32>
    %416 = vector.shape_cast %415 : vector<16xf32> to vector<16x1xf32>
    %417 = vector.broadcast %416 : vector<16x1xf32> to vector<16x16xf32>
    %418 = arith.subf %414, %417 : vector<16x16xf32>
    %419 = math.exp %418 : vector<16x16xf32>
    %cst_208 = arith.constant dense<0.000000e+00> : vector<16xf32>
    %420 = vector.multi_reduction <add>, %419, %cst_208 [1] : vector<16x16xf32> to vector<16xf32>
    %421 = vector.shape_cast %420 : vector<16xf32> to vector<16x1xf32>
    %422 = vector.broadcast %421 : vector<16x1xf32> to vector<16x16xf32>
    %423 = arith.divf %419, %422 : vector<16x16xf32>
    %cst_209 = arith.constant dense<0.000000e+00> : vector<16x8xf32>
    %424 = tpu.matmul %423, %410, %cst_209 {dimension_numbers = #tpu.dot_dimension_numbers<[1], [0], [0], [1], [0, 0, 1, 1], [], []>} : vector<16x16xf32>, vector<16x8xf32>, vector<16x8xf32> -> vector<16x8xf32>
    %c592 = arith.constant 592 : index
    %c0_210 = arith.constant 0 : index
    %425 = vector.load %arg1[%c592, %c0_210] : memref<904x128xf32, #tpu.memory_space<vmem>>, vector<8x32xf32>
    %cst_211 = arith.constant dense<0.000000e+00> : vector<16x32xf32>
    %426 = tpu.matmul %424, %425, %cst_211 {dimension_numbers = #tpu.dot_dimension_numbers<[1], [0], [0], [1], [0, 0, 1, 1], [], []>} : vector<16x8xf32>, vector<8x32xf32>, vector<16x32xf32> -> vector<16x32xf32>
    %427 = arith.addf %404, %426 : vector<16x32xf32>
    %428 = arith.addf %314, %427 : vector<16x32xf32>
    %c466 = arith.constant 466 : index
    %c0_212 = arith.constant 0 : index
    %429 = vector.load %arg1[%c466, %c0_212] : memref<904x128xf32, #tpu.memory_space<vmem>>, vector<1x32xf32>
    %430 = vector.broadcast %429 : vector<1x32xf32> to vector<16x32xf32>
    %431 = arith.addf %428, %430 : vector<16x32xf32>
    %c467 = arith.constant 467 : index
    %c0_213 = arith.constant 0 : index
    %432 = vector.load %arg1[%c467, %c0_213] : memref<904x128xf32, #tpu.memory_space<vmem>>, vector<1x32xf32>
    %c468 = arith.constant 468 : index
    %c0_214 = arith.constant 0 : index
    %433 = vector.load %arg1[%c468, %c0_214] : memref<904x128xf32, #tpu.memory_space<vmem>>, vector<1x32xf32>
    %cst_215 = arith.constant dense<0.000000e+00> : vector<16xf32>
    %434 = vector.multi_reduction <add>, %431, %cst_215 [1] : vector<16x32xf32> to vector<16xf32>
    %435 = vector.shape_cast %434 : vector<16xf32> to vector<16x1xf32>
    %cst_216 = arith.constant 3.200000e+01 : f32
    %436 = vector.broadcast %cst_216 : f32 to vector<16x1xf32>
    %437 = arith.divf %435, %436 : vector<16x1xf32>
    %438 = vector.broadcast %437 : vector<16x1xf32> to vector<16x32xf32>
    %439 = arith.subf %431, %438 : vector<16x32xf32>
    %440 = arith.mulf %439, %439 : vector<16x32xf32>
    %cst_217 = arith.constant dense<0.000000e+00> : vector<16xf32>
    %441 = vector.multi_reduction <add>, %440, %cst_217 [1] : vector<16x32xf32> to vector<16xf32>
    %442 = vector.shape_cast %441 : vector<16xf32> to vector<16x1xf32>
    %cst_218 = arith.constant 3.200000e+01 : f32
    %443 = vector.broadcast %cst_218 : f32 to vector<16x1xf32>
    %444 = arith.divf %442, %443 : vector<16x1xf32>
    %cst_219 = arith.constant 9.99999974E-6 : f32
    %445 = vector.broadcast %cst_219 : f32 to vector<16x1xf32>
    %446 = arith.addf %444, %445 : vector<16x1xf32>
    %447 = math.rsqrt %446 : vector<16x1xf32>
    %448 = vector.broadcast %447 : vector<16x1xf32> to vector<16x32xf32>
    %449 = arith.mulf %439, %448 : vector<16x32xf32>
    %450 = vector.broadcast %432 : vector<1x32xf32> to vector<16x32xf32>
    %451 = arith.mulf %449, %450 : vector<16x32xf32>
    %452 = vector.broadcast %433 : vector<1x32xf32> to vector<16x32xf32>
    %453 = arith.addf %451, %452 : vector<16x32xf32>
    %c600 = arith.constant 600 : index
    %c0_220 = arith.constant 0 : index
    %454 = vector.load %arg1[%c600, %c0_220] : memref<904x128xf32, #tpu.memory_space<vmem>>, vector<32x128xf32>
    %cst_221 = arith.constant dense<0.000000e+00> : vector<16x128xf32>
    %455 = tpu.matmul %453, %454, %cst_221 {dimension_numbers = #tpu.dot_dimension_numbers<[1], [0], [0], [1], [0, 0, 1, 1], [], []>} : vector<16x32xf32>, vector<32x128xf32>, vector<16x128xf32> -> vector<16x128xf32>
    %c470 = arith.constant 470 : index
    %c0_222 = arith.constant 0 : index
    %456 = vector.load %arg1[%c470, %c0_222] : memref<904x128xf32, #tpu.memory_space<vmem>>, vector<1x128xf32>
    %457 = vector.broadcast %456 : vector<1x128xf32> to vector<16x128xf32>
    %458 = arith.addf %455, %457 : vector<16x128xf32>
    %cst_223 = arith.constant 0.000000e+00 : f32
    %459 = vector.broadcast %cst_223 : f32 to vector<16x128xf32>
    %460 = arith.maximumf %458, %459 : vector<16x128xf32>
    %c632 = arith.constant 632 : index
    %c0_224 = arith.constant 0 : index
    %461 = vector.load %arg1[%c632, %c0_224] : memref<904x128xf32, #tpu.memory_space<vmem>>, vector<32x128xf32>
    %cst_225 = arith.constant dense<0.000000e+00> : vector<16x32xf32>
    %462 = tpu.matmul %460, %461, %cst_225 {dimension_numbers = #tpu.dot_dimension_numbers<[1], [1], [0], [0], [0, 0, 1, 0], [], []>} : vector<16x128xf32>, vector<32x128xf32>, vector<16x32xf32> -> vector<16x32xf32>
    %463 = arith.addf %431, %462 : vector<16x32xf32>
    %c469 = arith.constant 469 : index
    %c0_226 = arith.constant 0 : index
    %464 = vector.load %arg1[%c469, %c0_226] : memref<904x128xf32, #tpu.memory_space<vmem>>, vector<1x32xf32>
    %465 = vector.broadcast %464 : vector<1x32xf32> to vector<16x32xf32>
    %466 = arith.addf %463, %465 : vector<16x32xf32>
    %c664 = arith.constant 664 : index
    %c0_227 = arith.constant 0 : index
    %467 = vector.load %arg1[%c664, %c0_227] : memref<904x128xf32, #tpu.memory_space<vmem>>, vector<1x32xf32>
    %c665 = arith.constant 665 : index
    %c0_228 = arith.constant 0 : index
    %468 = vector.load %arg1[%c665, %c0_228] : memref<904x128xf32, #tpu.memory_space<vmem>>, vector<1x32xf32>
    %cst_229 = arith.constant dense<0.000000e+00> : vector<16xf32>
    %469 = vector.multi_reduction <add>, %466, %cst_229 [1] : vector<16x32xf32> to vector<16xf32>
    %470 = vector.shape_cast %469 : vector<16xf32> to vector<16x1xf32>
    %cst_230 = arith.constant 3.200000e+01 : f32
    %471 = vector.broadcast %cst_230 : f32 to vector<16x1xf32>
    %472 = arith.divf %470, %471 : vector<16x1xf32>
    %473 = vector.broadcast %472 : vector<16x1xf32> to vector<16x32xf32>
    %474 = arith.subf %466, %473 : vector<16x32xf32>
    %475 = arith.mulf %474, %474 : vector<16x32xf32>
    %cst_231 = arith.constant dense<0.000000e+00> : vector<16xf32>
    %476 = vector.multi_reduction <add>, %475, %cst_231 [1] : vector<16x32xf32> to vector<16xf32>
    %477 = vector.shape_cast %476 : vector<16xf32> to vector<16x1xf32>
    %cst_232 = arith.constant 3.200000e+01 : f32
    %478 = vector.broadcast %cst_232 : f32 to vector<16x1xf32>
    %479 = arith.divf %477, %478 : vector<16x1xf32>
    %cst_233 = arith.constant 9.99999974E-6 : f32
    %480 = vector.broadcast %cst_233 : f32 to vector<16x1xf32>
    %481 = arith.addf %479, %480 : vector<16x1xf32>
    %482 = math.rsqrt %481 : vector<16x1xf32>
    %483 = vector.broadcast %482 : vector<16x1xf32> to vector<16x32xf32>
    %484 = arith.mulf %474, %483 : vector<16x32xf32>
    %485 = vector.broadcast %467 : vector<1x32xf32> to vector<16x32xf32>
    %486 = arith.mulf %484, %485 : vector<16x32xf32>
    %487 = vector.broadcast %468 : vector<1x32xf32> to vector<16x32xf32>
    %488 = arith.addf %486, %487 : vector<16x32xf32>
    %c672 = arith.constant 672 : index
    %c0_234 = arith.constant 0 : index
    %489 = vector.load %arg1[%c672, %c0_234] : memref<904x128xf32, #tpu.memory_space<vmem>>, vector<8x32xf32>
    %c680 = arith.constant 680 : index
    %c0_235 = arith.constant 0 : index
    %490 = vector.load %arg1[%c680, %c0_235] : memref<904x128xf32, #tpu.memory_space<vmem>>, vector<8x32xf32>
    %c688 = arith.constant 688 : index
    %c0_236 = arith.constant 0 : index
    %491 = vector.load %arg1[%c688, %c0_236] : memref<904x128xf32, #tpu.memory_space<vmem>>, vector<8x32xf32>
    %cst_237 = arith.constant dense<0.000000e+00> : vector<16x8xf32>
    %492 = tpu.matmul %488, %489, %cst_237 {dimension_numbers = #tpu.dot_dimension_numbers<[1], [1], [0], [0], [0, 0, 1, 0], [], []>} : vector<16x32xf32>, vector<8x32xf32>, vector<16x8xf32> -> vector<16x8xf32>
    %cst_238 = arith.constant dense<0.000000e+00> : vector<16x8xf32>
    %493 = tpu.matmul %488, %490, %cst_238 {dimension_numbers = #tpu.dot_dimension_numbers<[1], [1], [0], [0], [0, 0, 1, 0], [], []>} : vector<16x32xf32>, vector<8x32xf32>, vector<16x8xf32> -> vector<16x8xf32>
    %cst_239 = arith.constant dense<0.000000e+00> : vector<16x8xf32>
    %494 = tpu.matmul %488, %491, %cst_239 {dimension_numbers = #tpu.dot_dimension_numbers<[1], [1], [0], [0], [0, 0, 1, 0], [], []>} : vector<16x32xf32>, vector<8x32xf32>, vector<16x8xf32> -> vector<16x8xf32>
    %cst_240 = arith.constant dense<0.000000e+00> : vector<16x16xf32>
    %495 = tpu.matmul %493, %492, %cst_240 {dimension_numbers = #tpu.dot_dimension_numbers<[1], [1], [0], [0], [0, 0, 1, 0], [], []>} : vector<16x8xf32>, vector<16x8xf32>, vector<16x16xf32> -> vector<16x16xf32>
    %cst_241 = arith.constant 0.176776692 : f32
    %496 = vector.broadcast %cst_241 : f32 to vector<16x16xf32>
    %497 = arith.mulf %495, %496 : vector<16x16xf32>
    %498 = arith.addf %497, %10 : vector<16x16xf32>
    %cst_242 = arith.constant dense<0xFF800000> : vector<16xf32>
    %499 = vector.multi_reduction <maximumf>, %498, %cst_242 [1] : vector<16x16xf32> to vector<16xf32>
    %500 = vector.shape_cast %499 : vector<16xf32> to vector<16x1xf32>
    %501 = vector.broadcast %500 : vector<16x1xf32> to vector<16x16xf32>
    %502 = arith.subf %498, %501 : vector<16x16xf32>
    %503 = math.exp %502 : vector<16x16xf32>
    %cst_243 = arith.constant dense<0.000000e+00> : vector<16xf32>
    %504 = vector.multi_reduction <add>, %503, %cst_243 [1] : vector<16x16xf32> to vector<16xf32>
    %505 = vector.shape_cast %504 : vector<16xf32> to vector<16x1xf32>
    %506 = vector.broadcast %505 : vector<16x1xf32> to vector<16x16xf32>
    %507 = arith.divf %503, %506 : vector<16x16xf32>
    %cst_244 = arith.constant dense<0.000000e+00> : vector<16x8xf32>
    %508 = tpu.matmul %507, %494, %cst_244 {dimension_numbers = #tpu.dot_dimension_numbers<[1], [0], [0], [1], [0, 0, 1, 1], [], []>} : vector<16x16xf32>, vector<16x8xf32>, vector<16x8xf32> -> vector<16x8xf32>
    %c768 = arith.constant 768 : index
    %c0_245 = arith.constant 0 : index
    %509 = vector.load %arg1[%c768, %c0_245] : memref<904x128xf32, #tpu.memory_space<vmem>>, vector<8x32xf32>
    %cst_246 = arith.constant dense<0.000000e+00> : vector<16x32xf32>
    %510 = tpu.matmul %508, %509, %cst_246 {dimension_numbers = #tpu.dot_dimension_numbers<[1], [0], [0], [1], [0, 0, 1, 1], [], []>} : vector<16x8xf32>, vector<8x32xf32>, vector<16x32xf32> -> vector<16x32xf32>
    %c696 = arith.constant 696 : index
    %c0_247 = arith.constant 0 : index
    %511 = vector.load %arg1[%c696, %c0_247] : memref<904x128xf32, #tpu.memory_space<vmem>>, vector<8x32xf32>
    %c704 = arith.constant 704 : index
    %c0_248 = arith.constant 0 : index
    %512 = vector.load %arg1[%c704, %c0_248] : memref<904x128xf32, #tpu.memory_space<vmem>>, vector<8x32xf32>
    %c712 = arith.constant 712 : index
    %c0_249 = arith.constant 0 : index
    %513 = vector.load %arg1[%c712, %c0_249] : memref<904x128xf32, #tpu.memory_space<vmem>>, vector<8x32xf32>
    %cst_250 = arith.constant dense<0.000000e+00> : vector<16x8xf32>
    %514 = tpu.matmul %488, %511, %cst_250 {dimension_numbers = #tpu.dot_dimension_numbers<[1], [1], [0], [0], [0, 0, 1, 0], [], []>} : vector<16x32xf32>, vector<8x32xf32>, vector<16x8xf32> -> vector<16x8xf32>
    %cst_251 = arith.constant dense<0.000000e+00> : vector<16x8xf32>
    %515 = tpu.matmul %488, %512, %cst_251 {dimension_numbers = #tpu.dot_dimension_numbers<[1], [1], [0], [0], [0, 0, 1, 0], [], []>} : vector<16x32xf32>, vector<8x32xf32>, vector<16x8xf32> -> vector<16x8xf32>
    %cst_252 = arith.constant dense<0.000000e+00> : vector<16x8xf32>
    %516 = tpu.matmul %488, %513, %cst_252 {dimension_numbers = #tpu.dot_dimension_numbers<[1], [1], [0], [0], [0, 0, 1, 0], [], []>} : vector<16x32xf32>, vector<8x32xf32>, vector<16x8xf32> -> vector<16x8xf32>
    %cst_253 = arith.constant dense<0.000000e+00> : vector<16x16xf32>
    %517 = tpu.matmul %515, %514, %cst_253 {dimension_numbers = #tpu.dot_dimension_numbers<[1], [1], [0], [0], [0, 0, 1, 0], [], []>} : vector<16x8xf32>, vector<16x8xf32>, vector<16x16xf32> -> vector<16x16xf32>
    %cst_254 = arith.constant 0.176776692 : f32
    %518 = vector.broadcast %cst_254 : f32 to vector<16x16xf32>
    %519 = arith.mulf %517, %518 : vector<16x16xf32>
    %520 = arith.addf %519, %10 : vector<16x16xf32>
    %cst_255 = arith.constant dense<0xFF800000> : vector<16xf32>
    %521 = vector.multi_reduction <maximumf>, %520, %cst_255 [1] : vector<16x16xf32> to vector<16xf32>
    %522 = vector.shape_cast %521 : vector<16xf32> to vector<16x1xf32>
    %523 = vector.broadcast %522 : vector<16x1xf32> to vector<16x16xf32>
    %524 = arith.subf %520, %523 : vector<16x16xf32>
    %525 = math.exp %524 : vector<16x16xf32>
    %cst_256 = arith.constant dense<0.000000e+00> : vector<16xf32>
    %526 = vector.multi_reduction <add>, %525, %cst_256 [1] : vector<16x16xf32> to vector<16xf32>
    %527 = vector.shape_cast %526 : vector<16xf32> to vector<16x1xf32>
    %528 = vector.broadcast %527 : vector<16x1xf32> to vector<16x16xf32>
    %529 = arith.divf %525, %528 : vector<16x16xf32>
    %cst_257 = arith.constant dense<0.000000e+00> : vector<16x8xf32>
    %530 = tpu.matmul %529, %516, %cst_257 {dimension_numbers = #tpu.dot_dimension_numbers<[1], [0], [0], [1], [0, 0, 1, 1], [], []>} : vector<16x16xf32>, vector<16x8xf32>, vector<16x8xf32> -> vector<16x8xf32>
    %c776 = arith.constant 776 : index
    %c0_258 = arith.constant 0 : index
    %531 = vector.load %arg1[%c776, %c0_258] : memref<904x128xf32, #tpu.memory_space<vmem>>, vector<8x32xf32>
    %cst_259 = arith.constant dense<0.000000e+00> : vector<16x32xf32>
    %532 = tpu.matmul %530, %531, %cst_259 {dimension_numbers = #tpu.dot_dimension_numbers<[1], [0], [0], [1], [0, 0, 1, 1], [], []>} : vector<16x8xf32>, vector<8x32xf32>, vector<16x32xf32> -> vector<16x32xf32>
    %533 = arith.addf %510, %532 : vector<16x32xf32>
    %c720 = arith.constant 720 : index
    %c0_260 = arith.constant 0 : index
    %534 = vector.load %arg1[%c720, %c0_260] : memref<904x128xf32, #tpu.memory_space<vmem>>, vector<8x32xf32>
    %c728 = arith.constant 728 : index
    %c0_261 = arith.constant 0 : index
    %535 = vector.load %arg1[%c728, %c0_261] : memref<904x128xf32, #tpu.memory_space<vmem>>, vector<8x32xf32>
    %c736 = arith.constant 736 : index
    %c0_262 = arith.constant 0 : index
    %536 = vector.load %arg1[%c736, %c0_262] : memref<904x128xf32, #tpu.memory_space<vmem>>, vector<8x32xf32>
    %cst_263 = arith.constant dense<0.000000e+00> : vector<16x8xf32>
    %537 = tpu.matmul %488, %534, %cst_263 {dimension_numbers = #tpu.dot_dimension_numbers<[1], [1], [0], [0], [0, 0, 1, 0], [], []>} : vector<16x32xf32>, vector<8x32xf32>, vector<16x8xf32> -> vector<16x8xf32>
    %cst_264 = arith.constant dense<0.000000e+00> : vector<16x8xf32>
    %538 = tpu.matmul %488, %535, %cst_264 {dimension_numbers = #tpu.dot_dimension_numbers<[1], [1], [0], [0], [0, 0, 1, 0], [], []>} : vector<16x32xf32>, vector<8x32xf32>, vector<16x8xf32> -> vector<16x8xf32>
    %cst_265 = arith.constant dense<0.000000e+00> : vector<16x8xf32>
    %539 = tpu.matmul %488, %536, %cst_265 {dimension_numbers = #tpu.dot_dimension_numbers<[1], [1], [0], [0], [0, 0, 1, 0], [], []>} : vector<16x32xf32>, vector<8x32xf32>, vector<16x8xf32> -> vector<16x8xf32>
    %cst_266 = arith.constant dense<0.000000e+00> : vector<16x16xf32>
    %540 = tpu.matmul %538, %537, %cst_266 {dimension_numbers = #tpu.dot_dimension_numbers<[1], [1], [0], [0], [0, 0, 1, 0], [], []>} : vector<16x8xf32>, vector<16x8xf32>, vector<16x16xf32> -> vector<16x16xf32>
    %cst_267 = arith.constant 0.176776692 : f32
    %541 = vector.broadcast %cst_267 : f32 to vector<16x16xf32>
    %542 = arith.mulf %540, %541 : vector<16x16xf32>
    %543 = arith.addf %542, %10 : vector<16x16xf32>
    %cst_268 = arith.constant dense<0xFF800000> : vector<16xf32>
    %544 = vector.multi_reduction <maximumf>, %543, %cst_268 [1] : vector<16x16xf32> to vector<16xf32>
    %545 = vector.shape_cast %544 : vector<16xf32> to vector<16x1xf32>
    %546 = vector.broadcast %545 : vector<16x1xf32> to vector<16x16xf32>
    %547 = arith.subf %543, %546 : vector<16x16xf32>
    %548 = math.exp %547 : vector<16x16xf32>
    %cst_269 = arith.constant dense<0.000000e+00> : vector<16xf32>
    %549 = vector.multi_reduction <add>, %548, %cst_269 [1] : vector<16x16xf32> to vector<16xf32>
    %550 = vector.shape_cast %549 : vector<16xf32> to vector<16x1xf32>
    %551 = vector.broadcast %550 : vector<16x1xf32> to vector<16x16xf32>
    %552 = arith.divf %548, %551 : vector<16x16xf32>
    %cst_270 = arith.constant dense<0.000000e+00> : vector<16x8xf32>
    %553 = tpu.matmul %552, %539, %cst_270 {dimension_numbers = #tpu.dot_dimension_numbers<[1], [0], [0], [1], [0, 0, 1, 1], [], []>} : vector<16x16xf32>, vector<16x8xf32>, vector<16x8xf32> -> vector<16x8xf32>
    %c784 = arith.constant 784 : index
    %c0_271 = arith.constant 0 : index
    %554 = vector.load %arg1[%c784, %c0_271] : memref<904x128xf32, #tpu.memory_space<vmem>>, vector<8x32xf32>
    %cst_272 = arith.constant dense<0.000000e+00> : vector<16x32xf32>
    %555 = tpu.matmul %553, %554, %cst_272 {dimension_numbers = #tpu.dot_dimension_numbers<[1], [0], [0], [1], [0, 0, 1, 1], [], []>} : vector<16x8xf32>, vector<8x32xf32>, vector<16x32xf32> -> vector<16x32xf32>
    %556 = arith.addf %533, %555 : vector<16x32xf32>
    %c744 = arith.constant 744 : index
    %c0_273 = arith.constant 0 : index
    %557 = vector.load %arg1[%c744, %c0_273] : memref<904x128xf32, #tpu.memory_space<vmem>>, vector<8x32xf32>
    %c752 = arith.constant 752 : index
    %c0_274 = arith.constant 0 : index
    %558 = vector.load %arg1[%c752, %c0_274] : memref<904x128xf32, #tpu.memory_space<vmem>>, vector<8x32xf32>
    %c760 = arith.constant 760 : index
    %c0_275 = arith.constant 0 : index
    %559 = vector.load %arg1[%c760, %c0_275] : memref<904x128xf32, #tpu.memory_space<vmem>>, vector<8x32xf32>
    %cst_276 = arith.constant dense<0.000000e+00> : vector<16x8xf32>
    %560 = tpu.matmul %488, %557, %cst_276 {dimension_numbers = #tpu.dot_dimension_numbers<[1], [1], [0], [0], [0, 0, 1, 0], [], []>} : vector<16x32xf32>, vector<8x32xf32>, vector<16x8xf32> -> vector<16x8xf32>
    %cst_277 = arith.constant dense<0.000000e+00> : vector<16x8xf32>
    %561 = tpu.matmul %488, %558, %cst_277 {dimension_numbers = #tpu.dot_dimension_numbers<[1], [1], [0], [0], [0, 0, 1, 0], [], []>} : vector<16x32xf32>, vector<8x32xf32>, vector<16x8xf32> -> vector<16x8xf32>
    %cst_278 = arith.constant dense<0.000000e+00> : vector<16x8xf32>
    %562 = tpu.matmul %488, %559, %cst_278 {dimension_numbers = #tpu.dot_dimension_numbers<[1], [1], [0], [0], [0, 0, 1, 0], [], []>} : vector<16x32xf32>, vector<8x32xf32>, vector<16x8xf32> -> vector<16x8xf32>
    %cst_279 = arith.constant dense<0.000000e+00> : vector<16x16xf32>
    %563 = tpu.matmul %561, %560, %cst_279 {dimension_numbers = #tpu.dot_dimension_numbers<[1], [1], [0], [0], [0, 0, 1, 0], [], []>} : vector<16x8xf32>, vector<16x8xf32>, vector<16x16xf32> -> vector<16x16xf32>
    %cst_280 = arith.constant 0.176776692 : f32
    %564 = vector.broadcast %cst_280 : f32 to vector<16x16xf32>
    %565 = arith.mulf %563, %564 : vector<16x16xf32>
    %566 = arith.addf %565, %10 : vector<16x16xf32>
    %cst_281 = arith.constant dense<0xFF800000> : vector<16xf32>
    %567 = vector.multi_reduction <maximumf>, %566, %cst_281 [1] : vector<16x16xf32> to vector<16xf32>
    %568 = vector.shape_cast %567 : vector<16xf32> to vector<16x1xf32>
    %569 = vector.broadcast %568 : vector<16x1xf32> to vector<16x16xf32>
    %570 = arith.subf %566, %569 : vector<16x16xf32>
    %571 = math.exp %570 : vector<16x16xf32>
    %cst_282 = arith.constant dense<0.000000e+00> : vector<16xf32>
    %572 = vector.multi_reduction <add>, %571, %cst_282 [1] : vector<16x16xf32> to vector<16xf32>
    %573 = vector.shape_cast %572 : vector<16xf32> to vector<16x1xf32>
    %574 = vector.broadcast %573 : vector<16x1xf32> to vector<16x16xf32>
    %575 = arith.divf %571, %574 : vector<16x16xf32>
    %cst_283 = arith.constant dense<0.000000e+00> : vector<16x8xf32>
    %576 = tpu.matmul %575, %562, %cst_283 {dimension_numbers = #tpu.dot_dimension_numbers<[1], [0], [0], [1], [0, 0, 1, 1], [], []>} : vector<16x16xf32>, vector<16x8xf32>, vector<16x8xf32> -> vector<16x8xf32>
    %c792 = arith.constant 792 : index
    %c0_284 = arith.constant 0 : index
    %577 = vector.load %arg1[%c792, %c0_284] : memref<904x128xf32, #tpu.memory_space<vmem>>, vector<8x32xf32>
    %cst_285 = arith.constant dense<0.000000e+00> : vector<16x32xf32>
    %578 = tpu.matmul %576, %577, %cst_285 {dimension_numbers = #tpu.dot_dimension_numbers<[1], [0], [0], [1], [0, 0, 1, 1], [], []>} : vector<16x8xf32>, vector<8x32xf32>, vector<16x32xf32> -> vector<16x32xf32>
    %579 = arith.addf %556, %578 : vector<16x32xf32>
    %580 = arith.addf %466, %579 : vector<16x32xf32>
    %c666 = arith.constant 666 : index
    %c0_286 = arith.constant 0 : index
    %581 = vector.load %arg1[%c666, %c0_286] : memref<904x128xf32, #tpu.memory_space<vmem>>, vector<1x32xf32>
    %582 = vector.broadcast %581 : vector<1x32xf32> to vector<16x32xf32>
    %583 = arith.addf %580, %582 : vector<16x32xf32>
    %c667 = arith.constant 667 : index
    %c0_287 = arith.constant 0 : index
    %584 = vector.load %arg1[%c667, %c0_287] : memref<904x128xf32, #tpu.memory_space<vmem>>, vector<1x32xf32>
    %c668 = arith.constant 668 : index
    %c0_288 = arith.constant 0 : index
    %585 = vector.load %arg1[%c668, %c0_288] : memref<904x128xf32, #tpu.memory_space<vmem>>, vector<1x32xf32>
    %cst_289 = arith.constant dense<0.000000e+00> : vector<16xf32>
    %586 = vector.multi_reduction <add>, %583, %cst_289 [1] : vector<16x32xf32> to vector<16xf32>
    %587 = vector.shape_cast %586 : vector<16xf32> to vector<16x1xf32>
    %cst_290 = arith.constant 3.200000e+01 : f32
    %588 = vector.broadcast %cst_290 : f32 to vector<16x1xf32>
    %589 = arith.divf %587, %588 : vector<16x1xf32>
    %590 = vector.broadcast %589 : vector<16x1xf32> to vector<16x32xf32>
    %591 = arith.subf %583, %590 : vector<16x32xf32>
    %592 = arith.mulf %591, %591 : vector<16x32xf32>
    %cst_291 = arith.constant dense<0.000000e+00> : vector<16xf32>
    %593 = vector.multi_reduction <add>, %592, %cst_291 [1] : vector<16x32xf32> to vector<16xf32>
    %594 = vector.shape_cast %593 : vector<16xf32> to vector<16x1xf32>
    %cst_292 = arith.constant 3.200000e+01 : f32
    %595 = vector.broadcast %cst_292 : f32 to vector<16x1xf32>
    %596 = arith.divf %594, %595 : vector<16x1xf32>
    %cst_293 = arith.constant 9.99999974E-6 : f32
    %597 = vector.broadcast %cst_293 : f32 to vector<16x1xf32>
    %598 = arith.addf %596, %597 : vector<16x1xf32>
    %599 = math.rsqrt %598 : vector<16x1xf32>
    %600 = vector.broadcast %599 : vector<16x1xf32> to vector<16x32xf32>
    %601 = arith.mulf %591, %600 : vector<16x32xf32>
    %602 = vector.broadcast %584 : vector<1x32xf32> to vector<16x32xf32>
    %603 = arith.mulf %601, %602 : vector<16x32xf32>
    %604 = vector.broadcast %585 : vector<1x32xf32> to vector<16x32xf32>
    %605 = arith.addf %603, %604 : vector<16x32xf32>
    %c800 = arith.constant 800 : index
    %c0_294 = arith.constant 0 : index
    %606 = vector.load %arg1[%c800, %c0_294] : memref<904x128xf32, #tpu.memory_space<vmem>>, vector<32x128xf32>
    %cst_295 = arith.constant dense<0.000000e+00> : vector<16x128xf32>
    %607 = tpu.matmul %605, %606, %cst_295 {dimension_numbers = #tpu.dot_dimension_numbers<[1], [0], [0], [1], [0, 0, 1, 1], [], []>} : vector<16x32xf32>, vector<32x128xf32>, vector<16x128xf32> -> vector<16x128xf32>
    %c670 = arith.constant 670 : index
    %c0_296 = arith.constant 0 : index
    %608 = vector.load %arg1[%c670, %c0_296] : memref<904x128xf32, #tpu.memory_space<vmem>>, vector<1x128xf32>
    %609 = vector.broadcast %608 : vector<1x128xf32> to vector<16x128xf32>
    %610 = arith.addf %607, %609 : vector<16x128xf32>
    %cst_297 = arith.constant 0.000000e+00 : f32
    %611 = vector.broadcast %cst_297 : f32 to vector<16x128xf32>
    %612 = arith.maximumf %610, %611 : vector<16x128xf32>
    %c832 = arith.constant 832 : index
    %c0_298 = arith.constant 0 : index
    %613 = vector.load %arg1[%c832, %c0_298] : memref<904x128xf32, #tpu.memory_space<vmem>>, vector<32x128xf32>
    %cst_299 = arith.constant dense<0.000000e+00> : vector<16x32xf32>
    %614 = tpu.matmul %612, %613, %cst_299 {dimension_numbers = #tpu.dot_dimension_numbers<[1], [1], [0], [0], [0, 0, 1, 0], [], []>} : vector<16x128xf32>, vector<32x128xf32>, vector<16x32xf32> -> vector<16x32xf32>
    %615 = arith.addf %583, %614 : vector<16x32xf32>
    %c669 = arith.constant 669 : index
    %c0_300 = arith.constant 0 : index
    %616 = vector.load %arg1[%c669, %c0_300] : memref<904x128xf32, #tpu.memory_space<vmem>>, vector<1x32xf32>
    %617 = vector.broadcast %616 : vector<1x32xf32> to vector<16x32xf32>
    %618 = arith.addf %615, %617 : vector<16x32xf32>
    %c864 = arith.constant 864 : index
    %c0_301 = arith.constant 0 : index
    %619 = vector.load %arg1[%c864, %c0_301] : memref<904x128xf32, #tpu.memory_space<vmem>>, vector<1x32xf32>
    %c865 = arith.constant 865 : index
    %c0_302 = arith.constant 0 : index
    %620 = vector.load %arg1[%c865, %c0_302] : memref<904x128xf32, #tpu.memory_space<vmem>>, vector<1x32xf32>
    %cst_303 = arith.constant dense<0.000000e+00> : vector<16xf32>
    %621 = vector.multi_reduction <add>, %618, %cst_303 [1] : vector<16x32xf32> to vector<16xf32>
    %622 = vector.shape_cast %621 : vector<16xf32> to vector<16x1xf32>
    %cst_304 = arith.constant 3.200000e+01 : f32
    %623 = vector.broadcast %cst_304 : f32 to vector<16x1xf32>
    %624 = arith.divf %622, %623 : vector<16x1xf32>
    %625 = vector.broadcast %624 : vector<16x1xf32> to vector<16x32xf32>
    %626 = arith.subf %618, %625 : vector<16x32xf32>
    %627 = arith.mulf %626, %626 : vector<16x32xf32>
    %cst_305 = arith.constant dense<0.000000e+00> : vector<16xf32>
    %628 = vector.multi_reduction <add>, %627, %cst_305 [1] : vector<16x32xf32> to vector<16xf32>
    %629 = vector.shape_cast %628 : vector<16xf32> to vector<16x1xf32>
    %cst_306 = arith.constant 3.200000e+01 : f32
    %630 = vector.broadcast %cst_306 : f32 to vector<16x1xf32>
    %631 = arith.divf %629, %630 : vector<16x1xf32>
    %cst_307 = arith.constant 9.99999974E-6 : f32
    %632 = vector.broadcast %cst_307 : f32 to vector<16x1xf32>
    %633 = arith.addf %631, %632 : vector<16x1xf32>
    %634 = math.rsqrt %633 : vector<16x1xf32>
    %635 = vector.broadcast %634 : vector<16x1xf32> to vector<16x32xf32>
    %636 = arith.mulf %626, %635 : vector<16x32xf32>
    %637 = vector.broadcast %619 : vector<1x32xf32> to vector<16x32xf32>
    %638 = arith.mulf %636, %637 : vector<16x32xf32>
    %639 = vector.broadcast %620 : vector<1x32xf32> to vector<16x32xf32>
    %640 = arith.addf %638, %639 : vector<16x32xf32>
    %c872 = arith.constant 872 : index
    %c0_308 = arith.constant 0 : index
    %641 = vector.load %arg1[%c872, %c0_308] : memref<904x128xf32, #tpu.memory_space<vmem>>, vector<32x128xf32>
    %cst_309 = arith.constant dense<0.000000e+00> : vector<16x128xf32>
    %642 = tpu.matmul %640, %641, %cst_309 {dimension_numbers = #tpu.dot_dimension_numbers<[1], [0], [0], [1], [0, 0, 1, 1], [], []>} : vector<16x32xf32>, vector<32x128xf32>, vector<16x128xf32> -> vector<16x128xf32>
    %c866 = arith.constant 866 : index
    %c0_310 = arith.constant 0 : index
    %643 = vector.load %arg1[%c866, %c0_310] : memref<904x128xf32, #tpu.memory_space<vmem>>, vector<1x128xf32>
    %644 = vector.broadcast %643 : vector<1x128xf32> to vector<16x128xf32>
    %645 = arith.addf %642, %644 : vector<16x128xf32>
    %c0_311 = arith.constant 0 : index
    %c0_312 = arith.constant 0 : index
    %646 = vector.load %arg2[%c0_311, %c0_312] : memref<16x128xf32, #tpu.memory_space<vmem>>, vector<16x128xf32>
    tpu.vector_store %arg2[%c0_311, %c0_312], %645 {strides = array<i32>} : memref<16x128xf32, #tpu.memory_space<vmem>>, vector<16x128xf32>,
    return
  }
}

</mosaic_0001>

<llo_original>
// kernel: forward.1
$region0: #{forward.1}
  #allocation0 [shape = 'u32[]', space=smem, size = 0x4, offset = 0x4, fixed_abs, tag = 'smem constant byte address 0x4 - core index']
  #allocation1 [shape = 'u32[144,128]{1,0:T(1,128)}', space=vmem, size = 0x12000, scoped, tag = 'internal scratch']
  %s0 = inlined_call_operand.vmem [shape: s32[16,1], index: 0, kind: input, shape index: {}]
  %s1 = inlined_call_operand.hbm [shape: f32[904,128], index: 1, kind: input, shape index: {}]
  %s2 = inlined_call_operand.vmem [shape: f32[16,128], index: 2, kind: output, shape index: {}]
  %s3 = sld [smem:[#allocation0]]
  $region22: #{forward.1} parent=0
    _
  %s5 = ssub.s32 1, %s3
  %s6 = scalar_select 0, %s5, %s3
  $region1: #{forward.1} parent=0
    #allocation2 [shape = 'u8[462848]{0}', space=vmem, size = 0x71000, scoped, tag = 'input window, operand 1, single buffered']
    #allocation3 [shape = 's32[1]{0}', space=sflag, size = 0x4, scoped, tag = 'scoped memory for forward.1']
    %7 = vsyncpa [#allocation3], 0
    // Predicated region
    $region2: #{forward.1} parent=1 // pred_check
      _
    $region3: #{forward.1} parent=1 // pred_check_branch
      %9 = sbr.rel (0) target = $region5
    $region4: #{forward.1} parent=1 // pred_region
      _
    $region5: #{forward.1} parent=1 // pred_fallthru
      _
    // Predicated region
    $region6: #{forward.1} parent=1 // pred_check
      _
    $region7: #{forward.1} parent=1 // pred_check_branch
      %11 = sbr.rel (0) target = $region9
    $region8: #{forward.1} parent=1 // pred_region
      %s13 = ssub.s32 14464, 14464
      %14 = vsyncadd [#allocation3], %s13
      %s15 = sshll.u32 [#allocation2], 4
      %s16 = int_to_ptr.vmem [resolvable:$true] %s15
      %21 = dma.hbm_to_vmem [thread:$0]  %s1, 14464, %s16, [#allocation3], 128, 128, 8
    $region9: #{forward.1} parent=1 // pred_fallthru
      _
    // Predicated region
    $region10: #{forward.1} parent=1 // pred_check
      _
    $region11: #{forward.1} parent=1 // pred_check_branch
      %23 = sbr.rel (0) target = $region13
    $region12: #{forward.1} parent=1 // pred_region
      %24 = dma.done [#allocation3], 14464
    $region13: #{forward.1} parent=1 // pred_fallthru
      _
    %v25 = vld [vmem:[%s0] sm:$0xff]
    %v26 = vld [vmem:[%s0 + $0x8] sm:$0xff]
    %v27 = vlaneseq
    %v28 = vand.u32 %v27, 127
    %29 = vset.pattern.permute.xlu0 0
    %30 = vperm.xlu0 %29, %v25
    %v31 = vpop.permute.xlu0 %30
    %32 = vset.pattern.permute.xlu0 0
    %33 = vperm.xlu0 %32, %v26
    %v34 = vpop.permute.xlu0 %33
    %vm35 = vcmp.eq.s32.totalorder %v28, %v31
    %vm36 = vcmp.eq.s32.totalorder %v28, %v34
    %v37 = vsel %vm35, 1, 0
    %v38 = vsel %vm36, 1, 0
    %v39 = vcvt.s32.f32 %v37
    %v40 = vcvt.s32.f32 %v38
    %v41 = vld [vmem:[#allocation2] sm:$0xff]
    %v42 = vld [vmem:[#allocation2 + $0x8] sm:$0xff]
    %v43 = vld [vmem:[#allocation2 + $0x10] sm:$0xff]
    %v44 = vld [vmem:[#allocation2 + $0x18] sm:$0xff]
    %v45 = vld [vmem:[#allocation2 + $0x20] sm:$0xff]
    %v46 = vld [vmem:[#allocation2 + $0x28] sm:$0xff]
    %47 = vmatprep.subr.mxu0 0.0
    %48 = vmatpush1.xpose.msra.mxu0 %v41
    %49 = vmatprep.subr.mxu0 0.0
    %50 = vmatpush1.xpose.msra.mxu0 %v42
    %51 = vmatprep.subr.mxu0 0.0
    %52 = vmatpush1.xpose.msra.mxu0 %v43
    %53 = vmatprep.subr.mxu0 0.0
    %54 = vmatpush1.xpose.msra.mxu0 %v44
    %55 = vmatprep.subr.mxu0 0.0
    %56 = vmatpush1.xpose.msra.mxu0 0.0
    %57 = vmatprep.subr.mxu0 0.0
    %58 = vmatpush1.xpose.msra.mxu0 0.0
    %59 = vmatprep.subr.mxu0 0.0
    %60 = vmatpush1.xpose.msra.mxu0 0.0
    %61 = vmatprep.subr.mxu0 0.0
    %62 = vmatpush1.xpose.msra.mxu0 0.0
    %63 = vmatprep.subr.mxu0 0.0
    %64 = vmatpush1.xpose.msra.mxu0 0.0
    %65 = vmatprep.subr.mxu0 0.0
    %66 = vmatpush1.xpose.msra.mxu0 0.0
    %67 = vmatprep.subr.mxu0 0.0
    %68 = vmatpush1.xpose.msra.mxu0 0.0
    %69 = vmatprep.subr.mxu0 0.0
    %70 = vmatpush1.xpose.msra.mxu0 0.0
    %71 = vmatprep.subr.mxu0 0.0
    %72 = vmatpush1.xpose.msra.mxu0 0.0
    %73 = vmatprep.subr.mxu0 0.0
    %74 = vmatpush1.xpose.msra.mxu0 0.0
    %75 = vmatprep.subr.mxu0 0.0
    %76 = vmatpush1.xpose.msra.mxu0 0.0
    %77 = vmatprep.subr.mxu0 0.0
    %78 = vmatpush1.xpose.msra.mxu0 0.0
    %79 = vmatprep.subr.mxu0 0.0
    %80 = vmatpush1.xpose.msra.mxu0 0.0
    %81 = vmatprep.subr.mxu0 0.0
    %82 = vmatpush1.xpose.msra.mxu0 0.0
    %83 = vmatprep.subr.mxu0 0.0
    %84 = vmatpush1.xpose.msra.mxu0 0.0
    %85 = vmatprep.subr.mxu0 0.0
    %86 = vmatpush1.xpose.msra.mxu0 0.0
    %87 = vmatprep.subr.mxu0 0.0
    %88 = vmatpush1.xpose.msra.mxu0 0.0
    %89 = vmatprep.subr.mxu0 0.0
    %90 = vmatpush1.xpose.msra.mxu0 0.0
    %91 = vmatprep.subr.mxu0 0.0
    %92 = vmatpush1.xpose.msra.mxu0 0.0
    %93 = vmatprep.subr.mxu0 0.0
    %94 = vmatpush1.xpose.msra.mxu0 0.0
    %95 = vmatprep.subr.mxu0 0.0
    %96 = vmatpush1.xpose.msra.mxu0 0.0
    %97 = vmatprep.subr.mxu0 0.0
    %98 = vmatpush1.xpose.msra.mxu0 0.0
    %99 = vmatprep.subr.mxu0 0.0
    %100 = vmatpush1.xpose.msra.mxu0 0.0
    %101 = vmatprep.subr.mxu0 0.0
    %102 = vmatpush1.xpose.msra.mxu0 0.0
    %103 = vmatprep.subr.mxu0 0.0
    %104 = vmatpush1.xpose.msra.mxu0 0.0
    %105 = vmatprep.subr.mxu0 0.0
    %106 = vmatpush1.xpose.msra.mxu0 0.0
    %107 = vmatprep.subr.mxu0 0.0
    %108 = vmatpush1.xpose.msra.mxu0 0.0
    %109 = vmatprep.subr.mxu0 0.0
    %110 = vmatpush1.xpose.msra.mxu0 0.0
    %111 = vmatprep.mubr.f32.mxu0 0.0
    %112 = vmatmul.mubr.f32.gmra.mrb[0].mxu0 %v39
    %v113 = vpop.f32.mrb[0].mxu0
    %v114 = vadd.f32 %v45, %v113
    %v115 = vpop.f32.mrb[0].mxu0
    %116 = vmatprep.mubr.f32.mxu0 0.0
    %117 = vmatmul.mubr.f32.gmra.mrb[0].mxu0 %v40
    %v118 = vpop.f32.mrb[0].mxu0
    %v119 = vadd.f32 %v46, %v118
    %v120 = vpop.f32.mrb[0].mxu0
    %121 = vdwg.mxu0
    %v122 = vld [vmem:[#allocation2 + $0x30] sm:$0xff]
    %v123 = vld [vmem:[#allocation2 + $0x38] sm:$0xff]
    %v124 = vld [vmem:[#allocation2 + $0x40] sm:$0x1]
    %v125 = vld [vmem:[#allocation2 + $0x41] sm:$0x1]
    %vm126 = vcmask 261120
    %v127 = vsel %vm126, %v114, 0.0
    %128 = vadd.xlane.f32.xlu0 %v127
    %v129 = vpop.xlane.xlu0 %128
    %v130 = vsel %vm126, %v119, 0.0
    %131 = vadd.xlane.f32.xlu0 %v130
    %v132 = vpop.xlane.xlu0 %131
    %v133 = vrcp.pop 32.0
    %v134 = vmul.f32 %v129, %v133
    %v135 = vmul.f32 %v132, %v133
    %v136 = vsub.f32 %v114, %v134
    %v137 = vsub.f32 %v119, %v135
    %v138 = vmul.f32 %v136, %v136
    %v139 = vmul.f32 %v137, %v137
    %v140 = vsel %vm126, %v138, 0.0
    %141 = vadd.xlane.f32.xlu0 %v140
    %v142 = vpop.xlane.xlu0 %141
    %v143 = vsel %vm126, %v139, 0.0
    %144 = vadd.xlane.f32.xlu0 %v143
    %v145 = vpop.xlane.xlu0 %144
    %v146 = vmul.f32 %v142, %v133
    %v147 = vmul.f32 %v145, %v133
    %v148 = vadd.f32 %v146, 1e-05
    %v149 = vadd.f32 %v147, 1e-05
    %v150 = vrsqrt.pop %v148
    %v151 = vrsqrt.pop %v149
    %v152 = vmul.f32 %v136, %v150
    %v153 = vmul.f32 %v137, %v151
    %v154 = vlaneseq
    %v155 = vshrl.u32 %v154, 7
    %v156 = vsub.s32 0, %v155
    %v157 = vrot.slane %v124, %v156
    %v158 = vmul.f32 %v152, %v157
    %v159 = vmul.f32 %v153, %v157
    %v160 = vlaneseq
    %v161 = vshrl.u32 %v160, 7
    %v162 = vsub.s32 0, %v161
    %v163 = vrot.slane %v125, %v162
    %v164 = vadd.f32 %v158, %v163
    %v165 = vadd.f32 %v159, %v163
    %v166 = vld [vmem:[#allocation2 + $0x48] sm:$0xff]
    %v167 = vld [vmem:[#allocation2 + $0x50] sm:$0xff]
    %v168 = vld [vmem:[#allocation2 + $0x58] sm:$0xff]
    %v170 = vsel %vm126, %v164, 0
    %v173 = vsel %vm126, %v165, 0
    %v176 = vsel %vm126, %v166, 0
    %178 = vmatprep.subr.mxu0 0.0
    %179 = vmatpush1.xpose.msra.mxu0 %v176
    %180 = vmatprep.subr.mxu0 0.0
    %181 = vmatpush1.xpose.msra.mxu0 0.0
    %182 = vmatprep.subr.mxu0 0.0
    %183 = vmatpush1.xpose.msra.mxu0 0.0
    %184 = vmatprep.subr.mxu0 0.0
    %185 = vmatpush1.xpose.msra.mxu0 0.0
    %186 = vmatprep.subr.mxu0 0.0
    %187 = vmatpush1.xpose.msra.mxu0 0.0
    %188 = vmatprep.subr.mxu0 0.0
    %189 = vmatpush1.xpose.msra.mxu0 0.0
    %190 = vmatprep.subr.mxu0 0.0
    %191 = vmatpush1.xpose.msra.mxu0 0.0
    %192 = vmatprep.subr.mxu0 0.0
    %193 = vmatpush1.xpose.msra.mxu0 0.0
    %194 = vmatprep.subr.mxu0 0.0
    %195 = vmatpush1.xpose.msra.mxu0 0.0
    %196 = vmatprep.subr.mxu0 0.0
    %197 = vmatpush1.xpose.msra.mxu0 0.0
    %198 = vmatprep.subr.mxu0 0.0
    %199 = vmatpush1.xpose.msra.mxu0 0.0
    %200 = vmatprep.subr.mxu0 0.0
    %201 = vmatpush1.xpose.msra.mxu0 0.0
    %202 = vmatprep.subr.mxu0 0.0
    %203 = vmatpush1.xpose.msra.mxu0 0.0
    %204 = vmatprep.subr.mxu0 0.0
    %205 = vmatpush1.xpose.msra.mxu0 0.0
    %206 = vmatprep.subr.mxu0 0.0
    %207 = vmatpush1.xpose.msra.mxu0 0.0
    %208 = vmatprep.subr.mxu0 0.0
    %209 = vmatpush1.xpose.msra.mxu0 0.0
    %210 = vmatprep.subr.mxu0 0.0
    %211 = vmatpush1.xpose.msra.mxu0 0.0
    %212 = vmatprep.subr.mxu0 0.0
    %213 = vmatpush1.xpose.msra.mxu0 0.0
    %214 = vmatprep.subr.mxu0 0.0
    %215 = vmatpush1.xpose.msra.mxu0 0.0
    %216 = vmatprep.subr.mxu0 0.0
    %217 = vmatpush1.xpose.msra.mxu0 0.0
    %218 = vmatprep.subr.mxu0 0.0
    %219 = vmatpush1.xpose.msra.mxu0 0.0
    %220 = vmatprep.subr.mxu0 0.0
    %221 = vmatpush1.xpose.msra.mxu0 0.0
    %222 = vmatprep.subr.mxu0 0.0
    %223 = vmatpush1.xpose.msra.mxu0 0.0
    %224 = vmatprep.subr.mxu0 0.0
    %225 = vmatpush1.xpose.msra.mxu0 0.0
    %226 = vmatprep.subr.mxu0 0.0
    %227 = vmatpush1.xpose.msra.mxu0 0.0
    %228 = vmatprep.subr.mxu0 0.0
    %229 = vmatpush1.xpose.msra.mxu0 0.0
    %230 = vmatprep.subr.mxu0 0.0
    %231 = vmatpush1.xpose.msra.mxu0 0.0
    %232 = vmatprep.subr.mxu0 0.0
    %233 = vmatpush1.xpose.msra.mxu0 0.0
    %234 = vmatprep.subr.mxu0 0.0
    %235 = vmatpush1.xpose.msra.mxu0 0.0
    %236 = vmatprep.subr.mxu0 0.0
    %237 = vmatpush1.xpose.msra.mxu0 0.0
    %238 = vmatprep.subr.mxu0 0.0
    %239 = vmatpush1.xpose.msra.mxu0 0.0
    %240 = vmatprep.subr.mxu0 0.0
    %241 = vmatpush1.xpose.msra.mxu0 0.0
    %242 = vmatprep.mubr.f32.mxu0 0.0
    %243 = vmatmul.mubr.f32.gmra.mrb[0].mxu0 %v170
    %v244 = vpop.f32.mrb[0].mxu0
    %v245 = vadd.f32 0.0, %v244
    %v246 = vpop.f32.mrb[0].mxu0
    %247 = vmatprep.mubr.f32.mxu0 0.0
    %248 = vmatmul.mubr.f32.gmra.mrb[0].mxu0 %v173
    %v249 = vpop.f32.mrb[0].mxu0
    %v250 = vadd.f32 0.0, %v249
    %v251 = vpop.f32.mrb[0].mxu0
    %252 = vdwg.mxu0
    %v254 = vsel %vm126, %v167, 0
    %256 = vmatprep.subr.mxu0 0.0
    %257 = vmatpush1.xpose.msra.mxu0 %v254
    %258 = vmatprep.subr.mxu0 0.0
    %259 = vmatpush1.xpose.msra.mxu0 0.0
    %260 = vmatprep.subr.mxu0 0.0
    %261 = vmatpush1.xpose.msra.mxu0 0.0
    %262 = vmatprep.subr.mxu0 0.0
    %263 = vmatpush1.xpose.msra.mxu0 0.0
    %264 = vmatprep.subr.mxu0 0.0
    %265 = vmatpush1.xpose.msra.mxu0 0.0
    %266 = vmatprep.subr.mxu0 0.0
    %267 = vmatpush1.xpose.msra.mxu0 0.0
    %268 = vmatprep.subr.mxu0 0.0
    %269 = vmatpush1.xpose.msra.mxu0 0.0
    %270 = vmatprep.subr.mxu0 0.0
    %271 = vmatpush1.xpose.msra.mxu0 0.0
    %272 = vmatprep.subr.mxu0 0.0
    %273 = vmatpush1.xpose.msra.mxu0 0.0
    %274 = vmatprep.subr.mxu0 0.0
    %275 = vmatpush1.xpose.msra.mxu0 0.0
    %276 = vmatprep.subr.mxu0 0.0
    %277 = vmatpush1.xpose.msra.mxu0 0.0
    %278 = vmatprep.subr.mxu0 0.0
    %279 = vmatpush1.xpose.msra.mxu0 0.0
    %280 = vmatprep.subr.mxu0 0.0
    %281 = vmatpush1.xpose.msra.mxu0 0.0
    %282 = vmatprep.subr.mxu0 0.0
    %283 = vmatpush1.xpose.msra.mxu0 0.0
    %284 = vmatprep.subr.mxu0 0.0
    %285 = vmatpush1.xpose.msra.mxu0 0.0
    %286 = vmatprep.subr.mxu0 0.0
    %287 = vmatpush1.xpose.msra.mxu0 0.0
    %288 = vmatprep.subr.mxu0 0.0
    %289 = vmatpush1.xpose.msra.mxu0 0.0
    %290 = vmatprep.subr.mxu0 0.0
    %291 = vmatpush1.xpose.msra.mxu0 0.0
    %292 = vmatprep.subr.mxu0 0.0
    %293 = vmatpush1.xpose.msra.mxu0 0.0
    %294 = vmatprep.subr.mxu0 0.0
    %295 = vmatpush1.xpose.msra.mxu0 0.0
    %296 = vmatprep.subr.mxu0 0.0
    %297 = vmatpush1.xpose.msra.mxu0 0.0
    %298 = vmatprep.subr.mxu0 0.0
    %299 = vmatpush1.xpose.msra.mxu0 0.0
    %300 = vmatprep.subr.mxu0 0.0
    %301 = vmatpush1.xpose.msra.mxu0 0.0
    %302 = vmatprep.subr.mxu0 0.0
    %303 = vmatpush1.xpose.msra.mxu0 0.0
    %304 = vmatprep.subr.mxu0 0.0
    %305 = vmatpush1.xpose.msra.mxu0 0.0
    %306 = vmatprep.subr.mxu0 0.0
    %307 = vmatpush1.xpose.msra.mxu0 0.0
    %308 = vmatprep.subr.mxu0 0.0
    %309 = vmatpush1.xpose.msra.mxu0 0.0
    %310 = vmatprep.subr.mxu0 0.0
    %311 = vmatpush1.xpose.msra.mxu0 0.0
    %312 = vmatprep.subr.mxu0 0.0
    %313 = vmatpush1.xpose.msra.mxu0 0.0
    %314 = vmatprep.subr.mxu0 0.0
    %315 = vmatpush1.xpose.msra.mxu0 0.0
    %316 = vmatprep.subr.mxu0 0.0
    %317 = vmatpush1.xpose.msra.mxu0 0.0
    %318 = vmatprep.subr.mxu0 0.0
    %319 = vmatpush1.xpose.msra.mxu0 0.0
    %320 = vmatprep.mubr.f32.mxu0 0.0
    %321 = vmatmul.mubr.f32.gmra.mrb[0].mxu0 %v170
    %v322 = vpop.f32.mrb[0].mxu0
    %v323 = vadd.f32 0.0, %v322
    %v324 = vpop.f32.mrb[0].mxu0
    %325 = vmatprep.mubr.f32.mxu0 0.0
    %326 = vmatmul.mubr.f32.gmra.mrb[0].mxu0 %v173
    %v327 = vpop.f32.mrb[0].mxu0
    %v328 = vadd.f32 0.0, %v327
    %v329 = vpop.f32.mrb[0].mxu0
    %330 = vdwg.mxu0
    %v332 = vsel %vm126, %v168, 0
    %334 = vmatprep.subr.mxu0 0.0
    %335 = vmatpush1.xpose.msra.mxu0 %v332
    %336 = vmatprep.subr.mxu0 0.0
    %337 = vmatpush1.xpose.msra.mxu0 0.0
    %338 = vmatprep.subr.mxu0 0.0
    %339 = vmatpush1.xpose.msra.mxu0 0.0
    %340 = vmatprep.subr.mxu0 0.0
    %341 = vmatpush1.xpose.msra.mxu0 0.0
    %342 = vmatprep.subr.mxu0 0.0
    %343 = vmatpush1.xpose.msra.mxu0 0.0
    %344 = vmatprep.subr.mxu0 0.0
    %345 = vmatpush1.xpose.msra.mxu0 0.0
    %346 = vmatprep.subr.mxu0 0.0
    %347 = vmatpush1.xpose.msra.mxu0 0.0
    %348 = vmatprep.subr.mxu0 0.0
    %349 = vmatpush1.xpose.msra.mxu0 0.0
    %350 = vmatprep.subr.mxu0 0.0
    %351 = vmatpush1.xpose.msra.mxu0 0.0
    %352 = vmatprep.subr.mxu0 0.0
    %353 = vmatpush1.xpose.msra.mxu0 0.0
    %354 = vmatprep.subr.mxu0 0.0
    %355 = vmatpush1.xpose.msra.mxu0 0.0
    %356 = vmatprep.subr.mxu0 0.0
    %357 = vmatpush1.xpose.msra.mxu0 0.0
    %358 = vmatprep.subr.mxu0 0.0
    %359 = vmatpush1.xpose.msra.mxu0 0.0
    %360 = vmatprep.subr.mxu0 0.0
    %361 = vmatpush1.xpose.msra.mxu0 0.0
    %362 = vmatprep.subr.mxu0 0.0
    %363 = vmatpush1.xpose.msra.mxu0 0.0
    %364 = vmatprep.subr.mxu0 0.0
    %365 = vmatpush1.xpose.msra.mxu0 0.0
    %366 = vmatprep.subr.mxu0 0.0
    %367 = vmatpush1.xpose.msra.mxu0 0.0
    %368 = vmatprep.subr.mxu0 0.0
    %369 = vmatpush1.xpose.msra.mxu0 0.0
    %370 = vmatprep.subr.mxu0 0.0
    %371 = vmatpush1.xpose.msra.mxu0 0.0
    %372 = vmatprep.subr.mxu0 0.0
    %373 = vmatpush1.xpose.msra.mxu0 0.0
    %374 = vmatprep.subr.mxu0 0.0
    %375 = vmatpush1.xpose.msra.mxu0 0.0
    %376 = vmatprep.subr.mxu0 0.0
    %377 = vmatpush1.xpose.msra.mxu0 0.0
    %378 = vmatprep.subr.mxu0 0.0
    %379 = vmatpush1.xpose.msra.mxu0 0.0
    %380 = vmatprep.subr.mxu0 0.0
    %381 = vmatpush1.xpose.msra.mxu0 0.0
    %382 = vmatprep.subr.mxu0 0.0
    %383 = vmatpush1.xpose.msra.mxu0 0.0
    %384 = vmatprep.subr.mxu0 0.0
    %385 = vmatpush1.xpose.msra.mxu0 0.0
    %386 = vmatprep.subr.mxu0 0.0
    %387 = vmatpush1.xpose.msra.mxu0 0.0
    %388 = vmatprep.subr.mxu0 0.0
    %389 = vmatpush1.xpose.msra.mxu0 0.0
    %390 = vmatprep.subr.mxu0 0.0
    %391 = vmatpush1.xpose.msra.mxu0 0.0
    %392 = vmatprep.subr.mxu0 0.0
    %393 = vmatpush1.xpose.msra.mxu0 0.0
    %394 = vmatprep.subr.mxu0 0.0
    %395 = vmatpush1.xpose.msra.mxu0 0.0
    %396 = vmatprep.subr.mxu0 0.0
    %397 = vmatpush1.xpose.msra.mxu0 0.0
    %398 = vmatprep.mubr.f32.mxu0 0.0
    %399 = vmatmul.mubr.f32.gmra.mrb[0].mxu0 %v170
    %v400 = vpop.f32.mrb[0].mxu0
    %v401 = vadd.f32 0.0, %v400
    %v402 = vpop.f32.mrb[0].mxu0
    %403 = vmatprep.mubr.f32.mxu0 0.0
    %404 = vmatmul.mubr.f32.gmra.mrb[0].mxu0 %v173
    %v405 = vpop.f32.mrb[0].mxu0
    %v406 = vadd.f32 0.0, %v405
    %v407 = vpop.f32.mrb[0].mxu0
    %408 = vdwg.mxu0
    %vm409 = vcmask 64512
    %v411 = vsel %vm409, %v323, 0
    %v414 = vsel %vm409, %v328, 0
    %v417 = vsel %vm409, %v245, 0
    %v420 = vsel %vm409, %v250, 0
    %422 = vmatprep.subr.mxu0 0.0
    %423 = vmatpush1.xpose.msra.mxu0 %v417
    %424 = vmatprep.subr.mxu0 0.0
    %425 = vmatpush1.xpose.msra.mxu0 %v420
    %426 = vmatprep.subr.mxu0 0.0
    %427 = vmatpush1.xpose.msra.mxu0 0.0
    %428 = vmatprep.subr.mxu0 0.0
    %429 = vmatpush1.xpose.msra.mxu0 0.0
    %430 = vmatprep.subr.mxu0 0.0
    %431 = vmatpush1.xpose.msra.mxu0 0.0
    %432 = vmatprep.subr.mxu0 0.0
    %433 = vmatpush1.xpose.msra.mxu0 0.0
    %434 = vmatprep.subr.mxu0 0.0
    %435 = vmatpush1.xpose.msra.mxu0 0.0
    %436 = vmatprep.subr.mxu0 0.0
    %437 = vmatpush1.xpose.msra.mxu0 0.0
    %438 = vmatprep.subr.mxu0 0.0
    %439 = vmatpush1.xpose.msra.mxu0 0.0
    %440 = vmatprep.subr.mxu0 0.0
    %441 = vmatpush1.xpose.msra.mxu0 0.0
    %442 = vmatprep.subr.mxu0 0.0
    %443 = vmatpush1.xpose.msra.mxu0 0.0
    %444 = vmatprep.subr.mxu0 0.0
    %445 = vmatpush1.xpose.msra.mxu0 0.0
    %446 = vmatprep.subr.mxu0 0.0
    %447 = vmatpush1.xpose.msra.mxu0 0.0
    %448 = vmatprep.subr.mxu0 0.0
    %449 = vmatpush1.xpose.msra.mxu0 0.0
    %450 = vmatprep.subr.mxu0 0.0
    %451 = vmatpush1.xpose.msra.mxu0 0.0
    %452 = vmatprep.subr.mxu0 0.0
    %453 = vmatpush1.xpose.msra.mxu0 0.0
    %454 = vmatprep.subr.mxu0 0.0
    %455 = vmatpush1.xpose.msra.mxu0 0.0
    %456 = vmatprep.subr.mxu0 0.0
    %457 = vmatpush1.xpose.msra.mxu0 0.0
    %458 = vmatprep.subr.mxu0 0.0
    %459 = vmatpush1.xpose.msra.mxu0 0.0
    %460 = vmatprep.subr.mxu0 0.0
    %461 = vmatpush1.xpose.msra.mxu0 0.0
    %462 = vmatprep.subr.mxu0 0.0
    %463 = vmatpush1.xpose.msra.mxu0 0.0
    %464 = vmatprep.subr.mxu0 0.0
    %465 = vmatpush1.xpose.msra.mxu0 0.0
    %466 = vmatprep.subr.mxu0 0.0
    %467 = vmatpush1.xpose.msra.mxu0 0.0
    %468 = vmatprep.subr.mxu0 0.0
    %469 = vmatpush1.xpose.msra.mxu0 0.0
    %470 = vmatprep.subr.mxu0 0.0
    %471 = vmatpush1.xpose.msra.mxu0 0.0
    %472 = vmatprep.subr.mxu0 0.0
    %473 = vmatpush1.xpose.msra.mxu0 0.0
    %474 = vmatprep.subr.mxu0 0.0
    %475 = vmatpush1.xpose.msra.mxu0 0.0
    %476 = vmatprep.subr.mxu0 0.0
    %477 = vmatpush1.xpose.msra.mxu0 0.0
    %478 = vmatprep.subr.mxu0 0.0
    %479 = vmatpush1.xpose.msra.mxu0 0.0
    %480 = vmatprep.subr.mxu0 0.0
    %481 = vmatpush1.xpose.msra.mxu0 0.0
    %482 = vmatprep.subr.mxu0 0.0
    %483 = vmatpush1.xpose.msra.mxu0 0.0
    %484 = vmatprep.subr.mxu0 0.0
    %485 = vmatpush1.xpose.msra.mxu0 0.0
    %486 = vmatprep.mubr.f32.mxu0 0.0
    %487 = vmatmul.mubr.f32.gmra.mrb[0].mxu0 %v411
    %v488 = vpop.f32.mrb[0].mxu0
    %v489 = vadd.f32 0.0, %v488
    %v490 = vpop.f32.mrb[0].mxu0
    %491 = vmatprep.mubr.f32.mxu0 0.0
    %492 = vmatmul.mubr.f32.gmra.mrb[0].mxu0 %v414
    %v493 = vpop.f32.mrb[0].mxu0
    %v494 = vadd.f32 0.0, %v493
    %v495 = vpop.f32.mrb[0].mxu0
    %496 = vdwg.mxu0
    %v497 = vmul.f32 %v489, 0.17677669
    %v498 = vmul.f32 %v494, 0.17677669
    %v499 = vadd.f32 %v497, %v122
    %v500 = vadd.f32 %v498, %v123
    %vm501 = vcmask 130048
    %v502 = vsel %vm501, %v499, -inf
    %503 = vmax.xlane.f32.xlu0 %v502
    %v504 = vpop.xlane.xlu0 %503
    %v505 = vsel %vm501, %v500, -inf
    %506 = vmax.xlane.f32.xlu0 %v505
    %v507 = vpop.xlane.xlu0 %506
    %v508 = vsub.f32 %v499, %v504
    %v509 = vsub.f32 %v500, %v507
    %v510 = vmul.f32 %v508, 1.442695
    %v511 = vpow.pop %v510
    %v512 = vmul.f32 %v509, 1.442695
    %v513 = vpow.pop %v512
    %v514 = vsel %vm501, %v511, 0.0
    %515 = vadd.xlane.f32.xlu0 %v514
    %v516 = vpop.xlane.xlu0 %515
    %v517 = vsel %vm501, %v513, 0.0
    %518 = vadd.xlane.f32.xlu0 %v517
    %v519 = vpop.xlane.xlu0 %518
    %v520 = vrcp.pop %v516
    %v521 = vmul.f32 %v511, %v520
    %v522 = vrcp.pop %v519
    %v523 = vmul.f32 %v513, %v522
    %v525 = vsel %vm501, %v521, 0
    %v528 = vsel %vm501, %v523, 0
    %530 = vmatprep.subr.mxu0 0.0
    %531 = vmatpush1.msra.mxu0 %v401
    %532 = vmatprep.subr.mxu0 0.0
    %533 = vmatpush1.msra.mxu0 %v406
    %534 = vmatprep.subr.mxu0 0.0
    %535 = vmatpush1.msra.mxu0 0.0
    %536 = vmatprep.subr.mxu0 0.0
    %537 = vmatpush1.msra.mxu0 0.0
    %538 = vmatprep.subr.mxu0 0.0
    %539 = vmatpush1.msra.mxu0 0.0
    %540 = vmatprep.subr.mxu0 0.0
    %541 = vmatpush1.msra.mxu0 0.0
    %542 = vmatprep.subr.mxu0 0.0
    %543 = vmatpush1.msra.mxu0 0.0
    %544 = vmatprep.subr.mxu0 0.0
    %545 = vmatpush1.msra.mxu0 0.0
    %546 = vmatprep.subr.mxu0 0.0
    %547 = vmatpush1.msra.mxu0 0.0
    %548 = vmatprep.subr.mxu0 0.0
    %549 = vmatpush1.msra.mxu0 0.0
    %550 = vmatprep.subr.mxu0 0.0
    %551 = vmatpush1.msra.mxu0 0.0
    %552 = vmatprep.subr.mxu0 0.0
    %553 = vmatpush1.msra.mxu0 0.0
    %554 = vmatprep.subr.mxu0 0.0
    %555 = vmatpush1.msra.mxu0 0.0
    %556 = vmatprep.subr.mxu0 0.0
    %557 = vmatpush1.msra.mxu0 0.0
    %558 = vmatprep.subr.mxu0 0.0
    %559 = vmatpush1.msra.mxu0 0.0
    %560 = vmatprep.subr.mxu0 0.0
    %561 = vmatpush1.msra.mxu0 0.0
    %562 = vmatprep.subr.mxu0 0.0
    %563 = vmatpush1.msra.mxu0 0.0
    %564 = vmatprep.subr.mxu0 0.0
    %565 = vmatpush1.msra.mxu0 0.0
    %566 = vmatprep.subr.mxu0 0.0
    %567 = vmatpush1.msra.mxu0 0.0
    %568 = vmatprep.subr.mxu0 0.0
    %569 = vmatpush1.msra.mxu0 0.0
    %570 = vmatprep.subr.mxu0 0.0
    %571 = vmatpush1.msra.mxu0 0.0
    %572 = vmatprep.subr.mxu0 0.0
    %573 = vmatpush1.msra.mxu0 0.0
    %574 = vmatprep.subr.mxu0 0.0
    %575 = vmatpush1.msra.mxu0 0.0
    %576 = vmatprep.subr.mxu0 0.0
    %577 = vmatpush1.msra.mxu0 0.0
    %578 = vmatprep.subr.mxu0 0.0
    %579 = vmatpush1.msra.mxu0 0.0
    %580 = vmatprep.subr.mxu0 0.0
    %581 = vmatpush1.msra.mxu0 0.0
    %582 = vmatprep.subr.mxu0 0.0
    %583 = vmatpush1.msra.mxu0 0.0
    %584 = vmatprep.subr.mxu0 0.0
    %585 = vmatpush1.msra.mxu0 0.0
    %586 = vmatprep.subr.mxu0 0.0
    %587 = vmatpush1.msra.mxu0 0.0
    %588 = vmatprep.subr.mxu0 0.0
    %589 = vmatpush1.msra.mxu0 0.0
    %590 = vmatprep.subr.mxu0 0.0
    %591 = vmatpush1.msra.mxu0 0.0
    %592 = vmatprep.subr.mxu0 0.0
    %593 = vmatpush1.msra.mxu0 0.0
    %594 = vmatprep.mubr.f32.mxu0 0.0
    %595 = vmatmul.mubr.f32.gmra.mrb[0].mxu0 %v525
    %v596 = vpop.f32.mrb[0].mxu0
    %v597 = vadd.f32 0.0, %v596
    %v598 = vpop.f32.mrb[0].mxu0
    %599 = vmatprep.mubr.f32.mxu0 0.0
    %600 = vmatmul.mubr.f32.gmra.mrb[0].mxu0 %v528
    %v601 = vpop.f32.mrb[0].mxu0
    %v602 = vadd.f32 0.0, %v601
    %v603 = vpop.f32.mrb[0].mxu0
    %604 = vdwg.mxu0
    %v605 = vld [vmem:[#allocation2 + $0xa8] sm:$0xff]
    %v606 = vld [vmem:[#allocation2 + $0x60] sm:$0xff]
    %v607 = vld [vmem:[#allocation2 + $0x68] sm:$0xff]
    %v608 = vld [vmem:[#allocation2 + $0x70] sm:$0xff]
    %v610 = vsel %vm126, %v606, 0
    %612 = vmatprep.subr.mxu0 0.0
    %613 = vmatpush1.xpose.msra.mxu0 %v610
    %614 = vmatprep.subr.mxu0 0.0
    %615 = vmatpush1.xpose.msra.mxu0 0.0
    %616 = vmatprep.subr.mxu0 0.0
    %617 = vmatpush1.xpose.msra.mxu0 0.0
    %618 = vmatprep.subr.mxu0 0.0
    %619 = vmatpush1.xpose.msra.mxu0 0.0
    %620 = vmatprep.subr.mxu0 0.0
    %621 = vmatpush1.xpose.msra.mxu0 0.0
    %622 = vmatprep.subr.mxu0 0.0
    %623 = vmatpush1.xpose.msra.mxu0 0.0
    %624 = vmatprep.subr.mxu0 0.0
    %625 = vmatpush1.xpose.msra.mxu0 0.0
    %626 = vmatprep.subr.mxu0 0.0
    %627 = vmatpush1.xpose.msra.mxu0 0.0
    %628 = vmatprep.subr.mxu0 0.0
    %629 = vmatpush1.xpose.msra.mxu0 0.0
    %630 = vmatprep.subr.mxu0 0.0
    %631 = vmatpush1.xpose.msra.mxu0 0.0
    %632 = vmatprep.subr.mxu0 0.0
    %633 = vmatpush1.xpose.msra.mxu0 0.0
    %634 = vmatprep.subr.mxu0 0.0
    %635 = vmatpush1.xpose.msra.mxu0 0.0
    %636 = vmatprep.subr.mxu0 0.0
    %637 = vmatpush1.xpose.msra.mxu0 0.0
    %638 = vmatprep.subr.mxu0 0.0
    %639 = vmatpush1.xpose.msra.mxu0 0.0
    %640 = vmatprep.subr.mxu0 0.0
    %641 = vmatpush1.xpose.msra.mxu0 0.0
    %642 = vmatprep.subr.mxu0 0.0
    %643 = vmatpush1.xpose.msra.mxu0 0.0
    %644 = vmatprep.subr.mxu0 0.0
    %645 = vmatpush1.xpose.msra.mxu0 0.0
    %646 = vmatprep.subr.mxu0 0.0
    %647 = vmatpush1.xpose.msra.mxu0 0.0
    %648 = vmatprep.subr.mxu0 0.0
    %649 = vmatpush1.xpose.msra.mxu0 0.0
    %650 = vmatprep.subr.mxu0 0.0
    %651 = vmatpush1.xpose.msra.mxu0 0.0
    %652 = vmatprep.subr.mxu0 0.0
    %653 = vmatpush1.xpose.msra.mxu0 0.0
    %654 = vmatprep.subr.mxu0 0.0
    %655 = vmatpush1.xpose.msra.mxu0 0.0
    %656 = vmatprep.subr.mxu0 0.0
    %657 = vmatpush1.xpose.msra.mxu0 0.0
    %658 = vmatprep.subr.mxu0 0.0
    %659 = vmatpush1.xpose.msra.mxu0 0.0
    %660 = vmatprep.subr.mxu0 0.0
    %661 = vmatpush1.xpose.msra.mxu0 0.0
    %662 = vmatprep.subr.mxu0 0.0
    %663 = vmatpush1.xpose.msra.mxu0 0.0
    %664 = vmatprep.subr.mxu0 0.0
    %665 = vmatpush1.xpose.msra.mxu0 0.0
    %666 = vmatprep.subr.mxu0 0.0
    %667 = vmatpush1.xpose.msra.mxu0 0.0
    %668 = vmatprep.subr.mxu0 0.0
    %669 = vmatpush1.xpose.msra.mxu0 0.0
    %670 = vmatprep.subr.mxu0 0.0
    %671 = vmatpush1.xpose.msra.mxu0 0.0
    %672 = vmatprep.subr.mxu0 0.0
    %673 = vmatpush1.xpose.msra.mxu0 0.0
    %674 = vmatprep.subr.mxu0 0.0
    %675 = vmatpush1.xpose.msra.mxu0 0.0
    %676 = vmatprep.mubr.f32.mxu0 0.0
    %677 = vmatmul.mubr.f32.gmra.mrb[0].mxu0 %v170
    %v678 = vpop.f32.mrb[0].mxu0
    %v679 = vadd.f32 0.0, %v678
    %v680 = vpop.f32.mrb[0].mxu0
    %681 = vmatprep.mubr.f32.mxu0 0.0
    %682 = vmatmul.mubr.f32.gmra.mrb[0].mxu0 %v173
    %v683 = vpop.f32.mrb[0].mxu0
    %v684 = vadd.f32 0.0, %v683
    %v685 = vpop.f32.mrb[0].mxu0
    %686 = vdwg.mxu0
    %v688 = vsel %vm126, %v607, 0
    %690 = vmatprep.subr.mxu0 0.0
    %691 = vmatpush1.xpose.msra.mxu0 %v688
    %692 = vmatprep.subr.mxu0 0.0
    %693 = vmatpush1.xpose.msra.mxu0 0.0
    %694 = vmatprep.subr.mxu0 0.0
    %695 = vmatpush1.xpose.msra.mxu0 0.0
    %696 = vmatprep.subr.mxu0 0.0
    %697 = vmatpush1.xpose.msra.mxu0 0.0
    %698 = vmatprep.subr.mxu0 0.0
    %699 = vmatpush1.xpose.msra.mxu0 0.0
    %700 = vmatprep.subr.mxu0 0.0
    %701 = vmatpush1.xpose.msra.mxu0 0.0
    %702 = vmatprep.subr.mxu0 0.0
    %703 = vmatpush1.xpose.msra.mxu0 0.0
    %704 = vmatprep.subr.mxu0 0.0
    %705 = vmatpush1.xpose.msra.mxu0 0.0
    %706 = vmatprep.subr.mxu0 0.0
    %707 = vmatpush1.xpose.msra.mxu0 0.0
    %708 = vmatprep.subr.mxu0 0.0
    %709 = vmatpush1.xpose.msra.mxu0 0.0
    %710 = vmatprep.subr.mxu0 0.0
    %711 = vmatpush1.xpose.msra.mxu0 0.0
    %712 = vmatprep.subr.mxu0 0.0
    %713 = vmatpush1.xpose.msra.mxu0 0.0
    %714 = vmatprep.subr.mxu0 0.0
    %715 = vmatpush1.xpose.msra.mxu0 0.0
    %716 = vmatprep.subr.mxu0 0.0
    %717 = vmatpush1.xpose.msra.mxu0 0.0
    %718 = vmatprep.subr.mxu0 0.0
    %719 = vmatpush1.xpose.msra.mxu0 0.0
    %720 = vmatprep.subr.mxu0 0.0
    %721 = vmatpush1.xpose.msra.mxu0 0.0
    %722 = vmatprep.subr.mxu0 0.0
    %723 = vmatpush1.xpose.msra.mxu0 0.0
    %724 = vmatprep.subr.mxu0 0.0
    %725 = vmatpush1.xpose.msra.mxu0 0.0
    %726 = vmatprep.subr.mxu0 0.0
    %727 = vmatpush1.xpose.msra.mxu0 0.0
    %728 = vmatprep.subr.mxu0 0.0
    %729 = vmatpush1.xpose.msra.mxu0 0.0
    %730 = vmatprep.subr.mxu0 0.0
    %731 = vmatpush1.xpose.msra.mxu0 0.0
    %732 = vmatprep.subr.mxu0 0.0
    %733 = vmatpush1.xpose.msra.mxu0 0.0
    %734 = vmatprep.subr.mxu0 0.0
    %735 = vmatpush1.xpose.msra.mxu0 0.0
    %736 = vmatprep.subr.mxu0 0.0
    %737 = vmatpush1.xpose.msra.mxu0 0.0
    %738 = vmatprep.subr.mxu0 0.0
    %739 = vmatpush1.xpose.msra.mxu0 0.0
    %740 = vmatprep.subr.mxu0 0.0
    %741 = vmatpush1.xpose.msra.mxu0 0.0
    %742 = vmatprep.subr.mxu0 0.0
    %743 = vmatpush1.xpose.msra.mxu0 0.0
    %744 = vmatprep.subr.mxu0 0.0
    %745 = vmatpush1.xpose.msra.mxu0 0.0
    %746 = vmatprep.subr.mxu0 0.0
    %747 = vmatpush1.xpose.msra.mxu0 0.0
    %748 = vmatprep.subr.mxu0 0.0
    %749 = vmatpush1.xpose.msra.mxu0 0.0
    %750 = vmatprep.subr.mxu0 0.0
    %751 = vmatpush1.xpose.msra.mxu0 0.0
    %752 = vmatprep.subr.mxu0 0.0
    %753 = vmatpush1.xpose.msra.mxu0 0.0
    %754 = vmatprep.mubr.f32.mxu0 0.0
    %755 = vmatmul.mubr.f32.gmra.mrb[0].mxu0 %v170
    %v756 = vpop.f32.mrb[0].mxu0
    %v757 = vadd.f32 0.0, %v756
    %v758 = vpop.f32.mrb[0].mxu0
    %759 = vmatprep.mubr.f32.mxu0 0.0
    %760 = vmatmul.mubr.f32.gmra.mrb[0].mxu0 %v173
    %v761 = vpop.f32.mrb[0].mxu0
    %v762 = vadd.f32 0.0, %v761
    %v763 = vpop.f32.mrb[0].mxu0
    %764 = vdwg.mxu0
    %v766 = vsel %vm126, %v608, 0
    %768 = vmatprep.subr.mxu0 0.0
    %769 = vmatpush1.xpose.msra.mxu0 %v766
    %770 = vmatprep.subr.mxu0 0.0
    %771 = vmatpush1.xpose.msra.mxu0 0.0
    %772 = vmatprep.subr.mxu0 0.0
    %773 = vmatpush1.xpose.msra.mxu0 0.0
    %774 = vmatprep.subr.mxu0 0.0
    %775 = vmatpush1.xpose.msra.mxu0 0.0
    %776 = vmatprep.subr.mxu0 0.0
    %777 = vmatpush1.xpose.msra.mxu0 0.0
    %778 = vmatprep.subr.mxu0 0.0
    %779 = vmatpush1.xpose.msra.mxu0 0.0
    %780 = vmatprep.subr.mxu0 0.0
    %781 = vmatpush1.xpose.msra.mxu0 0.0
    %782 = vmatprep.subr.mxu0 0.0
    %783 = vmatpush1.xpose.msra.mxu0 0.0
    %784 = vmatprep.subr.mxu0 0.0
    %785 = vmatpush1.xpose.msra.mxu0 0.0
    %786 = vmatprep.subr.mxu0 0.0
    %787 = vmatpush1.xpose.msra.mxu0 0.0
    %788 = vmatprep.subr.mxu0 0.0
    %789 = vmatpush1.xpose.msra.mxu0 0.0
    %790 = vmatprep.subr.mxu0 0.0
    %791 = vmatpush1.xpose.msra.mxu0 0.0
    %792 = vmatprep.subr.mxu0 0.0
    %793 = vmatpush1.xpose.msra.mxu0 0.0
    %794 = vmatprep.subr.mxu0 0.0
    %795 = vmatpush1.xpose.msra.mxu0 0.0
    %796 = vmatprep.subr.mxu0 0.0
    %797 = vmatpush1.xpose.msra.mxu0 0.0
    %798 = vmatprep.subr.mxu0 0.0
    %799 = vmatpush1.xpose.msra.mxu0 0.0
    %800 = vmatprep.subr.mxu0 0.0
    %801 = vmatpush1.xpose.msra.mxu0 0.0
    %802 = vmatprep.subr.mxu0 0.0
    %803 = vmatpush1.xpose.msra.mxu0 0.0
    %804 = vmatprep.subr.mxu0 0.0
    %805 = vmatpush1.xpose.msra.mxu0 0.0
    %806 = vmatprep.subr.mxu0 0.0
    %807 = vmatpush1.xpose.msra.mxu0 0.0
    %808 = vmatprep.subr.mxu0 0.0
    %809 = vmatpush1.xpose.msra.mxu0 0.0
    %810 = vmatprep.subr.mxu0 0.0
    %811 = vmatpush1.xpose.msra.mxu0 0.0
    %812 = vmatprep.subr.mxu0 0.0
    %813 = vmatpush1.xpose.msra.mxu0 0.0
    %814 = vmatprep.subr.mxu0 0.0
    %815 = vmatpush1.xpose.msra.mxu0 0.0
    %816 = vmatprep.subr.mxu0 0.0
    %817 = vmatpush1.xpose.msra.mxu0 0.0
    %818 = vmatprep.subr.mxu0 0.0
    %819 = vmatpush1.xpose.msra.mxu0 0.0
    %820 = vmatprep.subr.mxu0 0.0
    %821 = vmatpush1.xpose.msra.mxu0 0.0
    %822 = vmatprep.subr.mxu0 0.0
    %823 = vmatpush1.xpose.msra.mxu0 0.0
    %824 = vmatprep.subr.mxu0 0.0
    %825 = vmatpush1.xpose.msra.mxu0 0.0
    %826 = vmatprep.subr.mxu0 0.0
    %827 = vmatpush1.xpose.msra.mxu0 0.0
    %828 = vmatprep.subr.mxu0 0.0
    %829 = vmatpush1.xpose.msra.mxu0 0.0
    %830 = vmatprep.subr.mxu0 0.0
    %831 = vmatpush1.xpose.msra.mxu0 0.0
    %832 = vmatprep.mubr.f32.mxu0 0.0
    %833 = vmatmul.mubr.f32.gmra.mrb[0].mxu0 %v170
    %v834 = vpop.f32.mrb[0].mxu0
    %v835 = vadd.f32 0.0, %v834
    %v836 = vpop.f32.mrb[0].mxu0
    %837 = vmatprep.mubr.f32.mxu0 0.0
    %838 = vmatmul.mubr.f32.gmra.mrb[0].mxu0 %v173
    %v839 = vpop.f32.mrb[0].mxu0
    %v840 = vadd.f32 0.0, %v839
    %v841 = vpop.f32.mrb[0].mxu0
    %842 = vdwg.mxu0
    %v844 = vsel %vm409, %v757, 0
    %v847 = vsel %vm409, %v762, 0
    %v850 = vsel %vm409, %v679, 0
    %v853 = vsel %vm409, %v684, 0
    %855 = vmatprep.subr.mxu0 0.0
    %856 = vmatpush1.xpose.msra.mxu0 %v850
    %857 = vmatprep.subr.mxu0 0.0
    %858 = vmatpush1.xpose.msra.mxu0 %v853
    %859 = vmatprep.subr.mxu0 0.0
    %860 = vmatpush1.xpose.msra.mxu0 0.0
    %861 = vmatprep.subr.mxu0 0.0
    %862 = vmatpush1.xpose.msra.mxu0 0.0
    %863 = vmatprep.subr.mxu0 0.0
    %864 = vmatpush1.xpose.msra.mxu0 0.0
    %865 = vmatprep.subr.mxu0 0.0
    %866 = vmatpush1.xpose.msra.mxu0 0.0
    %867 = vmatprep.subr.mxu0 0.0
    %868 = vmatpush1.xpose.msra.mxu0 0.0
    %869 = vmatprep.subr.mxu0 0.0
    %870 = vmatpush1.xpose.msra.mxu0 0.0
    %871 = vmatprep.subr.mxu0 0.0
    %872 = vmatpush1.xpose.msra.mxu0 0.0
    %873 = vmatprep.subr.mxu0 0.0
    %874 = vmatpush1.xpose.msra.mxu0 0.0
    %875 = vmatprep.subr.mxu0 0.0
    %876 = vmatpush1.xpose.msra.mxu0 0.0
    %877 = vmatprep.subr.mxu0 0.0
    %878 = vmatpush1.xpose.msra.mxu0 0.0
    %879 = vmatprep.subr.mxu0 0.0
    %880 = vmatpush1.xpose.msra.mxu0 0.0
    %881 = vmatprep.subr.mxu0 0.0
    %882 = vmatpush1.xpose.msra.mxu0 0.0
    %883 = vmatprep.subr.mxu0 0.0
    %884 = vmatpush1.xpose.msra.mxu0 0.0
    %885 = vmatprep.subr.mxu0 0.0
    %886 = vmatpush1.xpose.msra.mxu0 0.0
    %887 = vmatprep.subr.mxu0 0.0
    %888 = vmatpush1.xpose.msra.mxu0 0.0
    %889 = vmatprep.subr.mxu0 0.0
    %890 = vmatpush1.xpose.msra.mxu0 0.0
    %891 = vmatprep.subr.mxu0 0.0
    %892 = vmatpush1.xpose.msra.mxu0 0.0
    %893 = vmatprep.subr.mxu0 0.0
    %894 = vmatpush1.xpose.msra.mxu0 0.0
    %895 = vmatprep.subr.mxu0 0.0
    %896 = vmatpush1.xpose.msra.mxu0 0.0
    %897 = vmatprep.subr.mxu0 0.0
    %898 = vmatpush1.xpose.msra.mxu0 0.0
    %899 = vmatprep.subr.mxu0 0.0
    %900 = vmatpush1.xpose.msra.mxu0 0.0
    %901 = vmatprep.subr.mxu0 0.0
    %902 = vmatpush1.xpose.msra.mxu0 0.0
    %903 = vmatprep.subr.mxu0 0.0
    %904 = vmatpush1.xpose.msra.mxu0 0.0
    %905 = vmatprep.subr.mxu0 0.0
    %906 = vmatpush1.xpose.msra.mxu0 0.0
    %907 = vmatprep.subr.mxu0 0.0
    %908 = vmatpush1.xpose.msra.mxu0 0.0
    %909 = vmatprep.subr.mxu0 0.0
    %910 = vmatpush1.xpose.msra.mxu0 0.0
    %911 = vmatprep.subr.mxu0 0.0
    %912 = vmatpush1.xpose.msra.mxu0 0.0
    %913 = vmatprep.subr.mxu0 0.0
    %914 = vmatpush1.xpose.msra.mxu0 0.0
    %915 = vmatprep.subr.mxu0 0.0
    %916 = vmatpush1.xpose.msra.mxu0 0.0
    %917 = vmatprep.subr.mxu0 0.0
    %918 = vmatpush1.xpose.msra.mxu0 0.0
    %919 = vmatprep.mubr.f32.mxu0 0.0
    %920 = vmatmul.mubr.f32.gmra.mrb[0].mxu0 %v844
    %v921 = vpop.f32.mrb[0].mxu0
    %v922 = vadd.f32 0.0, %v921
    %v923 = vpop.f32.mrb[0].mxu0
    %924 = vmatprep.mubr.f32.mxu0 0.0
    %925 = vmatmul.mubr.f32.gmra.mrb[0].mxu0 %v847
    %v926 = vpop.f32.mrb[0].mxu0
    %v927 = vadd.f32 0.0, %v926
    %v928 = vpop.f32.mrb[0].mxu0
    %929 = vdwg.mxu0
    %v930 = vmul.f32 %v922, 0.17677669
    %v931 = vmul.f32 %v927, 0.17677669
    %v932 = vadd.f32 %v930, %v122
    %v933 = vadd.f32 %v931, %v123
    %v934 = vsel %vm501, %v932, -inf
    %935 = vmax.xlane.f32.xlu0 %v934
    %v936 = vpop.xlane.xlu0 %935
    %v937 = vsel %vm501, %v933, -inf
    %938 = vmax.xlane.f32.xlu0 %v937
    %v939 = vpop.xlane.xlu0 %938
    %v940 = vsub.f32 %v932, %v936
    %v941 = vsub.f32 %v933, %v939
    %v942 = vmul.f32 %v940, 1.442695
    %v943 = vpow.pop %v942
    %v944 = vmul.f32 %v941, 1.442695
    %v945 = vpow.pop %v944
    %v946 = vsel %vm501, %v943, 0.0
    %947 = vadd.xlane.f32.xlu0 %v946
    %v948 = vpop.xlane.xlu0 %947
    %v949 = vsel %vm501, %v945, 0.0
    %950 = vadd.xlane.f32.xlu0 %v949
    %v951 = vpop.xlane.xlu0 %950
    %v952 = vrcp.pop %v948
    %v953 = vmul.f32 %v943, %v952
    %v954 = vrcp.pop %v951
    %v955 = vmul.f32 %v945, %v954
    %v957 = vsel %vm501, %v953, 0
    %v960 = vsel %vm501, %v955, 0
    %962 = vmatprep.subr.mxu0 0.0
    %963 = vmatpush1.msra.mxu0 %v835
    %964 = vmatprep.subr.mxu0 0.0
    %965 = vmatpush1.msra.mxu0 %v840
    %966 = vmatprep.subr.mxu0 0.0
    %967 = vmatpush1.msra.mxu0 0.0
    %968 = vmatprep.subr.mxu0 0.0
    %969 = vmatpush1.msra.mxu0 0.0
    %970 = vmatprep.subr.mxu0 0.0
    %971 = vmatpush1.msra.mxu0 0.0
    %972 = vmatprep.subr.mxu0 0.0
    %973 = vmatpush1.msra.mxu0 0.0
    %974 = vmatprep.subr.mxu0 0.0
    %975 = vmatpush1.msra.mxu0 0.0
    %976 = vmatprep.subr.mxu0 0.0
    %977 = vmatpush1.msra.mxu0 0.0
    %978 = vmatprep.subr.mxu0 0.0
    %979 = vmatpush1.msra.mxu0 0.0
    %980 = vmatprep.subr.mxu0 0.0
    %981 = vmatpush1.msra.mxu0 0.0
    %982 = vmatprep.subr.mxu0 0.0
    %983 = vmatpush1.msra.mxu0 0.0
    %984 = vmatprep.subr.mxu0 0.0
    %985 = vmatpush1.msra.mxu0 0.0
    %986 = vmatprep.subr.mxu0 0.0
    %987 = vmatpush1.msra.mxu0 0.0
    %988 = vmatprep.subr.mxu0 0.0
    %989 = vmatpush1.msra.mxu0 0.0
    %990 = vmatprep.subr.mxu0 0.0
    %991 = vmatpush1.msra.mxu0 0.0
    %992 = vmatprep.subr.mxu0 0.0
    %993 = vmatpush1.msra.mxu0 0.0
    %994 = vmatprep.subr.mxu0 0.0
    %995 = vmatpush1.msra.mxu0 0.0
    %996 = vmatprep.subr.mxu0 0.0
    %997 = vmatpush1.msra.mxu0 0.0
    %998 = vmatprep.subr.mxu0 0.0
    %999 = vmatpush1.msra.mxu0 0.0
    %1000 = vmatprep.subr.mxu0 0.0
    %1001 = vmatpush1.msra.mxu0 0.0
    %1002 = vmatprep.subr.mxu0 0.0
    %1003 = vmatpush1.msra.mxu0 0.0
    %1004 = vmatprep.subr.mxu0 0.0
    %1005 = vmatpush1.msra.mxu0 0.0
    %1006 = vmatprep.subr.mxu0 0.0
    %1007 = vmatpush1.msra.mxu0 0.0
    %1008 = vmatprep.subr.mxu0 0.0
    %1009 = vmatpush1.msra.mxu0 0.0
    %1010 = vmatprep.subr.mxu0 0.0
    %1011 = vmatpush1.msra.mxu0 0.0
    %1012 = vmatprep.subr.mxu0 0.0
    %1013 = vmatpush1.msra.mxu0 0.0
    %1014 = vmatprep.subr.mxu0 0.0
    %1015 = vmatpush1.msra.mxu0 0.0
    %1016 = vmatprep.subr.mxu0 0.0
    %1017 = vmatpush1.msra.mxu0 0.0
    %1018 = vmatprep.subr.mxu0 0.0
    %1019 = vmatpush1.msra.mxu0 0.0
    %1020 = vmatprep.subr.mxu0 0.0
    %1021 = vmatpush1.msra.mxu0 0.0
    %1022 = vmatprep.subr.mxu0 0.0
    %1023 = vmatpush1.msra.mxu0 0.0
    %1024 = vmatprep.subr.mxu0 0.0
    %1025 = vmatpush1.msra.mxu0 0.0
    %1026 = vmatprep.mubr.f32.mxu0 0.0
    %1027 = vmatmul.mubr.f32.gmra.mrb[0].mxu0 %v957
    %v1028 = vpop.f32.mrb[0].mxu0
    %v1029 = vadd.f32 0.0, %v1028
    %v1030 = vpop.f32.mrb[0].mxu0
    %1031 = vmatprep.mubr.f32.mxu0 0.0
    %1032 = vmatmul.mubr.f32.gmra.mrb[0].mxu0 %v960
    %v1033 = vpop.f32.mrb[0].mxu0
    %v1034 = vadd.f32 0.0, %v1033
    %v1035 = vpop.f32.mrb[0].mxu0
    %1036 = vdwg.mxu0
    %v1037 = vld [vmem:[#allocation2 + $0xb0] sm:$0xff]
    %v1039 = vsel %vm409, %v1029, 0
    %v1042 = vsel %vm409, %v1034, 0
    %1044 = vmatprep.subr.mxu0 0.0
    %1045 = vmatpush1.msra.mxu0 %v1037
    %1046 = vmatprep.subr.mxu0 0.0
    %1047 = vmatpush1.msra.mxu0 0.0
    %1048 = vmatprep.subr.mxu0 0.0
    %1049 = vmatpush1.msra.mxu0 0.0
    %1050 = vmatprep.subr.mxu0 0.0
    %1051 = vmatpush1.msra.mxu0 0.0
    %1052 = vmatprep.subr.mxu0 0.0
    %1053 = vmatpush1.msra.mxu0 0.0
    %1054 = vmatprep.subr.mxu0 0.0
    %1055 = vmatpush1.msra.mxu0 0.0
    %1056 = vmatprep.subr.mxu0 0.0
    %1057 = vmatpush1.msra.mxu0 0.0
    %1058 = vmatprep.subr.mxu0 0.0
    %1059 = vmatpush1.msra.mxu0 0.0
    %1060 = vmatprep.subr.mxu0 0.0
    %1061 = vmatpush1.msra.mxu0 0.0
    %1062 = vmatprep.subr.mxu0 0.0
    %1063 = vmatpush1.msra.mxu0 0.0
    %1064 = vmatprep.subr.mxu0 0.0
    %1065 = vmatpush1.msra.mxu0 0.0
    %1066 = vmatprep.subr.mxu0 0.0
    %1067 = vmatpush1.msra.mxu0 0.0
    %1068 = vmatprep.subr.mxu0 0.0
    %1069 = vmatpush1.msra.mxu0 0.0
    %1070 = vmatprep.subr.mxu0 0.0
    %1071 = vmatpush1.msra.mxu0 0.0
    %1072 = vmatprep.subr.mxu0 0.0
    %1073 = vmatpush1.msra.mxu0 0.0
    %1074 = vmatprep.subr.mxu0 0.0
    %1075 = vmatpush1.msra.mxu0 0.0
    %1076 = vmatprep.subr.mxu0 0.0
    %1077 = vmatpush1.msra.mxu0 0.0
    %1078 = vmatprep.subr.mxu0 0.0
    %1079 = vmatpush1.msra.mxu0 0.0
    %1080 = vmatprep.subr.mxu0 0.0
    %1081 = vmatpush1.msra.mxu0 0.0
    %1082 = vmatprep.subr.mxu0 0.0
    %1083 = vmatpush1.msra.mxu0 0.0
    %1084 = vmatprep.subr.mxu0 0.0
    %1085 = vmatpush1.msra.mxu0 0.0
    %1086 = vmatprep.subr.mxu0 0.0
    %1087 = vmatpush1.msra.mxu0 0.0
    %1088 = vmatprep.subr.mxu0 0.0
    %1089 = vmatpush1.msra.mxu0 0.0
    %1090 = vmatprep.subr.mxu0 0.0
    %1091 = vmatpush1.msra.mxu0 0.0
    %1092 = vmatprep.subr.mxu0 0.0
    %1093 = vmatpush1.msra.mxu0 0.0
    %1094 = vmatprep.subr.mxu0 0.0
    %1095 = vmatpush1.msra.mxu0 0.0
    %1096 = vmatprep.subr.mxu0 0.0
    %1097 = vmatpush1.msra.mxu0 0.0
    %1098 = vmatprep.subr.mxu0 0.0
    %1099 = vmatpush1.msra.mxu0 0.0
    %1100 = vmatprep.subr.mxu0 0.0
    %1101 = vmatpush1.msra.mxu0 0.0
    %1102 = vmatprep.subr.mxu0 0.0
    %1103 = vmatpush1.msra.mxu0 0.0
    %1104 = vmatprep.subr.mxu0 0.0
    %1105 = vmatpush1.msra.mxu0 0.0
    %1106 = vmatprep.subr.mxu0 0.0
    %1107 = vmatpush1.msra.mxu0 0.0
    %1108 = vmatprep.mubr.f32.mxu0 0.0
    %1109 = vmatmul.mubr.f32.gmra.mrb[0].mxu0 %v1039
    %v1110 = vpop.f32.mrb[0].mxu0
    %v1111 = vadd.f32 0.0, %v1110
    %v1112 = vpop.f32.mrb[0].mxu0
    %1113 = vmatprep.mubr.f32.mxu0 0.0
    %1114 = vmatmul.mubr.f32.gmra.mrb[0].mxu0 %v1042
    %v1115 = vpop.f32.mrb[0].mxu0
    %v1116 = vadd.f32 0.0, %v1115
    %v1117 = vpop.f32.mrb[0].mxu0
    %1118 = vdwg.mxu0
    %v1120 = vsel %vm409, %v597, 0
    %v1123 = vsel %vm409, %v602, 0
    %1125 = vmatprep.subr.mxu0 0.0
    %1126 = vmatpush1.msra.mxu0 %v605
    %1127 = vmatprep.subr.mxu0 0.0
    %1128 = vmatpush1.msra.mxu0 0.0
    %1129 = vmatprep.subr.mxu0 0.0
    %1130 = vmatpush1.msra.mxu0 0.0
    %1131 = vmatprep.subr.mxu0 0.0
    %1132 = vmatpush1.msra.mxu0 0.0
    %1133 = vmatprep.subr.mxu0 0.0
    %1134 = vmatpush1.msra.mxu0 0.0
    %1135 = vmatprep.subr.mxu0 0.0
    %1136 = vmatpush1.msra.mxu0 0.0
    %1137 = vmatprep.subr.mxu0 0.0
    %1138 = vmatpush1.msra.mxu0 0.0
    %1139 = vmatprep.subr.mxu0 0.0
    %1140 = vmatpush1.msra.mxu0 0.0
    %1141 = vmatprep.subr.mxu0 0.0
    %1142 = vmatpush1.msra.mxu0 0.0
    %1143 = vmatprep.subr.mxu0 0.0
    %1144 = vmatpush1.msra.mxu0 0.0
    %1145 = vmatprep.subr.mxu0 0.0
    %1146 = vmatpush1.msra.mxu0 0.0
    %1147 = vmatprep.subr.mxu0 0.0
    %1148 = vmatpush1.msra.mxu0 0.0
    %1149 = vmatprep.subr.mxu0 0.0
    %1150 = vmatpush1.msra.mxu0 0.0
    %1151 = vmatprep.subr.mxu0 0.0
    %1152 = vmatpush1.msra.mxu0 0.0
    %1153 = vmatprep.subr.mxu0 0.0
    %1154 = vmatpush1.msra.mxu0 0.0
    %1155 = vmatprep.subr.mxu0 0.0
    %1156 = vmatpush1.msra.mxu0 0.0
    %1157 = vmatprep.subr.mxu0 0.0
    %1158 = vmatpush1.msra.mxu0 0.0
    %1159 = vmatprep.subr.mxu0 0.0
    %1160 = vmatpush1.msra.mxu0 0.0
    %1161 = vmatprep.subr.mxu0 0.0
    %1162 = vmatpush1.msra.mxu0 0.0
    %1163 = vmatprep.subr.mxu0 0.0
    %1164 = vmatpush1.msra.mxu0 0.0
    %1165 = vmatprep.subr.mxu0 0.0
    %1166 = vmatpush1.msra.mxu0 0.0
    %1167 = vmatprep.subr.mxu0 0.0
    %1168 = vmatpush1.msra.mxu0 0.0
    %1169 = vmatprep.subr.mxu0 0.0
    %1170 = vmatpush1.msra.mxu0 0.0
    %1171 = vmatprep.subr.mxu0 0.0
    %1172 = vmatpush1.msra.mxu0 0.0
    %1173 = vmatprep.subr.mxu0 0.0
    %1174 = vmatpush1.msra.mxu0 0.0
    %1175 = vmatprep.subr.mxu0 0.0
    %1176 = vmatpush1.msra.mxu0 0.0
    %1177 = vmatprep.subr.mxu0 0.0
    %1178 = vmatpush1.msra.mxu0 0.0
    %1179 = vmatprep.subr.mxu0 0.0
    %1180 = vmatpush1.msra.mxu0 0.0
    %1181 = vmatprep.subr.mxu0 0.0
    %1182 = vmatpush1.msra.mxu0 0.0
    %1183 = vmatprep.subr.mxu0 0.0
    %1184 = vmatpush1.msra.mxu0 0.0
    %1185 = vmatprep.subr.mxu0 0.0
    %1186 = vmatpush1.msra.mxu0 0.0
    %1187 = vmatprep.subr.mxu0 0.0
    %1188 = vmatpush1.msra.mxu0 0.0
    %1189 = vmatprep.mubr.f32.mxu0 0.0
    %1190 = vmatmul.mubr.f32.gmra.mrb[0].mxu0 %v1120
    %v1191 = vpop.f32.mrb[0].mxu0
    %v1192 = vadd.f32 %v1111, %v1191
    %v1193 = vpop.f32.mrb[0].mxu0
    %1194 = vmatprep.mubr.f32.mxu0 0.0
    %1195 = vmatmul.mubr.f32.gmra.mrb[0].mxu0 %v1123
    %v1196 = vpop.f32.mrb[0].mxu0
    %v1197 = vadd.f32 %v1116, %v1196
    %v1198 = vpop.f32.mrb[0].mxu0
    %1199 = vdwg.mxu0
    %v1200 = vld [vmem:[#allocation2 + $0x78] sm:$0xff]
    %v1201 = vld [vmem:[#allocation2 + $0x80] sm:$0xff]
    %v1202 = vld [vmem:[#allocation2 + $0x88] sm:$0xff]
    %v1204 = vsel %vm126, %v1200, 0
    %1206 = vmatprep.subr.mxu0 0.0
    %1207 = vmatpush1.xpose.msra.mxu0 %v1204
    %1208 = vmatprep.subr.mxu0 0.0
    %1209 = vmatpush1.xpose.msra.mxu0 0.0
    %1210 = vmatprep.subr.mxu0 0.0
    %1211 = vmatpush1.xpose.msra.mxu0 0.0
    %1212 = vmatprep.subr.mxu0 0.0
    %1213 = vmatpush1.xpose.msra.mxu0 0.0
    %1214 = vmatprep.subr.mxu0 0.0
    %1215 = vmatpush1.xpose.msra.mxu0 0.0
    %1216 = vmatprep.subr.mxu0 0.0
    %1217 = vmatpush1.xpose.msra.mxu0 0.0
    %1218 = vmatprep.subr.mxu0 0.0
    %1219 = vmatpush1.xpose.msra.mxu0 0.0
    %1220 = vmatprep.subr.mxu0 0.0
    %1221 = vmatpush1.xpose.msra.mxu0 0.0
    %1222 = vmatprep.subr.mxu0 0.0
    %1223 = vmatpush1.xpose.msra.mxu0 0.0
    %1224 = vmatprep.subr.mxu0 0.0
    %1225 = vmatpush1.xpose.msra.mxu0 0.0
    %1226 = vmatprep.subr.mxu0 0.0
    %1227 = vmatpush1.xpose.msra.mxu0 0.0
    %1228 = vmatprep.subr.mxu0 0.0
    %1229 = vmatpush1.xpose.msra.mxu0 0.0
    %1230 = vmatprep.subr.mxu0 0.0
    %1231 = vmatpush1.xpose.msra.mxu0 0.0
    %1232 = vmatprep.subr.mxu0 0.0
    %1233 = vmatpush1.xpose.msra.mxu0 0.0
    %1234 = vmatprep.subr.mxu0 0.0
    %1235 = vmatpush1.xpose.msra.mxu0 0.0
    %1236 = vmatprep.subr.mxu0 0.0
    %1237 = vmatpush1.xpose.msra.mxu0 0.0
    %1238 = vmatprep.subr.mxu0 0.0
    %1239 = vmatpush1.xpose.msra.mxu0 0.0
    %1240 = vmatprep.subr.mxu0 0.0
    %1241 = vmatpush1.xpose.msra.mxu0 0.0
    %1242 = vmatprep.subr.mxu0 0.0
    %1243 = vmatpush1.xpose.msra.mxu0 0.0
    %1244 = vmatprep.subr.mxu0 0.0
    %1245 = vmatpush1.xpose.msra.mxu0 0.0
    %1246 = vmatprep.subr.mxu0 0.0
    %1247 = vmatpush1.xpose.msra.mxu0 0.0
    %1248 = vmatprep.subr.mxu0 0.0
    %1249 = vmatpush1.xpose.msra.mxu0 0.0
    %1250 = vmatprep.subr.mxu0 0.0
    %1251 = vmatpush1.xpose.msra.mxu0 0.0
    %1252 = vmatprep.subr.mxu0 0.0
    %1253 = vmatpush1.xpose.msra.mxu0 0.0
    %1254 = vmatprep.subr.mxu0 0.0
    %1255 = vmatpush1.xpose.msra.mxu0 0.0
    %1256 = vmatprep.subr.mxu0 0.0
    %1257 = vmatpush1.xpose.msra.mxu0 0.0
    %1258 = vmatprep.subr.mxu0 0.0
    %1259 = vmatpush1.xpose.msra.mxu0 0.0
    %1260 = vmatprep.subr.mxu0 0.0
    %1261 = vmatpush1.xpose.msra.mxu0 0.0
    %1262 = vmatprep.subr.mxu0 0.0
    %1263 = vmatpush1.xpose.msra.mxu0 0.0
    %1264 = vmatprep.subr.mxu0 0.0
    %1265 = vmatpush1.xpose.msra.mxu0 0.0
    %1266 = vmatprep.subr.mxu0 0.0
    %1267 = vmatpush1.xpose.msra.mxu0 0.0
    %1268 = vmatprep.subr.mxu0 0.0
    %1269 = vmatpush1.xpose.msra.mxu0 0.0
    %1270 = vmatprep.mubr.f32.mxu0 0.0
    %1271 = vmatmul.mubr.f32.gmra.mrb[0].mxu0 %v170
    %v1272 = vpop.f32.mrb[0].mxu0
    %v1273 = vadd.f32 0.0, %v1272
    %v1274 = vpop.f32.mrb[0].mxu0
    %1275 = vmatprep.mubr.f32.mxu0 0.0
    %1276 = vmatmul.mubr.f32.gmra.mrb[0].mxu0 %v173
    %v1277 = vpop.f32.mrb[0].mxu0
    %v1278 = vadd.f32 0.0, %v1277
    %v1279 = vpop.f32.mrb[0].mxu0
    %1280 = vdwg.mxu0
    %v1282 = vsel %vm126, %v1201, 0
    %1284 = vmatprep.subr.mxu0 0.0
    %1285 = vmatpush1.xpose.msra.mxu0 %v1282
    %1286 = vmatprep.subr.mxu0 0.0
    %1287 = vmatpush1.xpose.msra.mxu0 0.0
    %1288 = vmatprep.subr.mxu0 0.0
    %1289 = vmatpush1.xpose.msra.mxu0 0.0
    %1290 = vmatprep.subr.mxu0 0.0
    %1291 = vmatpush1.xpose.msra.mxu0 0.0
    %1292 = vmatprep.subr.mxu0 0.0
    %1293 = vmatpush1.xpose.msra.mxu0 0.0
    %1294 = vmatprep.subr.mxu0 0.0
    %1295 = vmatpush1.xpose.msra.mxu0 0.0
    %1296 = vmatprep.subr.mxu0 0.0
    %1297 = vmatpush1.xpose.msra.mxu0 0.0
    %1298 = vmatprep.subr.mxu0 0.0
    %1299 = vmatpush1.xpose.msra.mxu0 0.0
    %1300 = vmatprep.subr.mxu0 0.0
    %1301 = vmatpush1.xpose.msra.mxu0 0.0
    %1302 = vmatprep.subr.mxu0 0.0
    %1303 = vmatpush1.xpose.msra.mxu0 0.0
    %1304 = vmatprep.subr.mxu0 0.0
    %1305 = vmatpush1.xpose.msra.mxu0 0.0
    %1306 = vmatprep.subr.mxu0 0.0
    %1307 = vmatpush1.xpose.msra.mxu0 0.0
    %1308 = vmatprep.subr.mxu0 0.0
    %1309 = vmatpush1.xpose.msra.mxu0 0.0
    %1310 = vmatprep.subr.mxu0 0.0
    %1311 = vmatpush1.xpose.msra.mxu0 0.0
    %1312 = vmatprep.subr.mxu0 0.0
    %1313 = vmatpush1.xpose.msra.mxu0 0.0
    %1314 = vmatprep.subr.mxu0 0.0
    %1315 = vmatpush1.xpose.msra.mxu0 0.0
    %1316 = vmatprep.subr.mxu0 0.0
    %1317 = vmatpush1.xpose.msra.mxu0 0.0
    %1318 = vmatprep.subr.mxu0 0.0
    %1319 = vmatpush1.xpose.msra.mxu0 0.0
    %1320 = vmatprep.subr.mxu0 0.0
    %1321 = vmatpush1.xpose.msra.mxu0 0.0
    %1322 = vmatprep.subr.mxu0 0.0
    %1323 = vmatpush1.xpose.msra.mxu0 0.0
    %1324 = vmatprep.subr.mxu0 0.0
    %1325 = vmatpush1.xpose.msra.mxu0 0.0
    %1326 = vmatprep.subr.mxu0 0.0
    %1327 = vmatpush1.xpose.msra.mxu0 0.0
    %1328 = vmatprep.subr.mxu0 0.0
    %1329 = vmatpush1.xpose.msra.mxu0 0.0
    %1330 = vmatprep.subr.mxu0 0.0
    %1331 = vmatpush1.xpose.msra.mxu0 0.0
    %1332 = vmatprep.subr.mxu0 0.0
    %1333 = vmatpush1.xpose.msra.mxu0 0.0
    %1334 = vmatprep.subr.mxu0 0.0
    %1335 = vmatpush1.xpose.msra.mxu0 0.0
    %1336 = vmatprep.subr.mxu0 0.0
    %1337 = vmatpush1.xpose.msra.mxu0 0.0
    %1338 = vmatprep.subr.mxu0 0.0
    %1339 = vmatpush1.xpose.msra.mxu0 0.0
    %1340 = vmatprep.subr.mxu0 0.0
    %1341 = vmatpush1.xpose.msra.mxu0 0.0
    %1342 = vmatprep.subr.mxu0 0.0
    %1343 = vmatpush1.xpose.msra.mxu0 0.0
    %1344 = vmatprep.subr.mxu0 0.0
    %1345 = vmatpush1.xpose.msra.mxu0 0.0
    %1346 = vmatprep.subr.mxu0 0.0
    %1347 = vmatpush1.xpose.msra.mxu0 0.0
    %1348 = vmatprep.mubr.f32.mxu0 0.0
    %1349 = vmatmul.mubr.f32.gmra.mrb[0].mxu0 %v170
    %v1350 = vpop.f32.mrb[0].mxu0
    %v1351 = vadd.f32 0.0, %v1350
    %v1352 = vpop.f32.mrb[0].mxu0
    %1353 = vmatprep.mubr.f32.mxu0 0.0
    %1354 = vmatmul.mubr.f32.gmra.mrb[0].mxu0 %v173
    %v1355 = vpop.f32.mrb[0].mxu0
    %v1356 = vadd.f32 0.0, %v1355
    %v1357 = vpop.f32.mrb[0].mxu0
    %1358 = vdwg.mxu0
    %v1360 = vsel %vm126, %v1202, 0
    %1362 = vmatprep.subr.mxu0 0.0
    %1363 = vmatpush1.xpose.msra.mxu0 %v1360
    %1364 = vmatprep.subr.mxu0 0.0
    %1365 = vmatpush1.xpose.msra.mxu0 0.0
    %1366 = vmatprep.subr.mxu0 0.0
    %1367 = vmatpush1.xpose.msra.mxu0 0.0
    %1368 = vmatprep.subr.mxu0 0.0
    %1369 = vmatpush1.xpose.msra.mxu0 0.0
    %1370 = vmatprep.subr.mxu0 0.0
    %1371 = vmatpush1.xpose.msra.mxu0 0.0
    %1372 = vmatprep.subr.mxu0 0.0
    %1373 = vmatpush1.xpose.msra.mxu0 0.0
    %1374 = vmatprep.subr.mxu0 0.0
    %1375 = vmatpush1.xpose.msra.mxu0 0.0
    %1376 = vmatprep.subr.mxu0 0.0
    %1377 = vmatpush1.xpose.msra.mxu0 0.0
    %1378 = vmatprep.subr.mxu0 0.0
    %1379 = vmatpush1.xpose.msra.mxu0 0.0
    %1380 = vmatprep.subr.mxu0 0.0
    %1381 = vmatpush1.xpose.msra.mxu0 0.0
    %1382 = vmatprep.subr.mxu0 0.0
    %1383 = vmatpush1.xpose.msra.mxu0 0.0
    %1384 = vmatprep.subr.mxu0 0.0
    %1385 = vmatpush1.xpose.msra.mxu0 0.0
    %1386 = vmatprep.subr.mxu0 0.0
    %1387 = vmatpush1.xpose.msra.mxu0 0.0
    %1388 = vmatprep.subr.mxu0 0.0
    %1389 = vmatpush1.xpose.msra.mxu0 0.0
    %1390 = vmatprep.subr.mxu0 0.0
    %1391 = vmatpush1.xpose.msra.mxu0 0.0
    %1392 = vmatprep.subr.mxu0 0.0
    %1393 = vmatpush1.xpose.msra.mxu0 0.0
    %1394 = vmatprep.subr.mxu0 0.0
    %1395 = vmatpush1.xpose.msra.mxu0 0.0
    %1396 = vmatprep.subr.mxu0 0.0
    %1397 = vmatpush1.xpose.msra.mxu0 0.0
    %1398 = vmatprep.subr.mxu0 0.0
    %1399 = vmatpush1.xpose.msra.mxu0 0.0
    %1400 = vmatprep.subr.mxu0 0.0
    %1401 = vmatpush1.xpose.msra.mxu0 0.0
    %1402 = vmatprep.subr.mxu0 0.0
    %1403 = vmatpush1.xpose.msra.mxu0 0.0
    %1404 = vmatprep.subr.mxu0 0.0
    %1405 = vmatpush1.xpose.msra.mxu0 0.0
    %1406 = vmatprep.subr.mxu0 0.0
    %1407 = vmatpush1.xpose.msra.mxu0 0.0
    %1408 = vmatprep.subr.mxu0 0.0
    %1409 = vmatpush1.xpose.msra.mxu0 0.0
    %1410 = vmatprep.subr.mxu0 0.0
    %1411 = vmatpush1.xpose.msra.mxu0 0.0
    %1412 = vmatprep.subr.mxu0 0.0
    %1413 = vmatpush1.xpose.msra.mxu0 0.0
    %1414 = vmatprep.subr.mxu0 0.0
    %1415 = vmatpush1.xpose.msra.mxu0 0.0
    %1416 = vmatprep.subr.mxu0 0.0
    %1417 = vmatpush1.xpose.msra.mxu0 0.0
    %1418 = vmatprep.subr.mxu0 0.0
    %1419 = vmatpush1.xpose.msra.mxu0 0.0
    %1420 = vmatprep.subr.mxu0 0.0
    %1421 = vmatpush1.xpose.msra.mxu0 0.0
    %1422 = vmatprep.subr.mxu0 0.0
    %1423 = vmatpush1.xpose.msra.mxu0 0.0
    %1424 = vmatprep.subr.mxu0 0.0
    %1425 = vmatpush1.xpose.msra.mxu0 0.0
    %1426 = vmatprep.mubr.f32.mxu0 0.0
    %1427 = vmatmul.mubr.f32.gmra.mrb[0].mxu0 %v170
    %v1428 = vpop.f32.mrb[0].mxu0
    %v1429 = vadd.f32 0.0, %v1428
    %v1430 = vpop.f32.mrb[0].mxu0
    %1431 = vmatprep.mubr.f32.mxu0 0.0
    %1432 = vmatmul.mubr.f32.gmra.mrb[0].mxu0 %v173
    %v1433 = vpop.f32.mrb[0].mxu0
    %v1434 = vadd.f32 0.0, %v1433
    %v1435 = vpop.f32.mrb[0].mxu0
    %1436 = vdwg.mxu0
    %v1438 = vsel %vm409, %v1351, 0
    %v1441 = vsel %vm409, %v1356, 0
    %v1444 = vsel %vm409, %v1273, 0
    %v1447 = vsel %vm409, %v1278, 0
    %1449 = vmatprep.subr.mxu0 0.0
    %1450 = vmatpush1.xpose.msra.mxu0 %v1444
    %1451 = vmatprep.subr.mxu0 0.0
    %1452 = vmatpush1.xpose.msra.mxu0 %v1447
    %1453 = vmatprep.subr.mxu0 0.0
    %1454 = vmatpush1.xpose.msra.mxu0 0.0
    %1455 = vmatprep.subr.mxu0 0.0
    %1456 = vmatpush1.xpose.msra.mxu0 0.0
    %1457 = vmatprep.subr.mxu0 0.0
    %1458 = vmatpush1.xpose.msra.mxu0 0.0
    %1459 = vmatprep.subr.mxu0 0.0
    %1460 = vmatpush1.xpose.msra.mxu0 0.0
    %1461 = vmatprep.subr.mxu0 0.0
    %1462 = vmatpush1.xpose.msra.mxu0 0.0
    %1463 = vmatprep.subr.mxu0 0.0
    %1464 = vmatpush1.xpose.msra.mxu0 0.0
    %1465 = vmatprep.subr.mxu0 0.0
    %1466 = vmatpush1.xpose.msra.mxu0 0.0
    %1467 = vmatprep.subr.mxu0 0.0
    %1468 = vmatpush1.xpose.msra.mxu0 0.0
    %1469 = vmatprep.subr.mxu0 0.0
    %1470 = vmatpush1.xpose.msra.mxu0 0.0
    %1471 = vmatprep.subr.mxu0 0.0
    %1472 = vmatpush1.xpose.msra.mxu0 0.0
    %1473 = vmatprep.subr.mxu0 0.0
    %1474 = vmatpush1.xpose.msra.mxu0 0.0
    %1475 = vmatprep.subr.mxu0 0.0
    %1476 = vmatpush1.xpose.msra.mxu0 0.0
    %1477 = vmatprep.subr.mxu0 0.0
    %1478 = vmatpush1.xpose.msra.mxu0 0.0
    %1479 = vmatprep.subr.mxu0 0.0
    %1480 = vmatpush1.xpose.msra.mxu0 0.0
    %1481 = vmatprep.subr.mxu0 0.0
    %1482 = vmatpush1.xpose.msra.mxu0 0.0
    %1483 = vmatprep.subr.mxu0 0.0
    %1484 = vmatpush1.xpose.msra.mxu0 0.0
    %1485 = vmatprep.subr.mxu0 0.0
    %1486 = vmatpush1.xpose.msra.mxu0 0.0
    %1487 = vmatprep.subr.mxu0 0.0
    %1488 = vmatpush1.xpose.msra.mxu0 0.0
    %1489 = vmatprep.subr.mxu0 0.0
    %1490 = vmatpush1.xpose.msra.mxu0 0.0
    %1491 = vmatprep.subr.mxu0 0.0
    %1492 = vmatpush1.xpose.msra.mxu0 0.0
    %1493 = vmatprep.subr.mxu0 0.0
    %1494 = vmatpush1.xpose.msra.mxu0 0.0
    %1495 = vmatprep.subr.mxu0 0.0
    %1496 = vmatpush1.xpose.msra.mxu0 0.0
    %1497 = vmatprep.subr.mxu0 0.0
    %1498 = vmatpush1.xpose.msra.mxu0 0.0
    %1499 = vmatprep.subr.mxu0 0.0
    %1500 = vmatpush1.xpose.msra.mxu0 0.0
    %1501 = vmatprep.subr.mxu0 0.0
    %1502 = vmatpush1.xpose.msra.mxu0 0.0
    %1503 = vmatprep.subr.mxu0 0.0
    %1504 = vmatpush1.xpose.msra.mxu0 0.0
    %1505 = vmatprep.subr.mxu0 0.0
    %1506 = vmatpush1.xpose.msra.mxu0 0.0
    %1507 = vmatprep.subr.mxu0 0.0
    %1508 = vmatpush1.xpose.msra.mxu0 0.0
    %1509 = vmatprep.subr.mxu0 0.0
    %1510 = vmatpush1.xpose.msra.mxu0 0.0
    %1511 = vmatprep.subr.mxu0 0.0
    %1512 = vmatpush1.xpose.msra.mxu0 0.0
    %1513 = vmatprep.mubr.f32.mxu0 0.0
    %1514 = vmatmul.mubr.f32.gmra.mrb[0].mxu0 %v1438
    %v1515 = vpop.f32.mrb[0].mxu0
    %v1516 = vadd.f32 0.0, %v1515
    %v1517 = vpop.f32.mrb[0].mxu0
    %1518 = vmatprep.mubr.f32.mxu0 0.0
    %1519 = vmatmul.mubr.f32.gmra.mrb[0].mxu0 %v1441
    %v1520 = vpop.f32.mrb[0].mxu0
    %v1521 = vadd.f32 0.0, %v1520
    %v1522 = vpop.f32.mrb[0].mxu0
    %1523 = vdwg.mxu0
    %v1524 = vmul.f32 %v1516, 0.17677669
    %v1525 = vmul.f32 %v1521, 0.17677669
    %v1526 = vadd.f32 %v1524, %v122
    %v1527 = vadd.f32 %v1525, %v123
    %v1528 = vsel %vm501, %v1526, -inf
    %1529 = vmax.xlane.f32.xlu0 %v1528
    %v1530 = vpop.xlane.xlu0 %1529
    %v1531 = vsel %vm501, %v1527, -inf
    %1532 = vmax.xlane.f32.xlu0 %v1531
    %v1533 = vpop.xlane.xlu0 %1532
    %v1534 = vsub.f32 %v1526, %v1530
    %v1535 = vsub.f32 %v1527, %v1533
    %v1536 = vmul.f32 %v1534, 1.442695
    %v1537 = vpow.pop %v1536
    %v1538 = vmul.f32 %v1535, 1.442695
    %v1539 = vpow.pop %v1538
    %v1540 = vsel %vm501, %v1537, 0.0
    %1541 = vadd.xlane.f32.xlu0 %v1540
    %v1542 = vpop.xlane.xlu0 %1541
    %v1543 = vsel %vm501, %v1539, 0.0
    %1544 = vadd.xlane.f32.xlu0 %v1543
    %v1545 = vpop.xlane.xlu0 %1544
    %v1546 = vrcp.pop %v1542
    %v1547 = vmul.f32 %v1537, %v1546
    %v1548 = vrcp.pop %v1545
    %v1549 = vmul.f32 %v1539, %v1548
    %v1551 = vsel %vm501, %v1547, 0
    %v1554 = vsel %vm501, %v1549, 0
    %1556 = vmatprep.subr.mxu0 0.0
    %1557 = vmatpush1.msra.mxu0 %v1429
    %1558 = vmatprep.subr.mxu0 0.0
    %1559 = vmatpush1.msra.mxu0 %v1434
    %1560 = vmatprep.subr.mxu0 0.0
    %1561 = vmatpush1.msra.mxu0 0.0
    %1562 = vmatprep.subr.mxu0 0.0
    %1563 = vmatpush1.msra.mxu0 0.0
    %1564 = vmatprep.subr.mxu0 0.0
    %1565 = vmatpush1.msra.mxu0 0.0
    %1566 = vmatprep.subr.mxu0 0.0
    %1567 = vmatpush1.msra.mxu0 0.0
    %1568 = vmatprep.subr.mxu0 0.0
    %1569 = vmatpush1.msra.mxu0 0.0
    %1570 = vmatprep.subr.mxu0 0.0
    %1571 = vmatpush1.msra.mxu0 0.0
    %1572 = vmatprep.subr.mxu0 0.0
    %1573 = vmatpush1.msra.mxu0 0.0
    %1574 = vmatprep.subr.mxu0 0.0
    %1575 = vmatpush1.msra.mxu0 0.0
    %1576 = vmatprep.subr.mxu0 0.0
    %1577 = vmatpush1.msra.mxu0 0.0
    %1578 = vmatprep.subr.mxu0 0.0
    %1579 = vmatpush1.msra.mxu0 0.0
    %1580 = vmatprep.subr.mxu0 0.0
    %1581 = vmatpush1.msra.mxu0 0.0
    %1582 = vmatprep.subr.mxu0 0.0
    %1583 = vmatpush1.msra.mxu0 0.0
    %1584 = vmatprep.subr.mxu0 0.0
    %1585 = vmatpush1.msra.mxu0 0.0
    %1586 = vmatprep.subr.mxu0 0.0
    %1587 = vmatpush1.msra.mxu0 0.0
    %1588 = vmatprep.subr.mxu0 0.0
    %1589 = vmatpush1.msra.mxu0 0.0
    %1590 = vmatprep.subr.mxu0 0.0
    %1591 = vmatpush1.msra.mxu0 0.0
    %1592 = vmatprep.subr.mxu0 0.0
    %1593 = vmatpush1.msra.mxu0 0.0
    %1594 = vmatprep.subr.mxu0 0.0
    %1595 = vmatpush1.msra.mxu0 0.0
    %1596 = vmatprep.subr.mxu0 0.0
    %1597 = vmatpush1.msra.mxu0 0.0
    %1598 = vmatprep.subr.mxu0 0.0
    %1599 = vmatpush1.msra.mxu0 0.0
    %1600 = vmatprep.subr.mxu0 0.0
    %1601 = vmatpush1.msra.mxu0 0.0
    %1602 = vmatprep.subr.mxu0 0.0
    %1603 = vmatpush1.msra.mxu0 0.0
    %1604 = vmatprep.subr.mxu0 0.0
    %1605 = vmatpush1.msra.mxu0 0.0
    %1606 = vmatprep.subr.mxu0 0.0
    %1607 = vmatpush1.msra.mxu0 0.0
    %1608 = vmatprep.subr.mxu0 0.0
    %1609 = vmatpush1.msra.mxu0 0.0
    %1610 = vmatprep.subr.mxu0 0.0
    %1611 = vmatpush1.msra.mxu0 0.0
    %1612 = vmatprep.subr.mxu0 0.0
    %1613 = vmatpush1.msra.mxu0 0.0
    %1614 = vmatprep.subr.mxu0 0.0
    %1615 = vmatpush1.msra.mxu0 0.0
    %1616 = vmatprep.subr.mxu0 0.0
    %1617 = vmatpush1.msra.mxu0 0.0
    %1618 = vmatprep.subr.mxu0 0.0
    %1619 = vmatpush1.msra.mxu0 0.0
    %1620 = vmatprep.mubr.f32.mxu0 0.0
    %1621 = vmatmul.mubr.f32.gmra.mrb[0].mxu0 %v1551
    %v1622 = vpop.f32.mrb[0].mxu0
    %v1623 = vadd.f32 0.0, %v1622
    %v1624 = vpop.f32.mrb[0].mxu0
    %1625 = vmatprep.mubr.f32.mxu0 0.0
    %1626 = vmatmul.mubr.f32.gmra.mrb[0].mxu0 %v1554
    %v1627 = vpop.f32.mrb[0].mxu0
    %v1628 = vadd.f32 0.0, %v1627
    %v1629 = vpop.f32.mrb[0].mxu0
    %1630 = vdwg.mxu0
    %v1631 = vld [vmem:[#allocation2 + $0xb8] sm:$0xff]
    %v1633 = vsel %vm409, %v1623, 0
    %v1636 = vsel %vm409, %v1628, 0
    %1638 = vmatprep.subr.mxu0 0.0
    %1639 = vmatpush1.msra.mxu0 %v1631
    %1640 = vmatprep.subr.mxu0 0.0
    %1641 = vmatpush1.msra.mxu0 0.0
    %1642 = vmatprep.subr.mxu0 0.0
    %1643 = vmatpush1.msra.mxu0 0.0
    %1644 = vmatprep.subr.mxu0 0.0
    %1645 = vmatpush1.msra.mxu0 0.0
    %1646 = vmatprep.subr.mxu0 0.0
    %1647 = vmatpush1.msra.mxu0 0.0
    %1648 = vmatprep.subr.mxu0 0.0
    %1649 = vmatpush1.msra.mxu0 0.0
    %1650 = vmatprep.subr.mxu0 0.0
    %1651 = vmatpush1.msra.mxu0 0.0
    %1652 = vmatprep.subr.mxu0 0.0
    %1653 = vmatpush1.msra.mxu0 0.0
    %1654 = vmatprep.subr.mxu0 0.0
    %1655 = vmatpush1.msra.mxu0 0.0
    %1656 = vmatprep.subr.mxu0 0.0
    %1657 = vmatpush1.msra.mxu0 0.0
    %1658 = vmatprep.subr.mxu0 0.0
    %1659 = vmatpush1.msra.mxu0 0.0
    %1660 = vmatprep.subr.mxu0 0.0
    %1661 = vmatpush1.msra.mxu0 0.0
    %1662 = vmatprep.subr.mxu0 0.0
    %1663 = vmatpush1.msra.mxu0 0.0
    %1664 = vmatprep.subr.mxu0 0.0
    %1665 = vmatpush1.msra.mxu0 0.0
    %1666 = vmatprep.subr.mxu0 0.0
    %1667 = vmatpush1.msra.mxu0 0.0
    %1668 = vmatprep.subr.mxu0 0.0
    %1669 = vmatpush1.msra.mxu0 0.0
    %1670 = vmatprep.subr.mxu0 0.0
    %1671 = vmatpush1.msra.mxu0 0.0
    %1672 = vmatprep.subr.mxu0 0.0
    %1673 = vmatpush1.msra.mxu0 0.0
    %1674 = vmatprep.subr.mxu0 0.0
    %1675 = vmatpush1.msra.mxu0 0.0
    %1676 = vmatprep.subr.mxu0 0.0
    %1677 = vmatpush1.msra.mxu0 0.0
    %1678 = vmatprep.subr.mxu0 0.0
    %1679 = vmatpush1.msra.mxu0 0.0
    %1680 = vmatprep.subr.mxu0 0.0
    %1681 = vmatpush1.msra.mxu0 0.0
    %1682 = vmatprep.subr.mxu0 0.0
    %1683 = vmatpush1.msra.mxu0 0.0
    %1684 = vmatprep.subr.mxu0 0.0
    %1685 = vmatpush1.msra.mxu0 0.0
    %1686 = vmatprep.subr.mxu0 0.0
    %1687 = vmatpush1.msra.mxu0 0.0
    %1688 = vmatprep.subr.mxu0 0.0
    %1689 = vmatpush1.msra.mxu0 0.0
    %1690 = vmatprep.subr.mxu0 0.0
    %1691 = vmatpush1.msra.mxu0 0.0
    %1692 = vmatprep.subr.mxu0 0.0
    %1693 = vmatpush1.msra.mxu0 0.0
    %1694 = vmatprep.subr.mxu0 0.0
    %1695 = vmatpush1.msra.mxu0 0.0
    %1696 = vmatprep.subr.mxu0 0.0
    %1697 = vmatpush1.msra.mxu0 0.0
    %1698 = vmatprep.subr.mxu0 0.0
    %1699 = vmatpush1.msra.mxu0 0.0
    %1700 = vmatprep.subr.mxu0 0.0
    %1701 = vmatpush1.msra.mxu0 0.0
    %1702 = vmatprep.mubr.f32.mxu0 0.0
    %1703 = vmatmul.mubr.f32.gmra.mrb[0].mxu0 %v1633
    %v1704 = vpop.f32.mrb[0].mxu0
    %v1705 = vadd.f32 0.0, %v1704
    %v1706 = vpop.f32.mrb[0].mxu0
    %1707 = vmatprep.mubr.f32.mxu0 0.0
    %1708 = vmatmul.mubr.f32.gmra.mrb[0].mxu0 %v1636
    %v1709 = vpop.f32.mrb[0].mxu0
    %v1710 = vadd.f32 0.0, %v1709
    %v1711 = vpop.f32.mrb[0].mxu0
    %1712 = vdwg.mxu0
    %v1713 = vadd.f32 %v1192, %v1705
    %v1714 = vadd.f32 %v1197, %v1710
    %v1715 = vld [vmem:[#allocation2 + $0x90] sm:$0xff]
    %v1716 = vld [vmem:[#allocation2 + $0x98] sm:$0xff]
    %v1717 = vld [vmem:[#allocation2 + $0xa0] sm:$0xff]
    %v1719 = vsel %vm126, %v1715, 0
    %1721 = vmatprep.subr.mxu0 0.0
    %1722 = vmatpush1.xpose.msra.mxu0 %v1719
    %1723 = vmatprep.subr.mxu0 0.0
    %1724 = vmatpush1.xpose.msra.mxu0 0.0
    %1725 = vmatprep.subr.mxu0 0.0
    %1726 = vmatpush1.xpose.msra.mxu0 0.0
    %1727 = vmatprep.subr.mxu0 0.0
    %1728 = vmatpush1.xpose.msra.mxu0 0.0
    %1729 = vmatprep.subr.mxu0 0.0
    %1730 = vmatpush1.xpose.msra.mxu0 0.0
    %1731 = vmatprep.subr.mxu0 0.0
    %1732 = vmatpush1.xpose.msra.mxu0 0.0
    %1733 = vmatprep.subr.mxu0 0.0
    %1734 = vmatpush1.xpose.msra.mxu0 0.0
    %1735 = vmatprep.subr.mxu0 0.0
    %1736 = vmatpush1.xpose.msra.mxu0 0.0
    %1737 = vmatprep.subr.mxu0 0.0
    %1738 = vmatpush1.xpose.msra.mxu0 0.0
    %1739 = vmatprep.subr.mxu0 0.0
    %1740 = vmatpush1.xpose.msra.mxu0 0.0
    %1741 = vmatprep.subr.mxu0 0.0
    %1742 = vmatpush1.xpose.msra.mxu0 0.0
    %1743 = vmatprep.subr.mxu0 0.0
    %1744 = vmatpush1.xpose.msra.mxu0 0.0
    %1745 = vmatprep.subr.mxu0 0.0
    %1746 = vmatpush1.xpose.msra.mxu0 0.0
    %1747 = vmatprep.subr.mxu0 0.0
    %1748 = vmatpush1.xpose.msra.mxu0 0.0
    %1749 = vmatprep.subr.mxu0 0.0
    %1750 = vmatpush1.xpose.msra.mxu0 0.0
    %1751 = vmatprep.subr.mxu0 0.0
    %1752 = vmatpush1.xpose.msra.mxu0 0.0
    %1753 = vmatprep.subr.mxu0 0.0
    %1754 = vmatpush1.xpose.msra.mxu0 0.0
    %1755 = vmatprep.subr.mxu0 0.0
    %1756 = vmatpush1.xpose.msra.mxu0 0.0
    %1757 = vmatprep.subr.mxu0 0.0
    %1758 = vmatpush1.xpose.msra.mxu0 0.0
    %1759 = vmatprep.subr.mxu0 0.0
    %1760 = vmatpush1.xpose.msra.mxu0 0.0
    %1761 = vmatprep.subr.mxu0 0.0
    %1762 = vmatpush1.xpose.msra.mxu0 0.0
    %1763 = vmatprep.subr.mxu0 0.0
    %1764 = vmatpush1.xpose.msra.mxu0 0.0
    %1765 = vmatprep.subr.mxu0 0.0
    %1766 = vmatpush1.xpose.msra.mxu0 0.0
    %1767 = vmatprep.subr.mxu0 0.0
    %1768 = vmatpush1.xpose.msra.mxu0 0.0
    %1769 = vmatprep.subr.mxu0 0.0
    %1770 = vmatpush1.xpose.msra.mxu0 0.0
    %1771 = vmatprep.subr.mxu0 0.0
    %1772 = vmatpush1.xpose.msra.mxu0 0.0
    %1773 = vmatprep.subr.mxu0 0.0
    %1774 = vmatpush1.xpose.msra.mxu0 0.0
    %1775 = vmatprep.subr.mxu0 0.0
    %1776 = vmatpush1.xpose.msra.mxu0 0.0
    %1777 = vmatprep.subr.mxu0 0.0
    %1778 = vmatpush1.xpose.msra.mxu0 0.0
    %1779 = vmatprep.subr.mxu0 0.0
    %1780 = vmatpush1.xpose.msra.mxu0 0.0
    %1781 = vmatprep.subr.mxu0 0.0
    %1782 = vmatpush1.xpose.msra.mxu0 0.0
    %1783 = vmatprep.subr.mxu0 0.0
    %1784 = vmatpush1.xpose.msra.mxu0 0.0
    %1785 = vmatprep.mubr.f32.mxu0 0.0
    %1786 = vmatmul.mubr.f32.gmra.mrb[0].mxu0 %v170
    %v1787 = vpop.f32.mrb[0].mxu0
    %v1788 = vadd.f32 0.0, %v1787
    %v1789 = vpop.f32.mrb[0].mxu0
    %1790 = vmatprep.mubr.f32.mxu0 0.0
    %1791 = vmatmul.mubr.f32.gmra.mrb[0].mxu0 %v173
    %v1792 = vpop.f32.mrb[0].mxu0
    %v1793 = vadd.f32 0.0, %v1792
    %v1794 = vpop.f32.mrb[0].mxu0
    %1795 = vdwg.mxu0
    %v1797 = vsel %vm126, %v1716, 0
    %1799 = vmatprep.subr.mxu0 0.0
    %1800 = vmatpush1.xpose.msra.mxu0 %v1797
    %1801 = vmatprep.subr.mxu0 0.0
    %1802 = vmatpush1.xpose.msra.mxu0 0.0
    %1803 = vmatprep.subr.mxu0 0.0
    %1804 = vmatpush1.xpose.msra.mxu0 0.0
    %1805 = vmatprep.subr.mxu0 0.0
    %1806 = vmatpush1.xpose.msra.mxu0 0.0
    %1807 = vmatprep.subr.mxu0 0.0
    %1808 = vmatpush1.xpose.msra.mxu0 0.0
    %1809 = vmatprep.subr.mxu0 0.0
    %1810 = vmatpush1.xpose.msra.mxu0 0.0
    %1811 = vmatprep.subr.mxu0 0.0
    %1812 = vmatpush1.xpose.msra.mxu0 0.0
    %1813 = vmatprep.subr.mxu0 0.0
    %1814 = vmatpush1.xpose.msra.mxu0 0.0
    %1815 = vmatprep.subr.mxu0 0.0
    %1816 = vmatpush1.xpose.msra.mxu0 0.0
    %1817 = vmatprep.subr.mxu0 0.0
    %1818 = vmatpush1.xpose.msra.mxu0 0.0
    %1819 = vmatprep.subr.mxu0 0.0
    %1820 = vmatpush1.xpose.msra.mxu0 0.0
    %1821 = vmatprep.subr.mxu0 0.0
    %1822 = vmatpush1.xpose.msra.mxu0 0.0
    %1823 = vmatprep.subr.mxu0 0.0
    %1824 = vmatpush1.xpose.msra.mxu0 0.0
    %1825 = vmatprep.subr.mxu0 0.0
    %1826 = vmatpush1.xpose.msra.mxu0 0.0
    %1827 = vmatprep.subr.mxu0 0.0
    %1828 = vmatpush1.xpose.msra.mxu0 0.0
    %1829 = vmatprep.subr.mxu0 0.0
    %1830 = vmatpush1.xpose.msra.mxu0 0.0
    %1831 = vmatprep.subr.mxu0 0.0
    %1832 = vmatpush1.xpose.msra.mxu0 0.0
    %1833 = vmatprep.subr.mxu0 0.0
    %1834 = vmatpush1.xpose.msra.mxu0 0.0
    %1835 = vmatprep.subr.mxu0 0.0
    %1836 = vmatpush1.xpose.msra.mxu0 0.0
    %1837 = vmatprep.subr.mxu0 0.0
    %1838 = vmatpush1.xpose.msra.mxu0 0.0
    %1839 = vmatprep.subr.mxu0 0.0
    %1840 = vmatpush1.xpose.msra.mxu0 0.0
    %1841 = vmatprep.subr.mxu0 0.0
    %1842 = vmatpush1.xpose.msra.mxu0 0.0
    %1843 = vmatprep.subr.mxu0 0.0
    %1844 = vmatpush1.xpose.msra.mxu0 0.0
    %1845 = vmatprep.subr.mxu0 0.0
    %1846 = vmatpush1.xpose.msra.mxu0 0.0
    %1847 = vmatprep.subr.mxu0 0.0
    %1848 = vmatpush1.xpose.msra.mxu0 0.0
    %1849 = vmatprep.subr.mxu0 0.0
    %1850 = vmatpush1.xpose.msra.mxu0 0.0
    %1851 = vmatprep.subr.mxu0 0.0
    %1852 = vmatpush1.xpose.msra.mxu0 0.0
    %1853 = vmatprep.subr.mxu0 0.0
    %1854 = vmatpush1.xpose.msra.mxu0 0.0
    %1855 = vmatprep.subr.mxu0 0.0
    %1856 = vmatpush1.xpose.msra.mxu0 0.0
    %1857 = vmatprep.subr.mxu0 0.0
    %1858 = vmatpush1.xpose.msra.mxu0 0.0
    %1859 = vmatprep.subr.mxu0 0.0
    %1860 = vmatpush1.xpose.msra.mxu0 0.0
    %1861 = vmatprep.subr.mxu0 0.0
    %1862 = vmatpush1.xpose.msra.mxu0 0.0
    %1863 = vmatprep.mubr.f32.mxu0 0.0
    %1864 = vmatmul.mubr.f32.gmra.mrb[0].mxu0 %v170
    %v1865 = vpop.f32.mrb[0].mxu0
    %v1866 = vadd.f32 0.0, %v1865
    %v1867 = vpop.f32.mrb[0].mxu0
    %1868 = vmatprep.mubr.f32.mxu0 0.0
    %1869 = vmatmul.mubr.f32.gmra.mrb[0].mxu0 %v173
    %v1870 = vpop.f32.mrb[0].mxu0
    %v1871 = vadd.f32 0.0, %v1870
    %v1872 = vpop.f32.mrb[0].mxu0
    %1873 = vdwg.mxu0
    %v1875 = vsel %vm126, %v1717, 0
    %1877 = vmatprep.subr.mxu0 0.0
    %1878 = vmatpush1.xpose.msra.mxu0 %v1875
    %1879 = vmatprep.subr.mxu0 0.0
    %1880 = vmatpush1.xpose.msra.mxu0 0.0
    %1881 = vmatprep.subr.mxu0 0.0
    %1882 = vmatpush1.xpose.msra.mxu0 0.0
    %1883 = vmatprep.subr.mxu0 0.0
    %1884 = vmatpush1.xpose.msra.mxu0 0.0
    %1885 = vmatprep.subr.mxu0 0.0
    %1886 = vmatpush1.xpose.msra.mxu0 0.0
    %1887 = vmatprep.subr.mxu0 0.0
    %1888 = vmatpush1.xpose.msra.mxu0 0.0
    %1889 = vmatprep.subr.mxu0 0.0
    %1890 = vmatpush1.xpose.msra.mxu0 0.0
    %1891 = vmatprep.subr.mxu0 0.0
    %1892 = vmatpush1.xpose.msra.mxu0 0.0
    %1893 = vmatprep.subr.mxu0 0.0
    %1894 = vmatpush1.xpose.msra.mxu0 0.0
    %1895 = vmatprep.subr.mxu0 0.0
    %1896 = vmatpush1.xpose.msra.mxu0 0.0
    %1897 = vmatprep.subr.mxu0 0.0
    %1898 = vmatpush1.xpose.msra.mxu0 0.0
    %1899 = vmatprep.subr.mxu0 0.0
    %1900 = vmatpush1.xpose.msra.mxu0 0.0
    %1901 = vmatprep.subr.mxu0 0.0
    %1902 = vmatpush1.xpose.msra.mxu0 0.0
    %1903 = vmatprep.subr.mxu0 0.0
    %1904 = vmatpush1.xpose.msra.mxu0 0.0
    %1905 = vmatprep.subr.mxu0 0.0
    %1906 = vmatpush1.xpose.msra.mxu0 0.0
    %1907 = vmatprep.subr.mxu0 0.0
    %1908 = vmatpush1.xpose.msra.mxu0 0.0
    %1909 = vmatprep.subr.mxu0 0.0
    %1910 = vmatpush1.xpose.msra.mxu0 0.0
    %1911 = vmatprep.subr.mxu0 0.0
    %1912 = vmatpush1.xpose.msra.mxu0 0.0
    %1913 = vmatprep.subr.mxu0 0.0
    %1914 = vmatpush1.xpose.msra.mxu0 0.0
    %1915 = vmatprep.subr.mxu0 0.0
    %1916 = vmatpush1.xpose.msra.mxu0 0.0
    %1917 = vmatprep.subr.mxu0 0.0
    %1918 = vmatpush1.xpose.msra.mxu0 0.0
    %1919 = vmatprep.subr.mxu0 0.0
    %1920 = vmatpush1.xpose.msra.mxu0 0.0
    %1921 = vmatprep.subr.mxu0 0.0
    %1922 = vmatpush1.xpose.msra.mxu0 0.0
    %1923 = vmatprep.subr.mxu0 0.0
    %1924 = vmatpush1.xpose.msra.mxu0 0.0
    %1925 = vmatprep.subr.mxu0 0.0
    %1926 = vmatpush1.xpose.msra.mxu0 0.0
    %1927 = vmatprep.subr.mxu0 0.0
    %1928 = vmatpush1.xpose.msra.mxu0 0.0
    %1929 = vmatprep.subr.mxu0 0.0
    %1930 = vmatpush1.xpose.msra.mxu0 0.0
    %1931 = vmatprep.subr.mxu0 0.0
    %1932 = vmatpush1.xpose.msra.mxu0 0.0
    %1933 = vmatprep.subr.mxu0 0.0
    %1934 = vmatpush1.xpose.msra.mxu0 0.0
    %1935 = vmatprep.subr.mxu0 0.0
    %1936 = vmatpush1.xpose.msra.mxu0 0.0
    %1937 = vmatprep.subr.mxu0 0.0
    %1938 = vmatpush1.xpose.msra.mxu0 0.0
    %1939 = vmatprep.subr.mxu0 0.0
    %1940 = vmatpush1.xpose.msra.mxu0 0.0
    %1941 = vmatprep.mubr.f32.mxu0 0.0
    %1942 = vmatmul.mubr.f32.gmra.mrb[0].mxu0 %v170
    %v1943 = vpop.f32.mrb[0].mxu0
    %v1944 = vadd.f32 0.0, %v1943
    %v1945 = vpop.f32.mrb[0].mxu0
    %1946 = vmatprep.mubr.f32.mxu0 0.0
    %1947 = vmatmul.mubr.f32.gmra.mrb[0].mxu0 %v173
    %v1948 = vpop.f32.mrb[0].mxu0
    %v1949 = vadd.f32 0.0, %v1948
    %v1950 = vpop.f32.mrb[0].mxu0
    %1951 = vdwg.mxu0
    %v1953 = vsel %vm409, %v1866, 0
    %v1956 = vsel %vm409, %v1871, 0
    %v1959 = vsel %vm409, %v1788, 0
    %v1962 = vsel %vm409, %v1793, 0
    %1964 = vmatprep.subr.mxu0 0.0
    %1965 = vmatpush1.xpose.msra.mxu0 %v1959
    %1966 = vmatprep.subr.mxu0 0.0
    %1967 = vmatpush1.xpose.msra.mxu0 %v1962
    %1968 = vmatprep.subr.mxu0 0.0
    %1969 = vmatpush1.xpose.msra.mxu0 0.0
    %1970 = vmatprep.subr.mxu0 0.0
    %1971 = vmatpush1.xpose.msra.mxu0 0.0
    %1972 = vmatprep.subr.mxu0 0.0
    %1973 = vmatpush1.xpose.msra.mxu0 0.0
    %1974 = vmatprep.subr.mxu0 0.0
    %1975 = vmatpush1.xpose.msra.mxu0 0.0
    %1976 = vmatprep.subr.mxu0 0.0
    %1977 = vmatpush1.xpose.msra.mxu0 0.0
    %1978 = vmatprep.subr.mxu0 0.0
    %1979 = vmatpush1.xpose.msra.mxu0 0.0
    %1980 = vmatprep.subr.mxu0 0.0
    %1981 = vmatpush1.xpose.msra.mxu0 0.0
    %1982 = vmatprep.subr.mxu0 0.0
    %1983 = vmatpush1.xpose.msra.mxu0 0.0
    %1984 = vmatprep.subr.mxu0 0.0
    %1985 = vmatpush1.xpose.msra.mxu0 0.0
    %1986 = vmatprep.subr.mxu0 0.0
    %1987 = vmatpush1.xpose.msra.mxu0 0.0
    %1988 = vmatprep.subr.mxu0 0.0
    %1989 = vmatpush1.xpose.msra.mxu0 0.0
    %1990 = vmatprep.subr.mxu0 0.0
    %1991 = vmatpush1.xpose.msra.mxu0 0.0
    %1992 = vmatprep.subr.mxu0 0.0
    %1993 = vmatpush1.xpose.msra.mxu0 0.0
    %1994 = vmatprep.subr.mxu0 0.0
    %1995 = vmatpush1.xpose.msra.mxu0 0.0
    %1996 = vmatprep.subr.mxu0 0.0
    %1997 = vmatpush1.xpose.msra.mxu0 0.0
    %1998 = vmatprep.subr.mxu0 0.0
    %1999 = vmatpush1.xpose.msra.mxu0 0.0
    %2000 = vmatprep.subr.mxu0 0.0
    %2001 = vmatpush1.xpose.msra.mxu0 0.0
    %2002 = vmatprep.subr.mxu0 0.0
    %2003 = vmatpush1.xpose.msra.mxu0 0.0
    %2004 = vmatprep.subr.mxu0 0.0
    %2005 = vmatpush1.xpose.msra.mxu0 0.0
    %2006 = vmatprep.subr.mxu0 0.0
    %2007 = vmatpush1.xpose.msra.mxu0 0.0
    %2008 = vmatprep.subr.mxu0 0.0
    %2009 = vmatpush1.xpose.msra.mxu0 0.0
    %2010 = vmatprep.subr.mxu0 0.0
    %2011 = vmatpush1.xpose.msra.mxu0 0.0
    %2012 = vmatprep.subr.mxu0 0.0
    %2013 = vmatpush1.xpose.msra.mxu0 0.0
    %2014 = vmatprep.subr.mxu0 0.0
    %2015 = vmatpush1.xpose.msra.mxu0 0.0
    %2016 = vmatprep.subr.mxu0 0.0
    %2017 = vmatpush1.xpose.msra.mxu0 0.0
    %2018 = vmatprep.subr.mxu0 0.0
    %2019 = vmatpush1.xpose.msra.mxu0 0.0
    %2020 = vmatprep.subr.mxu0 0.0
    %2021 = vmatpush1.xpose.msra.mxu0 0.0
    %2022 = vmatprep.subr.mxu0 0.0
    %2023 = vmatpush1.xpose.msra.mxu0 0.0
    %2024 = vmatprep.subr.mxu0 0.0
    %2025 = vmatpush1.xpose.msra.mxu0 0.0
    %2026 = vmatprep.subr.mxu0 0.0
    %2027 = vmatpush1.xpose.msra.mxu0 0.0
    %2028 = vmatprep.mubr.f32.mxu0 0.0
    %2029 = vmatmul.mubr.f32.gmra.mrb[0].mxu0 %v1953
    %v2030 = vpop.f32.mrb[0].mxu0
    %v2031 = vadd.f32 0.0, %v2030
    %v2032 = vpop.f32.mrb[0].mxu0
    %2033 = vmatprep.mubr.f32.mxu0 0.0
    %2034 = vmatmul.mubr.f32.gmra.mrb[0].mxu0 %v1956
    %v2035 = vpop.f32.mrb[0].mxu0
    %v2036 = vadd.f32 0.0, %v2035
    %v2037 = vpop.f32.mrb[0].mxu0
    %2038 = vdwg.mxu0
    %v2039 = vmul.f32 %v2031, 0.17677669
    %v2040 = vmul.f32 %v2036, 0.17677669
    %v2041 = vadd.f32 %v2039, %v122
    %v2042 = vadd.f32 %v2040, %v123
    %v2043 = vsel %vm501, %v2041, -inf
    %2044 = vmax.xlane.f32.xlu0 %v2043
    %v2045 = vpop.xlane.xlu0 %2044
    %v2046 = vsel %vm501, %v2042, -inf
    %2047 = vmax.xlane.f32.xlu0 %v2046
    %v2048 = vpop.xlane.xlu0 %2047
    %v2049 = vsub.f32 %v2041, %v2045
    %v2050 = vsub.f32 %v2042, %v2048
    %v2051 = vmul.f32 %v2049, 1.442695
    %v2052 = vpow.pop %v2051
    %v2053 = vmul.f32 %v2050, 1.442695
    %v2054 = vpow.pop %v2053
    %v2055 = vsel %vm501, %v2052, 0.0
    %2056 = vadd.xlane.f32.xlu0 %v2055
    %v2057 = vpop.xlane.xlu0 %2056
    %v2058 = vsel %vm501, %v2054, 0.0
    %2059 = vadd.xlane.f32.xlu0 %v2058
    %v2060 = vpop.xlane.xlu0 %2059
    %v2061 = vrcp.pop %v2057
    %v2062 = vmul.f32 %v2052, %v2061
    %v2063 = vrcp.pop %v2060
    %v2064 = vmul.f32 %v2054, %v2063
    %v2066 = vsel %vm501, %v2062, 0
    %v2069 = vsel %vm501, %v2064, 0
    %2071 = vmatprep.subr.mxu0 0.0
    %2072 = vmatpush1.msra.mxu0 %v1944
    %2073 = vmatprep.subr.mxu0 0.0
    %2074 = vmatpush1.msra.mxu0 %v1949
    %2075 = vmatprep.subr.mxu0 0.0
    %2076 = vmatpush1.msra.mxu0 0.0
    %2077 = vmatprep.subr.mxu0 0.0
    %2078 = vmatpush1.msra.mxu0 0.0
    %2079 = vmatprep.subr.mxu0 0.0
    %2080 = vmatpush1.msra.mxu0 0.0
    %2081 = vmatprep.subr.mxu0 0.0
    %2082 = vmatpush1.msra.mxu0 0.0
    %2083 = vmatprep.subr.mxu0 0.0
    %2084 = vmatpush1.msra.mxu0 0.0
    %2085 = vmatprep.subr.mxu0 0.0
    %2086 = vmatpush1.msra.mxu0 0.0
    %2087 = vmatprep.subr.mxu0 0.0
    %2088 = vmatpush1.msra.mxu0 0.0
    %2089 = vmatprep.subr.mxu0 0.0
    %2090 = vmatpush1.msra.mxu0 0.0
    %2091 = vmatprep.subr.mxu0 0.0
    %2092 = vmatpush1.msra.mxu0 0.0
    %2093 = vmatprep.subr.mxu0 0.0
    %2094 = vmatpush1.msra.mxu0 0.0
    %2095 = vmatprep.subr.mxu0 0.0
    %2096 = vmatpush1.msra.mxu0 0.0
    %2097 = vmatprep.subr.mxu0 0.0
    %2098 = vmatpush1.msra.mxu0 0.0
    %2099 = vmatprep.subr.mxu0 0.0
    %2100 = vmatpush1.msra.mxu0 0.0
    %2101 = vmatprep.subr.mxu0 0.0
    %2102 = vmatpush1.msra.mxu0 0.0
    %2103 = vmatprep.subr.mxu0 0.0
    %2104 = vmatpush1.msra.mxu0 0.0
    %2105 = vmatprep.subr.mxu0 0.0
    %2106 = vmatpush1.msra.mxu0 0.0
    %2107 = vmatprep.subr.mxu0 0.0
    %2108 = vmatpush1.msra.mxu0 0.0
    %2109 = vmatprep.subr.mxu0 0.0
    %2110 = vmatpush1.msra.mxu0 0.0
    %2111 = vmatprep.subr.mxu0 0.0
    %2112 = vmatpush1.msra.mxu0 0.0
    %2113 = vmatprep.subr.mxu0 0.0
    %2114 = vmatpush1.msra.mxu0 0.0
    %2115 = vmatprep.subr.mxu0 0.0
    %2116 = vmatpush1.msra.mxu0 0.0
    %2117 = vmatprep.subr.mxu0 0.0
    %2118 = vmatpush1.msra.mxu0 0.0
    %2119 = vmatprep.subr.mxu0 0.0
    %2120 = vmatpush1.msra.mxu0 0.0
    %2121 = vmatprep.subr.mxu0 0.0
    %2122 = vmatpush1.msra.mxu0 0.0
    %2123 = vmatprep.subr.mxu0 0.0
    %2124 = vmatpush1.msra.mxu0 0.0
    %2125 = vmatprep.subr.mxu0 0.0
    %2126 = vmatpush1.msra.mxu0 0.0
    %2127 = vmatprep.subr.mxu0 0.0
    %2128 = vmatpush1.msra.mxu0 0.0
    %2129 = vmatprep.subr.mxu0 0.0
    %2130 = vmatpush1.msra.mxu0 0.0
    %2131 = vmatprep.subr.mxu0 0.0
    %2132 = vmatpush1.msra.mxu0 0.0
    %2133 = vmatprep.subr.mxu0 0.0
    %2134 = vmatpush1.msra.mxu0 0.0
    %2135 = vmatprep.mubr.f32.mxu0 0.0
    %2136 = vmatmul.mubr.f32.gmra.mrb[0].mxu0 %v2066
    %v2137 = vpop.f32.mrb[0].mxu0
    %v2138 = vadd.f32 0.0, %v2137
    %v2139 = vpop.f32.mrb[0].mxu0
    %2140 = vmatprep.mubr.f32.mxu0 0.0
    %2141 = vmatmul.mubr.f32.gmra.mrb[0].mxu0 %v2069
    %v2142 = vpop.f32.mrb[0].mxu0
    %v2143 = vadd.f32 0.0, %v2142
    %v2144 = vpop.f32.mrb[0].mxu0
    %2145 = vdwg.mxu0
    %v2146 = vld [vmem:[#allocation2 + $0xc0] sm:$0xff]
    %v2148 = vsel %vm409, %v2138, 0
    %v2151 = vsel %vm409, %v2143, 0
    %2153 = vmatprep.subr.mxu0 0.0
    %2154 = vmatpush1.msra.mxu0 %v2146
    %2155 = vmatprep.subr.mxu0 0.0
    %2156 = vmatpush1.msra.mxu0 0.0
    %2157 = vmatprep.subr.mxu0 0.0
    %2158 = vmatpush1.msra.mxu0 0.0
    %2159 = vmatprep.subr.mxu0 0.0
    %2160 = vmatpush1.msra.mxu0 0.0
    %2161 = vmatprep.subr.mxu0 0.0
    %2162 = vmatpush1.msra.mxu0 0.0
    %2163 = vmatprep.subr.mxu0 0.0
    %2164 = vmatpush1.msra.mxu0 0.0
    %2165 = vmatprep.subr.mxu0 0.0
    %2166 = vmatpush1.msra.mxu0 0.0
    %2167 = vmatprep.subr.mxu0 0.0
    %2168 = vmatpush1.msra.mxu0 0.0
    %2169 = vmatprep.subr.mxu0 0.0
    %2170 = vmatpush1.msra.mxu0 0.0
    %2171 = vmatprep.subr.mxu0 0.0
    %2172 = vmatpush1.msra.mxu0 0.0
    %2173 = vmatprep.subr.mxu0 0.0
    %2174 = vmatpush1.msra.mxu0 0.0
    %2175 = vmatprep.subr.mxu0 0.0
    %2176 = vmatpush1.msra.mxu0 0.0
    %2177 = vmatprep.subr.mxu0 0.0
    %2178 = vmatpush1.msra.mxu0 0.0
    %2179 = vmatprep.subr.mxu0 0.0
    %2180 = vmatpush1.msra.mxu0 0.0
    %2181 = vmatprep.subr.mxu0 0.0
    %2182 = vmatpush1.msra.mxu0 0.0
    %2183 = vmatprep.subr.mxu0 0.0
    %2184 = vmatpush1.msra.mxu0 0.0
    %2185 = vmatprep.subr.mxu0 0.0
    %2186 = vmatpush1.msra.mxu0 0.0
    %2187 = vmatprep.subr.mxu0 0.0
    %2188 = vmatpush1.msra.mxu0 0.0
    %2189 = vmatprep.subr.mxu0 0.0
    %2190 = vmatpush1.msra.mxu0 0.0
    %2191 = vmatprep.subr.mxu0 0.0
    %2192 = vmatpush1.msra.mxu0 0.0
    %2193 = vmatprep.subr.mxu0 0.0
    %2194 = vmatpush1.msra.mxu0 0.0
    %2195 = vmatprep.subr.mxu0 0.0
    %2196 = vmatpush1.msra.mxu0 0.0
    %2197 = vmatprep.subr.mxu0 0.0
    %2198 = vmatpush1.msra.mxu0 0.0
    %2199 = vmatprep.subr.mxu0 0.0
    %2200 = vmatpush1.msra.mxu0 0.0
    %2201 = vmatprep.subr.mxu0 0.0
    %2202 = vmatpush1.msra.mxu0 0.0
    %2203 = vmatprep.subr.mxu0 0.0
    %2204 = vmatpush1.msra.mxu0 0.0
    %2205 = vmatprep.subr.mxu0 0.0
    %2206 = vmatpush1.msra.mxu0 0.0
    %2207 = vmatprep.subr.mxu0 0.0
    %2208 = vmatpush1.msra.mxu0 0.0
    %2209 = vmatprep.subr.mxu0 0.0
    %2210 = vmatpush1.msra.mxu0 0.0
    %2211 = vmatprep.subr.mxu0 0.0
    %2212 = vmatpush1.msra.mxu0 0.0
    %2213 = vmatprep.subr.mxu0 0.0
    %2214 = vmatpush1.msra.mxu0 0.0
    %2215 = vmatprep.subr.mxu0 0.0
    %2216 = vmatpush1.msra.mxu0 0.0
    %2217 = vmatprep.mubr.f32.mxu0 0.0
    %2218 = vmatmul.mubr.f32.gmra.mrb[0].mxu0 %v2148
    %v2219 = vpop.f32.mrb[0].mxu0
    %v2220 = vadd.f32 0.0, %v2219
    %v2221 = vpop.f32.mrb[0].mxu0
    %2222 = vmatprep.mubr.f32.mxu0 0.0
    %2223 = vmatmul.mubr.f32.gmra.mrb[0].mxu0 %v2151
    %v2224 = vpop.f32.mrb[0].mxu0
    %v2225 = vadd.f32 0.0, %v2224
    %v2226 = vpop.f32.mrb[0].mxu0
    %2227 = vdwg.mxu0
    %v2228 = vadd.f32 %v1713, %v2220
    %v2229 = vadd.f32 %v1714, %v2225
    %v2230 = vadd.f32 %v114, %v2228
    %v2231 = vadd.f32 %v119, %v2229
    %v2232 = vld [vmem:[#allocation2 + $0x42] sm:$0x1]
    %v2233 = vlaneseq
    %v2234 = vshrl.u32 %v2233, 7
    %v2235 = vsub.s32 0, %v2234
    %v2236 = vrot.slane %v2232, %v2235
    %v2237 = vadd.f32 %v2230, %v2236
    %v2238 = vadd.f32 %v2231, %v2236
    %v2239 = vld [vmem:[#allocation2 + $0x43] sm:$0x1]
    %v2240 = vld [vmem:[#allocation2 + $0x44] sm:$0x1]
    %v2241 = vsel %vm126, %v2237, 0.0
    %2242 = vadd.xlane.f32.xlu0 %v2241
    %v2243 = vpop.xlane.xlu0 %2242
    %v2244 = vsel %vm126, %v2238, 0.0
    %2245 = vadd.xlane.f32.xlu0 %v2244
    %v2246 = vpop.xlane.xlu0 %2245
    %v2247 = vmul.f32 %v2243, %v133
    %v2248 = vmul.f32 %v2246, %v133
    %v2249 = vsub.f32 %v2237, %v2247
    %v2250 = vsub.f32 %v2238, %v2248
    %v2251 = vmul.f32 %v2249, %v2249
    %v2252 = vmul.f32 %v2250, %v2250
    %v2253 = vsel %vm126, %v2251, 0.0
    %2254 = vadd.xlane.f32.xlu0 %v2253
    %v2255 = vpop.xlane.xlu0 %2254
    %v2256 = vsel %vm126, %v2252, 0.0
    %2257 = vadd.xlane.f32.xlu0 %v2256
    %v2258 = vpop.xlane.xlu0 %2257
    %v2259 = vmul.f32 %v2255, %v133
    %v2260 = vmul.f32 %v2258, %v133
    %v2261 = vadd.f32 %v2259, 1e-05
    %v2262 = vadd.f32 %v2260, 1e-05
    %v2263 = vrsqrt.pop %v2261
    %v2264 = vrsqrt.pop %v2262
    %v2265 = vmul.f32 %v2249, %v2263
    %v2266 = vmul.f32 %v2250, %v2264
    %v2267 = vlaneseq
    %v2268 = vshrl.u32 %v2267, 7
    %v2269 = vsub.s32 0, %v2268
    %v2270 = vrot.slane %v2239, %v2269
    %v2271 = vmul.f32 %v2265, %v2270
    %v2272 = vmul.f32 %v2266, %v2270
    %v2273 = vlaneseq
    %v2274 = vshrl.u32 %v2273, 7
    %v2275 = vsub.s32 0, %v2274
    %v2276 = vrot.slane %v2240, %v2275
    %v2277 = vadd.f32 %v2271, %v2276
    %v2278 = vadd.f32 %v2272, %v2276
    %v2279 = vld [vmem:[#allocation2 + $0xc8] sm:$0xff]
    %v2280 = vld [vmem:[#allocation2 + $0xd0] sm:$0xff]
    %v2281 = vld [vmem:[#allocation2 + $0xd8] sm:$0xff]
    %v2282 = vld [vmem:[#allocation2 + $0xe0] sm:$0xff]
    %v2283 = vld [vmem:[#allocation2 + $0x46] sm:$0x1]
    %v2284 = vlaneseq
    %v2285 = vshrl.u32 %v2284, 7
    %v2286 = vsub.s32 0, %v2285
    %v2287 = vrot.slane %v2283, %v2286
    %v2289 = vsel %vm126, %v2277, 0
    %v2292 = vsel %vm126, %v2278, 0
    %2294 = vmatprep.subr.mxu0 0.0
    %2295 = vmatpush1.msra.mxu0 %v2279
    %2296 = vmatprep.subr.mxu0 0.0
    %2297 = vmatpush1.msra.mxu0 %v2280
    %2298 = vmatprep.subr.mxu0 0.0
    %2299 = vmatpush1.msra.mxu0 %v2281
    %2300 = vmatprep.subr.mxu0 0.0
    %2301 = vmatpush1.msra.mxu0 %v2282
    %2302 = vmatprep.subr.mxu0 0.0
    %2303 = vmatpush1.msra.mxu0 0.0
    %2304 = vmatprep.subr.mxu0 0.0
    %2305 = vmatpush1.msra.mxu0 0.0
    %2306 = vmatprep.subr.mxu0 0.0
    %2307 = vmatpush1.msra.mxu0 0.0
    %2308 = vmatprep.subr.mxu0 0.0
    %2309 = vmatpush1.msra.mxu0 0.0
    %2310 = vmatprep.subr.mxu0 0.0
    %2311 = vmatpush1.msra.mxu0 0.0
    %2312 = vmatprep.subr.mxu0 0.0
    %2313 = vmatpush1.msra.mxu0 0.0
    %2314 = vmatprep.subr.mxu0 0.0
    %2315 = vmatpush1.msra.mxu0 0.0
    %2316 = vmatprep.subr.mxu0 0.0
    %2317 = vmatpush1.msra.mxu0 0.0
    %2318 = vmatprep.subr.mxu0 0.0
    %2319 = vmatpush1.msra.mxu0 0.0
    %2320 = vmatprep.subr.mxu0 0.0
    %2321 = vmatpush1.msra.mxu0 0.0
    %2322 = vmatprep.subr.mxu0 0.0
    %2323 = vmatpush1.msra.mxu0 0.0
    %2324 = vmatprep.subr.mxu0 0.0
    %2325 = vmatpush1.msra.mxu0 0.0
    %2326 = vmatprep.subr.mxu0 0.0
    %2327 = vmatpush1.msra.mxu0 0.0
    %2328 = vmatprep.subr.mxu0 0.0
    %2329 = vmatpush1.msra.mxu0 0.0
    %2330 = vmatprep.subr.mxu0 0.0
    %2331 = vmatpush1.msra.mxu0 0.0
    %2332 = vmatprep.subr.mxu0 0.0
    %2333 = vmatpush1.msra.mxu0 0.0
    %2334 = vmatprep.subr.mxu0 0.0
    %2335 = vmatpush1.msra.mxu0 0.0
    %2336 = vmatprep.subr.mxu0 0.0
    %2337 = vmatpush1.msra.mxu0 0.0
    %2338 = vmatprep.subr.mxu0 0.0
    %2339 = vmatpush1.msra.mxu0 0.0
    %2340 = vmatprep.subr.mxu0 0.0
    %2341 = vmatpush1.msra.mxu0 0.0
    %2342 = vmatprep.subr.mxu0 0.0
    %2343 = vmatpush1.msra.mxu0 0.0
    %2344 = vmatprep.subr.mxu0 0.0
    %2345 = vmatpush1.msra.mxu0 0.0
    %2346 = vmatprep.subr.mxu0 0.0
    %2347 = vmatpush1.msra.mxu0 0.0
    %2348 = vmatprep.subr.mxu0 0.0
    %2349 = vmatpush1.msra.mxu0 0.0
    %2350 = vmatprep.subr.mxu0 0.0
    %2351 = vmatpush1.msra.mxu0 0.0
    %2352 = vmatprep.subr.mxu0 0.0
    %2353 = vmatpush1.msra.mxu0 0.0
    %2354 = vmatprep.subr.mxu0 0.0
    %2355 = vmatpush1.msra.mxu0 0.0
    %2356 = vmatprep.subr.mxu0 0.0
    %2357 = vmatpush1.msra.mxu0 0.0
    %2358 = vmatprep.mubr.f32.mxu0 0.0
    %2359 = vmatmul.mubr.f32.gmra.mrb[0].mxu0 %v2289
    %v2360 = vpop.f32.mrb[0].mxu0
    %v2361 = vadd.f32 %v2287, %v2360
    %v2362 = vpop.f32.mrb[0].mxu0
    %2363 = vmatprep.mubr.f32.mxu0 0.0
    %2364 = vmatmul.mubr.f32.gmra.mrb[0].mxu0 %v2292
    %v2365 = vpop.f32.mrb[0].mxu0
    %v2366 = vadd.f32 %v2287, %v2365
    %v2367 = vpop.f32.mrb[0].mxu0
    %2368 = vdwg.mxu0
    %v2369 = vmax.f32 %v2361, 0.0
    %v2370 = vmax.f32 %v2366, 0.0
    %v2371 = vld [vmem:[#allocation2 + $0xe8] sm:$0xff]
    %v2372 = vld [vmem:[#allocation2 + $0xf0] sm:$0xff]
    %v2373 = vld [vmem:[#allocation2 + $0xf8] sm:$0xff]
    %v2374 = vld [vmem:[#allocation2 + $0x100] sm:$0xff]
    %2375 = vmatprep.subr.mxu0 0.0
    %2376 = vmatpush1.xpose.msra.mxu0 %v2371
    %2377 = vmatprep.subr.mxu0 0.0
    %2378 = vmatpush1.xpose.msra.mxu0 %v2372
    %2379 = vmatprep.subr.mxu0 0.0
    %2380 = vmatpush1.xpose.msra.mxu0 %v2373
    %2381 = vmatprep.subr.mxu0 0.0
    %2382 = vmatpush1.xpose.msra.mxu0 %v2374
    %2383 = vmatprep.subr.mxu0 0.0
    %2384 = vmatpush1.xpose.msra.mxu0 0.0
    %2385 = vmatprep.subr.mxu0 0.0
    %2386 = vmatpush1.xpose.msra.mxu0 0.0
    %2387 = vmatprep.subr.mxu0 0.0
    %2388 = vmatpush1.xpose.msra.mxu0 0.0
    %2389 = vmatprep.subr.mxu0 0.0
    %2390 = vmatpush1.xpose.msra.mxu0 0.0
    %2391 = vmatprep.subr.mxu0 0.0
    %2392 = vmatpush1.xpose.msra.mxu0 0.0
    %2393 = vmatprep.subr.mxu0 0.0
    %2394 = vmatpush1.xpose.msra.mxu0 0.0
    %2395 = vmatprep.subr.mxu0 0.0
    %2396 = vmatpush1.xpose.msra.mxu0 0.0
    %2397 = vmatprep.subr.mxu0 0.0
    %2398 = vmatpush1.xpose.msra.mxu0 0.0
    %2399 = vmatprep.subr.mxu0 0.0
    %2400 = vmatpush1.xpose.msra.mxu0 0.0
    %2401 = vmatprep.subr.mxu0 0.0
    %2402 = vmatpush1.xpose.msra.mxu0 0.0
    %2403 = vmatprep.subr.mxu0 0.0
    %2404 = vmatpush1.xpose.msra.mxu0 0.0
    %2405 = vmatprep.subr.mxu0 0.0
    %2406 = vmatpush1.xpose.msra.mxu0 0.0
    %2407 = vmatprep.subr.mxu0 0.0
    %2408 = vmatpush1.xpose.msra.mxu0 0.0
    %2409 = vmatprep.subr.mxu0 0.0
    %2410 = vmatpush1.xpose.msra.mxu0 0.0
    %2411 = vmatprep.subr.mxu0 0.0
    %2412 = vmatpush1.xpose.msra.mxu0 0.0
    %2413 = vmatprep.subr.mxu0 0.0
    %2414 = vmatpush1.xpose.msra.mxu0 0.0
    %2415 = vmatprep.subr.mxu0 0.0
    %2416 = vmatpush1.xpose.msra.mxu0 0.0
    %2417 = vmatprep.subr.mxu0 0.0
    %2418 = vmatpush1.xpose.msra.mxu0 0.0
    %2419 = vmatprep.subr.mxu0 0.0
    %2420 = vmatpush1.xpose.msra.mxu0 0.0
    %2421 = vmatprep.subr.mxu0 0.0
    %2422 = vmatpush1.xpose.msra.mxu0 0.0
    %2423 = vmatprep.subr.mxu0 0.0
    %2424 = vmatpush1.xpose.msra.mxu0 0.0
    %2425 = vmatprep.subr.mxu0 0.0
    %2426 = vmatpush1.xpose.msra.mxu0 0.0
    %2427 = vmatprep.subr.mxu0 0.0
    %2428 = vmatpush1.xpose.msra.mxu0 0.0
    %2429 = vmatprep.subr.mxu0 0.0
    %2430 = vmatpush1.xpose.msra.mxu0 0.0
    %2431 = vmatprep.subr.mxu0 0.0
    %2432 = vmatpush1.xpose.msra.mxu0 0.0
    %2433 = vmatprep.subr.mxu0 0.0
    %2434 = vmatpush1.xpose.msra.mxu0 0.0
    %2435 = vmatprep.subr.mxu0 0.0
    %2436 = vmatpush1.xpose.msra.mxu0 0.0
    %2437 = vmatprep.subr.mxu0 0.0
    %2438 = vmatpush1.xpose.msra.mxu0 0.0
    %2439 = vmatprep.mubr.f32.mxu0 0.0
    %2440 = vmatmul.mubr.f32.gmra.mrb[0].mxu0 %v2369
    %v2441 = vpop.f32.mrb[0].mxu0
    %v2442 = vadd.f32 0.0, %v2441
    %v2443 = vpop.f32.mrb[0].mxu0
    %2444 = vmatprep.mubr.f32.mxu0 0.0
    %2445 = vmatmul.mubr.f32.gmra.mrb[0].mxu0 %v2370
    %v2446 = vpop.f32.mrb[0].mxu0
    %v2447 = vadd.f32 0.0, %v2446
    %v2448 = vpop.f32.mrb[0].mxu0
    %2449 = vdwg.mxu0
    %v2450 = vadd.f32 %v2237, %v2442
    %v2451 = vadd.f32 %v2238, %v2447
    %v2452 = vld [vmem:[#allocation2 + $0x45] sm:$0x1]
    %v2453 = vlaneseq
    %v2454 = vshrl.u32 %v2453, 7
    %v2455 = vsub.s32 0, %v2454
    %v2456 = vrot.slane %v2452, %v2455
    %v2457 = vadd.f32 %v2450, %v2456
    %v2458 = vadd.f32 %v2451, %v2456
    %v2459 = vld [vmem:[#allocation2 + $0x108] sm:$0x1]
    %v2460 = vld [vmem:[#allocation2 + $0x109] sm:$0x1]
    %v2461 = vsel %vm126, %v2457, 0.0
    %2462 = vadd.xlane.f32.xlu0 %v2461
    %v2463 = vpop.xlane.xlu0 %2462
    %v2464 = vsel %vm126, %v2458, 0.0
    %2465 = vadd.xlane.f32.xlu0 %v2464
    %v2466 = vpop.xlane.xlu0 %2465
    %v2467 = vmul.f32 %v2463, %v133
    %v2468 = vmul.f32 %v2466, %v133
    %v2469 = vsub.f32 %v2457, %v2467
    %v2470 = vsub.f32 %v2458, %v2468
    %v2471 = vmul.f32 %v2469, %v2469
    %v2472 = vmul.f32 %v2470, %v2470
    %v2473 = vsel %vm126, %v2471, 0.0
    %2474 = vadd.xlane.f32.xlu0 %v2473
    %v2475 = vpop.xlane.xlu0 %2474
    %v2476 = vsel %vm126, %v2472, 0.0
    %2477 = vadd.xlane.f32.xlu0 %v2476
    %v2478 = vpop.xlane.xlu0 %2477
    %v2479 = vmul.f32 %v2475, %v133
    %v2480 = vmul.f32 %v2478, %v133
    %v2481 = vadd.f32 %v2479, 1e-05
    %v2482 = vadd.f32 %v2480, 1e-05
    %v2483 = vrsqrt.pop %v2481
    %v2484 = vrsqrt.pop %v2482
    %v2485 = vmul.f32 %v2469, %v2483
    %v2486 = vmul.f32 %v2470, %v2484
    %v2487 = vlaneseq
    %v2488 = vshrl.u32 %v2487, 7
    %v2489 = vsub.s32 0, %v2488
    %v2490 = vrot.slane %v2459, %v2489
    %v2491 = vmul.f32 %v2485, %v2490
    %v2492 = vmul.f32 %v2486, %v2490
    %v2493 = vlaneseq
    %v2494 = vshrl.u32 %v2493, 7
    %v2495 = vsub.s32 0, %v2494
    %v2496 = vrot.slane %v2460, %v2495
    %v2497 = vadd.f32 %v2491, %v2496
    %v2498 = vadd.f32 %v2492, %v2496
    %v2499 = vld [vmem:[#allocation2 + $0x110] sm:$0xff]
    %v2500 = vld [vmem:[#allocation2 + $0x118] sm:$0xff]
    %v2501 = vld [vmem:[#allocation2 + $0x120] sm:$0xff]
    %v2503 = vsel %vm126, %v2497, 0
    %v2506 = vsel %vm126, %v2498, 0
    %v2509 = vsel %vm126, %v2499, 0
    %2511 = vmatprep.subr.mxu0 0.0
    %2512 = vmatpush1.xpose.msra.mxu0 %v2509
    %2513 = vmatprep.subr.mxu0 0.0
    %2514 = vmatpush1.xpose.msra.mxu0 0.0
    %2515 = vmatprep.subr.mxu0 0.0
    %2516 = vmatpush1.xpose.msra.mxu0 0.0
    %2517 = vmatprep.subr.mxu0 0.0
    %2518 = vmatpush1.xpose.msra.mxu0 0.0
    %2519 = vmatprep.subr.mxu0 0.0
    %2520 = vmatpush1.xpose.msra.mxu0 0.0
    %2521 = vmatprep.subr.mxu0 0.0
    %2522 = vmatpush1.xpose.msra.mxu0 0.0
    %2523 = vmatprep.subr.mxu0 0.0
    %2524 = vmatpush1.xpose.msra.mxu0 0.0
    %2525 = vmatprep.subr.mxu0 0.0
    %2526 = vmatpush1.xpose.msra.mxu0 0.0
    %2527 = vmatprep.subr.mxu0 0.0
    %2528 = vmatpush1.xpose.msra.mxu0 0.0
    %2529 = vmatprep.subr.mxu0 0.0
    %2530 = vmatpush1.xpose.msra.mxu0 0.0
    %2531 = vmatprep.subr.mxu0 0.0
    %2532 = vmatpush1.xpose.msra.mxu0 0.0
    %2533 = vmatprep.subr.mxu0 0.0
    %2534 = vmatpush1.xpose.msra.mxu0 0.0
    %2535 = vmatprep.subr.mxu0 0.0
    %2536 = vmatpush1.xpose.msra.mxu0 0.0
    %2537 = vmatprep.subr.mxu0 0.0
    %2538 = vmatpush1.xpose.msra.mxu0 0.0
    %2539 = vmatprep.subr.mxu0 0.0
    %2540 = vmatpush1.xpose.msra.mxu0 0.0
    %2541 = vmatprep.subr.mxu0 0.0
    %2542 = vmatpush1.xpose.msra.mxu0 0.0
    %2543 = vmatprep.subr.mxu0 0.0
    %2544 = vmatpush1.xpose.msra.mxu0 0.0
    %2545 = vmatprep.subr.mxu0 0.0
    %2546 = vmatpush1.xpose.msra.mxu0 0.0
    %2547 = vmatprep.subr.mxu0 0.0
    %2548 = vmatpush1.xpose.msra.mxu0 0.0
    %2549 = vmatprep.subr.mxu0 0.0
    %2550 = vmatpush1.xpose.msra.mxu0 0.0
    %2551 = vmatprep.subr.mxu0 0.0
    %2552 = vmatpush1.xpose.msra.mxu0 0.0
    %2553 = vmatprep.subr.mxu0 0.0
    %2554 = vmatpush1.xpose.msra.mxu0 0.0
    %2555 = vmatprep.subr.mxu0 0.0
    %2556 = vmatpush1.xpose.msra.mxu0 0.0
    %2557 = vmatprep.subr.mxu0 0.0
    %2558 = vmatpush1.xpose.msra.mxu0 0.0
    %2559 = vmatprep.subr.mxu0 0.0
    %2560 = vmatpush1.xpose.msra.mxu0 0.0
    %2561 = vmatprep.subr.mxu0 0.0
    %2562 = vmatpush1.xpose.msra.mxu0 0.0
    %2563 = vmatprep.subr.mxu0 0.0
    %2564 = vmatpush1.xpose.msra.mxu0 0.0
    %2565 = vmatprep.subr.mxu0 0.0
    %2566 = vmatpush1.xpose.msra.mxu0 0.0
    %2567 = vmatprep.subr.mxu0 0.0
    %2568 = vmatpush1.xpose.msra.mxu0 0.0
    %2569 = vmatprep.subr.mxu0 0.0
    %2570 = vmatpush1.xpose.msra.mxu0 0.0
    %2571 = vmatprep.subr.mxu0 0.0
    %2572 = vmatpush1.xpose.msra.mxu0 0.0
    %2573 = vmatprep.subr.mxu0 0.0
    %2574 = vmatpush1.xpose.msra.mxu0 0.0
    %2575 = vmatprep.mubr.f32.mxu0 0.0
    %2576 = vmatmul.mubr.f32.gmra.mrb[0].mxu0 %v2503
    %v2577 = vpop.f32.mrb[0].mxu0
    %v2578 = vadd.f32 0.0, %v2577
    %v2579 = vpop.f32.mrb[0].mxu0
    %2580 = vmatprep.mubr.f32.mxu0 0.0
    %2581 = vmatmul.mubr.f32.gmra.mrb[0].mxu0 %v2506
    %v2582 = vpop.f32.mrb[0].mxu0
    %v2583 = vadd.f32 0.0, %v2582
    %v2584 = vpop.f32.mrb[0].mxu0
    %2585 = vdwg.mxu0
    %v2587 = vsel %vm126, %v2500, 0
    %2589 = vmatprep.subr.mxu0 0.0
    %2590 = vmatpush1.xpose.msra.mxu0 %v2587
    %2591 = vmatprep.subr.mxu0 0.0
    %2592 = vmatpush1.xpose.msra.mxu0 0.0
    %2593 = vmatprep.subr.mxu0 0.0
    %2594 = vmatpush1.xpose.msra.mxu0 0.0
    %2595 = vmatprep.subr.mxu0 0.0
    %2596 = vmatpush1.xpose.msra.mxu0 0.0
    %2597 = vmatprep.subr.mxu0 0.0
    %2598 = vmatpush1.xpose.msra.mxu0 0.0
    %2599 = vmatprep.subr.mxu0 0.0
    %2600 = vmatpush1.xpose.msra.mxu0 0.0
    %2601 = vmatprep.subr.mxu0 0.0
    %2602 = vmatpush1.xpose.msra.mxu0 0.0
    %2603 = vmatprep.subr.mxu0 0.0
    %2604 = vmatpush1.xpose.msra.mxu0 0.0
    %2605 = vmatprep.subr.mxu0 0.0
    %2606 = vmatpush1.xpose.msra.mxu0 0.0
    %2607 = vmatprep.subr.mxu0 0.0
    %2608 = vmatpush1.xpose.msra.mxu0 0.0
    %2609 = vmatprep.subr.mxu0 0.0
    %2610 = vmatpush1.xpose.msra.mxu0 0.0
    %2611 = vmatprep.subr.mxu0 0.0
    %2612 = vmatpush1.xpose.msra.mxu0 0.0
    %2613 = vmatprep.subr.mxu0 0.0
    %2614 = vmatpush1.xpose.msra.mxu0 0.0
    %2615 = vmatprep.subr.mxu0 0.0
    %2616 = vmatpush1.xpose.msra.mxu0 0.0
    %2617 = vmatprep.subr.mxu0 0.0
    %2618 = vmatpush1.xpose.msra.mxu0 0.0
    %2619 = vmatprep.subr.mxu0 0.0
    %2620 = vmatpush1.xpose.msra.mxu0 0.0
    %2621 = vmatprep.subr.mxu0 0.0
    %2622 = vmatpush1.xpose.msra.mxu0 0.0
    %2623 = vmatprep.subr.mxu0 0.0
    %2624 = vmatpush1.xpose.msra.mxu0 0.0
    %2625 = vmatprep.subr.mxu0 0.0
    %2626 = vmatpush1.xpose.msra.mxu0 0.0
    %2627 = vmatprep.subr.mxu0 0.0
    %2628 = vmatpush1.xpose.msra.mxu0 0.0
    %2629 = vmatprep.subr.mxu0 0.0
    %2630 = vmatpush1.xpose.msra.mxu0 0.0
    %2631 = vmatprep.subr.mxu0 0.0
    %2632 = vmatpush1.xpose.msra.mxu0 0.0
    %2633 = vmatprep.subr.mxu0 0.0
    %2634 = vmatpush1.xpose.msra.mxu0 0.0
    %2635 = vmatprep.subr.mxu0 0.0
    %2636 = vmatpush1.xpose.msra.mxu0 0.0
    %2637 = vmatprep.subr.mxu0 0.0
    %2638 = vmatpush1.xpose.msra.mxu0 0.0
    %2639 = vmatprep.subr.mxu0 0.0
    %2640 = vmatpush1.xpose.msra.mxu0 0.0
    %2641 = vmatprep.subr.mxu0 0.0
    %2642 = vmatpush1.xpose.msra.mxu0 0.0
    %2643 = vmatprep.subr.mxu0 0.0
    %2644 = vmatpush1.xpose.msra.mxu0 0.0
    %2645 = vmatprep.subr.mxu0 0.0
    %2646 = vmatpush1.xpose.msra.mxu0 0.0
    %2647 = vmatprep.subr.mxu0 0.0
    %2648 = vmatpush1.xpose.msra.mxu0 0.0
    %2649 = vmatprep.subr.mxu0 0.0
    %2650 = vmatpush1.xpose.msra.mxu0 0.0
    %2651 = vmatprep.subr.mxu0 0.0
    %2652 = vmatpush1.xpose.msra.mxu0 0.0
    %2653 = vmatprep.mubr.f32.mxu0 0.0
    %2654 = vmatmul.mubr.f32.gmra.mrb[0].mxu0 %v2503
    %v2655 = vpop.f32.mrb[0].mxu0
    %v2656 = vadd.f32 0.0, %v2655
    %v2657 = vpop.f32.mrb[0].mxu0
    %2658 = vmatprep.mubr.f32.mxu0 0.0
    %2659 = vmatmul.mubr.f32.gmra.mrb[0].mxu0 %v2506
    %v2660 = vpop.f32.mrb[0].mxu0
    %v2661 = vadd.f32 0.0, %v2660
    %v2662 = vpop.f32.mrb[0].mxu0
    %2663 = vdwg.mxu0
    %v2665 = vsel %vm126, %v2501, 0
    %2667 = vmatprep.subr.mxu0 0.0
    %2668 = vmatpush1.xpose.msra.mxu0 %v2665
    %2669 = vmatprep.subr.mxu0 0.0
    %2670 = vmatpush1.xpose.msra.mxu0 0.0
    %2671 = vmatprep.subr.mxu0 0.0
    %2672 = vmatpush1.xpose.msra.mxu0 0.0
    %2673 = vmatprep.subr.mxu0 0.0
    %2674 = vmatpush1.xpose.msra.mxu0 0.0
    %2675 = vmatprep.subr.mxu0 0.0
    %2676 = vmatpush1.xpose.msra.mxu0 0.0
    %2677 = vmatprep.subr.mxu0 0.0
    %2678 = vmatpush1.xpose.msra.mxu0 0.0
    %2679 = vmatprep.subr.mxu0 0.0
    %2680 = vmatpush1.xpose.msra.mxu0 0.0
    %2681 = vmatprep.subr.mxu0 0.0
    %2682 = vmatpush1.xpose.msra.mxu0 0.0
    %2683 = vmatprep.subr.mxu0 0.0
    %2684 = vmatpush1.xpose.msra.mxu0 0.0
    %2685 = vmatprep.subr.mxu0 0.0
    %2686 = vmatpush1.xpose.msra.mxu0 0.0
    %2687 = vmatprep.subr.mxu0 0.0
    %2688 = vmatpush1.xpose.msra.mxu0 0.0
    %2689 = vmatprep.subr.mxu0 0.0
    %2690 = vmatpush1.xpose.msra.mxu0 0.0
    %2691 = vmatprep.subr.mxu0 0.0
    %2692 = vmatpush1.xpose.msra.mxu0 0.0
    %2693 = vmatprep.subr.mxu0 0.0
    %2694 = vmatpush1.xpose.msra.mxu0 0.0
    %2695 = vmatprep.subr.mxu0 0.0
    %2696 = vmatpush1.xpose.msra.mxu0 0.0
    %2697 = vmatprep.subr.mxu0 0.0
    %2698 = vmatpush1.xpose.msra.mxu0 0.0
    %2699 = vmatprep.subr.mxu0 0.0
    %2700 = vmatpush1.xpose.msra.mxu0 0.0
    %2701 = vmatprep.subr.mxu0 0.0
    %2702 = vmatpush1.xpose.msra.mxu0 0.0
    %2703 = vmatprep.subr.mxu0 0.0
    %2704 = vmatpush1.xpose.msra.mxu0 0.0
    %2705 = vmatprep.subr.mxu0 0.0
    %2706 = vmatpush1.xpose.msra.mxu0 0.0
    %2707 = vmatprep.subr.mxu0 0.0
    %2708 = vmatpush1.xpose.msra.mxu0 0.0
    %2709 = vmatprep.subr.mxu0 0.0
    %2710 = vmatpush1.xpose.msra.mxu0 0.0
    %2711 = vmatprep.subr.mxu0 0.0
    %2712 = vmatpush1.xpose.msra.mxu0 0.0
    %2713 = vmatprep.subr.mxu0 0.0
    %2714 = vmatpush1.xpose.msra.mxu0 0.0
    %2715 = vmatprep.subr.mxu0 0.0
    %2716 = vmatpush1.xpose.msra.mxu0 0.0
    %2717 = vmatprep.subr.mxu0 0.0
    %2718 = vmatpush1.xpose.msra.mxu0 0.0
    %2719 = vmatprep.subr.mxu0 0.0
    %2720 = vmatpush1.xpose.msra.mxu0 0.0
    %2721 = vmatprep.subr.mxu0 0.0
    %2722 = vmatpush1.xpose.msra.mxu0 0.0
    %2723 = vmatprep.subr.mxu0 0.0
    %2724 = vmatpush1.xpose.msra.mxu0 0.0
    %2725 = vmatprep.subr.mxu0 0.0
    %2726 = vmatpush1.xpose.msra.mxu0 0.0
    %2727 = vmatprep.subr.mxu0 0.0
    %2728 = vmatpush1.xpose.msra.mxu0 0.0
    %2729 = vmatprep.subr.mxu0 0.0
    %2730 = vmatpush1.xpose.msra.mxu0 0.0
    %2731 = vmatprep.mubr.f32.mxu0 0.0
    %2732 = vmatmul.mubr.f32.gmra.mrb[0].mxu0 %v2503
    %v2733 = vpop.f32.mrb[0].mxu0
    %v2734 = vadd.f32 0.0, %v2733
    %v2735 = vpop.f32.mrb[0].mxu0
    %2736 = vmatprep.mubr.f32.mxu0 0.0
    %2737 = vmatmul.mubr.f32.gmra.mrb[0].mxu0 %v2506
    %v2738 = vpop.f32.mrb[0].mxu0
    %v2739 = vadd.f32 0.0, %v2738
    %v2740 = vpop.f32.mrb[0].mxu0
    %2741 = vdwg.mxu0
    %v2743 = vsel %vm409, %v2656, 0
    %v2746 = vsel %vm409, %v2661, 0
    %v2749 = vsel %vm409, %v2578, 0
    %v2752 = vsel %vm409, %v2583, 0
    %2754 = vmatprep.subr.mxu0 0.0
    %2755 = vmatpush1.xpose.msra.mxu0 %v2749
    %2756 = vmatprep.subr.mxu0 0.0
    %2757 = vmatpush1.xpose.msra.mxu0 %v2752
    %2758 = vmatprep.subr.mxu0 0.0
    %2759 = vmatpush1.xpose.msra.mxu0 0.0
    %2760 = vmatprep.subr.mxu0 0.0
    %2761 = vmatpush1.xpose.msra.mxu0 0.0
    %2762 = vmatprep.subr.mxu0 0.0
    %2763 = vmatpush1.xpose.msra.mxu0 0.0
    %2764 = vmatprep.subr.mxu0 0.0
    %2765 = vmatpush1.xpose.msra.mxu0 0.0
    %2766 = vmatprep.subr.mxu0 0.0
    %2767 = vmatpush1.xpose.msra.mxu0 0.0
    %2768 = vmatprep.subr.mxu0 0.0
    %2769 = vmatpush1.xpose.msra.mxu0 0.0
    %2770 = vmatprep.subr.mxu0 0.0
    %2771 = vmatpush1.xpose.msra.mxu0 0.0
    %2772 = vmatprep.subr.mxu0 0.0
    %2773 = vmatpush1.xpose.msra.mxu0 0.0
    %2774 = vmatprep.subr.mxu0 0.0
    %2775 = vmatpush1.xpose.msra.mxu0 0.0
    %2776 = vmatprep.subr.mxu0 0.0
    %2777 = vmatpush1.xpose.msra.mxu0 0.0
    %2778 = vmatprep.subr.mxu0 0.0
    %2779 = vmatpush1.xpose.msra.mxu0 0.0
    %2780 = vmatprep.subr.mxu0 0.0
    %2781 = vmatpush1.xpose.msra.mxu0 0.0
    %2782 = vmatprep.subr.mxu0 0.0
    %2783 = vmatpush1.xpose.msra.mxu0 0.0
    %2784 = vmatprep.subr.mxu0 0.0
    %2785 = vmatpush1.xpose.msra.mxu0 0.0
    %2786 = vmatprep.subr.mxu0 0.0
    %2787 = vmatpush1.xpose.msra.mxu0 0.0
    %2788 = vmatprep.subr.mxu0 0.0
    %2789 = vmatpush1.xpose.msra.mxu0 0.0
    %2790 = vmatprep.subr.mxu0 0.0
    %2791 = vmatpush1.xpose.msra.mxu0 0.0
    %2792 = vmatprep.subr.mxu0 0.0
    %2793 = vmatpush1.xpose.msra.mxu0 0.0
    %2794 = vmatprep.subr.mxu0 0.0
    %2795 = vmatpush1.xpose.msra.mxu0 0.0
    %2796 = vmatprep.subr.mxu0 0.0
    %2797 = vmatpush1.xpose.msra.mxu0 0.0
    %2798 = vmatprep.subr.mxu0 0.0
    %2799 = vmatpush1.xpose.msra.mxu0 0.0
    %2800 = vmatprep.subr.mxu0 0.0
    %2801 = vmatpush1.xpose.msra.mxu0 0.0
    %2802 = vmatprep.subr.mxu0 0.0
    %2803 = vmatpush1.xpose.msra.mxu0 0.0
    %2804 = vmatprep.subr.mxu0 0.0
    %2805 = vmatpush1.xpose.msra.mxu0 0.0
    %2806 = vmatprep.subr.mxu0 0.0
    %2807 = vmatpush1.xpose.msra.mxu0 0.0
    %2808 = vmatprep.subr.mxu0 0.0
    %2809 = vmatpush1.xpose.msra.mxu0 0.0
    %2810 = vmatprep.subr.mxu0 0.0
    %2811 = vmatpush1.xpose.msra.mxu0 0.0
    %2812 = vmatprep.subr.mxu0 0.0
    %2813 = vmatpush1.xpose.msra.mxu0 0.0
    %2814 = vmatprep.subr.mxu0 0.0
    %2815 = vmatpush1.xpose.msra.mxu0 0.0
    %2816 = vmatprep.subr.mxu0 0.0
    %2817 = vmatpush1.xpose.msra.mxu0 0.0
    %2818 = vmatprep.mubr.f32.mxu0 0.0
    %2819 = vmatmul.mubr.f32.gmra.mrb[0].mxu0 %v2743
    %v2820 = vpop.f32.mrb[0].mxu0
    %v2821 = vadd.f32 0.0, %v2820
    %v2822 = vpop.f32.mrb[0].mxu0
    %2823 = vmatprep.mubr.f32.mxu0 0.0
    %2824 = vmatmul.mubr.f32.gmra.mrb[0].mxu0 %v2746
    %v2825 = vpop.f32.mrb[0].mxu0
    %v2826 = vadd.f32 0.0, %v2825
    %v2827 = vpop.f32.mrb[0].mxu0
    %2828 = vdwg.mxu0
    %v2829 = vmul.f32 %v2821, 0.17677669
    %v2830 = vmul.f32 %v2826, 0.17677669
    %v2831 = vadd.f32 %v2829, %v122
    %v2832 = vadd.f32 %v2830, %v123
    %v2833 = vsel %vm501, %v2831, -inf
    %2834 = vmax.xlane.f32.xlu0 %v2833
    %v2835 = vpop.xlane.xlu0 %2834
    %v2836 = vsel %vm501, %v2832, -inf
    %2837 = vmax.xlane.f32.xlu0 %v2836
    %v2838 = vpop.xlane.xlu0 %2837
    %v2839 = vsub.f32 %v2831, %v2835
    %v2840 = vsub.f32 %v2832, %v2838
    %v2841 = vmul.f32 %v2839, 1.442695
    %v2842 = vpow.pop %v2841
    %v2843 = vmul.f32 %v2840, 1.442695
    %v2844 = vpow.pop %v2843
    %v2845 = vsel %vm501, %v2842, 0.0
    %2846 = vadd.xlane.f32.xlu0 %v2845
    %v2847 = vpop.xlane.xlu0 %2846
    %v2848 = vsel %vm501, %v2844, 0.0
    %2849 = vadd.xlane.f32.xlu0 %v2848
    %v2850 = vpop.xlane.xlu0 %2849
    %v2851 = vrcp.pop %v2847
    %v2852 = vmul.f32 %v2842, %v2851
    %v2853 = vrcp.pop %v2850
    %v2854 = vmul.f32 %v2844, %v2853
    %v2856 = vsel %vm501, %v2852, 0
    %v2859 = vsel %vm501, %v2854, 0
    %2861 = vmatprep.subr.mxu0 0.0
    %2862 = vmatpush1.msra.mxu0 %v2734
    %2863 = vmatprep.subr.mxu0 0.0
    %2864 = vmatpush1.msra.mxu0 %v2739
    %2865 = vmatprep.subr.mxu0 0.0
    %2866 = vmatpush1.msra.mxu0 0.0
    %2867 = vmatprep.subr.mxu0 0.0
    %2868 = vmatpush1.msra.mxu0 0.0
    %2869 = vmatprep.subr.mxu0 0.0
    %2870 = vmatpush1.msra.mxu0 0.0
    %2871 = vmatprep.subr.mxu0 0.0
    %2872 = vmatpush1.msra.mxu0 0.0
    %2873 = vmatprep.subr.mxu0 0.0
    %2874 = vmatpush1.msra.mxu0 0.0
    %2875 = vmatprep.subr.mxu0 0.0
    %2876 = vmatpush1.msra.mxu0 0.0
    %2877 = vmatprep.subr.mxu0 0.0
    %2878 = vmatpush1.msra.mxu0 0.0
    %2879 = vmatprep.subr.mxu0 0.0
    %2880 = vmatpush1.msra.mxu0 0.0
    %2881 = vmatprep.subr.mxu0 0.0
    %2882 = vmatpush1.msra.mxu0 0.0
    %2883 = vmatprep.subr.mxu0 0.0
    %2884 = vmatpush1.msra.mxu0 0.0
    %2885 = vmatprep.subr.mxu0 0.0
    %2886 = vmatpush1.msra.mxu0 0.0
    %2887 = vmatprep.subr.mxu0 0.0
    %2888 = vmatpush1.msra.mxu0 0.0
    %2889 = vmatprep.subr.mxu0 0.0
    %2890 = vmatpush1.msra.mxu0 0.0
    %2891 = vmatprep.subr.mxu0 0.0
    %2892 = vmatpush1.msra.mxu0 0.0
    %2893 = vmatprep.subr.mxu0 0.0
    %2894 = vmatpush1.msra.mxu0 0.0
    %2895 = vmatprep.subr.mxu0 0.0
    %2896 = vmatpush1.msra.mxu0 0.0
    %2897 = vmatprep.subr.mxu0 0.0
    %2898 = vmatpush1.msra.mxu0 0.0
    %2899 = vmatprep.subr.mxu0 0.0
    %2900 = vmatpush1.msra.mxu0 0.0
    %2901 = vmatprep.subr.mxu0 0.0
    %2902 = vmatpush1.msra.mxu0 0.0
    %2903 = vmatprep.subr.mxu0 0.0
    %2904 = vmatpush1.msra.mxu0 0.0
    %2905 = vmatprep.subr.mxu0 0.0
    %2906 = vmatpush1.msra.mxu0 0.0
    %2907 = vmatprep.subr.mxu0 0.0
    %2908 = vmatpush1.msra.mxu0 0.0
    %2909 = vmatprep.subr.mxu0 0.0
    %2910 = vmatpush1.msra.mxu0 0.0
    %2911 = vmatprep.subr.mxu0 0.0
    %2912 = vmatpush1.msra.mxu0 0.0
    %2913 = vmatprep.subr.mxu0 0.0
    %2914 = vmatpush1.msra.mxu0 0.0
    %2915 = vmatprep.subr.mxu0 0.0
    %2916 = vmatpush1.msra.mxu0 0.0
    %2917 = vmatprep.subr.mxu0 0.0
    %2918 = vmatpush1.msra.mxu0 0.0
    %2919 = vmatprep.subr.mxu0 0.0
    %2920 = vmatpush1.msra.mxu0 0.0
    %2921 = vmatprep.subr.mxu0 0.0
    %2922 = vmatpush1.msra.mxu0 0.0
    %2923 = vmatprep.subr.mxu0 0.0
    %2924 = vmatpush1.msra.mxu0 0.0
    %2925 = vmatprep.mubr.f32.mxu0 0.0
    %2926 = vmatmul.mubr.f32.gmra.mrb[0].mxu0 %v2856
    %v2927 = vpop.f32.mrb[0].mxu0
    %v2928 = vadd.f32 0.0, %v2927
    %v2929 = vpop.f32.mrb[0].mxu0
    %2930 = vmatprep.mubr.f32.mxu0 0.0
    %2931 = vmatmul.mubr.f32.gmra.mrb[0].mxu0 %v2859
    %v2932 = vpop.f32.mrb[0].mxu0
    %v2933 = vadd.f32 0.0, %v2932
    %v2934 = vpop.f32.mrb[0].mxu0
    %2935 = vdwg.mxu0
    %v2936 = vld [vmem:[#allocation2 + $0x170] sm:$0xff]
    %v2937 = vld [vmem:[#allocation2 + $0x128] sm:$0xff]
    %v2938 = vld [vmem:[#allocation2 + $0x130] sm:$0xff]
    %v2939 = vld [vmem:[#allocation2 + $0x138] sm:$0xff]
    %v2941 = vsel %vm126, %v2937, 0
    %2943 = vmatprep.subr.mxu0 0.0
    %2944 = vmatpush1.xpose.msra.mxu0 %v2941
    %2945 = vmatprep.subr.mxu0 0.0
    %2946 = vmatpush1.xpose.msra.mxu0 0.0
    %2947 = vmatprep.subr.mxu0 0.0
    %2948 = vmatpush1.xpose.msra.mxu0 0.0
    %2949 = vmatprep.subr.mxu0 0.0
    %2950 = vmatpush1.xpose.msra.mxu0 0.0
    %2951 = vmatprep.subr.mxu0 0.0
    %2952 = vmatpush1.xpose.msra.mxu0 0.0
    %2953 = vmatprep.subr.mxu0 0.0
    %2954 = vmatpush1.xpose.msra.mxu0 0.0
    %2955 = vmatprep.subr.mxu0 0.0
    %2956 = vmatpush1.xpose.msra.mxu0 0.0
    %2957 = vmatprep.subr.mxu0 0.0
    %2958 = vmatpush1.xpose.msra.mxu0 0.0
    %2959 = vmatprep.subr.mxu0 0.0
    %2960 = vmatpush1.xpose.msra.mxu0 0.0
    %2961 = vmatprep.subr.mxu0 0.0
    %2962 = vmatpush1.xpose.msra.mxu0 0.0
    %2963 = vmatprep.subr.mxu0 0.0
    %2964 = vmatpush1.xpose.msra.mxu0 0.0
    %2965 = vmatprep.subr.mxu0 0.0
    %2966 = vmatpush1.xpose.msra.mxu0 0.0
    %2967 = vmatprep.subr.mxu0 0.0
    %2968 = vmatpush1.xpose.msra.mxu0 0.0
    %2969 = vmatprep.subr.mxu0 0.0
    %2970 = vmatpush1.xpose.msra.mxu0 0.0
    %2971 = vmatprep.subr.mxu0 0.0
    %2972 = vmatpush1.xpose.msra.mxu0 0.0
    %2973 = vmatprep.subr.mxu0 0.0
    %2974 = vmatpush1.xpose.msra.mxu0 0.0
    %2975 = vmatprep.subr.mxu0 0.0
    %2976 = vmatpush1.xpose.msra.mxu0 0.0
    %2977 = vmatprep.subr.mxu0 0.0
    %2978 = vmatpush1.xpose.msra.mxu0 0.0
    %2979 = vmatprep.subr.mxu0 0.0
    %2980 = vmatpush1.xpose.msra.mxu0 0.0
    %2981 = vmatprep.subr.mxu0 0.0
    %2982 = vmatpush1.xpose.msra.mxu0 0.0
    %2983 = vmatprep.subr.mxu0 0.0
    %2984 = vmatpush1.xpose.msra.mxu0 0.0
    %2985 = vmatprep.subr.mxu0 0.0
    %2986 = vmatpush1.xpose.msra.mxu0 0.0
    %2987 = vmatprep.subr.mxu0 0.0
    %2988 = vmatpush1.xpose.msra.mxu0 0.0
    %2989 = vmatprep.subr.mxu0 0.0
    %2990 = vmatpush1.xpose.msra.mxu0 0.0
    %2991 = vmatprep.subr.mxu0 0.0
    %2992 = vmatpush1.xpose.msra.mxu0 0.0
    %2993 = vmatprep.subr.mxu0 0.0
    %2994 = vmatpush1.xpose.msra.mxu0 0.0
    %2995 = vmatprep.subr.mxu0 0.0
    %2996 = vmatpush1.xpose.msra.mxu0 0.0
    %2997 = vmatprep.subr.mxu0 0.0
    %2998 = vmatpush1.xpose.msra.mxu0 0.0
    %2999 = vmatprep.subr.mxu0 0.0
    %3000 = vmatpush1.xpose.msra.mxu0 0.0
    %3001 = vmatprep.subr.mxu0 0.0
    %3002 = vmatpush1.xpose.msra.mxu0 0.0
    %3003 = vmatprep.subr.mxu0 0.0
    %3004 = vmatpush1.xpose.msra.mxu0 0.0
    %3005 = vmatprep.subr.mxu0 0.0
    %3006 = vmatpush1.xpose.msra.mxu0 0.0
    %3007 = vmatprep.mubr.f32.mxu0 0.0
    %3008 = vmatmul.mubr.f32.gmra.mrb[0].mxu0 %v2503
    %v3009 = vpop.f32.mrb[0].mxu0
    %v3010 = vadd.f32 0.0, %v3009
    %v3011 = vpop.f32.mrb[0].mxu0
    %3012 = vmatprep.mubr.f32.mxu0 0.0
    %3013 = vmatmul.mubr.f32.gmra.mrb[0].mxu0 %v2506
    %v3014 = vpop.f32.mrb[0].mxu0
    %v3015 = vadd.f32 0.0, %v3014
    %v3016 = vpop.f32.mrb[0].mxu0
    %3017 = vdwg.mxu0
    %v3019 = vsel %vm126, %v2938, 0
    %3021 = vmatprep.subr.mxu0 0.0
    %3022 = vmatpush1.xpose.msra.mxu0 %v3019
    %3023 = vmatprep.subr.mxu0 0.0
    %3024 = vmatpush1.xpose.msra.mxu0 0.0
    %3025 = vmatprep.subr.mxu0 0.0
    %3026 = vmatpush1.xpose.msra.mxu0 0.0
    %3027 = vmatprep.subr.mxu0 0.0
    %3028 = vmatpush1.xpose.msra.mxu0 0.0
    %3029 = vmatprep.subr.mxu0 0.0
    %3030 = vmatpush1.xpose.msra.mxu0 0.0
    %3031 = vmatprep.subr.mxu0 0.0
    %3032 = vmatpush1.xpose.msra.mxu0 0.0
    %3033 = vmatprep.subr.mxu0 0.0
    %3034 = vmatpush1.xpose.msra.mxu0 0.0
    %3035 = vmatprep.subr.mxu0 0.0
    %3036 = vmatpush1.xpose.msra.mxu0 0.0
    %3037 = vmatprep.subr.mxu0 0.0
    %3038 = vmatpush1.xpose.msra.mxu0 0.0
    %3039 = vmatprep.subr.mxu0 0.0
    %3040 = vmatpush1.xpose.msra.mxu0 0.0
    %3041 = vmatprep.subr.mxu0 0.0
    %3042 = vmatpush1.xpose.msra.mxu0 0.0
    %3043 = vmatprep.subr.mxu0 0.0
    %3044 = vmatpush1.xpose.msra.mxu0 0.0
    %3045 = vmatprep.subr.mxu0 0.0
    %3046 = vmatpush1.xpose.msra.mxu0 0.0
    %3047 = vmatprep.subr.mxu0 0.0
    %3048 = vmatpush1.xpose.msra.mxu0 0.0
    %3049 = vmatprep.subr.mxu0 0.0
    %3050 = vmatpush1.xpose.msra.mxu0 0.0
    %3051 = vmatprep.subr.mxu0 0.0
    %3052 = vmatpush1.xpose.msra.mxu0 0.0
    %3053 = vmatprep.subr.mxu0 0.0
    %3054 = vmatpush1.xpose.msra.mxu0 0.0
    %3055 = vmatprep.subr.mxu0 0.0
    %3056 = vmatpush1.xpose.msra.mxu0 0.0
    %3057 = vmatprep.subr.mxu0 0.0
    %3058 = vmatpush1.xpose.msra.mxu0 0.0
    %3059 = vmatprep.subr.mxu0 0.0
    %3060 = vmatpush1.xpose.msra.mxu0 0.0
    %3061 = vmatprep.subr.mxu0 0.0
    %3062 = vmatpush1.xpose.msra.mxu0 0.0
    %3063 = vmatprep.subr.mxu0 0.0
    %3064 = vmatpush1.xpose.msra.mxu0 0.0
    %3065 = vmatprep.subr.mxu0 0.0
    %3066 = vmatpush1.xpose.msra.mxu0 0.0
    %3067 = vmatprep.subr.mxu0 0.0
    %3068 = vmatpush1.xpose.msra.mxu0 0.0
    %3069 = vmatprep.subr.mxu0 0.0
    %3070 = vmatpush1.xpose.msra.mxu0 0.0
    %3071 = vmatprep.subr.mxu0 0.0
    %3072 = vmatpush1.xpose.msra.mxu0 0.0
    %3073 = vmatprep.subr.mxu0 0.0
    %3074 = vmatpush1.xpose.msra.mxu0 0.0
    %3075 = vmatprep.subr.mxu0 0.0
    %3076 = vmatpush1.xpose.msra.mxu0 0.0
    %3077 = vmatprep.subr.mxu0 0.0
    %3078 = vmatpush1.xpose.msra.mxu0 0.0
    %3079 = vmatprep.subr.mxu0 0.0
    %3080 = vmatpush1.xpose.msra.mxu0 0.0
    %3081 = vmatprep.subr.mxu0 0.0
    %3082 = vmatpush1.xpose.msra.mxu0 0.0
    %3083 = vmatprep.subr.mxu0 0.0
    %3084 = vmatpush1.xpose.msra.mxu0 0.0
    %3085 = vmatprep.mubr.f32.mxu0 0.0
    %3086 = vmatmul.mubr.f32.gmra.mrb[0].mxu0 %v2503
    %v3087 = vpop.f32.mrb[0].mxu0
    %v3088 = vadd.f32 0.0, %v3087
    %v3089 = vpop.f32.mrb[0].mxu0
    %3090 = vmatprep.mubr.f32.mxu0 0.0
    %3091 = vmatmul.mubr.f32.gmra.mrb[0].mxu0 %v2506
    %v3092 = vpop.f32.mrb[0].mxu0
    %v3093 = vadd.f32 0.0, %v3092
    %v3094 = vpop.f32.mrb[0].mxu0
    %3095 = vdwg.mxu0
    %v3097 = vsel %vm126, %v2939, 0
    %3099 = vmatprep.subr.mxu0 0.0
    %3100 = vmatpush1.xpose.msra.mxu0 %v3097
    %3101 = vmatprep.subr.mxu0 0.0
    %3102 = vmatpush1.xpose.msra.mxu0 0.0
    %3103 = vmatprep.subr.mxu0 0.0
    %3104 = vmatpush1.xpose.msra.mxu0 0.0
    %3105 = vmatprep.subr.mxu0 0.0
    %3106 = vmatpush1.xpose.msra.mxu0 0.0
    %3107 = vmatprep.subr.mxu0 0.0
    %3108 = vmatpush1.xpose.msra.mxu0 0.0
    %3109 = vmatprep.subr.mxu0 0.0
    %3110 = vmatpush1.xpose.msra.mxu0 0.0
    %3111 = vmatprep.subr.mxu0 0.0
    %3112 = vmatpush1.xpose.msra.mxu0 0.0
    %3113 = vmatprep.subr.mxu0 0.0
    %3114 = vmatpush1.xpose.msra.mxu0 0.0
    %3115 = vmatprep.subr.mxu0 0.0
    %3116 = vmatpush1.xpose.msra.mxu0 0.0
    %3117 = vmatprep.subr.mxu0 0.0
    %3118 = vmatpush1.xpose.msra.mxu0 0.0
    %3119 = vmatprep.subr.mxu0 0.0
    %3120 = vmatpush1.xpose.msra.mxu0 0.0
    %3121 = vmatprep.subr.mxu0 0.0
    %3122 = vmatpush1.xpose.msra.mxu0 0.0
    %3123 = vmatprep.subr.mxu0 0.0
    %3124 = vmatpush1.xpose.msra.mxu0 0.0
    %3125 = vmatprep.subr.mxu0 0.0
    %3126 = vmatpush1.xpose.msra.mxu0 0.0
    %3127 = vmatprep.subr.mxu0 0.0
    %3128 = vmatpush1.xpose.msra.mxu0 0.0
    %3129 = vmatprep.subr.mxu0 0.0
    %3130 = vmatpush1.xpose.msra.mxu0 0.0
    %3131 = vmatprep.subr.mxu0 0.0
    %3132 = vmatpush1.xpose.msra.mxu0 0.0
    %3133 = vmatprep.subr.mxu0 0.0
    %3134 = vmatpush1.xpose.msra.mxu0 0.0
    %3135 = vmatprep.subr.mxu0 0.0
    %3136 = vmatpush1.xpose.msra.mxu0 0.0
    %3137 = vmatprep.subr.mxu0 0.0
    %3138 = vmatpush1.xpose.msra.mxu0 0.0
    %3139 = vmatprep.subr.mxu0 0.0
    %3140 = vmatpush1.xpose.msra.mxu0 0.0
    %3141 = vmatprep.subr.mxu0 0.0
    %3142 = vmatpush1.xpose.msra.mxu0 0.0
    %3143 = vmatprep.subr.mxu0 0.0
    %3144 = vmatpush1.xpose.msra.mxu0 0.0
    %3145 = vmatprep.subr.mxu0 0.0
    %3146 = vmatpush1.xpose.msra.mxu0 0.0
    %3147 = vmatprep.subr.mxu0 0.0
    %3148 = vmatpush1.xpose.msra.mxu0 0.0
    %3149 = vmatprep.subr.mxu0 0.0
    %3150 = vmatpush1.xpose.msra.mxu0 0.0
    %3151 = vmatprep.subr.mxu0 0.0
    %3152 = vmatpush1.xpose.msra.mxu0 0.0
    %3153 = vmatprep.subr.mxu0 0.0
    %3154 = vmatpush1.xpose.msra.mxu0 0.0
    %3155 = vmatprep.subr.mxu0 0.0
    %3156 = vmatpush1.xpose.msra.mxu0 0.0
    %3157 = vmatprep.subr.mxu0 0.0
    %3158 = vmatpush1.xpose.msra.mxu0 0.0
    %3159 = vmatprep.subr.mxu0 0.0
    %3160 = vmatpush1.xpose.msra.mxu0 0.0
    %3161 = vmatprep.subr.mxu0 0.0
    %3162 = vmatpush1.xpose.msra.mxu0 0.0
    %3163 = vmatprep.mubr.f32.mxu0 0.0
    %3164 = vmatmul.mubr.f32.gmra.mrb[0].mxu0 %v2503
    %v3165 = vpop.f32.mrb[0].mxu0
    %v3166 = vadd.f32 0.0, %v3165
    %v3167 = vpop.f32.mrb[0].mxu0
    %3168 = vmatprep.mubr.f32.mxu0 0.0
    %3169 = vmatmul.mubr.f32.gmra.mrb[0].mxu0 %v2506
    %v3170 = vpop.f32.mrb[0].mxu0
    %v3171 = vadd.f32 0.0, %v3170
    %v3172 = vpop.f32.mrb[0].mxu0
    %3173 = vdwg.mxu0
    %v3175 = vsel %vm409, %v3088, 0
    %v3178 = vsel %vm409, %v3093, 0
    %v3181 = vsel %vm409, %v3010, 0
    %v3184 = vsel %vm409, %v3015, 0
    %3186 = vmatprep.subr.mxu0 0.0
    %3187 = vmatpush1.xpose.msra.mxu0 %v3181
    %3188 = vmatprep.subr.mxu0 0.0
    %3189 = vmatpush1.xpose.msra.mxu0 %v3184
    %3190 = vmatprep.subr.mxu0 0.0
    %3191 = vmatpush1.xpose.msra.mxu0 0.0
    %3192 = vmatprep.subr.mxu0 0.0
    %3193 = vmatpush1.xpose.msra.mxu0 0.0
    %3194 = vmatprep.subr.mxu0 0.0
    %3195 = vmatpush1.xpose.msra.mxu0 0.0
    %3196 = vmatprep.subr.mxu0 0.0
    %3197 = vmatpush1.xpose.msra.mxu0 0.0
    %3198 = vmatprep.subr.mxu0 0.0
    %3199 = vmatpush1.xpose.msra.mxu0 0.0
    %3200 = vmatprep.subr.mxu0 0.0
    %3201 = vmatpush1.xpose.msra.mxu0 0.0
    %3202 = vmatprep.subr.mxu0 0.0
    %3203 = vmatpush1.xpose.msra.mxu0 0.0
    %3204 = vmatprep.subr.mxu0 0.0
    %3205 = vmatpush1.xpose.msra.mxu0 0.0
    %3206 = vmatprep.subr.mxu0 0.0
    %3207 = vmatpush1.xpose.msra.mxu0 0.0
    %3208 = vmatprep.subr.mxu0 0.0
    %3209 = vmatpush1.xpose.msra.mxu0 0.0
    %3210 = vmatprep.subr.mxu0 0.0
    %3211 = vmatpush1.xpose.msra.mxu0 0.0
    %3212 = vmatprep.subr.mxu0 0.0
    %3213 = vmatpush1.xpose.msra.mxu0 0.0
    %3214 = vmatprep.subr.mxu0 0.0
    %3215 = vmatpush1.xpose.msra.mxu0 0.0
    %3216 = vmatprep.subr.mxu0 0.0
    %3217 = vmatpush1.xpose.msra.mxu0 0.0
    %3218 = vmatprep.subr.mxu0 0.0
    %3219 = vmatpush1.xpose.msra.mxu0 0.0
    %3220 = vmatprep.subr.mxu0 0.0
    %3221 = vmatpush1.xpose.msra.mxu0 0.0
    %3222 = vmatprep.subr.mxu0 0.0
    %3223 = vmatpush1.xpose.msra.mxu0 0.0
    %3224 = vmatprep.subr.mxu0 0.0
    %3225 = vmatpush1.xpose.msra.mxu0 0.0
    %3226 = vmatprep.subr.mxu0 0.0
    %3227 = vmatpush1.xpose.msra.mxu0 0.0
    %3228 = vmatprep.subr.mxu0 0.0
    %3229 = vmatpush1.xpose.msra.mxu0 0.0
    %3230 = vmatprep.subr.mxu0 0.0
    %3231 = vmatpush1.xpose.msra.mxu0 0.0
    %3232 = vmatprep.subr.mxu0 0.0
    %3233 = vmatpush1.xpose.msra.mxu0 0.0
    %3234 = vmatprep.subr.mxu0 0.0
    %3235 = vmatpush1.xpose.msra.mxu0 0.0
    %3236 = vmatprep.subr.mxu0 0.0
    %3237 = vmatpush1.xpose.msra.mxu0 0.0
    %3238 = vmatprep.subr.mxu0 0.0
    %3239 = vmatpush1.xpose.msra.mxu0 0.0
    %3240 = vmatprep.subr.mxu0 0.0
    %3241 = vmatpush1.xpose.msra.mxu0 0.0
    %3242 = vmatprep.subr.mxu0 0.0
    %3243 = vmatpush1.xpose.msra.mxu0 0.0
    %3244 = vmatprep.subr.mxu0 0.0
    %3245 = vmatpush1.xpose.msra.mxu0 0.0
    %3246 = vmatprep.subr.mxu0 0.0
    %3247 = vmatpush1.xpose.msra.mxu0 0.0
    %3248 = vmatprep.subr.mxu0 0.0
    %3249 = vmatpush1.xpose.msra.mxu0 0.0
    %3250 = vmatprep.mubr.f32.mxu0 0.0
    %3251 = vmatmul.mubr.f32.gmra.mrb[0].mxu0 %v3175
    %v3252 = vpop.f32.mrb[0].mxu0
    %v3253 = vadd.f32 0.0, %v3252
    %v3254 = vpop.f32.mrb[0].mxu0
    %3255 = vmatprep.mubr.f32.mxu0 0.0
    %3256 = vmatmul.mubr.f32.gmra.mrb[0].mxu0 %v3178
    %v3257 = vpop.f32.mrb[0].mxu0
    %v3258 = vadd.f32 0.0, %v3257
    %v3259 = vpop.f32.mrb[0].mxu0
    %3260 = vdwg.mxu0
    %v3261 = vmul.f32 %v3253, 0.17677669
    %v3262 = vmul.f32 %v3258, 0.17677669
    %v3263 = vadd.f32 %v3261, %v122
    %v3264 = vadd.f32 %v3262, %v123
    %v3265 = vsel %vm501, %v3263, -inf
    %3266 = vmax.xlane.f32.xlu0 %v3265
    %v3267 = vpop.xlane.xlu0 %3266
    %v3268 = vsel %vm501, %v3264, -inf
    %3269 = vmax.xlane.f32.xlu0 %v3268
    %v3270 = vpop.xlane.xlu0 %3269
    %v3271 = vsub.f32 %v3263, %v3267
    %v3272 = vsub.f32 %v3264, %v3270
    %v3273 = vmul.f32 %v3271, 1.442695
    %v3274 = vpow.pop %v3273
    %v3275 = vmul.f32 %v3272, 1.442695
    %v3276 = vpow.pop %v3275
    %v3277 = vsel %vm501, %v3274, 0.0
    %3278 = vadd.xlane.f32.xlu0 %v3277
    %v3279 = vpop.xlane.xlu0 %3278
    %v3280 = vsel %vm501, %v3276, 0.0
    %3281 = vadd.xlane.f32.xlu0 %v3280
    %v3282 = vpop.xlane.xlu0 %3281
    %v3283 = vrcp.pop %v3279
    %v3284 = vmul.f32 %v3274, %v3283
    %v3285 = vrcp.pop %v3282
    %v3286 = vmul.f32 %v3276, %v3285
    %v3288 = vsel %vm501, %v3284, 0
    %v3291 = vsel %vm501, %v3286, 0
    %3293 = vmatprep.subr.mxu0 0.0
    %3294 = vmatpush1.msra.mxu0 %v3166
    %3295 = vmatprep.subr.mxu0 0.0
    %3296 = vmatpush1.msra.mxu0 %v3171
    %3297 = vmatprep.subr.mxu0 0.0
    %3298 = vmatpush1.msra.mxu0 0.0
    %3299 = vmatprep.subr.mxu0 0.0
    %3300 = vmatpush1.msra.mxu0 0.0
    %3301 = vmatprep.subr.mxu0 0.0
    %3302 = vmatpush1.msra.mxu0 0.0
    %3303 = vmatprep.subr.mxu0 0.0
    %3304 = vmatpush1.msra.mxu0 0.0
    %3305 = vmatprep.subr.mxu0 0.0
    %3306 = vmatpush1.msra.mxu0 0.0
    %3307 = vmatprep.subr.mxu0 0.0
    %3308 = vmatpush1.msra.mxu0 0.0
    %3309 = vmatprep.subr.mxu0 0.0
    %3310 = vmatpush1.msra.mxu0 0.0
    %3311 = vmatprep.subr.mxu0 0.0
    %3312 = vmatpush1.msra.mxu0 0.0
    %3313 = vmatprep.subr.mxu0 0.0
    %3314 = vmatpush1.msra.mxu0 0.0
    %3315 = vmatprep.subr.mxu0 0.0
    %3316 = vmatpush1.msra.mxu0 0.0
    %3317 = vmatprep.subr.mxu0 0.0
    %3318 = vmatpush1.msra.mxu0 0.0
    %3319 = vmatprep.subr.mxu0 0.0
    %3320 = vmatpush1.msra.mxu0 0.0
    %3321 = vmatprep.subr.mxu0 0.0
    %3322 = vmatpush1.msra.mxu0 0.0
    %3323 = vmatprep.subr.mxu0 0.0
    %3324 = vmatpush1.msra.mxu0 0.0
    %3325 = vmatprep.subr.mxu0 0.0
    %3326 = vmatpush1.msra.mxu0 0.0
    %3327 = vmatprep.subr.mxu0 0.0
    %3328 = vmatpush1.msra.mxu0 0.0
    %3329 = vmatprep.subr.mxu0 0.0
    %3330 = vmatpush1.msra.mxu0 0.0
    %3331 = vmatprep.subr.mxu0 0.0
    %3332 = vmatpush1.msra.mxu0 0.0
    %3333 = vmatprep.subr.mxu0 0.0
    %3334 = vmatpush1.msra.mxu0 0.0
    %3335 = vmatprep.subr.mxu0 0.0
    %3336 = vmatpush1.msra.mxu0 0.0
    %3337 = vmatprep.subr.mxu0 0.0
    %3338 = vmatpush1.msra.mxu0 0.0
    %3339 = vmatprep.subr.mxu0 0.0
    %3340 = vmatpush1.msra.mxu0 0.0
    %3341 = vmatprep.subr.mxu0 0.0
    %3342 = vmatpush1.msra.mxu0 0.0
    %3343 = vmatprep.subr.mxu0 0.0
    %3344 = vmatpush1.msra.mxu0 0.0
    %3345 = vmatprep.subr.mxu0 0.0
    %3346 = vmatpush1.msra.mxu0 0.0
    %3347 = vmatprep.subr.mxu0 0.0
    %3348 = vmatpush1.msra.mxu0 0.0
    %3349 = vmatprep.subr.mxu0 0.0
    %3350 = vmatpush1.msra.mxu0 0.0
    %3351 = vmatprep.subr.mxu0 0.0
    %3352 = vmatpush1.msra.mxu0 0.0
    %3353 = vmatprep.subr.mxu0 0.0
    %3354 = vmatpush1.msra.mxu0 0.0
    %3355 = vmatprep.subr.mxu0 0.0
    %3356 = vmatpush1.msra.mxu0 0.0
    %3357 = vmatprep.mubr.f32.mxu0 0.0
    %3358 = vmatmul.mubr.f32.gmra.mrb[0].mxu0 %v3288
    %v3359 = vpop.f32.mrb[0].mxu0
    %v3360 = vadd.f32 0.0, %v3359
    %v3361 = vpop.f32.mrb[0].mxu0
    %3362 = vmatprep.mubr.f32.mxu0 0.0
    %3363 = vmatmul.mubr.f32.gmra.mrb[0].mxu0 %v3291
    %v3364 = vpop.f32.mrb[0].mxu0
    %v3365 = vadd.f32 0.0, %v3364
    %v3366 = vpop.f32.mrb[0].mxu0
    %3367 = vdwg.mxu0
    %v3368 = vld [vmem:[#allocation2 + $0x178] sm:$0xff]
    %v3370 = vsel %vm409, %v3360, 0
    %v3373 = vsel %vm409, %v3365, 0
    %3375 = vmatprep.subr.mxu0 0.0
    %3376 = vmatpush1.msra.mxu0 %v3368
    %3377 = vmatprep.subr.mxu0 0.0
    %3378 = vmatpush1.msra.mxu0 0.0
    %3379 = vmatprep.subr.mxu0 0.0
    %3380 = vmatpush1.msra.mxu0 0.0
    %3381 = vmatprep.subr.mxu0 0.0
    %3382 = vmatpush1.msra.mxu0 0.0
    %3383 = vmatprep.subr.mxu0 0.0
    %3384 = vmatpush1.msra.mxu0 0.0
    %3385 = vmatprep.subr.mxu0 0.0
    %3386 = vmatpush1.msra.mxu0 0.0
    %3387 = vmatprep.subr.mxu0 0.0
    %3388 = vmatpush1.msra.mxu0 0.0
    %3389 = vmatprep.subr.mxu0 0.0
    %3390 = vmatpush1.msra.mxu0 0.0
    %3391 = vmatprep.subr.mxu0 0.0
    %3392 = vmatpush1.msra.mxu0 0.0
    %3393 = vmatprep.subr.mxu0 0.0
    %3394 = vmatpush1.msra.mxu0 0.0
    %3395 = vmatprep.subr.mxu0 0.0
    %3396 = vmatpush1.msra.mxu0 0.0
    %3397 = vmatprep.subr.mxu0 0.0
    %3398 = vmatpush1.msra.mxu0 0.0
    %3399 = vmatprep.subr.mxu0 0.0
    %3400 = vmatpush1.msra.mxu0 0.0
    %3401 = vmatprep.subr.mxu0 0.0
    %3402 = vmatpush1.msra.mxu0 0.0
    %3403 = vmatprep.subr.mxu0 0.0
    %3404 = vmatpush1.msra.mxu0 0.0
    %3405 = vmatprep.subr.mxu0 0.0
    %3406 = vmatpush1.msra.mxu0 0.0
    %3407 = vmatprep.subr.mxu0 0.0
    %3408 = vmatpush1.msra.mxu0 0.0
    %3409 = vmatprep.subr.mxu0 0.0
    %3410 = vmatpush1.msra.mxu0 0.0
    %3411 = vmatprep.subr.mxu0 0.0
    %3412 = vmatpush1.msra.mxu0 0.0
    %3413 = vmatprep.subr.mxu0 0.0
    %3414 = vmatpush1.msra.mxu0 0.0
    %3415 = vmatprep.subr.mxu0 0.0
    %3416 = vmatpush1.msra.mxu0 0.0
    %3417 = vmatprep.subr.mxu0 0.0
    %3418 = vmatpush1.msra.mxu0 0.0
    %3419 = vmatprep.subr.mxu0 0.0
    %3420 = vmatpush1.msra.mxu0 0.0
    %3421 = vmatprep.subr.mxu0 0.0
    %3422 = vmatpush1.msra.mxu0 0.0
    %3423 = vmatprep.subr.mxu0 0.0
    %3424 = vmatpush1.msra.mxu0 0.0
    %3425 = vmatprep.subr.mxu0 0.0
    %3426 = vmatpush1.msra.mxu0 0.0
    %3427 = vmatprep.subr.mxu0 0.0
    %3428 = vmatpush1.msra.mxu0 0.0
    %3429 = vmatprep.subr.mxu0 0.0
    %3430 = vmatpush1.msra.mxu0 0.0
    %3431 = vmatprep.subr.mxu0 0.0
    %3432 = vmatpush1.msra.mxu0 0.0
    %3433 = vmatprep.subr.mxu0 0.0
    %3434 = vmatpush1.msra.mxu0 0.0
    %3435 = vmatprep.subr.mxu0 0.0
    %3436 = vmatpush1.msra.mxu0 0.0
    %3437 = vmatprep.subr.mxu0 0.0
    %3438 = vmatpush1.msra.mxu0 0.0
    %3439 = vmatprep.mubr.f32.mxu0 0.0
    %3440 = vmatmul.mubr.f32.gmra.mrb[0].mxu0 %v3370
    %v3441 = vpop.f32.mrb[0].mxu0
    %v3442 = vadd.f32 0.0, %v3441
    %v3443 = vpop.f32.mrb[0].mxu0
    %3444 = vmatprep.mubr.f32.mxu0 0.0
    %3445 = vmatmul.mubr.f32.gmra.mrb[0].mxu0 %v3373
    %v3446 = vpop.f32.mrb[0].mxu0
    %v3447 = vadd.f32 0.0, %v3446
    %v3448 = vpop.f32.mrb[0].mxu0
    %3449 = vdwg.mxu0
    %v3451 = vsel %vm409, %v2928, 0
    %v3454 = vsel %vm409, %v2933, 0
    %3456 = vmatprep.subr.mxu0 0.0
    %3457 = vmatpush1.msra.mxu0 %v2936
    %3458 = vmatprep.subr.mxu0 0.0
    %3459 = vmatpush1.msra.mxu0 0.0
    %3460 = vmatprep.subr.mxu0 0.0
    %3461 = vmatpush1.msra.mxu0 0.0
    %3462 = vmatprep.subr.mxu0 0.0
    %3463 = vmatpush1.msra.mxu0 0.0
    %3464 = vmatprep.subr.mxu0 0.0
    %3465 = vmatpush1.msra.mxu0 0.0
    %3466 = vmatprep.subr.mxu0 0.0
    %3467 = vmatpush1.msra.mxu0 0.0
    %3468 = vmatprep.subr.mxu0 0.0
    %3469 = vmatpush1.msra.mxu0 0.0
    %3470 = vmatprep.subr.mxu0 0.0
    %3471 = vmatpush1.msra.mxu0 0.0
    %3472 = vmatprep.subr.mxu0 0.0
    %3473 = vmatpush1.msra.mxu0 0.0
    %3474 = vmatprep.subr.mxu0 0.0
    %3475 = vmatpush1.msra.mxu0 0.0
    %3476 = vmatprep.subr.mxu0 0.0
    %3477 = vmatpush1.msra.mxu0 0.0
    %3478 = vmatprep.subr.mxu0 0.0
    %3479 = vmatpush1.msra.mxu0 0.0
    %3480 = vmatprep.subr.mxu0 0.0
    %3481 = vmatpush1.msra.mxu0 0.0
    %3482 = vmatprep.subr.mxu0 0.0
    %3483 = vmatpush1.msra.mxu0 0.0
    %3484 = vmatprep.subr.mxu0 0.0
    %3485 = vmatpush1.msra.mxu0 0.0
    %3486 = vmatprep.subr.mxu0 0.0
    %3487 = vmatpush1.msra.mxu0 0.0
    %3488 = vmatprep.subr.mxu0 0.0
    %3489 = vmatpush1.msra.mxu0 0.0
    %3490 = vmatprep.subr.mxu0 0.0
    %3491 = vmatpush1.msra.mxu0 0.0
    %3492 = vmatprep.subr.mxu0 0.0
    %3493 = vmatpush1.msra.mxu0 0.0
    %3494 = vmatprep.subr.mxu0 0.0
    %3495 = vmatpush1.msra.mxu0 0.0
    %3496 = vmatprep.subr.mxu0 0.0
    %3497 = vmatpush1.msra.mxu0 0.0
    %3498 = vmatprep.subr.mxu0 0.0
    %3499 = vmatpush1.msra.mxu0 0.0
    %3500 = vmatprep.subr.mxu0 0.0
    %3501 = vmatpush1.msra.mxu0 0.0
    %3502 = vmatprep.subr.mxu0 0.0
    %3503 = vmatpush1.msra.mxu0 0.0
    %3504 = vmatprep.subr.mxu0 0.0
    %3505 = vmatpush1.msra.mxu0 0.0
    %3506 = vmatprep.subr.mxu0 0.0
    %3507 = vmatpush1.msra.mxu0 0.0
    %3508 = vmatprep.subr.mxu0 0.0
    %3509 = vmatpush1.msra.mxu0 0.0
    %3510 = vmatprep.subr.mxu0 0.0
    %3511 = vmatpush1.msra.mxu0 0.0
    %3512 = vmatprep.subr.mxu0 0.0
    %3513 = vmatpush1.msra.mxu0 0.0
    %3514 = vmatprep.subr.mxu0 0.0
    %3515 = vmatpush1.msra.mxu0 0.0
    %3516 = vmatprep.subr.mxu0 0.0
    %3517 = vmatpush1.msra.mxu0 0.0
    %3518 = vmatprep.subr.mxu0 0.0
    %3519 = vmatpush1.msra.mxu0 0.0
    %3520 = vmatprep.mubr.f32.mxu0 0.0
    %3521 = vmatmul.mubr.f32.gmra.mrb[0].mxu0 %v3451
    %v3522 = vpop.f32.mrb[0].mxu0
    %v3523 = vadd.f32 %v3442, %v3522
    %v3524 = vpop.f32.mrb[0].mxu0
    %3525 = vmatprep.mubr.f32.mxu0 0.0
    %3526 = vmatmul.mubr.f32.gmra.mrb[0].mxu0 %v3454
    %v3527 = vpop.f32.mrb[0].mxu0
    %v3528 = vadd.f32 %v3447, %v3527
    %v3529 = vpop.f32.mrb[0].mxu0
    %3530 = vdwg.mxu0
    %v3531 = vld [vmem:[#allocation2 + $0x140] sm:$0xff]
    %v3532 = vld [vmem:[#allocation2 + $0x148] sm:$0xff]
    %v3533 = vld [vmem:[#allocation2 + $0x150] sm:$0xff]
    %v3535 = vsel %vm126, %v3531, 0
    %3537 = vmatprep.subr.mxu0 0.0
    %3538 = vmatpush1.xpose.msra.mxu0 %v3535
    %3539 = vmatprep.subr.mxu0 0.0
    %3540 = vmatpush1.xpose.msra.mxu0 0.0
    %3541 = vmatprep.subr.mxu0 0.0
    %3542 = vmatpush1.xpose.msra.mxu0 0.0
    %3543 = vmatprep.subr.mxu0 0.0
    %3544 = vmatpush1.xpose.msra.mxu0 0.0
    %3545 = vmatprep.subr.mxu0 0.0
    %3546 = vmatpush1.xpose.msra.mxu0 0.0
    %3547 = vmatprep.subr.mxu0 0.0
    %3548 = vmatpush1.xpose.msra.mxu0 0.0
    %3549 = vmatprep.subr.mxu0 0.0
    %3550 = vmatpush1.xpose.msra.mxu0 0.0
    %3551 = vmatprep.subr.mxu0 0.0
    %3552 = vmatpush1.xpose.msra.mxu0 0.0
    %3553 = vmatprep.subr.mxu0 0.0
    %3554 = vmatpush1.xpose.msra.mxu0 0.0
    %3555 = vmatprep.subr.mxu0 0.0
    %3556 = vmatpush1.xpose.msra.mxu0 0.0
    %3557 = vmatprep.subr.mxu0 0.0
    %3558 = vmatpush1.xpose.msra.mxu0 0.0
    %3559 = vmatprep.subr.mxu0 0.0
    %3560 = vmatpush1.xpose.msra.mxu0 0.0
    %3561 = vmatprep.subr.mxu0 0.0
    %3562 = vmatpush1.xpose.msra.mxu0 0.0
    %3563 = vmatprep.subr.mxu0 0.0
    %3564 = vmatpush1.xpose.msra.mxu0 0.0
    %3565 = vmatprep.subr.mxu0 0.0
    %3566 = vmatpush1.xpose.msra.mxu0 0.0
    %3567 = vmatprep.subr.mxu0 0.0
    %3568 = vmatpush1.xpose.msra.mxu0 0.0
    %3569 = vmatprep.subr.mxu0 0.0
    %3570 = vmatpush1.xpose.msra.mxu0 0.0
    %3571 = vmatprep.subr.mxu0 0.0
    %3572 = vmatpush1.xpose.msra.mxu0 0.0
    %3573 = vmatprep.subr.mxu0 0.0
    %3574 = vmatpush1.xpose.msra.mxu0 0.0
    %3575 = vmatprep.subr.mxu0 0.0
    %3576 = vmatpush1.xpose.msra.mxu0 0.0
    %3577 = vmatprep.subr.mxu0 0.0
    %3578 = vmatpush1.xpose.msra.mxu0 0.0
    %3579 = vmatprep.subr.mxu0 0.0
    %3580 = vmatpush1.xpose.msra.mxu0 0.0
    %3581 = vmatprep.subr.mxu0 0.0
    %3582 = vmatpush1.xpose.msra.mxu0 0.0
    %3583 = vmatprep.subr.mxu0 0.0
    %3584 = vmatpush1.xpose.msra.mxu0 0.0
    %3585 = vmatprep.subr.mxu0 0.0
    %3586 = vmatpush1.xpose.msra.mxu0 0.0
    %3587 = vmatprep.subr.mxu0 0.0
    %3588 = vmatpush1.xpose.msra.mxu0 0.0
    %3589 = vmatprep.subr.mxu0 0.0
    %3590 = vmatpush1.xpose.msra.mxu0 0.0
    %3591 = vmatprep.subr.mxu0 0.0
    %3592 = vmatpush1.xpose.msra.mxu0 0.0
    %3593 = vmatprep.subr.mxu0 0.0
    %3594 = vmatpush1.xpose.msra.mxu0 0.0
    %3595 = vmatprep.subr.mxu0 0.0
    %3596 = vmatpush1.xpose.msra.mxu0 0.0
    %3597 = vmatprep.subr.mxu0 0.0
    %3598 = vmatpush1.xpose.msra.mxu0 0.0
    %3599 = vmatprep.subr.mxu0 0.0
    %3600 = vmatpush1.xpose.msra.mxu0 0.0
    %3601 = vmatprep.mubr.f32.mxu0 0.0
    %3602 = vmatmul.mubr.f32.gmra.mrb[0].mxu0 %v2503
    %v3603 = vpop.f32.mrb[0].mxu0
    %v3604 = vadd.f32 0.0, %v3603
    %v3605 = vpop.f32.mrb[0].mxu0
    %3606 = vmatprep.mubr.f32.mxu0 0.0
    %3607 = vmatmul.mubr.f32.gmra.mrb[0].mxu0 %v2506
    %v3608 = vpop.f32.mrb[0].mxu0
    %v3609 = vadd.f32 0.0, %v3608
    %v3610 = vpop.f32.mrb[0].mxu0
    %3611 = vdwg.mxu0
    %v3613 = vsel %vm126, %v3532, 0
    %3615 = vmatprep.subr.mxu0 0.0
    %3616 = vmatpush1.xpose.msra.mxu0 %v3613
    %3617 = vmatprep.subr.mxu0 0.0
    %3618 = vmatpush1.xpose.msra.mxu0 0.0
    %3619 = vmatprep.subr.mxu0 0.0
    %3620 = vmatpush1.xpose.msra.mxu0 0.0
    %3621 = vmatprep.subr.mxu0 0.0
    %3622 = vmatpush1.xpose.msra.mxu0 0.0
    %3623 = vmatprep.subr.mxu0 0.0
    %3624 = vmatpush1.xpose.msra.mxu0 0.0
    %3625 = vmatprep.subr.mxu0 0.0
    %3626 = vmatpush1.xpose.msra.mxu0 0.0
    %3627 = vmatprep.subr.mxu0 0.0
    %3628 = vmatpush1.xpose.msra.mxu0 0.0
    %3629 = vmatprep.subr.mxu0 0.0
    %3630 = vmatpush1.xpose.msra.mxu0 0.0
    %3631 = vmatprep.subr.mxu0 0.0
    %3632 = vmatpush1.xpose.msra.mxu0 0.0
    %3633 = vmatprep.subr.mxu0 0.0
    %3634 = vmatpush1.xpose.msra.mxu0 0.0
    %3635 = vmatprep.subr.mxu0 0.0
    %3636 = vmatpush1.xpose.msra.mxu0 0.0
    %3637 = vmatprep.subr.mxu0 0.0
    %3638 = vmatpush1.xpose.msra.mxu0 0.0
    %3639 = vmatprep.subr.mxu0 0.0
    %3640 = vmatpush1.xpose.msra.mxu0 0.0
    %3641 = vmatprep.subr.mxu0 0.0
    %3642 = vmatpush1.xpose.msra.mxu0 0.0
    %3643 = vmatprep.subr.mxu0 0.0
    %3644 = vmatpush1.xpose.msra.mxu0 0.0
    %3645 = vmatprep.subr.mxu0 0.0
    %3646 = vmatpush1.xpose.msra.mxu0 0.0
    %3647 = vmatprep.subr.mxu0 0.0
    %3648 = vmatpush1.xpose.msra.mxu0 0.0
    %3649 = vmatprep.subr.mxu0 0.0
    %3650 = vmatpush1.xpose.msra.mxu0 0.0
    %3651 = vmatprep.subr.mxu0 0.0
    %3652 = vmatpush1.xpose.msra.mxu0 0.0
    %3653 = vmatprep.subr.mxu0 0.0
    %3654 = vmatpush1.xpose.msra.mxu0 0.0
    %3655 = vmatprep.subr.mxu0 0.0
    %3656 = vmatpush1.xpose.msra.mxu0 0.0
    %3657 = vmatprep.subr.mxu0 0.0
    %3658 = vmatpush1.xpose.msra.mxu0 0.0
    %3659 = vmatprep.subr.mxu0 0.0
    %3660 = vmatpush1.xpose.msra.mxu0 0.0
    %3661 = vmatprep.subr.mxu0 0.0
    %3662 = vmatpush1.xpose.msra.mxu0 0.0
    %3663 = vmatprep.subr.mxu0 0.0
    %3664 = vmatpush1.xpose.msra.mxu0 0.0
    %3665 = vmatprep.subr.mxu0 0.0
    %3666 = vmatpush1.xpose.msra.mxu0 0.0
    %3667 = vmatprep.subr.mxu0 0.0
    %3668 = vmatpush1.xpose.msra.mxu0 0.0
    %3669 = vmatprep.subr.mxu0 0.0
    %3670 = vmatpush1.xpose.msra.mxu0 0.0
    %3671 = vmatprep.subr.mxu0 0.0
    %3672 = vmatpush1.xpose.msra.mxu0 0.0
    %3673 = vmatprep.subr.mxu0 0.0
    %3674 = vmatpush1.xpose.msra.mxu0 0.0
    %3675 = vmatprep.subr.mxu0 0.0
    %3676 = vmatpush1.xpose.msra.mxu0 0.0
    %3677 = vmatprep.subr.mxu0 0.0
    %3678 = vmatpush1.xpose.msra.mxu0 0.0
    %3679 = vmatprep.mubr.f32.mxu0 0.0
    %3680 = vmatmul.mubr.f32.gmra.mrb[0].mxu0 %v2503
    %v3681 = vpop.f32.mrb[0].mxu0
    %v3682 = vadd.f32 0.0, %v3681
    %v3683 = vpop.f32.mrb[0].mxu0
    %3684 = vmatprep.mubr.f32.mxu0 0.0
    %3685 = vmatmul.mubr.f32.gmra.mrb[0].mxu0 %v2506
    %v3686 = vpop.f32.mrb[0].mxu0
    %v3687 = vadd.f32 0.0, %v3686
    %v3688 = vpop.f32.mrb[0].mxu0
    %3689 = vdwg.mxu0
    %v3691 = vsel %vm126, %v3533, 0
    %3693 = vmatprep.subr.mxu0 0.0
    %3694 = vmatpush1.xpose.msra.mxu0 %v3691
    %3695 = vmatprep.subr.mxu0 0.0
    %3696 = vmatpush1.xpose.msra.mxu0 0.0
    %3697 = vmatprep.subr.mxu0 0.0
    %3698 = vmatpush1.xpose.msra.mxu0 0.0
    %3699 = vmatprep.subr.mxu0 0.0
    %3700 = vmatpush1.xpose.msra.mxu0 0.0
    %3701 = vmatprep.subr.mxu0 0.0
    %3702 = vmatpush1.xpose.msra.mxu0 0.0
    %3703 = vmatprep.subr.mxu0 0.0
    %3704 = vmatpush1.xpose.msra.mxu0 0.0
    %3705 = vmatprep.subr.mxu0 0.0
    %3706 = vmatpush1.xpose.msra.mxu0 0.0
    %3707 = vmatprep.subr.mxu0 0.0
    %3708 = vmatpush1.xpose.msra.mxu0 0.0
    %3709 = vmatprep.subr.mxu0 0.0
    %3710 = vmatpush1.xpose.msra.mxu0 0.0
    %3711 = vmatprep.subr.mxu0 0.0
    %3712 = vmatpush1.xpose.msra.mxu0 0.0
    %3713 = vmatprep.subr.mxu0 0.0
    %3714 = vmatpush1.xpose.msra.mxu0 0.0
    %3715 = vmatprep.subr.mxu0 0.0
    %3716 = vmatpush1.xpose.msra.mxu0 0.0
    %3717 = vmatprep.subr.mxu0 0.0
    %3718 = vmatpush1.xpose.msra.mxu0 0.0
    %3719 = vmatprep.subr.mxu0 0.0
    %3720 = vmatpush1.xpose.msra.mxu0 0.0
    %3721 = vmatprep.subr.mxu0 0.0
    %3722 = vmatpush1.xpose.msra.mxu0 0.0
    %3723 = vmatprep.subr.mxu0 0.0
    %3724 = vmatpush1.xpose.msra.mxu0 0.0
    %3725 = vmatprep.subr.mxu0 0.0
    %3726 = vmatpush1.xpose.msra.mxu0 0.0
    %3727 = vmatprep.subr.mxu0 0.0
    %3728 = vmatpush1.xpose.msra.mxu0 0.0
    %3729 = vmatprep.subr.mxu0 0.0
    %3730 = vmatpush1.xpose.msra.mxu0 0.0
    %3731 = vmatprep.subr.mxu0 0.0
    %3732 = vmatpush1.xpose.msra.mxu0 0.0
    %3733 = vmatprep.subr.mxu0 0.0
    %3734 = vmatpush1.xpose.msra.mxu0 0.0
    %3735 = vmatprep.subr.mxu0 0.0
    %3736 = vmatpush1.xpose.msra.mxu0 0.0
    %3737 = vmatprep.subr.mxu0 0.0
    %3738 = vmatpush1.xpose.msra.mxu0 0.0
    %3739 = vmatprep.subr.mxu0 0.0
    %3740 = vmatpush1.xpose.msra.mxu0 0.0
    %3741 = vmatprep.subr.mxu0 0.0
    %3742 = vmatpush1.xpose.msra.mxu0 0.0
    %3743 = vmatprep.subr.mxu0 0.0
    %3744 = vmatpush1.xpose.msra.mxu0 0.0
    %3745 = vmatprep.subr.mxu0 0.0
    %3746 = vmatpush1.xpose.msra.mxu0 0.0
    %3747 = vmatprep.subr.mxu0 0.0
    %3748 = vmatpush1.xpose.msra.mxu0 0.0
    %3749 = vmatprep.subr.mxu0 0.0
    %3750 = vmatpush1.xpose.msra.mxu0 0.0
    %3751 = vmatprep.subr.mxu0 0.0
    %3752 = vmatpush1.xpose.msra.mxu0 0.0
    %3753 = vmatprep.subr.mxu0 0.0
    %3754 = vmatpush1.xpose.msra.mxu0 0.0
    %3755 = vmatprep.subr.mxu0 0.0
    %3756 = vmatpush1.xpose.msra.mxu0 0.0
    %3757 = vmatprep.mubr.f32.mxu0 0.0
    %3758 = vmatmul.mubr.f32.gmra.mrb[0].mxu0 %v2503
    %v3759 = vpop.f32.mrb[0].mxu0
    %v3760 = vadd.f32 0.0, %v3759
    %v3761 = vpop.f32.mrb[0].mxu0
    %3762 = vmatprep.mubr.f32.mxu0 0.0
    %3763 = vmatmul.mubr.f32.gmra.mrb[0].mxu0 %v2506
    %v3764 = vpop.f32.mrb[0].mxu0
    %v3765 = vadd.f32 0.0, %v3764
    %v3766 = vpop.f32.mrb[0].mxu0
    %3767 = vdwg.mxu0
    %v3769 = vsel %vm409, %v3682, 0
    %v3772 = vsel %vm409, %v3687, 0
    %v3775 = vsel %vm409, %v3604, 0
    %v3778 = vsel %vm409, %v3609, 0
    %3780 = vmatprep.subr.mxu0 0.0
    %3781 = vmatpush1.xpose.msra.mxu0 %v3775
    %3782 = vmatprep.subr.mxu0 0.0
    %3783 = vmatpush1.xpose.msra.mxu0 %v3778
    %3784 = vmatprep.subr.mxu0 0.0
    %3785 = vmatpush1.xpose.msra.mxu0 0.0
    %3786 = vmatprep.subr.mxu0 0.0
    %3787 = vmatpush1.xpose.msra.mxu0 0.0
    %3788 = vmatprep.subr.mxu0 0.0
    %3789 = vmatpush1.xpose.msra.mxu0 0.0
    %3790 = vmatprep.subr.mxu0 0.0
    %3791 = vmatpush1.xpose.msra.mxu0 0.0
    %3792 = vmatprep.subr.mxu0 0.0
    %3793 = vmatpush1.xpose.msra.mxu0 0.0
    %3794 = vmatprep.subr.mxu0 0.0
    %3795 = vmatpush1.xpose.msra.mxu0 0.0
    %3796 = vmatprep.subr.mxu0 0.0
    %3797 = vmatpush1.xpose.msra.mxu0 0.0
    %3798 = vmatprep.subr.mxu0 0.0
    %3799 = vmatpush1.xpose.msra.mxu0 0.0
    %3800 = vmatprep.subr.mxu0 0.0
    %3801 = vmatpush1.xpose.msra.mxu0 0.0
    %3802 = vmatprep.subr.mxu0 0.0
    %3803 = vmatpush1.xpose.msra.mxu0 0.0
    %3804 = vmatprep.subr.mxu0 0.0
    %3805 = vmatpush1.xpose.msra.mxu0 0.0
    %3806 = vmatprep.subr.mxu0 0.0
    %3807 = vmatpush1.xpose.msra.mxu0 0.0
    %3808 = vmatprep.subr.mxu0 0.0
    %3809 = vmatpush1.xpose.msra.mxu0 0.0
    %3810 = vmatprep.subr.mxu0 0.0
    %3811 = vmatpush1.xpose.msra.mxu0 0.0
    %3812 = vmatprep.subr.mxu0 0.0
    %3813 = vmatpush1.xpose.msra.mxu0 0.0
    %3814 = vmatprep.subr.mxu0 0.0
    %3815 = vmatpush1.xpose.msra.mxu0 0.0
    %3816 = vmatprep.subr.mxu0 0.0
    %3817 = vmatpush1.xpose.msra.mxu0 0.0
    %3818 = vmatprep.subr.mxu0 0.0
    %3819 = vmatpush1.xpose.msra.mxu0 0.0
    %3820 = vmatprep.subr.mxu0 0.0
    %3821 = vmatpush1.xpose.msra.mxu0 0.0
    %3822 = vmatprep.subr.mxu0 0.0
    %3823 = vmatpush1.xpose.msra.mxu0 0.0
    %3824 = vmatprep.subr.mxu0 0.0
    %3825 = vmatpush1.xpose.msra.mxu0 0.0
    %3826 = vmatprep.subr.mxu0 0.0
    %3827 = vmatpush1.xpose.msra.mxu0 0.0
    %3828 = vmatprep.subr.mxu0 0.0
    %3829 = vmatpush1.xpose.msra.mxu0 0.0
    %3830 = vmatprep.subr.mxu0 0.0
    %3831 = vmatpush1.xpose.msra.mxu0 0.0
    %3832 = vmatprep.subr.mxu0 0.0
    %3833 = vmatpush1.xpose.msra.mxu0 0.0
    %3834 = vmatprep.subr.mxu0 0.0
    %3835 = vmatpush1.xpose.msra.mxu0 0.0
    %3836 = vmatprep.subr.mxu0 0.0
    %3837 = vmatpush1.xpose.msra.mxu0 0.0
    %3838 = vmatprep.subr.mxu0 0.0
    %3839 = vmatpush1.xpose.msra.mxu0 0.0
    %3840 = vmatprep.subr.mxu0 0.0
    %3841 = vmatpush1.xpose.msra.mxu0 0.0
    %3842 = vmatprep.subr.mxu0 0.0
    %3843 = vmatpush1.xpose.msra.mxu0 0.0
    %3844 = vmatprep.mubr.f32.mxu0 0.0
    %3845 = vmatmul.mubr.f32.gmra.mrb[0].mxu0 %v3769
    %v3846 = vpop.f32.mrb[0].mxu0
    %v3847 = vadd.f32 0.0, %v3846
    %v3848 = vpop.f32.mrb[0].mxu0
    %3849 = vmatprep.mubr.f32.mxu0 0.0
    %3850 = vmatmul.mubr.f32.gmra.mrb[0].mxu0 %v3772
    %v3851 = vpop.f32.mrb[0].mxu0
    %v3852 = vadd.f32 0.0, %v3851
    %v3853 = vpop.f32.mrb[0].mxu0
    %3854 = vdwg.mxu0
    %v3855 = vmul.f32 %v3847, 0.17677669
    %v3856 = vmul.f32 %v3852, 0.17677669
    %v3857 = vadd.f32 %v3855, %v122
    %v3858 = vadd.f32 %v3856, %v123
    %v3859 = vsel %vm501, %v3857, -inf
    %3860 = vmax.xlane.f32.xlu0 %v3859
    %v3861 = vpop.xlane.xlu0 %3860
    %v3862 = vsel %vm501, %v3858, -inf
    %3863 = vmax.xlane.f32.xlu0 %v3862
    %v3864 = vpop.xlane.xlu0 %3863
    %v3865 = vsub.f32 %v3857, %v3861
    %v3866 = vsub.f32 %v3858, %v3864
    %v3867 = vmul.f32 %v3865, 1.442695
    %v3868 = vpow.pop %v3867
    %v3869 = vmul.f32 %v3866, 1.442695
    %v3870 = vpow.pop %v3869
    %v3871 = vsel %vm501, %v3868, 0.0
    %3872 = vadd.xlane.f32.xlu0 %v3871
    %v3873 = vpop.xlane.xlu0 %3872
    %v3874 = vsel %vm501, %v3870, 0.0
    %3875 = vadd.xlane.f32.xlu0 %v3874
    %v3876 = vpop.xlane.xlu0 %3875
    %v3877 = vrcp.pop %v3873
    %v3878 = vmul.f32 %v3868, %v3877
    %v3879 = vrcp.pop %v3876
    %v3880 = vmul.f32 %v3870, %v3879
    %v3882 = vsel %vm501, %v3878, 0
    %v3885 = vsel %vm501, %v3880, 0
    %3887 = vmatprep.subr.mxu0 0.0
    %3888 = vmatpush1.msra.mxu0 %v3760
    %3889 = vmatprep.subr.mxu0 0.0
    %3890 = vmatpush1.msra.mxu0 %v3765
    %3891 = vmatprep.subr.mxu0 0.0
    %3892 = vmatpush1.msra.mxu0 0.0
    %3893 = vmatprep.subr.mxu0 0.0
    %3894 = vmatpush1.msra.mxu0 0.0
    %3895 = vmatprep.subr.mxu0 0.0
    %3896 = vmatpush1.msra.mxu0 0.0
    %3897 = vmatprep.subr.mxu0 0.0
    %3898 = vmatpush1.msra.mxu0 0.0
    %3899 = vmatprep.subr.mxu0 0.0
    %3900 = vmatpush1.msra.mxu0 0.0
    %3901 = vmatprep.subr.mxu0 0.0
    %3902 = vmatpush1.msra.mxu0 0.0
    %3903 = vmatprep.subr.mxu0 0.0
    %3904 = vmatpush1.msra.mxu0 0.0
    %3905 = vmatprep.subr.mxu0 0.0
    %3906 = vmatpush1.msra.mxu0 0.0
    %3907 = vmatprep.subr.mxu0 0.0
    %3908 = vmatpush1.msra.mxu0 0.0
    %3909 = vmatprep.subr.mxu0 0.0
    %3910 = vmatpush1.msra.mxu0 0.0
    %3911 = vmatprep.subr.mxu0 0.0
    %3912 = vmatpush1.msra.mxu0 0.0
    %3913 = vmatprep.subr.mxu0 0.0
    %3914 = vmatpush1.msra.mxu0 0.0
    %3915 = vmatprep.subr.mxu0 0.0
    %3916 = vmatpush1.msra.mxu0 0.0
    %3917 = vmatprep.subr.mxu0 0.0
    %3918 = vmatpush1.msra.mxu0 0.0
    %3919 = vmatprep.subr.mxu0 0.0
    %3920 = vmatpush1.msra.mxu0 0.0
    %3921 = vmatprep.subr.mxu0 0.0
    %3922 = vmatpush1.msra.mxu0 0.0
    %3923 = vmatprep.subr.mxu0 0.0
    %3924 = vmatpush1.msra.mxu0 0.0
    %3925 = vmatprep.subr.mxu0 0.0
    %3926 = vmatpush1.msra.mxu0 0.0
    %3927 = vmatprep.subr.mxu0 0.0
    %3928 = vmatpush1.msra.mxu0 0.0
    %3929 = vmatprep.subr.mxu0 0.0
    %3930 = vmatpush1.msra.mxu0 0.0
    %3931 = vmatprep.subr.mxu0 0.0
    %3932 = vmatpush1.msra.mxu0 0.0
    %3933 = vmatprep.subr.mxu0 0.0
    %3934 = vmatpush1.msra.mxu0 0.0
    %3935 = vmatprep.subr.mxu0 0.0
    %3936 = vmatpush1.msra.mxu0 0.0
    %3937 = vmatprep.subr.mxu0 0.0
    %3938 = vmatpush1.msra.mxu0 0.0
    %3939 = vmatprep.subr.mxu0 0.0
    %3940 = vmatpush1.msra.mxu0 0.0
    %3941 = vmatprep.subr.mxu0 0.0
    %3942 = vmatpush1.msra.mxu0 0.0
    %3943 = vmatprep.subr.mxu0 0.0
    %3944 = vmatpush1.msra.mxu0 0.0
    %3945 = vmatprep.subr.mxu0 0.0
    %3946 = vmatpush1.msra.mxu0 0.0
    %3947 = vmatprep.subr.mxu0 0.0
    %3948 = vmatpush1.msra.mxu0 0.0
    %3949 = vmatprep.subr.mxu0 0.0
    %3950 = vmatpush1.msra.mxu0 0.0
    %3951 = vmatprep.mubr.f32.mxu0 0.0
    %3952 = vmatmul.mubr.f32.gmra.mrb[0].mxu0 %v3882
    %v3953 = vpop.f32.mrb[0].mxu0
    %v3954 = vadd.f32 0.0, %v3953
    %v3955 = vpop.f32.mrb[0].mxu0
    %3956 = vmatprep.mubr.f32.mxu0 0.0
    %3957 = vmatmul.mubr.f32.gmra.mrb[0].mxu0 %v3885
    %v3958 = vpop.f32.mrb[0].mxu0
    %v3959 = vadd.f32 0.0, %v3958
    %v3960 = vpop.f32.mrb[0].mxu0
    %3961 = vdwg.mxu0
    %v3962 = vld [vmem:[#allocation2 + $0x180] sm:$0xff]
    %v3964 = vsel %vm409, %v3954, 0
    %v3967 = vsel %vm409, %v3959, 0
    %3969 = vmatprep.subr.mxu0 0.0
    %3970 = vmatpush1.msra.mxu0 %v3962
    %3971 = vmatprep.subr.mxu0 0.0
    %3972 = vmatpush1.msra.mxu0 0.0
    %3973 = vmatprep.subr.mxu0 0.0
    %3974 = vmatpush1.msra.mxu0 0.0
    %3975 = vmatprep.subr.mxu0 0.0
    %3976 = vmatpush1.msra.mxu0 0.0
    %3977 = vmatprep.subr.mxu0 0.0
    %3978 = vmatpush1.msra.mxu0 0.0
    %3979 = vmatprep.subr.mxu0 0.0
    %3980 = vmatpush1.msra.mxu0 0.0
    %3981 = vmatprep.subr.mxu0 0.0
    %3982 = vmatpush1.msra.mxu0 0.0
    %3983 = vmatprep.subr.mxu0 0.0
    %3984 = vmatpush1.msra.mxu0 0.0
    %3985 = vmatprep.subr.mxu0 0.0
    %3986 = vmatpush1.msra.mxu0 0.0
    %3987 = vmatprep.subr.mxu0 0.0
    %3988 = vmatpush1.msra.mxu0 0.0
    %3989 = vmatprep.subr.mxu0 0.0
    %3990 = vmatpush1.msra.mxu0 0.0
    %3991 = vmatprep.subr.mxu0 0.0
    %3992 = vmatpush1.msra.mxu0 0.0
    %3993 = vmatprep.subr.mxu0 0.0
    %3994 = vmatpush1.msra.mxu0 0.0
    %3995 = vmatprep.subr.mxu0 0.0
    %3996 = vmatpush1.msra.mxu0 0.0
    %3997 = vmatprep.subr.mxu0 0.0
    %3998 = vmatpush1.msra.mxu0 0.0
    %3999 = vmatprep.subr.mxu0 0.0
    %4000 = vmatpush1.msra.mxu0 0.0
    %4001 = vmatprep.subr.mxu0 0.0
    %4002 = vmatpush1.msra.mxu0 0.0
    %4003 = vmatprep.subr.mxu0 0.0
    %4004 = vmatpush1.msra.mxu0 0.0
    %4005 = vmatprep.subr.mxu0 0.0
    %4006 = vmatpush1.msra.mxu0 0.0
    %4007 = vmatprep.subr.mxu0 0.0
    %4008 = vmatpush1.msra.mxu0 0.0
    %4009 = vmatprep.subr.mxu0 0.0
    %4010 = vmatpush1.msra.mxu0 0.0
    %4011 = vmatprep.subr.mxu0 0.0
    %4012 = vmatpush1.msra.mxu0 0.0
    %4013 = vmatprep.subr.mxu0 0.0
    %4014 = vmatpush1.msra.mxu0 0.0
    %4015 = vmatprep.subr.mxu0 0.0
    %4016 = vmatpush1.msra.mxu0 0.0
    %4017 = vmatprep.subr.mxu0 0.0
    %4018 = vmatpush1.msra.mxu0 0.0
    %4019 = vmatprep.subr.mxu0 0.0
    %4020 = vmatpush1.msra.mxu0 0.0
    %4021 = vmatprep.subr.mxu0 0.0
    %4022 = vmatpush1.msra.mxu0 0.0
    %4023 = vmatprep.subr.mxu0 0.0
    %4024 = vmatpush1.msra.mxu0 0.0
    %4025 = vmatprep.subr.mxu0 0.0
    %4026 = vmatpush1.msra.mxu0 0.0
    %4027 = vmatprep.subr.mxu0 0.0
    %4028 = vmatpush1.msra.mxu0 0.0
    %4029 = vmatprep.subr.mxu0 0.0
    %4030 = vmatpush1.msra.mxu0 0.0
    %4031 = vmatprep.subr.mxu0 0.0
    %4032 = vmatpush1.msra.mxu0 0.0
    %4033 = vmatprep.mubr.f32.mxu0 0.0
    %4034 = vmatmul.mubr.f32.gmra.mrb[0].mxu0 %v3964
    %v4035 = vpop.f32.mrb[0].mxu0
    %v4036 = vadd.f32 0.0, %v4035
    %v4037 = vpop.f32.mrb[0].mxu0
    %4038 = vmatprep.mubr.f32.mxu0 0.0
    %4039 = vmatmul.mubr.f32.gmra.mrb[0].mxu0 %v3967
    %v4040 = vpop.f32.mrb[0].mxu0
    %v4041 = vadd.f32 0.0, %v4040
    %v4042 = vpop.f32.mrb[0].mxu0
    %4043 = vdwg.mxu0
    %v4044 = vadd.f32 %v3523, %v4036
    %v4045 = vadd.f32 %v3528, %v4041
    %v4046 = vld [vmem:[#allocation2 + $0x158] sm:$0xff]
    %v4047 = vld [vmem:[#allocation2 + $0x160] sm:$0xff]
    %v4048 = vld [vmem:[#allocation2 + $0x168] sm:$0xff]
    %v4050 = vsel %vm126, %v4046, 0
    %4052 = vmatprep.subr.mxu0 0.0
    %4053 = vmatpush1.xpose.msra.mxu0 %v4050
    %4054 = vmatprep.subr.mxu0 0.0
    %4055 = vmatpush1.xpose.msra.mxu0 0.0
    %4056 = vmatprep.subr.mxu0 0.0
    %4057 = vmatpush1.xpose.msra.mxu0 0.0
    %4058 = vmatprep.subr.mxu0 0.0
    %4059 = vmatpush1.xpose.msra.mxu0 0.0
    %4060 = vmatprep.subr.mxu0 0.0
    %4061 = vmatpush1.xpose.msra.mxu0 0.0
    %4062 = vmatprep.subr.mxu0 0.0
    %4063 = vmatpush1.xpose.msra.mxu0 0.0
    %4064 = vmatprep.subr.mxu0 0.0
    %4065 = vmatpush1.xpose.msra.mxu0 0.0
    %4066 = vmatprep.subr.mxu0 0.0
    %4067 = vmatpush1.xpose.msra.mxu0 0.0
    %4068 = vmatprep.subr.mxu0 0.0
    %4069 = vmatpush1.xpose.msra.mxu0 0.0
    %4070 = vmatprep.subr.mxu0 0.0
    %4071 = vmatpush1.xpose.msra.mxu0 0.0
    %4072 = vmatprep.subr.mxu0 0.0
    %4073 = vmatpush1.xpose.msra.mxu0 0.0
    %4074 = vmatprep.subr.mxu0 0.0
    %4075 = vmatpush1.xpose.msra.mxu0 0.0
    %4076 = vmatprep.subr.mxu0 0.0
    %4077 = vmatpush1.xpose.msra.mxu0 0.0
    %4078 = vmatprep.subr.mxu0 0.0
    %4079 = vmatpush1.xpose.msra.mxu0 0.0
    %4080 = vmatprep.subr.mxu0 0.0
    %4081 = vmatpush1.xpose.msra.mxu0 0.0
    %4082 = vmatprep.subr.mxu0 0.0
    %4083 = vmatpush1.xpose.msra.mxu0 0.0
    %4084 = vmatprep.subr.mxu0 0.0
    %4085 = vmatpush1.xpose.msra.mxu0 0.0
    %4086 = vmatprep.subr.mxu0 0.0
    %4087 = vmatpush1.xpose.msra.mxu0 0.0
    %4088 = vmatprep.subr.mxu0 0.0
    %4089 = vmatpush1.xpose.msra.mxu0 0.0
    %4090 = vmatprep.subr.mxu0 0.0
    %4091 = vmatpush1.xpose.msra.mxu0 0.0
    %4092 = vmatprep.subr.mxu0 0.0
    %4093 = vmatpush1.xpose.msra.mxu0 0.0
    %4094 = vmatprep.subr.mxu0 0.0
    %4095 = vmatpush1.xpose.msra.mxu0 0.0
    %4096 = vmatprep.subr.mxu0 0.0
    %4097 = vmatpush1.xpose.msra.mxu0 0.0
    %4098 = vmatprep.subr.mxu0 0.0
    %4099 = vmatpush1.xpose.msra.mxu0 0.0
    %4100 = vmatprep.subr.mxu0 0.0
    %4101 = vmatpush1.xpose.msra.mxu0 0.0
    %4102 = vmatprep.subr.mxu0 0.0
    %4103 = vmatpush1.xpose.msra.mxu0 0.0
    %4104 = vmatprep.subr.mxu0 0.0
    %4105 = vmatpush1.xpose.msra.mxu0 0.0
    %4106 = vmatprep.subr.mxu0 0.0
    %4107 = vmatpush1.xpose.msra.mxu0 0.0
    %4108 = vmatprep.subr.mxu0 0.0
    %4109 = vmatpush1.xpose.msra.mxu0 0.0
    %4110 = vmatprep.subr.mxu0 0.0
    %4111 = vmatpush1.xpose.msra.mxu0 0.0
    %4112 = vmatprep.subr.mxu0 0.0
    %4113 = vmatpush1.xpose.msra.mxu0 0.0
    %4114 = vmatprep.subr.mxu0 0.0
    %4115 = vmatpush1.xpose.msra.mxu0 0.0
    %4116 = vmatprep.mubr.f32.mxu0 0.0
    %4117 = vmatmul.mubr.f32.gmra.mrb[0].mxu0 %v2503
    %v4118 = vpop.f32.mrb[0].mxu0
    %v4119 = vadd.f32 0.0, %v4118
    %v4120 = vpop.f32.mrb[0].mxu0
    %4121 = vmatprep.mubr.f32.mxu0 0.0
    %4122 = vmatmul.mubr.f32.gmra.mrb[0].mxu0 %v2506
    %v4123 = vpop.f32.mrb[0].mxu0
    %v4124 = vadd.f32 0.0, %v4123
    %v4125 = vpop.f32.mrb[0].mxu0
    %4126 = vdwg.mxu0
    %v4128 = vsel %vm126, %v4047, 0
    %4130 = vmatprep.subr.mxu0 0.0
    %4131 = vmatpush1.xpose.msra.mxu0 %v4128
    %4132 = vmatprep.subr.mxu0 0.0
    %4133 = vmatpush1.xpose.msra.mxu0 0.0
    %4134 = vmatprep.subr.mxu0 0.0
    %4135 = vmatpush1.xpose.msra.mxu0 0.0
    %4136 = vmatprep.subr.mxu0 0.0
    %4137 = vmatpush1.xpose.msra.mxu0 0.0
    %4138 = vmatprep.subr.mxu0 0.0
    %4139 = vmatpush1.xpose.msra.mxu0 0.0
    %4140 = vmatprep.subr.mxu0 0.0
    %4141 = vmatpush1.xpose.msra.mxu0 0.0
    %4142 = vmatprep.subr.mxu0 0.0
    %4143 = vmatpush1.xpose.msra.mxu0 0.0
    %4144 = vmatprep.subr.mxu0 0.0
    %4145 = vmatpush1.xpose.msra.mxu0 0.0
    %4146 = vmatprep.subr.mxu0 0.0
    %4147 = vmatpush1.xpose.msra.mxu0 0.0
    %4148 = vmatprep.subr.mxu0 0.0
    %4149 = vmatpush1.xpose.msra.mxu0 0.0
    %4150 = vmatprep.subr.mxu0 0.0
    %4151 = vmatpush1.xpose.msra.mxu0 0.0
    %4152 = vmatprep.subr.mxu0 0.0
    %4153 = vmatpush1.xpose.msra.mxu0 0.0
    %4154 = vmatprep.subr.mxu0 0.0
    %4155 = vmatpush1.xpose.msra.mxu0 0.0
    %4156 = vmatprep.subr.mxu0 0.0
    %4157 = vmatpush1.xpose.msra.mxu0 0.0
    %4158 = vmatprep.subr.mxu0 0.0
    %4159 = vmatpush1.xpose.msra.mxu0 0.0
    %4160 = vmatprep.subr.mxu0 0.0
    %4161 = vmatpush1.xpose.msra.mxu0 0.0
    %4162 = vmatprep.subr.mxu0 0.0
    %4163 = vmatpush1.xpose.msra.mxu0 0.0
    %4164 = vmatprep.subr.mxu0 0.0
    %4165 = vmatpush1.xpose.msra.mxu0 0.0
    %4166 = vmatprep.subr.mxu0 0.0
    %4167 = vmatpush1.xpose.msra.mxu0 0.0
    %4168 = vmatprep.subr.mxu0 0.0
    %4169 = vmatpush1.xpose.msra.mxu0 0.0
    %4170 = vmatprep.subr.mxu0 0.0
    %4171 = vmatpush1.xpose.msra.mxu0 0.0
    %4172 = vmatprep.subr.mxu0 0.0
    %4173 = vmatpush1.xpose.msra.mxu0 0.0
    %4174 = vmatprep.subr.mxu0 0.0
    %4175 = vmatpush1.xpose.msra.mxu0 0.0
    %4176 = vmatprep.subr.mxu0 0.0
    %4177 = vmatpush1.xpose.msra.mxu0 0.0
    %4178 = vmatprep.subr.mxu0 0.0
    %4179 = vmatpush1.xpose.msra.mxu0 0.0
    %4180 = vmatprep.subr.mxu0 0.0
    %4181 = vmatpush1.xpose.msra.mxu0 0.0
    %4182 = vmatprep.subr.mxu0 0.0
    %4183 = vmatpush1.xpose.msra.mxu0 0.0
    %4184 = vmatprep.subr.mxu0 0.0
    %4185 = vmatpush1.xpose.msra.mxu0 0.0
    %4186 = vmatprep.subr.mxu0 0.0
    %4187 = vmatpush1.xpose.msra.mxu0 0.0
    %4188 = vmatprep.subr.mxu0 0.0
    %4189 = vmatpush1.xpose.msra.mxu0 0.0
    %4190 = vmatprep.subr.mxu0 0.0
    %4191 = vmatpush1.xpose.msra.mxu0 0.0
    %4192 = vmatprep.subr.mxu0 0.0
    %4193 = vmatpush1.xpose.msra.mxu0 0.0
    %4194 = vmatprep.mubr.f32.mxu0 0.0
    %4195 = vmatmul.mubr.f32.gmra.mrb[0].mxu0 %v2503
    %v4196 = vpop.f32.mrb[0].mxu0
    %v4197 = vadd.f32 0.0, %v4196
    %v4198 = vpop.f32.mrb[0].mxu0
    %4199 = vmatprep.mubr.f32.mxu0 0.0
    %4200 = vmatmul.mubr.f32.gmra.mrb[0].mxu0 %v2506
    %v4201 = vpop.f32.mrb[0].mxu0
    %v4202 = vadd.f32 0.0, %v4201
    %v4203 = vpop.f32.mrb[0].mxu0
    %4204 = vdwg.mxu0
    %v4206 = vsel %vm126, %v4048, 0
    %4208 = vmatprep.subr.mxu0 0.0
    %4209 = vmatpush1.xpose.msra.mxu0 %v4206
    %4210 = vmatprep.subr.mxu0 0.0
    %4211 = vmatpush1.xpose.msra.mxu0 0.0
    %4212 = vmatprep.subr.mxu0 0.0
    %4213 = vmatpush1.xpose.msra.mxu0 0.0
    %4214 = vmatprep.subr.mxu0 0.0
    %4215 = vmatpush1.xpose.msra.mxu0 0.0
    %4216 = vmatprep.subr.mxu0 0.0
    %4217 = vmatpush1.xpose.msra.mxu0 0.0
    %4218 = vmatprep.subr.mxu0 0.0
    %4219 = vmatpush1.xpose.msra.mxu0 0.0
    %4220 = vmatprep.subr.mxu0 0.0
    %4221 = vmatpush1.xpose.msra.mxu0 0.0
    %4222 = vmatprep.subr.mxu0 0.0
    %4223 = vmatpush1.xpose.msra.mxu0 0.0
    %4224 = vmatprep.subr.mxu0 0.0
    %4225 = vmatpush1.xpose.msra.mxu0 0.0
    %4226 = vmatprep.subr.mxu0 0.0
    %4227 = vmatpush1.xpose.msra.mxu0 0.0
    %4228 = vmatprep.subr.mxu0 0.0
    %4229 = vmatpush1.xpose.msra.mxu0 0.0
    %4230 = vmatprep.subr.mxu0 0.0
    %4231 = vmatpush1.xpose.msra.mxu0 0.0
    %4232 = vmatprep.subr.mxu0 0.0
    %4233 = vmatpush1.xpose.msra.mxu0 0.0
    %4234 = vmatprep.subr.mxu0 0.0
    %4235 = vmatpush1.xpose.msra.mxu0 0.0
    %4236 = vmatprep.subr.mxu0 0.0
    %4237 = vmatpush1.xpose.msra.mxu0 0.0
    %4238 = vmatprep.subr.mxu0 0.0
    %4239 = vmatpush1.xpose.msra.mxu0 0.0
    %4240 = vmatprep.subr.mxu0 0.0
    %4241 = vmatpush1.xpose.msra.mxu0 0.0
    %4242 = vmatprep.subr.mxu0 0.0
    %4243 = vmatpush1.xpose.msra.mxu0 0.0
    %4244 = vmatprep.subr.mxu0 0.0
    %4245 = vmatpush1.xpose.msra.mxu0 0.0
    %4246 = vmatprep.subr.mxu0 0.0
    %4247 = vmatpush1.xpose.msra.mxu0 0.0
    %4248 = vmatprep.subr.mxu0 0.0
    %4249 = vmatpush1.xpose.msra.mxu0 0.0
    %4250 = vmatprep.subr.mxu0 0.0
    %4251 = vmatpush1.xpose.msra.mxu0 0.0
    %4252 = vmatprep.subr.mxu0 0.0
    %4253 = vmatpush1.xpose.msra.mxu0 0.0
    %4254 = vmatprep.subr.mxu0 0.0
    %4255 = vmatpush1.xpose.msra.mxu0 0.0
    %4256 = vmatprep.subr.mxu0 0.0
    %4257 = vmatpush1.xpose.msra.mxu0 0.0
    %4258 = vmatprep.subr.mxu0 0.0
    %4259 = vmatpush1.xpose.msra.mxu0 0.0
    %4260 = vmatprep.subr.mxu0 0.0
    %4261 = vmatpush1.xpose.msra.mxu0 0.0
    %4262 = vmatprep.subr.mxu0 0.0
    %4263 = vmatpush1.xpose.msra.mxu0 0.0
    %4264 = vmatprep.subr.mxu0 0.0
    %4265 = vmatpush1.xpose.msra.mxu0 0.0
    %4266 = vmatprep.subr.mxu0 0.0
    %4267 = vmatpush1.xpose.msra.mxu0 0.0
    %4268 = vmatprep.subr.mxu0 0.0
    %4269 = vmatpush1.xpose.msra.mxu0 0.0
    %4270 = vmatprep.subr.mxu0 0.0
    %4271 = vmatpush1.xpose.msra.mxu0 0.0
    %4272 = vmatprep.mubr.f32.mxu0 0.0
    %4273 = vmatmul.mubr.f32.gmra.mrb[0].mxu0 %v2503
    %v4274 = vpop.f32.mrb[0].mxu0
    %v4275 = vadd.f32 0.0, %v4274
    %v4276 = vpop.f32.mrb[0].mxu0
    %4277 = vmatprep.mubr.f32.mxu0 0.0
    %4278 = vmatmul.mubr.f32.gmra.mrb[0].mxu0 %v2506
    %v4279 = vpop.f32.mrb[0].mxu0
    %v4280 = vadd.f32 0.0, %v4279
    %v4281 = vpop.f32.mrb[0].mxu0
    %4282 = vdwg.mxu0
    %v4284 = vsel %vm409, %v4197, 0
    %v4287 = vsel %vm409, %v4202, 0
    %v4290 = vsel %vm409, %v4119, 0
    %v4293 = vsel %vm409, %v4124, 0
    %4295 = vmatprep.subr.mxu0 0.0
    %4296 = vmatpush1.xpose.msra.mxu0 %v4290
    %4297 = vmatprep.subr.mxu0 0.0
    %4298 = vmatpush1.xpose.msra.mxu0 %v4293
    %4299 = vmatprep.subr.mxu0 0.0
    %4300 = vmatpush1.xpose.msra.mxu0 0.0
    %4301 = vmatprep.subr.mxu0 0.0
    %4302 = vmatpush1.xpose.msra.mxu0 0.0
    %4303 = vmatprep.subr.mxu0 0.0
    %4304 = vmatpush1.xpose.msra.mxu0 0.0
    %4305 = vmatprep.subr.mxu0 0.0
    %4306 = vmatpush1.xpose.msra.mxu0 0.0
    %4307 = vmatprep.subr.mxu0 0.0
    %4308 = vmatpush1.xpose.msra.mxu0 0.0
    %4309 = vmatprep.subr.mxu0 0.0
    %4310 = vmatpush1.xpose.msra.mxu0 0.0
    %4311 = vmatprep.subr.mxu0 0.0
    %4312 = vmatpush1.xpose.msra.mxu0 0.0
    %4313 = vmatprep.subr.mxu0 0.0
    %4314 = vmatpush1.xpose.msra.mxu0 0.0
    %4315 = vmatprep.subr.mxu0 0.0
    %4316 = vmatpush1.xpose.msra.mxu0 0.0
    %4317 = vmatprep.subr.mxu0 0.0
    %4318 = vmatpush1.xpose.msra.mxu0 0.0
    %4319 = vmatprep.subr.mxu0 0.0
    %4320 = vmatpush1.xpose.msra.mxu0 0.0
    %4321 = vmatprep.subr.mxu0 0.0
    %4322 = vmatpush1.xpose.msra.mxu0 0.0
    %4323 = vmatprep.subr.mxu0 0.0
    %4324 = vmatpush1.xpose.msra.mxu0 0.0
    %4325 = vmatprep.subr.mxu0 0.0
    %4326 = vmatpush1.xpose.msra.mxu0 0.0
    %4327 = vmatprep.subr.mxu0 0.0
    %4328 = vmatpush1.xpose.msra.mxu0 0.0
    %4329 = vmatprep.subr.mxu0 0.0
    %4330 = vmatpush1.xpose.msra.mxu0 0.0
    %4331 = vmatprep.subr.mxu0 0.0
    %4332 = vmatpush1.xpose.msra.mxu0 0.0
    %4333 = vmatprep.subr.mxu0 0.0
    %4334 = vmatpush1.xpose.msra.mxu0 0.0
    %4335 = vmatprep.subr.mxu0 0.0
    %4336 = vmatpush1.xpose.msra.mxu0 0.0
    %4337 = vmatprep.subr.mxu0 0.0
    %4338 = vmatpush1.xpose.msra.mxu0 0.0
    %4339 = vmatprep.subr.mxu0 0.0
    %4340 = vmatpush1.xpose.msra.mxu0 0.0
    %4341 = vmatprep.subr.mxu0 0.0
    %4342 = vmatpush1.xpose.msra.mxu0 0.0
    %4343 = vmatprep.subr.mxu0 0.0
    %4344 = vmatpush1.xpose.msra.mxu0 0.0
    %4345 = vmatprep.subr.mxu0 0.0
    %4346 = vmatpush1.xpose.msra.mxu0 0.0
    %4347 = vmatprep.subr.mxu0 0.0
    %4348 = vmatpush1.xpose.msra.mxu0 0.0
    %4349 = vmatprep.subr.mxu0 0.0
    %4350 = vmatpush1.xpose.msra.mxu0 0.0
    %4351 = vmatprep.subr.mxu0 0.0
    %4352 = vmatpush1.xpose.msra.mxu0 0.0
    %4353 = vmatprep.subr.mxu0 0.0
    %4354 = vmatpush1.xpose.msra.mxu0 0.0
    %4355 = vmatprep.subr.mxu0 0.0
    %4356 = vmatpush1.xpose.msra.mxu0 0.0
    %4357 = vmatprep.subr.mxu0 0.0
    %4358 = vmatpush1.xpose.msra.mxu0 0.0
    %4359 = vmatprep.mubr.f32.mxu0 0.0
    %4360 = vmatmul.mubr.f32.gmra.mrb[0].mxu0 %v4284
    %v4361 = vpop.f32.mrb[0].mxu0
    %v4362 = vadd.f32 0.0, %v4361
    %v4363 = vpop.f32.mrb[0].mxu0
    %4364 = vmatprep.mubr.f32.mxu0 0.0
    %4365 = vmatmul.mubr.f32.gmra.mrb[0].mxu0 %v4287
    %v4366 = vpop.f32.mrb[0].mxu0
    %v4367 = vadd.f32 0.0, %v4366
    %v4368 = vpop.f32.mrb[0].mxu0
    %4369 = vdwg.mxu0
    %v4370 = vmul.f32 %v4362, 0.17677669
    %v4371 = vmul.f32 %v4367, 0.17677669
    %v4372 = vadd.f32 %v4370, %v122
    %v4373 = vadd.f32 %v4371, %v123
    %v4374 = vsel %vm501, %v4372, -inf
    %4375 = vmax.xlane.f32.xlu0 %v4374
    %v4376 = vpop.xlane.xlu0 %4375
    %v4377 = vsel %vm501, %v4373, -inf
    %4378 = vmax.xlane.f32.xlu0 %v4377
    %v4379 = vpop.xlane.xlu0 %4378
    %v4380 = vsub.f32 %v4372, %v4376
    %v4381 = vsub.f32 %v4373, %v4379
    %v4382 = vmul.f32 %v4380, 1.442695
    %v4383 = vpow.pop %v4382
    %v4384 = vmul.f32 %v4381, 1.442695
    %v4385 = vpow.pop %v4384
    %v4386 = vsel %vm501, %v4383, 0.0
    %4387 = vadd.xlane.f32.xlu0 %v4386
    %v4388 = vpop.xlane.xlu0 %4387
    %v4389 = vsel %vm501, %v4385, 0.0
    %4390 = vadd.xlane.f32.xlu0 %v4389
    %v4391 = vpop.xlane.xlu0 %4390
    %v4392 = vrcp.pop %v4388
    %v4393 = vmul.f32 %v4383, %v4392
    %v4394 = vrcp.pop %v4391
    %v4395 = vmul.f32 %v4385, %v4394
    %v4397 = vsel %vm501, %v4393, 0
    %v4400 = vsel %vm501, %v4395, 0
    %4402 = vmatprep.subr.mxu0 0.0
    %4403 = vmatpush1.msra.mxu0 %v4275
    %4404 = vmatprep.subr.mxu0 0.0
    %4405 = vmatpush1.msra.mxu0 %v4280
    %4406 = vmatprep.subr.mxu0 0.0
    %4407 = vmatpush1.msra.mxu0 0.0
    %4408 = vmatprep.subr.mxu0 0.0
    %4409 = vmatpush1.msra.mxu0 0.0
    %4410 = vmatprep.subr.mxu0 0.0
    %4411 = vmatpush1.msra.mxu0 0.0
    %4412 = vmatprep.subr.mxu0 0.0
    %4413 = vmatpush1.msra.mxu0 0.0
    %4414 = vmatprep.subr.mxu0 0.0
    %4415 = vmatpush1.msra.mxu0 0.0
    %4416 = vmatprep.subr.mxu0 0.0
    %4417 = vmatpush1.msra.mxu0 0.0
    %4418 = vmatprep.subr.mxu0 0.0
    %4419 = vmatpush1.msra.mxu0 0.0
    %4420 = vmatprep.subr.mxu0 0.0
    %4421 = vmatpush1.msra.mxu0 0.0
    %4422 = vmatprep.subr.mxu0 0.0
    %4423 = vmatpush1.msra.mxu0 0.0
    %4424 = vmatprep.subr.mxu0 0.0
    %4425 = vmatpush1.msra.mxu0 0.0
    %4426 = vmatprep.subr.mxu0 0.0
    %4427 = vmatpush1.msra.mxu0 0.0
    %4428 = vmatprep.subr.mxu0 0.0
    %4429 = vmatpush1.msra.mxu0 0.0
    %4430 = vmatprep.subr.mxu0 0.0
    %4431 = vmatpush1.msra.mxu0 0.0
    %4432 = vmatprep.subr.mxu0 0.0
    %4433 = vmatpush1.msra.mxu0 0.0
    %4434 = vmatprep.subr.mxu0 0.0
    %4435 = vmatpush1.msra.mxu0 0.0
    %4436 = vmatprep.subr.mxu0 0.0
    %4437 = vmatpush1.msra.mxu0 0.0
    %4438 = vmatprep.subr.mxu0 0.0
    %4439 = vmatpush1.msra.mxu0 0.0
    %4440 = vmatprep.subr.mxu0 0.0
    %4441 = vmatpush1.msra.mxu0 0.0
    %4442 = vmatprep.subr.mxu0 0.0
    %4443 = vmatpush1.msra.mxu0 0.0
    %4444 = vmatprep.subr.mxu0 0.0
    %4445 = vmatpush1.msra.mxu0 0.0
    %4446 = vmatprep.subr.mxu0 0.0
    %4447 = vmatpush1.msra.mxu0 0.0
    %4448 = vmatprep.subr.mxu0 0.0
    %4449 = vmatpush1.msra.mxu0 0.0
    %4450 = vmatprep.subr.mxu0 0.0
    %4451 = vmatpush1.msra.mxu0 0.0
    %4452 = vmatprep.subr.mxu0 0.0
    %4453 = vmatpush1.msra.mxu0 0.0
    %4454 = vmatprep.subr.mxu0 0.0
    %4455 = vmatpush1.msra.mxu0 0.0
    %4456 = vmatprep.subr.mxu0 0.0
    %4457 = vmatpush1.msra.mxu0 0.0
    %4458 = vmatprep.subr.mxu0 0.0
    %4459 = vmatpush1.msra.mxu0 0.0
    %4460 = vmatprep.subr.mxu0 0.0
    %4461 = vmatpush1.msra.mxu0 0.0
    %4462 = vmatprep.subr.mxu0 0.0
    %4463 = vmatpush1.msra.mxu0 0.0
    %4464 = vmatprep.subr.mxu0 0.0
    %4465 = vmatpush1.msra.mxu0 0.0
    %4466 = vmatprep.mubr.f32.mxu0 0.0
    %4467 = vmatmul.mubr.f32.gmra.mrb[0].mxu0 %v4397
    %v4468 = vpop.f32.mrb[0].mxu0
    %v4469 = vadd.f32 0.0, %v4468
    %v4470 = vpop.f32.mrb[0].mxu0
    %4471 = vmatprep.mubr.f32.mxu0 0.0
    %4472 = vmatmul.mubr.f32.gmra.mrb[0].mxu0 %v4400
    %v4473 = vpop.f32.mrb[0].mxu0
    %v4474 = vadd.f32 0.0, %v4473
    %v4475 = vpop.f32.mrb[0].mxu0
    %4476 = vdwg.mxu0
    %v4477 = vld [vmem:[#allocation2 + $0x188] sm:$0xff]
    %v4479 = vsel %vm409, %v4469, 0
    %v4482 = vsel %vm409, %v4474, 0
    %4484 = vmatprep.subr.mxu0 0.0
    %4485 = vmatpush1.msra.mxu0 %v4477
    %4486 = vmatprep.subr.mxu0 0.0
    %4487 = vmatpush1.msra.mxu0 0.0
    %4488 = vmatprep.subr.mxu0 0.0
    %4489 = vmatpush1.msra.mxu0 0.0
    %4490 = vmatprep.subr.mxu0 0.0
    %4491 = vmatpush1.msra.mxu0 0.0
    %4492 = vmatprep.subr.mxu0 0.0
    %4493 = vmatpush1.msra.mxu0 0.0
    %4494 = vmatprep.subr.mxu0 0.0
    %4495 = vmatpush1.msra.mxu0 0.0
    %4496 = vmatprep.subr.mxu0 0.0
    %4497 = vmatpush1.msra.mxu0 0.0
    %4498 = vmatprep.subr.mxu0 0.0
    %4499 = vmatpush1.msra.mxu0 0.0
    %4500 = vmatprep.subr.mxu0 0.0
    %4501 = vmatpush1.msra.mxu0 0.0
    %4502 = vmatprep.subr.mxu0 0.0
    %4503 = vmatpush1.msra.mxu0 0.0
    %4504 = vmatprep.subr.mxu0 0.0
    %4505 = vmatpush1.msra.mxu0 0.0
    %4506 = vmatprep.subr.mxu0 0.0
    %4507 = vmatpush1.msra.mxu0 0.0
    %4508 = vmatprep.subr.mxu0 0.0
    %4509 = vmatpush1.msra.mxu0 0.0
    %4510 = vmatprep.subr.mxu0 0.0
    %4511 = vmatpush1.msra.mxu0 0.0
    %4512 = vmatprep.subr.mxu0 0.0
    %4513 = vmatpush1.msra.mxu0 0.0
    %4514 = vmatprep.subr.mxu0 0.0
    %4515 = vmatpush1.msra.mxu0 0.0
    %4516 = vmatprep.subr.mxu0 0.0
    %4517 = vmatpush1.msra.mxu0 0.0
    %4518 = vmatprep.subr.mxu0 0.0
    %4519 = vmatpush1.msra.mxu0 0.0
    %4520 = vmatprep.subr.mxu0 0.0
    %4521 = vmatpush1.msra.mxu0 0.0
    %4522 = vmatprep.subr.mxu0 0.0
    %4523 = vmatpush1.msra.mxu0 0.0
    %4524 = vmatprep.subr.mxu0 0.0
    %4525 = vmatpush1.msra.mxu0 0.0
    %4526 = vmatprep.subr.mxu0 0.0
    %4527 = vmatpush1.msra.mxu0 0.0
    %4528 = vmatprep.subr.mxu0 0.0
    %4529 = vmatpush1.msra.mxu0 0.0
    %4530 = vmatprep.subr.mxu0 0.0
    %4531 = vmatpush1.msra.mxu0 0.0
    %4532 = vmatprep.subr.mxu0 0.0
    %4533 = vmatpush1.msra.mxu0 0.0
    %4534 = vmatprep.subr.mxu0 0.0
    %4535 = vmatpush1.msra.mxu0 0.0
    %4536 = vmatprep.subr.mxu0 0.0
    %4537 = vmatpush1.msra.mxu0 0.0
    %4538 = vmatprep.subr.mxu0 0.0
    %4539 = vmatpush1.msra.mxu0 0.0
    %4540 = vmatprep.subr.mxu0 0.0
    %4541 = vmatpush1.msra.mxu0 0.0
    %4542 = vmatprep.subr.mxu0 0.0
    %4543 = vmatpush1.msra.mxu0 0.0
    %4544 = vmatprep.subr.mxu0 0.0
    %4545 = vmatpush1.msra.mxu0 0.0
    %4546 = vmatprep.subr.mxu0 0.0
    %4547 = vmatpush1.msra.mxu0 0.0
    %4548 = vmatprep.mubr.f32.mxu0 0.0
    %4549 = vmatmul.mubr.f32.gmra.mrb[0].mxu0 %v4479
    %v4550 = vpop.f32.mrb[0].mxu0
    %v4551 = vadd.f32 0.0, %v4550
    %v4552 = vpop.f32.mrb[0].mxu0
    %4553 = vmatprep.mubr.f32.mxu0 0.0
    %4554 = vmatmul.mubr.f32.gmra.mrb[0].mxu0 %v4482
    %v4555 = vpop.f32.mrb[0].mxu0
    %v4556 = vadd.f32 0.0, %v4555
    %v4557 = vpop.f32.mrb[0].mxu0
    %4558 = vdwg.mxu0
    %v4559 = vadd.f32 %v4044, %v4551
    %v4560 = vadd.f32 %v4045, %v4556
    %v4561 = vadd.f32 %v2457, %v4559
    %v4562 = vadd.f32 %v2458, %v4560
    %v4563 = vld [vmem:[#allocation2 + $0x10a] sm:$0x1]
    %v4564 = vlaneseq
    %v4565 = vshrl.u32 %v4564, 7
    %v4566 = vsub.s32 0, %v4565
    %v4567 = vrot.slane %v4563, %v4566
    %v4568 = vadd.f32 %v4561, %v4567
    %v4569 = vadd.f32 %v4562, %v4567
    %v4570 = vld [vmem:[#allocation2 + $0x10b] sm:$0x1]
    %v4571 = vld [vmem:[#allocation2 + $0x10c] sm:$0x1]
    %v4572 = vsel %vm126, %v4568, 0.0
    %4573 = vadd.xlane.f32.xlu0 %v4572
    %v4574 = vpop.xlane.xlu0 %4573
    %v4575 = vsel %vm126, %v4569, 0.0
    %4576 = vadd.xlane.f32.xlu0 %v4575
    %v4577 = vpop.xlane.xlu0 %4576
    %v4578 = vmul.f32 %v4574, %v133
    %v4579 = vmul.f32 %v4577, %v133
    %v4580 = vsub.f32 %v4568, %v4578
    %v4581 = vsub.f32 %v4569, %v4579
    %v4582 = vmul.f32 %v4580, %v4580
    %v4583 = vmul.f32 %v4581, %v4581
    %v4584 = vsel %vm126, %v4582, 0.0
    %4585 = vadd.xlane.f32.xlu0 %v4584
    %v4586 = vpop.xlane.xlu0 %4585
    %v4587 = vsel %vm126, %v4583, 0.0
    %4588 = vadd.xlane.f32.xlu0 %v4587
    %v4589 = vpop.xlane.xlu0 %4588
    %v4590 = vmul.f32 %v4586, %v133
    %v4591 = vmul.f32 %v4589, %v133
    %v4592 = vadd.f32 %v4590, 1e-05
    %v4593 = vadd.f32 %v4591, 1e-05
    %v4594 = vrsqrt.pop %v4592
    %v4595 = vrsqrt.pop %v4593
    %v4596 = vmul.f32 %v4580, %v4594
    %v4597 = vmul.f32 %v4581, %v4595
    %v4598 = vlaneseq
    %v4599 = vshrl.u32 %v4598, 7
    %v4600 = vsub.s32 0, %v4599
    %v4601 = vrot.slane %v4570, %v4600
    %v4602 = vmul.f32 %v4596, %v4601
    %v4603 = vmul.f32 %v4597, %v4601
    %v4604 = vlaneseq
    %v4605 = vshrl.u32 %v4604, 7
    %v4606 = vsub.s32 0, %v4605
    %v4607 = vrot.slane %v4571, %v4606
    %v4608 = vadd.f32 %v4602, %v4607
    %v4609 = vadd.f32 %v4603, %v4607
    %v4610 = vld [vmem:[#allocation2 + $0x190] sm:$0xff]
    %v4611 = vld [vmem:[#allocation2 + $0x198] sm:$0xff]
    %v4612 = vld [vmem:[#allocation2 + $0x1a0] sm:$0xff]
    %v4613 = vld [vmem:[#allocation2 + $0x1a8] sm:$0xff]
    %v4614 = vld [vmem:[#allocation2 + $0x10e] sm:$0x1]
    %v4615 = vlaneseq
    %v4616 = vshrl.u32 %v4615, 7
    %v4617 = vsub.s32 0, %v4616
    %v4618 = vrot.slane %v4614, %v4617
    %v4620 = vsel %vm126, %v4608, 0
    %v4623 = vsel %vm126, %v4609, 0
    %4625 = vmatprep.subr.mxu0 0.0
    %4626 = vmatpush1.msra.mxu0 %v4610
    %4627 = vmatprep.subr.mxu0 0.0
    %4628 = vmatpush1.msra.mxu0 %v4611
    %4629 = vmatprep.subr.mxu0 0.0
    %4630 = vmatpush1.msra.mxu0 %v4612
    %4631 = vmatprep.subr.mxu0 0.0
    %4632 = vmatpush1.msra.mxu0 %v4613
    %4633 = vmatprep.subr.mxu0 0.0
    %4634 = vmatpush1.msra.mxu0 0.0
    %4635 = vmatprep.subr.mxu0 0.0
    %4636 = vmatpush1.msra.mxu0 0.0
    %4637 = vmatprep.subr.mxu0 0.0
    %4638 = vmatpush1.msra.mxu0 0.0
    %4639 = vmatprep.subr.mxu0 0.0
    %4640 = vmatpush1.msra.mxu0 0.0
    %4641 = vmatprep.subr.mxu0 0.0
    %4642 = vmatpush1.msra.mxu0 0.0
    %4643 = vmatprep.subr.mxu0 0.0
    %4644 = vmatpush1.msra.mxu0 0.0
    %4645 = vmatprep.subr.mxu0 0.0
    %4646 = vmatpush1.msra.mxu0 0.0
    %4647 = vmatprep.subr.mxu0 0.0
    %4648 = vmatpush1.msra.mxu0 0.0
    %4649 = vmatprep.subr.mxu0 0.0
    %4650 = vmatpush1.msra.mxu0 0.0
    %4651 = vmatprep.subr.mxu0 0.0
    %4652 = vmatpush1.msra.mxu0 0.0
    %4653 = vmatprep.subr.mxu0 0.0
    %4654 = vmatpush1.msra.mxu0 0.0
    %4655 = vmatprep.subr.mxu0 0.0
    %4656 = vmatpush1.msra.mxu0 0.0
    %4657 = vmatprep.subr.mxu0 0.0
    %4658 = vmatpush1.msra.mxu0 0.0
    %4659 = vmatprep.subr.mxu0 0.0
    %4660 = vmatpush1.msra.mxu0 0.0
    %4661 = vmatprep.subr.mxu0 0.0
    %4662 = vmatpush1.msra.mxu0 0.0
    %4663 = vmatprep.subr.mxu0 0.0
    %4664 = vmatpush1.msra.mxu0 0.0
    %4665 = vmatprep.subr.mxu0 0.0
    %4666 = vmatpush1.msra.mxu0 0.0
    %4667 = vmatprep.subr.mxu0 0.0
    %4668 = vmatpush1.msra.mxu0 0.0
    %4669 = vmatprep.subr.mxu0 0.0
    %4670 = vmatpush1.msra.mxu0 0.0
    %4671 = vmatprep.subr.mxu0 0.0
    %4672 = vmatpush1.msra.mxu0 0.0
    %4673 = vmatprep.subr.mxu0 0.0
    %4674 = vmatpush1.msra.mxu0 0.0
    %4675 = vmatprep.subr.mxu0 0.0
    %4676 = vmatpush1.msra.mxu0 0.0
    %4677 = vmatprep.subr.mxu0 0.0
    %4678 = vmatpush1.msra.mxu0 0.0
    %4679 = vmatprep.subr.mxu0 0.0
    %4680 = vmatpush1.msra.mxu0 0.0
    %4681 = vmatprep.subr.mxu0 0.0
    %4682 = vmatpush1.msra.mxu0 0.0
    %4683 = vmatprep.subr.mxu0 0.0
    %4684 = vmatpush1.msra.mxu0 0.0
    %4685 = vmatprep.subr.mxu0 0.0
    %4686 = vmatpush1.msra.mxu0 0.0
    %4687 = vmatprep.subr.mxu0 0.0
    %4688 = vmatpush1.msra.mxu0 0.0
    %4689 = vmatprep.mubr.f32.mxu0 0.0
    %4690 = vmatmul.mubr.f32.gmra.mrb[0].mxu0 %v4620
    %v4691 = vpop.f32.mrb[0].mxu0
    %v4692 = vadd.f32 %v4618, %v4691
    %v4693 = vpop.f32.mrb[0].mxu0
    %4694 = vmatprep.mubr.f32.mxu0 0.0
    %4695 = vmatmul.mubr.f32.gmra.mrb[0].mxu0 %v4623
    %v4696 = vpop.f32.mrb[0].mxu0
    %v4697 = vadd.f32 %v4618, %v4696
    %v4698 = vpop.f32.mrb[0].mxu0
    %4699 = vdwg.mxu0
    %v4700 = vmax.f32 %v4692, 0.0
    %v4701 = vmax.f32 %v4697, 0.0
    %v4702 = vld [vmem:[#allocation2 + $0x1b0] sm:$0xff]
    %v4703 = vld [vmem:[#allocation2 + $0x1b8] sm:$0xff]
    %v4704 = vld [vmem:[#allocation2 + $0x1c0] sm:$0xff]
    %v4705 = vld [vmem:[#allocation2 + $0x1c8] sm:$0xff]
    %4706 = vmatprep.subr.mxu0 0.0
    %4707 = vmatpush1.xpose.msra.mxu0 %v4702
    %4708 = vmatprep.subr.mxu0 0.0
    %4709 = vmatpush1.xpose.msra.mxu0 %v4703
    %4710 = vmatprep.subr.mxu0 0.0
    %4711 = vmatpush1.xpose.msra.mxu0 %v4704
    %4712 = vmatprep.subr.mxu0 0.0
    %4713 = vmatpush1.xpose.msra.mxu0 %v4705
    %4714 = vmatprep.subr.mxu0 0.0
    %4715 = vmatpush1.xpose.msra.mxu0 0.0
    %4716 = vmatprep.subr.mxu0 0.0
    %4717 = vmatpush1.xpose.msra.mxu0 0.0
    %4718 = vmatprep.subr.mxu0 0.0
    %4719 = vmatpush1.xpose.msra.mxu0 0.0
    %4720 = vmatprep.subr.mxu0 0.0
    %4721 = vmatpush1.xpose.msra.mxu0 0.0
    %4722 = vmatprep.subr.mxu0 0.0
    %4723 = vmatpush1.xpose.msra.mxu0 0.0
    %4724 = vmatprep.subr.mxu0 0.0
    %4725 = vmatpush1.xpose.msra.mxu0 0.0
    %4726 = vmatprep.subr.mxu0 0.0
    %4727 = vmatpush1.xpose.msra.mxu0 0.0
    %4728 = vmatprep.subr.mxu0 0.0
    %4729 = vmatpush1.xpose.msra.mxu0 0.0
    %4730 = vmatprep.subr.mxu0 0.0
    %4731 = vmatpush1.xpose.msra.mxu0 0.0
    %4732 = vmatprep.subr.mxu0 0.0
    %4733 = vmatpush1.xpose.msra.mxu0 0.0
    %4734 = vmatprep.subr.mxu0 0.0
    %4735 = vmatpush1.xpose.msra.mxu0 0.0
    %4736 = vmatprep.subr.mxu0 0.0
    %4737 = vmatpush1.xpose.msra.mxu0 0.0
    %4738 = vmatprep.subr.mxu0 0.0
    %4739 = vmatpush1.xpose.msra.mxu0 0.0
    %4740 = vmatprep.subr.mxu0 0.0
    %4741 = vmatpush1.xpose.msra.mxu0 0.0
    %4742 = vmatprep.subr.mxu0 0.0
    %4743 = vmatpush1.xpose.msra.mxu0 0.0
    %4744 = vmatprep.subr.mxu0 0.0
    %4745 = vmatpush1.xpose.msra.mxu0 0.0
    %4746 = vmatprep.subr.mxu0 0.0
    %4747 = vmatpush1.xpose.msra.mxu0 0.0
    %4748 = vmatprep.subr.mxu0 0.0
    %4749 = vmatpush1.xpose.msra.mxu0 0.0
    %4750 = vmatprep.subr.mxu0 0.0
    %4751 = vmatpush1.xpose.msra.mxu0 0.0
    %4752 = vmatprep.subr.mxu0 0.0
    %4753 = vmatpush1.xpose.msra.mxu0 0.0
    %4754 = vmatprep.subr.mxu0 0.0
    %4755 = vmatpush1.xpose.msra.mxu0 0.0
    %4756 = vmatprep.subr.mxu0 0.0
    %4757 = vmatpush1.xpose.msra.mxu0 0.0
    %4758 = vmatprep.subr.mxu0 0.0
    %4759 = vmatpush1.xpose.msra.mxu0 0.0
    %4760 = vmatprep.subr.mxu0 0.0
    %4761 = vmatpush1.xpose.msra.mxu0 0.0
    %4762 = vmatprep.subr.mxu0 0.0
    %4763 = vmatpush1.xpose.msra.mxu0 0.0
    %4764 = vmatprep.subr.mxu0 0.0
    %4765 = vmatpush1.xpose.msra.mxu0 0.0
    %4766 = vmatprep.subr.mxu0 0.0
    %4767 = vmatpush1.xpose.msra.mxu0 0.0
    %4768 = vmatprep.subr.mxu0 0.0
    %4769 = vmatpush1.xpose.msra.mxu0 0.0
    %4770 = vmatprep.mubr.f32.mxu0 0.0
    %4771 = vmatmul.mubr.f32.gmra.mrb[0].mxu0 %v4700
    %v4772 = vpop.f32.mrb[0].mxu0
    %v4773 = vadd.f32 0.0, %v4772
    %v4774 = vpop.f32.mrb[0].mxu0
    %4775 = vmatprep.mubr.f32.mxu0 0.0
    %4776 = vmatmul.mubr.f32.gmra.mrb[0].mxu0 %v4701
    %v4777 = vpop.f32.mrb[0].mxu0
    %v4778 = vadd.f32 0.0, %v4777
    %v4779 = vpop.f32.mrb[0].mxu0
    %4780 = vdwg.mxu0
    %v4781 = vadd.f32 %v4568, %v4773
    %v4782 = vadd.f32 %v4569, %v4778
    %v4783 = vld [vmem:[#allocation2 + $0x10d] sm:$0x1]
    %v4784 = vlaneseq
    %v4785 = vshrl.u32 %v4784, 7
    %v4786 = vsub.s32 0, %v4785
    %v4787 = vrot.slane %v4783, %v4786
    %v4788 = vadd.f32 %v4781, %v4787
    %v4789 = vadd.f32 %v4782, %v4787
    %v4790 = vld [vmem:[#allocation2 + $0x1d0] sm:$0x1]
    %v4791 = vld [vmem:[#allocation2 + $0x1d1] sm:$0x1]
    %v4792 = vsel %vm126, %v4788, 0.0
    %4793 = vadd.xlane.f32.xlu0 %v4792
    %v4794 = vpop.xlane.xlu0 %4793
    %v4795 = vsel %vm126, %v4789, 0.0
    %4796 = vadd.xlane.f32.xlu0 %v4795
    %v4797 = vpop.xlane.xlu0 %4796
    %v4798 = vmul.f32 %v4794, %v133
    %v4799 = vmul.f32 %v4797, %v133
    %v4800 = vsub.f32 %v4788, %v4798
    %v4801 = vsub.f32 %v4789, %v4799
    %v4802 = vmul.f32 %v4800, %v4800
    %v4803 = vmul.f32 %v4801, %v4801
    %v4804 = vsel %vm126, %v4802, 0.0
    %4805 = vadd.xlane.f32.xlu0 %v4804
    %v4806 = vpop.xlane.xlu0 %4805
    %v4807 = vsel %vm126, %v4803, 0.0
    %4808 = vadd.xlane.f32.xlu0 %v4807
    %v4809 = vpop.xlane.xlu0 %4808
    %v4810 = vmul.f32 %v4806, %v133
    %v4811 = vmul.f32 %v4809, %v133
    %v4812 = vadd.f32 %v4810, 1e-05
    %v4813 = vadd.f32 %v4811, 1e-05
    %v4814 = vrsqrt.pop %v4812
    %v4815 = vrsqrt.pop %v4813
    %v4816 = vmul.f32 %v4800, %v4814
    %v4817 = vmul.f32 %v4801, %v4815
    %v4818 = vlaneseq
    %v4819 = vshrl.u32 %v4818, 7
    %v4820 = vsub.s32 0, %v4819
    %v4821 = vrot.slane %v4790, %v4820
    %v4822 = vmul.f32 %v4816, %v4821
    %v4823 = vmul.f32 %v4817, %v4821
    %v4824 = vlaneseq
    %v4825 = vshrl.u32 %v4824, 7
    %v4826 = vsub.s32 0, %v4825
    %v4827 = vrot.slane %v4791, %v4826
    %v4828 = vadd.f32 %v4822, %v4827
    %v4829 = vadd.f32 %v4823, %v4827
    %v4830 = vld [vmem:[#allocation2 + $0x1d8] sm:$0xff]
    %v4831 = vld [vmem:[#allocation2 + $0x1e0] sm:$0xff]
    %v4832 = vld [vmem:[#allocation2 + $0x1e8] sm:$0xff]
    %v4834 = vsel %vm126, %v4828, 0
    %v4837 = vsel %vm126, %v4829, 0
    %v4840 = vsel %vm126, %v4830, 0
    %4842 = vmatprep.subr.mxu0 0.0
    %4843 = vmatpush1.xpose.msra.mxu0 %v4840
    %4844 = vmatprep.subr.mxu0 0.0
    %4845 = vmatpush1.xpose.msra.mxu0 0.0
    %4846 = vmatprep.subr.mxu0 0.0
    %4847 = vmatpush1.xpose.msra.mxu0 0.0
    %4848 = vmatprep.subr.mxu0 0.0
    %4849 = vmatpush1.xpose.msra.mxu0 0.0
    %4850 = vmatprep.subr.mxu0 0.0
    %4851 = vmatpush1.xpose.msra.mxu0 0.0
    %4852 = vmatprep.subr.mxu0 0.0
    %4853 = vmatpush1.xpose.msra.mxu0 0.0
    %4854 = vmatprep.subr.mxu0 0.0
    %4855 = vmatpush1.xpose.msra.mxu0 0.0
    %4856 = vmatprep.subr.mxu0 0.0
    %4857 = vmatpush1.xpose.msra.mxu0 0.0
    %4858 = vmatprep.subr.mxu0 0.0
    %4859 = vmatpush1.xpose.msra.mxu0 0.0
    %4860 = vmatprep.subr.mxu0 0.0
    %4861 = vmatpush1.xpose.msra.mxu0 0.0
    %4862 = vmatprep.subr.mxu0 0.0
    %4863 = vmatpush1.xpose.msra.mxu0 0.0
    %4864 = vmatprep.subr.mxu0 0.0
    %4865 = vmatpush1.xpose.msra.mxu0 0.0
    %4866 = vmatprep.subr.mxu0 0.0
    %4867 = vmatpush1.xpose.msra.mxu0 0.0
    %4868 = vmatprep.subr.mxu0 0.0
    %4869 = vmatpush1.xpose.msra.mxu0 0.0
    %4870 = vmatprep.subr.mxu0 0.0
    %4871 = vmatpush1.xpose.msra.mxu0 0.0
    %4872 = vmatprep.subr.mxu0 0.0
    %4873 = vmatpush1.xpose.msra.mxu0 0.0
    %4874 = vmatprep.subr.mxu0 0.0
    %4875 = vmatpush1.xpose.msra.mxu0 0.0
    %4876 = vmatprep.subr.mxu0 0.0
    %4877 = vmatpush1.xpose.msra.mxu0 0.0
    %4878 = vmatprep.subr.mxu0 0.0
    %4879 = vmatpush1.xpose.msra.mxu0 0.0
    %4880 = vmatprep.subr.mxu0 0.0
    %4881 = vmatpush1.xpose.msra.mxu0 0.0
    %4882 = vmatprep.subr.mxu0 0.0
    %4883 = vmatpush1.xpose.msra.mxu0 0.0
    %4884 = vmatprep.subr.mxu0 0.0
    %4885 = vmatpush1.xpose.msra.mxu0 0.0
    %4886 = vmatprep.subr.mxu0 0.0
    %4887 = vmatpush1.xpose.msra.mxu0 0.0
    %4888 = vmatprep.subr.mxu0 0.0
    %4889 = vmatpush1.xpose.msra.mxu0 0.0
    %4890 = vmatprep.subr.mxu0 0.0
    %4891 = vmatpush1.xpose.msra.mxu0 0.0
    %4892 = vmatprep.subr.mxu0 0.0
    %4893 = vmatpush1.xpose.msra.mxu0 0.0
    %4894 = vmatprep.subr.mxu0 0.0
    %4895 = vmatpush1.xpose.msra.mxu0 0.0
    %4896 = vmatprep.subr.mxu0 0.0
    %4897 = vmatpush1.xpose.msra.mxu0 0.0
    %4898 = vmatprep.subr.mxu0 0.0
    %4899 = vmatpush1.xpose.msra.mxu0 0.0
    %4900 = vmatprep.subr.mxu0 0.0
    %4901 = vmatpush1.xpose.msra.mxu0 0.0
    %4902 = vmatprep.subr.mxu0 0.0
    %4903 = vmatpush1.xpose.msra.mxu0 0.0
    %4904 = vmatprep.subr.mxu0 0.0
    %4905 = vmatpush1.xpose.msra.mxu0 0.0
    %4906 = vmatprep.mubr.f32.mxu0 0.0
    %4907 = vmatmul.mubr.f32.gmra.mrb[0].mxu0 %v4834
    %v4908 = vpop.f32.mrb[0].mxu0
    %v4909 = vadd.f32 0.0, %v4908
    %v4910 = vpop.f32.mrb[0].mxu0
    %4911 = vmatprep.mubr.f32.mxu0 0.0
    %4912 = vmatmul.mubr.f32.gmra.mrb[0].mxu0 %v4837
    %v4913 = vpop.f32.mrb[0].mxu0
    %v4914 = vadd.f32 0.0, %v4913
    %v4915 = vpop.f32.mrb[0].mxu0
    %4916 = vdwg.mxu0
    %v4918 = vsel %vm126, %v4831, 0
    %4920 = vmatprep.subr.mxu0 0.0
    %4921 = vmatpush1.xpose.msra.mxu0 %v4918
    %4922 = vmatprep.subr.mxu0 0.0
    %4923 = vmatpush1.xpose.msra.mxu0 0.0
    %4924 = vmatprep.subr.mxu0 0.0
    %4925 = vmatpush1.xpose.msra.mxu0 0.0
    %4926 = vmatprep.subr.mxu0 0.0
    %4927 = vmatpush1.xpose.msra.mxu0 0.0
    %4928 = vmatprep.subr.mxu0 0.0
    %4929 = vmatpush1.xpose.msra.mxu0 0.0
    %4930 = vmatprep.subr.mxu0 0.0
    %4931 = vmatpush1.xpose.msra.mxu0 0.0
    %4932 = vmatprep.subr.mxu0 0.0
    %4933 = vmatpush1.xpose.msra.mxu0 0.0
    %4934 = vmatprep.subr.mxu0 0.0
    %4935 = vmatpush1.xpose.msra.mxu0 0.0
    %4936 = vmatprep.subr.mxu0 0.0
    %4937 = vmatpush1.xpose.msra.mxu0 0.0
    %4938 = vmatprep.subr.mxu0 0.0
    %4939 = vmatpush1.xpose.msra.mxu0 0.0
    %4940 = vmatprep.subr.mxu0 0.0
    %4941 = vmatpush1.xpose.msra.mxu0 0.0
    %4942 = vmatprep.subr.mxu0 0.0
    %4943 = vmatpush1.xpose.msra.mxu0 0.0
    %4944 = vmatprep.subr.mxu0 0.0
    %4945 = vmatpush1.xpose.msra.mxu0 0.0
    %4946 = vmatprep.subr.mxu0 0.0
    %4947 = vmatpush1.xpose.msra.mxu0 0.0
    %4948 = vmatprep.subr.mxu0 0.0
    %4949 = vmatpush1.xpose.msra.mxu0 0.0
    %4950 = vmatprep.subr.mxu0 0.0
    %4951 = vmatpush1.xpose.msra.mxu0 0.0
    %4952 = vmatprep.subr.mxu0 0.0
    %4953 = vmatpush1.xpose.msra.mxu0 0.0
    %4954 = vmatprep.subr.mxu0 0.0
    %4955 = vmatpush1.xpose.msra.mxu0 0.0
    %4956 = vmatprep.subr.mxu0 0.0
    %4957 = vmatpush1.xpose.msra.mxu0 0.0
    %4958 = vmatprep.subr.mxu0 0.0
    %4959 = vmatpush1.xpose.msra.mxu0 0.0
    %4960 = vmatprep.subr.mxu0 0.0
    %4961 = vmatpush1.xpose.msra.mxu0 0.0
    %4962 = vmatprep.subr.mxu0 0.0
    %4963 = vmatpush1.xpose.msra.mxu0 0.0
    %4964 = vmatprep.subr.mxu0 0.0
    %4965 = vmatpush1.xpose.msra.mxu0 0.0
    %4966 = vmatprep.subr.mxu0 0.0
    %4967 = vmatpush1.xpose.msra.mxu0 0.0
    %4968 = vmatprep.subr.mxu0 0.0
    %4969 = vmatpush1.xpose.msra.mxu0 0.0
    %4970 = vmatprep.subr.mxu0 0.0
    %4971 = vmatpush1.xpose.msra.mxu0 0.0
    %4972 = vmatprep.subr.mxu0 0.0
    %4973 = vmatpush1.xpose.msra.mxu0 0.0
    %4974 = vmatprep.subr.mxu0 0.0
    %4975 = vmatpush1.xpose.msra.mxu0 0.0
    %4976 = vmatprep.subr.mxu0 0.0
    %4977 = vmatpush1.xpose.msra.mxu0 0.0
    %4978 = vmatprep.subr.mxu0 0.0
    %4979 = vmatpush1.xpose.msra.mxu0 0.0
    %4980 = vmatprep.subr.mxu0 0.0
    %4981 = vmatpush1.xpose.msra.mxu0 0.0
    %4982 = vmatprep.subr.mxu0 0.0
    %4983 = vmatpush1.xpose.msra.mxu0 0.0
    %4984 = vmatprep.mubr.f32.mxu0 0.0
    %4985 = vmatmul.mubr.f32.gmra.mrb[0].mxu0 %v4834
    %v4986 = vpop.f32.mrb[0].mxu0
    %v4987 = vadd.f32 0.0, %v4986
    %v4988 = vpop.f32.mrb[0].mxu0
    %4989 = vmatprep.mubr.f32.mxu0 0.0
    %4990 = vmatmul.mubr.f32.gmra.mrb[0].mxu0 %v4837
    %v4991 = vpop.f32.mrb[0].mxu0
    %v4992 = vadd.f32 0.0, %v4991
    %v4993 = vpop.f32.mrb[0].mxu0
    %4994 = vdwg.mxu0
    %v4996 = vsel %vm126, %v4832, 0
    %4998 = vmatprep.subr.mxu0 0.0
    %4999 = vmatpush1.xpose.msra.mxu0 %v4996
    %5000 = vmatprep.subr.mxu0 0.0
    %5001 = vmatpush1.xpose.msra.mxu0 0.0
    %5002 = vmatprep.subr.mxu0 0.0
    %5003 = vmatpush1.xpose.msra.mxu0 0.0
    %5004 = vmatprep.subr.mxu0 0.0
    %5005 = vmatpush1.xpose.msra.mxu0 0.0
    %5006 = vmatprep.subr.mxu0 0.0
    %5007 = vmatpush1.xpose.msra.mxu0 0.0
    %5008 = vmatprep.subr.mxu0 0.0
    %5009 = vmatpush1.xpose.msra.mxu0 0.0
    %5010 = vmatprep.subr.mxu0 0.0
    %5011 = vmatpush1.xpose.msra.mxu0 0.0
    %5012 = vmatprep.subr.mxu0 0.0
    %5013 = vmatpush1.xpose.msra.mxu0 0.0
    %5014 = vmatprep.subr.mxu0 0.0
    %5015 = vmatpush1.xpose.msra.mxu0 0.0
    %5016 = vmatprep.subr.mxu0 0.0
    %5017 = vmatpush1.xpose.msra.mxu0 0.0
    %5018 = vmatprep.subr.mxu0 0.0
    %5019 = vmatpush1.xpose.msra.mxu0 0.0
    %5020 = vmatprep.subr.mxu0 0.0
    %5021 = vmatpush1.xpose.msra.mxu0 0.0
    %5022 = vmatprep.subr.mxu0 0.0
    %5023 = vmatpush1.xpose.msra.mxu0 0.0
    %5024 = vmatprep.subr.mxu0 0.0
    %5025 = vmatpush1.xpose.msra.mxu0 0.0
    %5026 = vmatprep.subr.mxu0 0.0
    %5027 = vmatpush1.xpose.msra.mxu0 0.0
    %5028 = vmatprep.subr.mxu0 0.0
    %5029 = vmatpush1.xpose.msra.mxu0 0.0
    %5030 = vmatprep.subr.mxu0 0.0
    %5031 = vmatpush1.xpose.msra.mxu0 0.0
    %5032 = vmatprep.subr.mxu0 0.0
    %5033 = vmatpush1.xpose.msra.mxu0 0.0
    %5034 = vmatprep.subr.mxu0 0.0
    %5035 = vmatpush1.xpose.msra.mxu0 0.0
    %5036 = vmatprep.subr.mxu0 0.0
    %5037 = vmatpush1.xpose.msra.mxu0 0.0
    %5038 = vmatprep.subr.mxu0 0.0
    %5039 = vmatpush1.xpose.msra.mxu0 0.0
    %5040 = vmatprep.subr.mxu0 0.0
    %5041 = vmatpush1.xpose.msra.mxu0 0.0
    %5042 = vmatprep.subr.mxu0 0.0
    %5043 = vmatpush1.xpose.msra.mxu0 0.0
    %5044 = vmatprep.subr.mxu0 0.0
    %5045 = vmatpush1.xpose.msra.mxu0 0.0
    %5046 = vmatprep.subr.mxu0 0.0
    %5047 = vmatpush1.xpose.msra.mxu0 0.0
    %5048 = vmatprep.subr.mxu0 0.0
    %5049 = vmatpush1.xpose.msra.mxu0 0.0
    %5050 = vmatprep.subr.mxu0 0.0
    %5051 = vmatpush1.xpose.msra.mxu0 0.0
    %5052 = vmatprep.subr.mxu0 0.0
    %5053 = vmatpush1.xpose.msra.mxu0 0.0
    %5054 = vmatprep.subr.mxu0 0.0
    %5055 = vmatpush1.xpose.msra.mxu0 0.0
    %5056 = vmatprep.subr.mxu0 0.0
    %5057 = vmatpush1.xpose.msra.mxu0 0.0
    %5058 = vmatprep.subr.mxu0 0.0
    %5059 = vmatpush1.xpose.msra.mxu0 0.0
    %5060 = vmatprep.subr.mxu0 0.0
    %5061 = vmatpush1.xpose.msra.mxu0 0.0
    %5062 = vmatprep.mubr.f32.mxu0 0.0
    %5063 = vmatmul.mubr.f32.gmra.mrb[0].mxu0 %v4834
    %v5064 = vpop.f32.mrb[0].mxu0
    %v5065 = vadd.f32 0.0, %v5064
    %v5066 = vpop.f32.mrb[0].mxu0
    %5067 = vmatprep.mubr.f32.mxu0 0.0
    %5068 = vmatmul.mubr.f32.gmra.mrb[0].mxu0 %v4837
    %v5069 = vpop.f32.mrb[0].mxu0
    %v5070 = vadd.f32 0.0, %v5069
    %v5071 = vpop.f32.mrb[0].mxu0
    %5072 = vdwg.mxu0
    %v5074 = vsel %vm409, %v4987, 0
    %v5077 = vsel %vm409, %v4992, 0
    %v5080 = vsel %vm409, %v4909, 0
    %v5083 = vsel %vm409, %v4914, 0
    %5085 = vmatprep.subr.mxu0 0.0
    %5086 = vmatpush1.xpose.msra.mxu0 %v5080
    %5087 = vmatprep.subr.mxu0 0.0
    %5088 = vmatpush1.xpose.msra.mxu0 %v5083
    %5089 = vmatprep.subr.mxu0 0.0
    %5090 = vmatpush1.xpose.msra.mxu0 0.0
    %5091 = vmatprep.subr.mxu0 0.0
    %5092 = vmatpush1.xpose.msra.mxu0 0.0
    %5093 = vmatprep.subr.mxu0 0.0
    %5094 = vmatpush1.xpose.msra.mxu0 0.0
    %5095 = vmatprep.subr.mxu0 0.0
    %5096 = vmatpush1.xpose.msra.mxu0 0.0
    %5097 = vmatprep.subr.mxu0 0.0
    %5098 = vmatpush1.xpose.msra.mxu0 0.0
    %5099 = vmatprep.subr.mxu0 0.0
    %5100 = vmatpush1.xpose.msra.mxu0 0.0
    %5101 = vmatprep.subr.mxu0 0.0
    %5102 = vmatpush1.xpose.msra.mxu0 0.0
    %5103 = vmatprep.subr.mxu0 0.0
    %5104 = vmatpush1.xpose.msra.mxu0 0.0
    %5105 = vmatprep.subr.mxu0 0.0
    %5106 = vmatpush1.xpose.msra.mxu0 0.0
    %5107 = vmatprep.subr.mxu0 0.0
    %5108 = vmatpush1.xpose.msra.mxu0 0.0
    %5109 = vmatprep.subr.mxu0 0.0
    %5110 = vmatpush1.xpose.msra.mxu0 0.0
    %5111 = vmatprep.subr.mxu0 0.0
    %5112 = vmatpush1.xpose.msra.mxu0 0.0
    %5113 = vmatprep.subr.mxu0 0.0
    %5114 = vmatpush1.xpose.msra.mxu0 0.0
    %5115 = vmatprep.subr.mxu0 0.0
    %5116 = vmatpush1.xpose.msra.mxu0 0.0
    %5117 = vmatprep.subr.mxu0 0.0
    %5118 = vmatpush1.xpose.msra.mxu0 0.0
    %5119 = vmatprep.subr.mxu0 0.0
    %5120 = vmatpush1.xpose.msra.mxu0 0.0
    %5121 = vmatprep.subr.mxu0 0.0
    %5122 = vmatpush1.xpose.msra.mxu0 0.0
    %5123 = vmatprep.subr.mxu0 0.0
    %5124 = vmatpush1.xpose.msra.mxu0 0.0
    %5125 = vmatprep.subr.mxu0 0.0
    %5126 = vmatpush1.xpose.msra.mxu0 0.0
    %5127 = vmatprep.subr.mxu0 0.0
    %5128 = vmatpush1.xpose.msra.mxu0 0.0
    %5129 = vmatprep.subr.mxu0 0.0
    %5130 = vmatpush1.xpose.msra.mxu0 0.0
    %5131 = vmatprep.subr.mxu0 0.0
    %5132 = vmatpush1.xpose.msra.mxu0 0.0
    %5133 = vmatprep.subr.mxu0 0.0
    %5134 = vmatpush1.xpose.msra.mxu0 0.0
    %5135 = vmatprep.subr.mxu0 0.0
    %5136 = vmatpush1.xpose.msra.mxu0 0.0
    %5137 = vmatprep.subr.mxu0 0.0
    %5138 = vmatpush1.xpose.msra.mxu0 0.0
    %5139 = vmatprep.subr.mxu0 0.0
    %5140 = vmatpush1.xpose.msra.mxu0 0.0
    %5141 = vmatprep.subr.mxu0 0.0
    %5142 = vmatpush1.xpose.msra.mxu0 0.0
    %5143 = vmatprep.subr.mxu0 0.0
    %5144 = vmatpush1.xpose.msra.mxu0 0.0
    %5145 = vmatprep.subr.mxu0 0.0
    %5146 = vmatpush1.xpose.msra.mxu0 0.0
    %5147 = vmatprep.subr.mxu0 0.0
    %5148 = vmatpush1.xpose.msra.mxu0 0.0
    %5149 = vmatprep.mubr.f32.mxu0 0.0
    %5150 = vmatmul.mubr.f32.gmra.mrb[0].mxu0 %v5074
    %v5151 = vpop.f32.mrb[0].mxu0
    %v5152 = vadd.f32 0.0, %v5151
    %v5153 = vpop.f32.mrb[0].mxu0
    %5154 = vmatprep.mubr.f32.mxu0 0.0
    %5155 = vmatmul.mubr.f32.gmra.mrb[0].mxu0 %v5077
    %v5156 = vpop.f32.mrb[0].mxu0
    %v5157 = vadd.f32 0.0, %v5156
    %v5158 = vpop.f32.mrb[0].mxu0
    %5159 = vdwg.mxu0
    %v5160 = vmul.f32 %v5152, 0.17677669
    %v5161 = vmul.f32 %v5157, 0.17677669
    %v5162 = vadd.f32 %v5160, %v122
    %v5163 = vadd.f32 %v5161, %v123
    %v5164 = vsel %vm501, %v5162, -inf
    %5165 = vmax.xlane.f32.xlu0 %v5164
    %v5166 = vpop.xlane.xlu0 %5165
    %v5167 = vsel %vm501, %v5163, -inf
    %5168 = vmax.xlane.f32.xlu0 %v5167
    %v5169 = vpop.xlane.xlu0 %5168
    %v5170 = vsub.f32 %v5162, %v5166
    %v5171 = vsub.f32 %v5163, %v5169
    %v5172 = vmul.f32 %v5170, 1.442695
    %v5173 = vpow.pop %v5172
    %v5174 = vmul.f32 %v5171, 1.442695
    %v5175 = vpow.pop %v5174
    %v5176 = vsel %vm501, %v5173, 0.0
    %5177 = vadd.xlane.f32.xlu0 %v5176
    %v5178 = vpop.xlane.xlu0 %5177
    %v5179 = vsel %vm501, %v5175, 0.0
    %5180 = vadd.xlane.f32.xlu0 %v5179
    %v5181 = vpop.xlane.xlu0 %5180
    %v5182 = vrcp.pop %v5178
    %v5183 = vmul.f32 %v5173, %v5182
    %v5184 = vrcp.pop %v5181
    %v5185 = vmul.f32 %v5175, %v5184
    %v5187 = vsel %vm501, %v5183, 0
    %v5190 = vsel %vm501, %v5185, 0
    %5192 = vmatprep.subr.mxu0 0.0
    %5193 = vmatpush1.msra.mxu0 %v5065
    %5194 = vmatprep.subr.mxu0 0.0
    %5195 = vmatpush1.msra.mxu0 %v5070
    %5196 = vmatprep.subr.mxu0 0.0
    %5197 = vmatpush1.msra.mxu0 0.0
    %5198 = vmatprep.subr.mxu0 0.0
    %5199 = vmatpush1.msra.mxu0 0.0
    %5200 = vmatprep.subr.mxu0 0.0
    %5201 = vmatpush1.msra.mxu0 0.0
    %5202 = vmatprep.subr.mxu0 0.0
    %5203 = vmatpush1.msra.mxu0 0.0
    %5204 = vmatprep.subr.mxu0 0.0
    %5205 = vmatpush1.msra.mxu0 0.0
    %5206 = vmatprep.subr.mxu0 0.0
    %5207 = vmatpush1.msra.mxu0 0.0
    %5208 = vmatprep.subr.mxu0 0.0
    %5209 = vmatpush1.msra.mxu0 0.0
    %5210 = vmatprep.subr.mxu0 0.0
    %5211 = vmatpush1.msra.mxu0 0.0
    %5212 = vmatprep.subr.mxu0 0.0
    %5213 = vmatpush1.msra.mxu0 0.0
    %5214 = vmatprep.subr.mxu0 0.0
    %5215 = vmatpush1.msra.mxu0 0.0
    %5216 = vmatprep.subr.mxu0 0.0
    %5217 = vmatpush1.msra.mxu0 0.0
    %5218 = vmatprep.subr.mxu0 0.0
    %5219 = vmatpush1.msra.mxu0 0.0
    %5220 = vmatprep.subr.mxu0 0.0
    %5221 = vmatpush1.msra.mxu0 0.0
    %5222 = vmatprep.subr.mxu0 0.0
    %5223 = vmatpush1.msra.mxu0 0.0
    %5224 = vmatprep.subr.mxu0 0.0
    %5225 = vmatpush1.msra.mxu0 0.0
    %5226 = vmatprep.subr.mxu0 0.0
    %5227 = vmatpush1.msra.mxu0 0.0
    %5228 = vmatprep.subr.mxu0 0.0
    %5229 = vmatpush1.msra.mxu0 0.0
    %5230 = vmatprep.subr.mxu0 0.0
    %5231 = vmatpush1.msra.mxu0 0.0
    %5232 = vmatprep.subr.mxu0 0.0
    %5233 = vmatpush1.msra.mxu0 0.0
    %5234 = vmatprep.subr.mxu0 0.0
    %5235 = vmatpush1.msra.mxu0 0.0
    %5236 = vmatprep.subr.mxu0 0.0
    %5237 = vmatpush1.msra.mxu0 0.0
    %5238 = vmatprep.subr.mxu0 0.0
    %5239 = vmatpush1.msra.mxu0 0.0
    %5240 = vmatprep.subr.mxu0 0.0
    %5241 = vmatpush1.msra.mxu0 0.0
    %5242 = vmatprep.subr.mxu0 0.0
    %5243 = vmatpush1.msra.mxu0 0.0
    %5244 = vmatprep.subr.mxu0 0.0
    %5245 = vmatpush1.msra.mxu0 0.0
    %5246 = vmatprep.subr.mxu0 0.0
    %5247 = vmatpush1.msra.mxu0 0.0
    %5248 = vmatprep.subr.mxu0 0.0
    %5249 = vmatpush1.msra.mxu0 0.0
    %5250 = vmatprep.subr.mxu0 0.0
    %5251 = vmatpush1.msra.mxu0 0.0
    %5252 = vmatprep.subr.mxu0 0.0
    %5253 = vmatpush1.msra.mxu0 0.0
    %5254 = vmatprep.subr.mxu0 0.0
    %5255 = vmatpush1.msra.mxu0 0.0
    %5256 = vmatprep.mubr.f32.mxu0 0.0
    %5257 = vmatmul.mubr.f32.gmra.mrb[0].mxu0 %v5187
    %v5258 = vpop.f32.mrb[0].mxu0
    %v5259 = vadd.f32 0.0, %v5258
    %v5260 = vpop.f32.mrb[0].mxu0
    %5261 = vmatprep.mubr.f32.mxu0 0.0
    %5262 = vmatmul.mubr.f32.gmra.mrb[0].mxu0 %v5190
    %v5263 = vpop.f32.mrb[0].mxu0
    %v5264 = vadd.f32 0.0, %v5263
    %v5265 = vpop.f32.mrb[0].mxu0
    %5266 = vdwg.mxu0
    %v5267 = vld [vmem:[#allocation2 + $0x238] sm:$0xff]
    %v5268 = vld [vmem:[#allocation2 + $0x1f0] sm:$0xff]
    %v5269 = vld [vmem:[#allocation2 + $0x1f8] sm:$0xff]
    %v5270 = vld [vmem:[#allocation2 + $0x200] sm:$0xff]
    %v5272 = vsel %vm126, %v5268, 0
    %5274 = vmatprep.subr.mxu0 0.0
    %5275 = vmatpush1.xpose.msra.mxu0 %v5272
    %5276 = vmatprep.subr.mxu0 0.0
    %5277 = vmatpush1.xpose.msra.mxu0 0.0
    %5278 = vmatprep.subr.mxu0 0.0
    %5279 = vmatpush1.xpose.msra.mxu0 0.0
    %5280 = vmatprep.subr.mxu0 0.0
    %5281 = vmatpush1.xpose.msra.mxu0 0.0
    %5282 = vmatprep.subr.mxu0 0.0
    %5283 = vmatpush1.xpose.msra.mxu0 0.0
    %5284 = vmatprep.subr.mxu0 0.0
    %5285 = vmatpush1.xpose.msra.mxu0 0.0
    %5286 = vmatprep.subr.mxu0 0.0
    %5287 = vmatpush1.xpose.msra.mxu0 0.0
    %5288 = vmatprep.subr.mxu0 0.0
    %5289 = vmatpush1.xpose.msra.mxu0 0.0
    %5290 = vmatprep.subr.mxu0 0.0
    %5291 = vmatpush1.xpose.msra.mxu0 0.0
    %5292 = vmatprep.subr.mxu0 0.0
    %5293 = vmatpush1.xpose.msra.mxu0 0.0
    %5294 = vmatprep.subr.mxu0 0.0
    %5295 = vmatpush1.xpose.msra.mxu0 0.0
    %5296 = vmatprep.subr.mxu0 0.0
    %5297 = vmatpush1.xpose.msra.mxu0 0.0
    %5298 = vmatprep.subr.mxu0 0.0
    %5299 = vmatpush1.xpose.msra.mxu0 0.0
    %5300 = vmatprep.subr.mxu0 0.0
    %5301 = vmatpush1.xpose.msra.mxu0 0.0
    %5302 = vmatprep.subr.mxu0 0.0
    %5303 = vmatpush1.xpose.msra.mxu0 0.0
    %5304 = vmatprep.subr.mxu0 0.0
    %5305 = vmatpush1.xpose.msra.mxu0 0.0
    %5306 = vmatprep.subr.mxu0 0.0
    %5307 = vmatpush1.xpose.msra.mxu0 0.0
    %5308 = vmatprep.subr.mxu0 0.0
    %5309 = vmatpush1.xpose.msra.mxu0 0.0
    %5310 = vmatprep.subr.mxu0 0.0
    %5311 = vmatpush1.xpose.msra.mxu0 0.0
    %5312 = vmatprep.subr.mxu0 0.0
    %5313 = vmatpush1.xpose.msra.mxu0 0.0
    %5314 = vmatprep.subr.mxu0 0.0
    %5315 = vmatpush1.xpose.msra.mxu0 0.0
    %5316 = vmatprep.subr.mxu0 0.0
    %5317 = vmatpush1.xpose.msra.mxu0 0.0
    %5318 = vmatprep.subr.mxu0 0.0
    %5319 = vmatpush1.xpose.msra.mxu0 0.0
    %5320 = vmatprep.subr.mxu0 0.0
    %5321 = vmatpush1.xpose.msra.mxu0 0.0
    %5322 = vmatprep.subr.mxu0 0.0
    %5323 = vmatpush1.xpose.msra.mxu0 0.0
    %5324 = vmatprep.subr.mxu0 0.0
    %5325 = vmatpush1.xpose.msra.mxu0 0.0
    %5326 = vmatprep.subr.mxu0 0.0
    %5327 = vmatpush1.xpose.msra.mxu0 0.0
    %5328 = vmatprep.subr.mxu0 0.0
    %5329 = vmatpush1.xpose.msra.mxu0 0.0
    %5330 = vmatprep.subr.mxu0 0.0
    %5331 = vmatpush1.xpose.msra.mxu0 0.0
    %5332 = vmatprep.subr.mxu0 0.0
    %5333 = vmatpush1.xpose.msra.mxu0 0.0
    %5334 = vmatprep.subr.mxu0 0.0
    %5335 = vmatpush1.xpose.msra.mxu0 0.0
    %5336 = vmatprep.subr.mxu0 0.0
    %5337 = vmatpush1.xpose.msra.mxu0 0.0
    %5338 = vmatprep.mubr.f32.mxu0 0.0
    %5339 = vmatmul.mubr.f32.gmra.mrb[0].mxu0 %v4834
    %v5340 = vpop.f32.mrb[0].mxu0
    %v5341 = vadd.f32 0.0, %v5340
    %v5342 = vpop.f32.mrb[0].mxu0
    %5343 = vmatprep.mubr.f32.mxu0 0.0
    %5344 = vmatmul.mubr.f32.gmra.mrb[0].mxu0 %v4837
    %v5345 = vpop.f32.mrb[0].mxu0
    %v5346 = vadd.f32 0.0, %v5345
    %v5347 = vpop.f32.mrb[0].mxu0
    %5348 = vdwg.mxu0
    %v5350 = vsel %vm126, %v5269, 0
    %5352 = vmatprep.subr.mxu0 0.0
    %5353 = vmatpush1.xpose.msra.mxu0 %v5350
    %5354 = vmatprep.subr.mxu0 0.0
    %5355 = vmatpush1.xpose.msra.mxu0 0.0
    %5356 = vmatprep.subr.mxu0 0.0
    %5357 = vmatpush1.xpose.msra.mxu0 0.0
    %5358 = vmatprep.subr.mxu0 0.0
    %5359 = vmatpush1.xpose.msra.mxu0 0.0
    %5360 = vmatprep.subr.mxu0 0.0
    %5361 = vmatpush1.xpose.msra.mxu0 0.0
    %5362 = vmatprep.subr.mxu0 0.0
    %5363 = vmatpush1.xpose.msra.mxu0 0.0
    %5364 = vmatprep.subr.mxu0 0.0
    %5365 = vmatpush1.xpose.msra.mxu0 0.0
    %5366 = vmatprep.subr.mxu0 0.0
    %5367 = vmatpush1.xpose.msra.mxu0 0.0
    %5368 = vmatprep.subr.mxu0 0.0
    %5369 = vmatpush1.xpose.msra.mxu0 0.0
    %5370 = vmatprep.subr.mxu0 0.0
    %5371 = vmatpush1.xpose.msra.mxu0 0.0
    %5372 = vmatprep.subr.mxu0 0.0
    %5373 = vmatpush1.xpose.msra.mxu0 0.0
    %5374 = vmatprep.subr.mxu0 0.0
    %5375 = vmatpush1.xpose.msra.mxu0 0.0
    %5376 = vmatprep.subr.mxu0 0.0
    %5377 = vmatpush1.xpose.msra.mxu0 0.0
    %5378 = vmatprep.subr.mxu0 0.0
    %5379 = vmatpush1.xpose.msra.mxu0 0.0
    %5380 = vmatprep.subr.mxu0 0.0
    %5381 = vmatpush1.xpose.msra.mxu0 0.0
    %5382 = vmatprep.subr.mxu0 0.0
    %5383 = vmatpush1.xpose.msra.mxu0 0.0
    %5384 = vmatprep.subr.mxu0 0.0
    %5385 = vmatpush1.xpose.msra.mxu0 0.0
    %5386 = vmatprep.subr.mxu0 0.0
    %5387 = vmatpush1.xpose.msra.mxu0 0.0
    %5388 = vmatprep.subr.mxu0 0.0
    %5389 = vmatpush1.xpose.msra.mxu0 0.0
    %5390 = vmatprep.subr.mxu0 0.0
    %5391 = vmatpush1.xpose.msra.mxu0 0.0
    %5392 = vmatprep.subr.mxu0 0.0
    %5393 = vmatpush1.xpose.msra.mxu0 0.0
    %5394 = vmatprep.subr.mxu0 0.0
    %5395 = vmatpush1.xpose.msra.mxu0 0.0
    %5396 = vmatprep.subr.mxu0 0.0
    %5397 = vmatpush1.xpose.msra.mxu0 0.0
    %5398 = vmatprep.subr.mxu0 0.0
    %5399 = vmatpush1.xpose.msra.mxu0 0.0
    %5400 = vmatprep.subr.mxu0 0.0
    %5401 = vmatpush1.xpose.msra.mxu0 0.0
    %5402 = vmatprep.subr.mxu0 0.0
    %5403 = vmatpush1.xpose.msra.mxu0 0.0
    %5404 = vmatprep.subr.mxu0 0.0
    %5405 = vmatpush1.xpose.msra.mxu0 0.0
    %5406 = vmatprep.subr.mxu0 0.0
    %5407 = vmatpush1.xpose.msra.mxu0 0.0
    %5408 = vmatprep.subr.mxu0 0.0
    %5409 = vmatpush1.xpose.msra.mxu0 0.0
    %5410 = vmatprep.subr.mxu0 0.0
    %5411 = vmatpush1.xpose.msra.mxu0 0.0
    %5412 = vmatprep.subr.mxu0 0.0
    %5413 = vmatpush1.xpose.msra.mxu0 0.0
    %5414 = vmatprep.subr.mxu0 0.0
    %5415 = vmatpush1.xpose.msra.mxu0 0.0
    %5416 = vmatprep.mubr.f32.mxu0 0.0
    %5417 = vmatmul.mubr.f32.gmra.mrb[0].mxu0 %v4834
    %v5418 = vpop.f32.mrb[0].mxu0
    %v5419 = vadd.f32 0.0, %v5418
    %v5420 = vpop.f32.mrb[0].mxu0
    %5421 = vmatprep.mubr.f32.mxu0 0.0
    %5422 = vmatmul.mubr.f32.gmra.mrb[0].mxu0 %v4837
    %v5423 = vpop.f32.mrb[0].mxu0
    %v5424 = vadd.f32 0.0, %v5423
    %v5425 = vpop.f32.mrb[0].mxu0
    %5426 = vdwg.mxu0
    %v5428 = vsel %vm126, %v5270, 0
    %5430 = vmatprep.subr.mxu0 0.0
    %5431 = vmatpush1.xpose.msra.mxu0 %v5428
    %5432 = vmatprep.subr.mxu0 0.0
    %5433 = vmatpush1.xpose.msra.mxu0 0.0
    %5434 = vmatprep.subr.mxu0 0.0
    %5435 = vmatpush1.xpose.msra.mxu0 0.0
    %5436 = vmatprep.subr.mxu0 0.0
    %5437 = vmatpush1.xpose.msra.mxu0 0.0
    %5438 = vmatprep.subr.mxu0 0.0
    %5439 = vmatpush1.xpose.msra.mxu0 0.0
    %5440 = vmatprep.subr.mxu0 0.0
    %5441 = vmatpush1.xpose.msra.mxu0 0.0
    %5442 = vmatprep.subr.mxu0 0.0
    %5443 = vmatpush1.xpose.msra.mxu0 0.0
    %5444 = vmatprep.subr.mxu0 0.0
    %5445 = vmatpush1.xpose.msra.mxu0 0.0
    %5446 = vmatprep.subr.mxu0 0.0
    %5447 = vmatpush1.xpose.msra.mxu0 0.0
    %5448 = vmatprep.subr.mxu0 0.0
    %5449 = vmatpush1.xpose.msra.mxu0 0.0
    %5450 = vmatprep.subr.mxu0 0.0
    %5451 = vmatpush1.xpose.msra.mxu0 0.0
    %5452 = vmatprep.subr.mxu0 0.0
    %5453 = vmatpush1.xpose.msra.mxu0 0.0
    %5454 = vmatprep.subr.mxu0 0.0
    %5455 = vmatpush1.xpose.msra.mxu0 0.0
    %5456 = vmatprep.subr.mxu0 0.0
    %5457 = vmatpush1.xpose.msra.mxu0 0.0
    %5458 = vmatprep.subr.mxu0 0.0
    %5459 = vmatpush1.xpose.msra.mxu0 0.0
    %5460 = vmatprep.subr.mxu0 0.0
    %5461 = vmatpush1.xpose.msra.mxu0 0.0
    %5462 = vmatprep.subr.mxu0 0.0
    %5463 = vmatpush1.xpose.msra.mxu0 0.0
    %5464 = vmatprep.subr.mxu0 0.0
    %5465 = vmatpush1.xpose.msra.mxu0 0.0
    %5466 = vmatprep.subr.mxu0 0.0
    %5467 = vmatpush1.xpose.msra.mxu0 0.0
    %5468 = vmatprep.subr.mxu0 0.0
    %5469 = vmatpush1.xpose.msra.mxu0 0.0
    %5470 = vmatprep.subr.mxu0 0.0
    %5471 = vmatpush1.xpose.msra.mxu0 0.0
    %5472 = vmatprep.subr.mxu0 0.0
    %5473 = vmatpush1.xpose.msra.mxu0 0.0
    %5474 = vmatprep.subr.mxu0 0.0
    %5475 = vmatpush1.xpose.msra.mxu0 0.0
    %5476 = vmatprep.subr.mxu0 0.0
    %5477 = vmatpush1.xpose.msra.mxu0 0.0
    %5478 = vmatprep.subr.mxu0 0.0
    %5479 = vmatpush1.xpose.msra.mxu0 0.0
    %5480 = vmatprep.subr.mxu0 0.0
    %5481 = vmatpush1.xpose.msra.mxu0 0.0
    %5482 = vmatprep.subr.mxu0 0.0
    %5483 = vmatpush1.xpose.msra.mxu0 0.0
    %5484 = vmatprep.subr.mxu0 0.0
    %5485 = vmatpush1.xpose.msra.mxu0 0.0
    %5486 = vmatprep.subr.mxu0 0.0
    %5487 = vmatpush1.xpose.msra.mxu0 0.0
    %5488 = vmatprep.subr.mxu0 0.0
    %5489 = vmatpush1.xpose.msra.mxu0 0.0
    %5490 = vmatprep.subr.mxu0 0.0
    %5491 = vmatpush1.xpose.msra.mxu0 0.0
    %5492 = vmatprep.subr.mxu0 0.0
    %5493 = vmatpush1.xpose.msra.mxu0 0.0
    %5494 = vmatprep.mubr.f32.mxu0 0.0
    %5495 = vmatmul.mubr.f32.gmra.mrb[0].mxu0 %v4834
    %v5496 = vpop.f32.mrb[0].mxu0
    %v5497 = vadd.f32 0.0, %v5496
    %v5498 = vpop.f32.mrb[0].mxu0
    %5499 = vmatprep.mubr.f32.mxu0 0.0
    %5500 = vmatmul.mubr.f32.gmra.mrb[0].mxu0 %v4837
    %v5501 = vpop.f32.mrb[0].mxu0
    %v5502 = vadd.f32 0.0, %v5501
    %v5503 = vpop.f32.mrb[0].mxu0
    %5504 = vdwg.mxu0
    %v5506 = vsel %vm409, %v5419, 0
    %v5509 = vsel %vm409, %v5424, 0
    %v5512 = vsel %vm409, %v5341, 0
    %v5515 = vsel %vm409, %v5346, 0
    %5517 = vmatprep.subr.mxu0 0.0
    %5518 = vmatpush1.xpose.msra.mxu0 %v5512
    %5519 = vmatprep.subr.mxu0 0.0
    %5520 = vmatpush1.xpose.msra.mxu0 %v5515
    %5521 = vmatprep.subr.mxu0 0.0
    %5522 = vmatpush1.xpose.msra.mxu0 0.0
    %5523 = vmatprep.subr.mxu0 0.0
    %5524 = vmatpush1.xpose.msra.mxu0 0.0
    %5525 = vmatprep.subr.mxu0 0.0
    %5526 = vmatpush1.xpose.msra.mxu0 0.0
    %5527 = vmatprep.subr.mxu0 0.0
    %5528 = vmatpush1.xpose.msra.mxu0 0.0
    %5529 = vmatprep.subr.mxu0 0.0
    %5530 = vmatpush1.xpose.msra.mxu0 0.0
    %5531 = vmatprep.subr.mxu0 0.0
    %5532 = vmatpush1.xpose.msra.mxu0 0.0
    %5533 = vmatprep.subr.mxu0 0.0
    %5534 = vmatpush1.xpose.msra.mxu0 0.0
    %5535 = vmatprep.subr.mxu0 0.0
    %5536 = vmatpush1.xpose.msra.mxu0 0.0
    %5537 = vmatprep.subr.mxu0 0.0
    %5538 = vmatpush1.xpose.msra.mxu0 0.0
    %5539 = vmatprep.subr.mxu0 0.0
    %5540 = vmatpush1.xpose.msra.mxu0 0.0
    %5541 = vmatprep.subr.mxu0 0.0
    %5542 = vmatpush1.xpose.msra.mxu0 0.0
    %5543 = vmatprep.subr.mxu0 0.0
    %5544 = vmatpush1.xpose.msra.mxu0 0.0
    %5545 = vmatprep.subr.mxu0 0.0
    %5546 = vmatpush1.xpose.msra.mxu0 0.0
    %5547 = vmatprep.subr.mxu0 0.0
    %5548 = vmatpush1.xpose.msra.mxu0 0.0
    %5549 = vmatprep.subr.mxu0 0.0
    %5550 = vmatpush1.xpose.msra.mxu0 0.0
    %5551 = vmatprep.subr.mxu0 0.0
    %5552 = vmatpush1.xpose.msra.mxu0 0.0
    %5553 = vmatprep.subr.mxu0 0.0
    %5554 = vmatpush1.xpose.msra.mxu0 0.0
    %5555 = vmatprep.subr.mxu0 0.0
    %5556 = vmatpush1.xpose.msra.mxu0 0.0
    %5557 = vmatprep.subr.mxu0 0.0
    %5558 = vmatpush1.xpose.msra.mxu0 0.0
    %5559 = vmatprep.subr.mxu0 0.0
    %5560 = vmatpush1.xpose.msra.mxu0 0.0
    %5561 = vmatprep.subr.mxu0 0.0
    %5562 = vmatpush1.xpose.msra.mxu0 0.0
    %5563 = vmatprep.subr.mxu0 0.0
    %5564 = vmatpush1.xpose.msra.mxu0 0.0
    %5565 = vmatprep.subr.mxu0 0.0
    %5566 = vmatpush1.xpose.msra.mxu0 0.0
    %5567 = vmatprep.subr.mxu0 0.0
    %5568 = vmatpush1.xpose.msra.mxu0 0.0
    %5569 = vmatprep.subr.mxu0 0.0
    %5570 = vmatpush1.xpose.msra.mxu0 0.0
    %5571 = vmatprep.subr.mxu0 0.0
    %5572 = vmatpush1.xpose.msra.mxu0 0.0
    %5573 = vmatprep.subr.mxu0 0.0
    %5574 = vmatpush1.xpose.msra.mxu0 0.0
    %5575 = vmatprep.subr.mxu0 0.0
    %5576 = vmatpush1.xpose.msra.mxu0 0.0
    %5577 = vmatprep.subr.mxu0 0.0
    %5578 = vmatpush1.xpose.msra.mxu0 0.0
    %5579 = vmatprep.subr.mxu0 0.0
    %5580 = vmatpush1.xpose.msra.mxu0 0.0
    %5581 = vmatprep.mubr.f32.mxu0 0.0
    %5582 = vmatmul.mubr.f32.gmra.mrb[0].mxu0 %v5506
    %v5583 = vpop.f32.mrb[0].mxu0
    %v5584 = vadd.f32 0.0, %v5583
    %v5585 = vpop.f32.mrb[0].mxu0
    %5586 = vmatprep.mubr.f32.mxu0 0.0
    %5587 = vmatmul.mubr.f32.gmra.mrb[0].mxu0 %v5509
    %v5588 = vpop.f32.mrb[0].mxu0
    %v5589 = vadd.f32 0.0, %v5588
    %v5590 = vpop.f32.mrb[0].mxu0
    %5591 = vdwg.mxu0
    %v5592 = vmul.f32 %v5584, 0.17677669
    %v5593 = vmul.f32 %v5589, 0.17677669
    %v5594 = vadd.f32 %v5592, %v122
    %v5595 = vadd.f32 %v5593, %v123
    %v5596 = vsel %vm501, %v5594, -inf
    %5597 = vmax.xlane.f32.xlu0 %v5596
    %v5598 = vpop.xlane.xlu0 %5597
    %v5599 = vsel %vm501, %v5595, -inf
    %5600 = vmax.xlane.f32.xlu0 %v5599
    %v5601 = vpop.xlane.xlu0 %5600
    %v5602 = vsub.f32 %v5594, %v5598
    %v5603 = vsub.f32 %v5595, %v5601
    %v5604 = vmul.f32 %v5602, 1.442695
    %v5605 = vpow.pop %v5604
    %v5606 = vmul.f32 %v5603, 1.442695
    %v5607 = vpow.pop %v5606
    %v5608 = vsel %vm501, %v5605, 0.0
    %5609 = vadd.xlane.f32.xlu0 %v5608
    %v5610 = vpop.xlane.xlu0 %5609
    %v5611 = vsel %vm501, %v5607, 0.0
    %5612 = vadd.xlane.f32.xlu0 %v5611
    %v5613 = vpop.xlane.xlu0 %5612
    %v5614 = vrcp.pop %v5610
    %v5615 = vmul.f32 %v5605, %v5614
    %v5616 = vrcp.pop %v5613
    %v5617 = vmul.f32 %v5607, %v5616
    %v5619 = vsel %vm501, %v5615, 0
    %v5622 = vsel %vm501, %v5617, 0
    %5624 = vmatprep.subr.mxu0 0.0
    %5625 = vmatpush1.msra.mxu0 %v5497
    %5626 = vmatprep.subr.mxu0 0.0
    %5627 = vmatpush1.msra.mxu0 %v5502
    %5628 = vmatprep.subr.mxu0 0.0
    %5629 = vmatpush1.msra.mxu0 0.0
    %5630 = vmatprep.subr.mxu0 0.0
    %5631 = vmatpush1.msra.mxu0 0.0
    %5632 = vmatprep.subr.mxu0 0.0
    %5633 = vmatpush1.msra.mxu0 0.0
    %5634 = vmatprep.subr.mxu0 0.0
    %5635 = vmatpush1.msra.mxu0 0.0
    %5636 = vmatprep.subr.mxu0 0.0
    %5637 = vmatpush1.msra.mxu0 0.0
    %5638 = vmatprep.subr.mxu0 0.0
    %5639 = vmatpush1.msra.mxu0 0.0
    %5640 = vmatprep.subr.mxu0 0.0
    %5641 = vmatpush1.msra.mxu0 0.0
    %5642 = vmatprep.subr.mxu0 0.0
    %5643 = vmatpush1.msra.mxu0 0.0
    %5644 = vmatprep.subr.mxu0 0.0
    %5645 = vmatpush1.msra.mxu0 0.0
    %5646 = vmatprep.subr.mxu0 0.0
    %5647 = vmatpush1.msra.mxu0 0.0
    %5648 = vmatprep.subr.mxu0 0.0
    %5649 = vmatpush1.msra.mxu0 0.0
    %5650 = vmatprep.subr.mxu0 0.0
    %5651 = vmatpush1.msra.mxu0 0.0
    %5652 = vmatprep.subr.mxu0 0.0
    %5653 = vmatpush1.msra.mxu0 0.0
    %5654 = vmatprep.subr.mxu0 0.0
    %5655 = vmatpush1.msra.mxu0 0.0
    %5656 = vmatprep.subr.mxu0 0.0
    %5657 = vmatpush1.msra.mxu0 0.0
    %5658 = vmatprep.subr.mxu0 0.0
    %5659 = vmatpush1.msra.mxu0 0.0
    %5660 = vmatprep.subr.mxu0 0.0
    %5661 = vmatpush1.msra.mxu0 0.0
    %5662 = vmatprep.subr.mxu0 0.0
    %5663 = vmatpush1.msra.mxu0 0.0
    %5664 = vmatprep.subr.mxu0 0.0
    %5665 = vmatpush1.msra.mxu0 0.0
    %5666 = vmatprep.subr.mxu0 0.0
    %5667 = vmatpush1.msra.mxu0 0.0
    %5668 = vmatprep.subr.mxu0 0.0
    %5669 = vmatpush1.msra.mxu0 0.0
    %5670 = vmatprep.subr.mxu0 0.0
    %5671 = vmatpush1.msra.mxu0 0.0
    %5672 = vmatprep.subr.mxu0 0.0
    %5673 = vmatpush1.msra.mxu0 0.0
    %5674 = vmatprep.subr.mxu0 0.0
    %5675 = vmatpush1.msra.mxu0 0.0
    %5676 = vmatprep.subr.mxu0 0.0
    %5677 = vmatpush1.msra.mxu0 0.0
    %5678 = vmatprep.subr.mxu0 0.0
    %5679 = vmatpush1.msra.mxu0 0.0
    %5680 = vmatprep.subr.mxu0 0.0
    %5681 = vmatpush1.msra.mxu0 0.0
    %5682 = vmatprep.subr.mxu0 0.0
    %5683 = vmatpush1.msra.mxu0 0.0
    %5684 = vmatprep.subr.mxu0 0.0
    %5685 = vmatpush1.msra.mxu0 0.0
    %5686 = vmatprep.subr.mxu0 0.0
    %5687 = vmatpush1.msra.mxu0 0.0
    %5688 = vmatprep.mubr.f32.mxu0 0.0
    %5689 = vmatmul.mubr.f32.gmra.mrb[0].mxu0 %v5619
    %v5690 = vpop.f32.mrb[0].mxu0
    %v5691 = vadd.f32 0.0, %v5690
    %v5692 = vpop.f32.mrb[0].mxu0
    %5693 = vmatprep.mubr.f32.mxu0 0.0
    %5694 = vmatmul.mubr.f32.gmra.mrb[0].mxu0 %v5622
    %v5695 = vpop.f32.mrb[0].mxu0
    %v5696 = vadd.f32 0.0, %v5695
    %v5697 = vpop.f32.mrb[0].mxu0
    %5698 = vdwg.mxu0
    %v5699 = vld [vmem:[#allocation2 + $0x240] sm:$0xff]
    %v5701 = vsel %vm409, %v5691, 0
    %v5704 = vsel %vm409, %v5696, 0
    %5706 = vmatprep.subr.mxu0 0.0
    %5707 = vmatpush1.msra.mxu0 %v5699
    %5708 = vmatprep.subr.mxu0 0.0
    %5709 = vmatpush1.msra.mxu0 0.0
    %5710 = vmatprep.subr.mxu0 0.0
    %5711 = vmatpush1.msra.mxu0 0.0
    %5712 = vmatprep.subr.mxu0 0.0
    %5713 = vmatpush1.msra.mxu0 0.0
    %5714 = vmatprep.subr.mxu0 0.0
    %5715 = vmatpush1.msra.mxu0 0.0
    %5716 = vmatprep.subr.mxu0 0.0
    %5717 = vmatpush1.msra.mxu0 0.0
    %5718 = vmatprep.subr.mxu0 0.0
    %5719 = vmatpush1.msra.mxu0 0.0
    %5720 = vmatprep.subr.mxu0 0.0
    %5721 = vmatpush1.msra.mxu0 0.0
    %5722 = vmatprep.subr.mxu0 0.0
    %5723 = vmatpush1.msra.mxu0 0.0
    %5724 = vmatprep.subr.mxu0 0.0
    %5725 = vmatpush1.msra.mxu0 0.0
    %5726 = vmatprep.subr.mxu0 0.0
    %5727 = vmatpush1.msra.mxu0 0.0
    %5728 = vmatprep.subr.mxu0 0.0
    %5729 = vmatpush1.msra.mxu0 0.0
    %5730 = vmatprep.subr.mxu0 0.0
    %5731 = vmatpush1.msra.mxu0 0.0
    %5732 = vmatprep.subr.mxu0 0.0
    %5733 = vmatpush1.msra.mxu0 0.0
    %5734 = vmatprep.subr.mxu0 0.0
    %5735 = vmatpush1.msra.mxu0 0.0
    %5736 = vmatprep.subr.mxu0 0.0
    %5737 = vmatpush1.msra.mxu0 0.0
    %5738 = vmatprep.subr.mxu0 0.0
    %5739 = vmatpush1.msra.mxu0 0.0
    %5740 = vmatprep.subr.mxu0 0.0
    %5741 = vmatpush1.msra.mxu0 0.0
    %5742 = vmatprep.subr.mxu0 0.0
    %5743 = vmatpush1.msra.mxu0 0.0
    %5744 = vmatprep.subr.mxu0 0.0
    %5745 = vmatpush1.msra.mxu0 0.0
    %5746 = vmatprep.subr.mxu0 0.0
    %5747 = vmatpush1.msra.mxu0 0.0
    %5748 = vmatprep.subr.mxu0 0.0
    %5749 = vmatpush1.msra.mxu0 0.0
    %5750 = vmatprep.subr.mxu0 0.0
    %5751 = vmatpush1.msra.mxu0 0.0
    %5752 = vmatprep.subr.mxu0 0.0
    %5753 = vmatpush1.msra.mxu0 0.0
    %5754 = vmatprep.subr.mxu0 0.0
    %5755 = vmatpush1.msra.mxu0 0.0
    %5756 = vmatprep.subr.mxu0 0.0
    %5757 = vmatpush1.msra.mxu0 0.0
    %5758 = vmatprep.subr.mxu0 0.0
    %5759 = vmatpush1.msra.mxu0 0.0
    %5760 = vmatprep.subr.mxu0 0.0
    %5761 = vmatpush1.msra.mxu0 0.0
    %5762 = vmatprep.subr.mxu0 0.0
    %5763 = vmatpush1.msra.mxu0 0.0
    %5764 = vmatprep.subr.mxu0 0.0
    %5765 = vmatpush1.msra.mxu0 0.0
    %5766 = vmatprep.subr.mxu0 0.0
    %5767 = vmatpush1.msra.mxu0 0.0
    %5768 = vmatprep.subr.mxu0 0.0
    %5769 = vmatpush1.msra.mxu0 0.0
    %5770 = vmatprep.mubr.f32.mxu0 0.0
    %5771 = vmatmul.mubr.f32.gmra.mrb[0].mxu0 %v5701
    %v5772 = vpop.f32.mrb[0].mxu0
    %v5773 = vadd.f32 0.0, %v5772
    %v5774 = vpop.f32.mrb[0].mxu0
    %5775 = vmatprep.mubr.f32.mxu0 0.0
    %5776 = vmatmul.mubr.f32.gmra.mrb[0].mxu0 %v5704
    %v5777 = vpop.f32.mrb[0].mxu0
    %v5778 = vadd.f32 0.0, %v5777
    %v5779 = vpop.f32.mrb[0].mxu0
    %5780 = vdwg.mxu0
    %v5782 = vsel %vm409, %v5259, 0
    %v5785 = vsel %vm409, %v5264, 0
    %5787 = vmatprep.subr.mxu0 0.0
    %5788 = vmatpush1.msra.mxu0 %v5267
    %5789 = vmatprep.subr.mxu0 0.0
    %5790 = vmatpush1.msra.mxu0 0.0
    %5791 = vmatprep.subr.mxu0 0.0
    %5792 = vmatpush1.msra.mxu0 0.0
    %5793 = vmatprep.subr.mxu0 0.0
    %5794 = vmatpush1.msra.mxu0 0.0
    %5795 = vmatprep.subr.mxu0 0.0
    %5796 = vmatpush1.msra.mxu0 0.0
    %5797 = vmatprep.subr.mxu0 0.0
    %5798 = vmatpush1.msra.mxu0 0.0
    %5799 = vmatprep.subr.mxu0 0.0
    %5800 = vmatpush1.msra.mxu0 0.0
    %5801 = vmatprep.subr.mxu0 0.0
    %5802 = vmatpush1.msra.mxu0 0.0
    %5803 = vmatprep.subr.mxu0 0.0
    %5804 = vmatpush1.msra.mxu0 0.0
    %5805 = vmatprep.subr.mxu0 0.0
    %5806 = vmatpush1.msra.mxu0 0.0
    %5807 = vmatprep.subr.mxu0 0.0
    %5808 = vmatpush1.msra.mxu0 0.0
    %5809 = vmatprep.subr.mxu0 0.0
    %5810 = vmatpush1.msra.mxu0 0.0
    %5811 = vmatprep.subr.mxu0 0.0
    %5812 = vmatpush1.msra.mxu0 0.0
    %5813 = vmatprep.subr.mxu0 0.0
    %5814 = vmatpush1.msra.mxu0 0.0
    %5815 = vmatprep.subr.mxu0 0.0
    %5816 = vmatpush1.msra.mxu0 0.0
    %5817 = vmatprep.subr.mxu0 0.0
    %5818 = vmatpush1.msra.mxu0 0.0
    %5819 = vmatprep.subr.mxu0 0.0
    %5820 = vmatpush1.msra.mxu0 0.0
    %5821 = vmatprep.subr.mxu0 0.0
    %5822 = vmatpush1.msra.mxu0 0.0
    %5823 = vmatprep.subr.mxu0 0.0
    %5824 = vmatpush1.msra.mxu0 0.0
    %5825 = vmatprep.subr.mxu0 0.0
    %5826 = vmatpush1.msra.mxu0 0.0
    %5827 = vmatprep.subr.mxu0 0.0
    %5828 = vmatpush1.msra.mxu0 0.0
    %5829 = vmatprep.subr.mxu0 0.0
    %5830 = vmatpush1.msra.mxu0 0.0
    %5831 = vmatprep.subr.mxu0 0.0
    %5832 = vmatpush1.msra.mxu0 0.0
    %5833 = vmatprep.subr.mxu0 0.0
    %5834 = vmatpush1.msra.mxu0 0.0
    %5835 = vmatprep.subr.mxu0 0.0
    %5836 = vmatpush1.msra.mxu0 0.0
    %5837 = vmatprep.subr.mxu0 0.0
    %5838 = vmatpush1.msra.mxu0 0.0
    %5839 = vmatprep.subr.mxu0 0.0
    %5840 = vmatpush1.msra.mxu0 0.0
    %5841 = vmatprep.subr.mxu0 0.0
    %5842 = vmatpush1.msra.mxu0 0.0
    %5843 = vmatprep.subr.mxu0 0.0
    %5844 = vmatpush1.msra.mxu0 0.0
    %5845 = vmatprep.subr.mxu0 0.0
    %5846 = vmatpush1.msra.mxu0 0.0
    %5847 = vmatprep.subr.mxu0 0.0
    %5848 = vmatpush1.msra.mxu0 0.0
    %5849 = vmatprep.subr.mxu0 0.0
    %5850 = vmatpush1.msra.mxu0 0.0
    %5851 = vmatprep.mubr.f32.mxu0 0.0
    %5852 = vmatmul.mubr.f32.gmra.mrb[0].mxu0 %v5782
    %v5853 = vpop.f32.mrb[0].mxu0
    %v5854 = vadd.f32 %v5773, %v5853
    %v5855 = vpop.f32.mrb[0].mxu0
    %5856 = vmatprep.mubr.f32.mxu0 0.0
    %5857 = vmatmul.mubr.f32.gmra.mrb[0].mxu0 %v5785
    %v5858 = vpop.f32.mrb[0].mxu0
    %v5859 = vadd.f32 %v5778, %v5858
    %v5860 = vpop.f32.mrb[0].mxu0
    %5861 = vdwg.mxu0
    %v5862 = vld [vmem:[#allocation2 + $0x208] sm:$0xff]
    %v5863 = vld [vmem:[#allocation2 + $0x210] sm:$0xff]
    %v5864 = vld [vmem:[#allocation2 + $0x218] sm:$0xff]
    %v5866 = vsel %vm126, %v5862, 0
    %5868 = vmatprep.subr.mxu0 0.0
    %5869 = vmatpush1.xpose.msra.mxu0 %v5866
    %5870 = vmatprep.subr.mxu0 0.0
    %5871 = vmatpush1.xpose.msra.mxu0 0.0
    %5872 = vmatprep.subr.mxu0 0.0
    %5873 = vmatpush1.xpose.msra.mxu0 0.0
    %5874 = vmatprep.subr.mxu0 0.0
    %5875 = vmatpush1.xpose.msra.mxu0 0.0
    %5876 = vmatprep.subr.mxu0 0.0
    %5877 = vmatpush1.xpose.msra.mxu0 0.0
    %5878 = vmatprep.subr.mxu0 0.0
    %5879 = vmatpush1.xpose.msra.mxu0 0.0
    %5880 = vmatprep.subr.mxu0 0.0
    %5881 = vmatpush1.xpose.msra.mxu0 0.0
    %5882 = vmatprep.subr.mxu0 0.0
    %5883 = vmatpush1.xpose.msra.mxu0 0.0
    %5884 = vmatprep.subr.mxu0 0.0
    %5885 = vmatpush1.xpose.msra.mxu0 0.0
    %5886 = vmatprep.subr.mxu0 0.0
    %5887 = vmatpush1.xpose.msra.mxu0 0.0
    %5888 = vmatprep.subr.mxu0 0.0
    %5889 = vmatpush1.xpose.msra.mxu0 0.0
    %5890 = vmatprep.subr.mxu0 0.0
    %5891 = vmatpush1.xpose.msra.mxu0 0.0
    %5892 = vmatprep.subr.mxu0 0.0
    %5893 = vmatpush1.xpose.msra.mxu0 0.0
    %5894 = vmatprep.subr.mxu0 0.0
    %5895 = vmatpush1.xpose.msra.mxu0 0.0
    %5896 = vmatprep.subr.mxu0 0.0
    %5897 = vmatpush1.xpose.msra.mxu0 0.0
    %5898 = vmatprep.subr.mxu0 0.0
    %5899 = vmatpush1.xpose.msra.mxu0 0.0
    %5900 = vmatprep.subr.mxu0 0.0
    %5901 = vmatpush1.xpose.msra.mxu0 0.0
    %5902 = vmatprep.subr.mxu0 0.0
    %5903 = vmatpush1.xpose.msra.mxu0 0.0
    %5904 = vmatprep.subr.mxu0 0.0
    %5905 = vmatpush1.xpose.msra.mxu0 0.0
    %5906 = vmatprep.subr.mxu0 0.0
    %5907 = vmatpush1.xpose.msra.mxu0 0.0
    %5908 = vmatprep.subr.mxu0 0.0
    %5909 = vmatpush1.xpose.msra.mxu0 0.0
    %5910 = vmatprep.subr.mxu0 0.0
    %5911 = vmatpush1.xpose.msra.mxu0 0.0
    %5912 = vmatprep.subr.mxu0 0.0
    %5913 = vmatpush1.xpose.msra.mxu0 0.0
    %5914 = vmatprep.subr.mxu0 0.0
    %5915 = vmatpush1.xpose.msra.mxu0 0.0
    %5916 = vmatprep.subr.mxu0 0.0
    %5917 = vmatpush1.xpose.msra.mxu0 0.0
    %5918 = vmatprep.subr.mxu0 0.0
    %5919 = vmatpush1.xpose.msra.mxu0 0.0
    %5920 = vmatprep.subr.mxu0 0.0
    %5921 = vmatpush1.xpose.msra.mxu0 0.0
    %5922 = vmatprep.subr.mxu0 0.0
    %5923 = vmatpush1.xpose.msra.mxu0 0.0
    %5924 = vmatprep.subr.mxu0 0.0
    %5925 = vmatpush1.xpose.msra.mxu0 0.0
    %5926 = vmatprep.subr.mxu0 0.0
    %5927 = vmatpush1.xpose.msra.mxu0 0.0
    %5928 = vmatprep.subr.mxu0 0.0
    %5929 = vmatpush1.xpose.msra.mxu0 0.0
    %5930 = vmatprep.subr.mxu0 0.0
    %5931 = vmatpush1.xpose.msra.mxu0 0.0
    %5932 = vmatprep.mubr.f32.mxu0 0.0
    %5933 = vmatmul.mubr.f32.gmra.mrb[0].mxu0 %v4834
    %v5934 = vpop.f32.mrb[0].mxu0
    %v5935 = vadd.f32 0.0, %v5934
    %v5936 = vpop.f32.mrb[0].mxu0
    %5937 = vmatprep.mubr.f32.mxu0 0.0
    %5938 = vmatmul.mubr.f32.gmra.mrb[0].mxu0 %v4837
    %v5939 = vpop.f32.mrb[0].mxu0
    %v5940 = vadd.f32 0.0, %v5939
    %v5941 = vpop.f32.mrb[0].mxu0
    %5942 = vdwg.mxu0
    %v5944 = vsel %vm126, %v5863, 0
    %5946 = vmatprep.subr.mxu0 0.0
    %5947 = vmatpush1.xpose.msra.mxu0 %v5944
    %5948 = vmatprep.subr.mxu0 0.0
    %5949 = vmatpush1.xpose.msra.mxu0 0.0
    %5950 = vmatprep.subr.mxu0 0.0
    %5951 = vmatpush1.xpose.msra.mxu0 0.0
    %5952 = vmatprep.subr.mxu0 0.0
    %5953 = vmatpush1.xpose.msra.mxu0 0.0
    %5954 = vmatprep.subr.mxu0 0.0
    %5955 = vmatpush1.xpose.msra.mxu0 0.0
    %5956 = vmatprep.subr.mxu0 0.0
    %5957 = vmatpush1.xpose.msra.mxu0 0.0
    %5958 = vmatprep.subr.mxu0 0.0
    %5959 = vmatpush1.xpose.msra.mxu0 0.0
    %5960 = vmatprep.subr.mxu0 0.0
    %5961 = vmatpush1.xpose.msra.mxu0 0.0
    %5962 = vmatprep.subr.mxu0 0.0
    %5963 = vmatpush1.xpose.msra.mxu0 0.0
    %5964 = vmatprep.subr.mxu0 0.0
    %5965 = vmatpush1.xpose.msra.mxu0 0.0
    %5966 = vmatprep.subr.mxu0 0.0
    %5967 = vmatpush1.xpose.msra.mxu0 0.0
    %5968 = vmatprep.subr.mxu0 0.0
    %5969 = vmatpush1.xpose.msra.mxu0 0.0
    %5970 = vmatprep.subr.mxu0 0.0
    %5971 = vmatpush1.xpose.msra.mxu0 0.0
    %5972 = vmatprep.subr.mxu0 0.0
    %5973 = vmatpush1.xpose.msra.mxu0 0.0
    %5974 = vmatprep.subr.mxu0 0.0
    %5975 = vmatpush1.xpose.msra.mxu0 0.0
    %5976 = vmatprep.subr.mxu0 0.0
    %5977 = vmatpush1.xpose.msra.mxu0 0.0
    %5978 = vmatprep.subr.mxu0 0.0
    %5979 = vmatpush1.xpose.msra.mxu0 0.0
    %5980 = vmatprep.subr.mxu0 0.0
    %5981 = vmatpush1.xpose.msra.mxu0 0.0
    %5982 = vmatprep.subr.mxu0 0.0
    %5983 = vmatpush1.xpose.msra.mxu0 0.0
    %5984 = vmatprep.subr.mxu0 0.0
    %5985 = vmatpush1.xpose.msra.mxu0 0.0
    %5986 = vmatprep.subr.mxu0 0.0
    %5987 = vmatpush1.xpose.msra.mxu0 0.0
    %5988 = vmatprep.subr.mxu0 0.0
    %5989 = vmatpush1.xpose.msra.mxu0 0.0
    %5990 = vmatprep.subr.mxu0 0.0
    %5991 = vmatpush1.xpose.msra.mxu0 0.0
    %5992 = vmatprep.subr.mxu0 0.0
    %5993 = vmatpush1.xpose.msra.mxu0 0.0
    %5994 = vmatprep.subr.mxu0 0.0
    %5995 = vmatpush1.xpose.msra.mxu0 0.0
    %5996 = vmatprep.subr.mxu0 0.0
    %5997 = vmatpush1.xpose.msra.mxu0 0.0
    %5998 = vmatprep.subr.mxu0 0.0
    %5999 = vmatpush1.xpose.msra.mxu0 0.0
    %6000 = vmatprep.subr.mxu0 0.0
    %6001 = vmatpush1.xpose.msra.mxu0 0.0
    %6002 = vmatprep.subr.mxu0 0.0
    %6003 = vmatpush1.xpose.msra.mxu0 0.0
    %6004 = vmatprep.subr.mxu0 0.0
    %6005 = vmatpush1.xpose.msra.mxu0 0.0
    %6006 = vmatprep.subr.mxu0 0.0
    %6007 = vmatpush1.xpose.msra.mxu0 0.0
    %6008 = vmatprep.subr.mxu0 0.0
    %6009 = vmatpush1.xpose.msra.mxu0 0.0
    %6010 = vmatprep.mubr.f32.mxu0 0.0
    %6011 = vmatmul.mubr.f32.gmra.mrb[0].mxu0 %v4834
    %v6012 = vpop.f32.mrb[0].mxu0
    %v6013 = vadd.f32 0.0, %v6012
    %v6014 = vpop.f32.mrb[0].mxu0
    %6015 = vmatprep.mubr.f32.mxu0 0.0
    %6016 = vmatmul.mubr.f32.gmra.mrb[0].mxu0 %v4837
    %v6017 = vpop.f32.mrb[0].mxu0
    %v6018 = vadd.f32 0.0, %v6017
    %v6019 = vpop.f32.mrb[0].mxu0
    %6020 = vdwg.mxu0
    %v6022 = vsel %vm126, %v5864, 0
    %6024 = vmatprep.subr.mxu0 0.0
    %6025 = vmatpush1.xpose.msra.mxu0 %v6022
    %6026 = vmatprep.subr.mxu0 0.0
    %6027 = vmatpush1.xpose.msra.mxu0 0.0
    %6028 = vmatprep.subr.mxu0 0.0
    %6029 = vmatpush1.xpose.msra.mxu0 0.0
    %6030 = vmatprep.subr.mxu0 0.0
    %6031 = vmatpush1.xpose.msra.mxu0 0.0
    %6032 = vmatprep.subr.mxu0 0.0
    %6033 = vmatpush1.xpose.msra.mxu0 0.0
    %6034 = vmatprep.subr.mxu0 0.0
    %6035 = vmatpush1.xpose.msra.mxu0 0.0
    %6036 = vmatprep.subr.mxu0 0.0
    %6037 = vmatpush1.xpose.msra.mxu0 0.0
    %6038 = vmatprep.subr.mxu0 0.0
    %6039 = vmatpush1.xpose.msra.mxu0 0.0
    %6040 = vmatprep.subr.mxu0 0.0
    %6041 = vmatpush1.xpose.msra.mxu0 0.0
    %6042 = vmatprep.subr.mxu0 0.0
    %6043 = vmatpush1.xpose.msra.mxu0 0.0
    %6044 = vmatprep.subr.mxu0 0.0
    %6045 = vmatpush1.xpose.msra.mxu0 0.0
    %6046 = vmatprep.subr.mxu0 0.0
    %6047 = vmatpush1.xpose.msra.mxu0 0.0
    %6048 = vmatprep.subr.mxu0 0.0
    %6049 = vmatpush1.xpose.msra.mxu0 0.0
    %6050 = vmatprep.subr.mxu0 0.0
    %6051 = vmatpush1.xpose.msra.mxu0 0.0
    %6052 = vmatprep.subr.mxu0 0.0
    %6053 = vmatpush1.xpose.msra.mxu0 0.0
    %6054 = vmatprep.subr.mxu0 0.0
    %6055 = vmatpush1.xpose.msra.mxu0 0.0
    %6056 = vmatprep.subr.mxu0 0.0
    %6057 = vmatpush1.xpose.msra.mxu0 0.0
    %6058 = vmatprep.subr.mxu0 0.0
    %6059 = vmatpush1.xpose.msra.mxu0 0.0
    %6060 = vmatprep.subr.mxu0 0.0
    %6061 = vmatpush1.xpose.msra.mxu0 0.0
    %6062 = vmatprep.subr.mxu0 0.0
    %6063 = vmatpush1.xpose.msra.mxu0 0.0
    %6064 = vmatprep.subr.mxu0 0.0
    %6065 = vmatpush1.xpose.msra.mxu0 0.0
    %6066 = vmatprep.subr.mxu0 0.0
    %6067 = vmatpush1.xpose.msra.mxu0 0.0
    %6068 = vmatprep.subr.mxu0 0.0
    %6069 = vmatpush1.xpose.msra.mxu0 0.0
    %6070 = vmatprep.subr.mxu0 0.0
    %6071 = vmatpush1.xpose.msra.mxu0 0.0
    %6072 = vmatprep.subr.mxu0 0.0
    %6073 = vmatpush1.xpose.msra.mxu0 0.0
    %6074 = vmatprep.subr.mxu0 0.0
    %6075 = vmatpush1.xpose.msra.mxu0 0.0
    %6076 = vmatprep.subr.mxu0 0.0
    %6077 = vmatpush1.xpose.msra.mxu0 0.0
    %6078 = vmatprep.subr.mxu0 0.0
    %6079 = vmatpush1.xpose.msra.mxu0 0.0
    %6080 = vmatprep.subr.mxu0 0.0
    %6081 = vmatpush1.xpose.msra.mxu0 0.0
    %6082 = vmatprep.subr.mxu0 0.0
    %6083 = vmatpush1.xpose.msra.mxu0 0.0
    %6084 = vmatprep.subr.mxu0 0.0
    %6085 = vmatpush1.xpose.msra.mxu0 0.0
    %6086 = vmatprep.subr.mxu0 0.0
    %6087 = vmatpush1.xpose.msra.mxu0 0.0
    %6088 = vmatprep.mubr.f32.mxu0 0.0
    %6089 = vmatmul.mubr.f32.gmra.mrb[0].mxu0 %v4834
    %v6090 = vpop.f32.mrb[0].mxu0
    %v6091 = vadd.f32 0.0, %v6090
    %v6092 = vpop.f32.mrb[0].mxu0
    %6093 = vmatprep.mubr.f32.mxu0 0.0
    %6094 = vmatmul.mubr.f32.gmra.mrb[0].mxu0 %v4837
    %v6095 = vpop.f32.mrb[0].mxu0
    %v6096 = vadd.f32 0.0, %v6095
    %v6097 = vpop.f32.mrb[0].mxu0
    %6098 = vdwg.mxu0
    %v6100 = vsel %vm409, %v6013, 0
    %v6103 = vsel %vm409, %v6018, 0
    %v6106 = vsel %vm409, %v5935, 0
    %v6109 = vsel %vm409, %v5940, 0
    %6111 = vmatprep.subr.mxu0 0.0
    %6112 = vmatpush1.xpose.msra.mxu0 %v6106
    %6113 = vmatprep.subr.mxu0 0.0
    %6114 = vmatpush1.xpose.msra.mxu0 %v6109
    %6115 = vmatprep.subr.mxu0 0.0
    %6116 = vmatpush1.xpose.msra.mxu0 0.0
    %6117 = vmatprep.subr.mxu0 0.0
    %6118 = vmatpush1.xpose.msra.mxu0 0.0
    %6119 = vmatprep.subr.mxu0 0.0
    %6120 = vmatpush1.xpose.msra.mxu0 0.0
    %6121 = vmatprep.subr.mxu0 0.0
    %6122 = vmatpush1.xpose.msra.mxu0 0.0
    %6123 = vmatprep.subr.mxu0 0.0
    %6124 = vmatpush1.xpose.msra.mxu0 0.0
    %6125 = vmatprep.subr.mxu0 0.0
    %6126 = vmatpush1.xpose.msra.mxu0 0.0
    %6127 = vmatprep.subr.mxu0 0.0
    %6128 = vmatpush1.xpose.msra.mxu0 0.0
    %6129 = vmatprep.subr.mxu0 0.0
    %6130 = vmatpush1.xpose.msra.mxu0 0.0
    %6131 = vmatprep.subr.mxu0 0.0
    %6132 = vmatpush1.xpose.msra.mxu0 0.0
    %6133 = vmatprep.subr.mxu0 0.0
    %6134 = vmatpush1.xpose.msra.mxu0 0.0
    %6135 = vmatprep.subr.mxu0 0.0
    %6136 = vmatpush1.xpose.msra.mxu0 0.0
    %6137 = vmatprep.subr.mxu0 0.0
    %6138 = vmatpush1.xpose.msra.mxu0 0.0
    %6139 = vmatprep.subr.mxu0 0.0
    %6140 = vmatpush1.xpose.msra.mxu0 0.0
    %6141 = vmatprep.subr.mxu0 0.0
    %6142 = vmatpush1.xpose.msra.mxu0 0.0
    %6143 = vmatprep.subr.mxu0 0.0
    %6144 = vmatpush1.xpose.msra.mxu0 0.0
    %6145 = vmatprep.subr.mxu0 0.0
    %6146 = vmatpush1.xpose.msra.mxu0 0.0
    %6147 = vmatprep.subr.mxu0 0.0
    %6148 = vmatpush1.xpose.msra.mxu0 0.0
    %6149 = vmatprep.subr.mxu0 0.0
    %6150 = vmatpush1.xpose.msra.mxu0 0.0
    %6151 = vmatprep.subr.mxu0 0.0
    %6152 = vmatpush1.xpose.msra.mxu0 0.0
    %6153 = vmatprep.subr.mxu0 0.0
    %6154 = vmatpush1.xpose.msra.mxu0 0.0
    %6155 = vmatprep.subr.mxu0 0.0
    %6156 = vmatpush1.xpose.msra.mxu0 0.0
    %6157 = vmatprep.subr.mxu0 0.0
    %6158 = vmatpush1.xpose.msra.mxu0 0.0
    %6159 = vmatprep.subr.mxu0 0.0
    %6160 = vmatpush1.xpose.msra.mxu0 0.0
    %6161 = vmatprep.subr.mxu0 0.0
    %6162 = vmatpush1.xpose.msra.mxu0 0.0
    %6163 = vmatprep.subr.mxu0 0.0
    %6164 = vmatpush1.xpose.msra.mxu0 0.0
    %6165 = vmatprep.subr.mxu0 0.0
    %6166 = vmatpush1.xpose.msra.mxu0 0.0
    %6167 = vmatprep.subr.mxu0 0.0
    %6168 = vmatpush1.xpose.msra.mxu0 0.0
    %6169 = vmatprep.subr.mxu0 0.0
    %6170 = vmatpush1.xpose.msra.mxu0 0.0
    %6171 = vmatprep.subr.mxu0 0.0
    %6172 = vmatpush1.xpose.msra.mxu0 0.0
    %6173 = vmatprep.subr.mxu0 0.0
    %6174 = vmatpush1.xpose.msra.mxu0 0.0
    %6175 = vmatprep.mubr.f32.mxu0 0.0
    %6176 = vmatmul.mubr.f32.gmra.mrb[0].mxu0 %v6100
    %v6177 = vpop.f32.mrb[0].mxu0
    %v6178 = vadd.f32 0.0, %v6177
    %v6179 = vpop.f32.mrb[0].mxu0
    %6180 = vmatprep.mubr.f32.mxu0 0.0
    %6181 = vmatmul.mubr.f32.gmra.mrb[0].mxu0 %v6103
    %v6182 = vpop.f32.mrb[0].mxu0
    %v6183 = vadd.f32 0.0, %v6182
    %v6184 = vpop.f32.mrb[0].mxu0
    %6185 = vdwg.mxu0
    %v6186 = vmul.f32 %v6178, 0.17677669
    %v6187 = vmul.f32 %v6183, 0.17677669
    %v6188 = vadd.f32 %v6186, %v122
    %v6189 = vadd.f32 %v6187, %v123
    %v6190 = vsel %vm501, %v6188, -inf
    %6191 = vmax.xlane.f32.xlu0 %v6190
    %v6192 = vpop.xlane.xlu0 %6191
    %v6193 = vsel %vm501, %v6189, -inf
    %6194 = vmax.xlane.f32.xlu0 %v6193
    %v6195 = vpop.xlane.xlu0 %6194
    %v6196 = vsub.f32 %v6188, %v6192
    %v6197 = vsub.f32 %v6189, %v6195
    %v6198 = vmul.f32 %v6196, 1.442695
    %v6199 = vpow.pop %v6198
    %v6200 = vmul.f32 %v6197, 1.442695
    %v6201 = vpow.pop %v6200
    %v6202 = vsel %vm501, %v6199, 0.0
    %6203 = vadd.xlane.f32.xlu0 %v6202
    %v6204 = vpop.xlane.xlu0 %6203
    %v6205 = vsel %vm501, %v6201, 0.0
    %6206 = vadd.xlane.f32.xlu0 %v6205
    %v6207 = vpop.xlane.xlu0 %6206
    %v6208 = vrcp.pop %v6204
    %v6209 = vmul.f32 %v6199, %v6208
    %v6210 = vrcp.pop %v6207
    %v6211 = vmul.f32 %v6201, %v6210
    %v6213 = vsel %vm501, %v6209, 0
    %v6216 = vsel %vm501, %v6211, 0
    %6218 = vmatprep.subr.mxu0 0.0
    %6219 = vmatpush1.msra.mxu0 %v6091
    %6220 = vmatprep.subr.mxu0 0.0
    %6221 = vmatpush1.msra.mxu0 %v6096
    %6222 = vmatprep.subr.mxu0 0.0
    %6223 = vmatpush1.msra.mxu0 0.0
    %6224 = vmatprep.subr.mxu0 0.0
    %6225 = vmatpush1.msra.mxu0 0.0
    %6226 = vmatprep.subr.mxu0 0.0
    %6227 = vmatpush1.msra.mxu0 0.0
    %6228 = vmatprep.subr.mxu0 0.0
    %6229 = vmatpush1.msra.mxu0 0.0
    %6230 = vmatprep.subr.mxu0 0.0
    %6231 = vmatpush1.msra.mxu0 0.0
    %6232 = vmatprep.subr.mxu0 0.0
    %6233 = vmatpush1.msra.mxu0 0.0
    %6234 = vmatprep.subr.mxu0 0.0
    %6235 = vmatpush1.msra.mxu0 0.0
    %6236 = vmatprep.subr.mxu0 0.0
    %6237 = vmatpush1.msra.mxu0 0.0
    %6238 = vmatprep.subr.mxu0 0.0
    %6239 = vmatpush1.msra.mxu0 0.0
    %6240 = vmatprep.subr.mxu0 0.0
    %6241 = vmatpush1.msra.mxu0 0.0
    %6242 = vmatprep.subr.mxu0 0.0
    %6243 = vmatpush1.msra.mxu0 0.0
    %6244 = vmatprep.subr.mxu0 0.0
    %6245 = vmatpush1.msra.mxu0 0.0
    %6246 = vmatprep.subr.mxu0 0.0
    %6247 = vmatpush1.msra.mxu0 0.0
    %6248 = vmatprep.subr.mxu0 0.0
    %6249 = vmatpush1.msra.mxu0 0.0
    %6250 = vmatprep.subr.mxu0 0.0
    %6251 = vmatpush1.msra.mxu0 0.0
    %6252 = vmatprep.subr.mxu0 0.0
    %6253 = vmatpush1.msra.mxu0 0.0
    %6254 = vmatprep.subr.mxu0 0.0
    %6255 = vmatpush1.msra.mxu0 0.0
    %6256 = vmatprep.subr.mxu0 0.0
    %6257 = vmatpush1.msra.mxu0 0.0
    %6258 = vmatprep.subr.mxu0 0.0
    %6259 = vmatpush1.msra.mxu0 0.0
    %6260 = vmatprep.subr.mxu0 0.0
    %6261 = vmatpush1.msra.mxu0 0.0
    %6262 = vmatprep.subr.mxu0 0.0
    %6263 = vmatpush1.msra.mxu0 0.0
    %6264 = vmatprep.subr.mxu0 0.0
    %6265 = vmatpush1.msra.mxu0 0.0
    %6266 = vmatprep.subr.mxu0 0.0
    %6267 = vmatpush1.msra.mxu0 0.0
    %6268 = vmatprep.subr.mxu0 0.0
    %6269 = vmatpush1.msra.mxu0 0.0
    %6270 = vmatprep.subr.mxu0 0.0
    %6271 = vmatpush1.msra.mxu0 0.0
    %6272 = vmatprep.subr.mxu0 0.0
    %6273 = vmatpush1.msra.mxu0 0.0
    %6274 = vmatprep.subr.mxu0 0.0
    %6275 = vmatpush1.msra.mxu0 0.0
    %6276 = vmatprep.subr.mxu0 0.0
    %6277 = vmatpush1.msra.mxu0 0.0
    %6278 = vmatprep.subr.mxu0 0.0
    %6279 = vmatpush1.msra.mxu0 0.0
    %6280 = vmatprep.subr.mxu0 0.0
    %6281 = vmatpush1.msra.mxu0 0.0
    %6282 = vmatprep.mubr.f32.mxu0 0.0
    %6283 = vmatmul.mubr.f32.gmra.mrb[0].mxu0 %v6213
    %v6284 = vpop.f32.mrb[0].mxu0
    %v6285 = vadd.f32 0.0, %v6284
    %v6286 = vpop.f32.mrb[0].mxu0
    %6287 = vmatprep.mubr.f32.mxu0 0.0
    %6288 = vmatmul.mubr.f32.gmra.mrb[0].mxu0 %v6216
    %v6289 = vpop.f32.mrb[0].mxu0
    %v6290 = vadd.f32 0.0, %v6289
    %v6291 = vpop.f32.mrb[0].mxu0
    %6292 = vdwg.mxu0
    %v6293 = vld [vmem:[#allocation2 + $0x248] sm:$0xff]
    %v6295 = vsel %vm409, %v6285, 0
    %v6298 = vsel %vm409, %v6290, 0
    %6300 = vmatprep.subr.mxu0 0.0
    %6301 = vmatpush1.msra.mxu0 %v6293
    %6302 = vmatprep.subr.mxu0 0.0
    %6303 = vmatpush1.msra.mxu0 0.0
    %6304 = vmatprep.subr.mxu0 0.0
    %6305 = vmatpush1.msra.mxu0 0.0
    %6306 = vmatprep.subr.mxu0 0.0
    %6307 = vmatpush1.msra.mxu0 0.0
    %6308 = vmatprep.subr.mxu0 0.0
    %6309 = vmatpush1.msra.mxu0 0.0
    %6310 = vmatprep.subr.mxu0 0.0
    %6311 = vmatpush1.msra.mxu0 0.0
    %6312 = vmatprep.subr.mxu0 0.0
    %6313 = vmatpush1.msra.mxu0 0.0
    %6314 = vmatprep.subr.mxu0 0.0
    %6315 = vmatpush1.msra.mxu0 0.0
    %6316 = vmatprep.subr.mxu0 0.0
    %6317 = vmatpush1.msra.mxu0 0.0
    %6318 = vmatprep.subr.mxu0 0.0
    %6319 = vmatpush1.msra.mxu0 0.0
    %6320 = vmatprep.subr.mxu0 0.0
    %6321 = vmatpush1.msra.mxu0 0.0
    %6322 = vmatprep.subr.mxu0 0.0
    %6323 = vmatpush1.msra.mxu0 0.0
    %6324 = vmatprep.subr.mxu0 0.0
    %6325 = vmatpush1.msra.mxu0 0.0
    %6326 = vmatprep.subr.mxu0 0.0
    %6327 = vmatpush1.msra.mxu0 0.0
    %6328 = vmatprep.subr.mxu0 0.0
    %6329 = vmatpush1.msra.mxu0 0.0
    %6330 = vmatprep.subr.mxu0 0.0
    %6331 = vmatpush1.msra.mxu0 0.0
    %6332 = vmatprep.subr.mxu0 0.0
    %6333 = vmatpush1.msra.mxu0 0.0
    %6334 = vmatprep.subr.mxu0 0.0
    %6335 = vmatpush1.msra.mxu0 0.0
    %6336 = vmatprep.subr.mxu0 0.0
    %6337 = vmatpush1.msra.mxu0 0.0
    %6338 = vmatprep.subr.mxu0 0.0
    %6339 = vmatpush1.msra.mxu0 0.0
    %6340 = vmatprep.subr.mxu0 0.0
    %6341 = vmatpush1.msra.mxu0 0.0
    %6342 = vmatprep.subr.mxu0 0.0
    %6343 = vmatpush1.msra.mxu0 0.0
    %6344 = vmatprep.subr.mxu0 0.0
    %6345 = vmatpush1.msra.mxu0 0.0
    %6346 = vmatprep.subr.mxu0 0.0
    %6347 = vmatpush1.msra.mxu0 0.0
    %6348 = vmatprep.subr.mxu0 0.0
    %6349 = vmatpush1.msra.mxu0 0.0
    %6350 = vmatprep.subr.mxu0 0.0
    %6351 = vmatpush1.msra.mxu0 0.0
    %6352 = vmatprep.subr.mxu0 0.0
    %6353 = vmatpush1.msra.mxu0 0.0
    %6354 = vmatprep.subr.mxu0 0.0
    %6355 = vmatpush1.msra.mxu0 0.0
    %6356 = vmatprep.subr.mxu0 0.0
    %6357 = vmatpush1.msra.mxu0 0.0
    %6358 = vmatprep.subr.mxu0 0.0
    %6359 = vmatpush1.msra.mxu0 0.0
    %6360 = vmatprep.subr.mxu0 0.0
    %6361 = vmatpush1.msra.mxu0 0.0
    %6362 = vmatprep.subr.mxu0 0.0
    %6363 = vmatpush1.msra.mxu0 0.0
    %6364 = vmatprep.mubr.f32.mxu0 0.0
    %6365 = vmatmul.mubr.f32.gmra.mrb[0].mxu0 %v6295
    %v6366 = vpop.f32.mrb[0].mxu0
    %v6367 = vadd.f32 0.0, %v6366
    %v6368 = vpop.f32.mrb[0].mxu0
    %6369 = vmatprep.mubr.f32.mxu0 0.0
    %6370 = vmatmul.mubr.f32.gmra.mrb[0].mxu0 %v6298
    %v6371 = vpop.f32.mrb[0].mxu0
    %v6372 = vadd.f32 0.0, %v6371
    %v6373 = vpop.f32.mrb[0].mxu0
    %6374 = vdwg.mxu0
    %v6375 = vadd.f32 %v5854, %v6367
    %v6376 = vadd.f32 %v5859, %v6372
    %v6377 = vld [vmem:[#allocation2 + $0x220] sm:$0xff]
    %v6378 = vld [vmem:[#allocation2 + $0x228] sm:$0xff]
    %v6379 = vld [vmem:[#allocation2 + $0x230] sm:$0xff]
    %v6381 = vsel %vm126, %v6377, 0
    %6383 = vmatprep.subr.mxu0 0.0
    %6384 = vmatpush1.xpose.msra.mxu0 %v6381
    %6385 = vmatprep.subr.mxu0 0.0
    %6386 = vmatpush1.xpose.msra.mxu0 0.0
    %6387 = vmatprep.subr.mxu0 0.0
    %6388 = vmatpush1.xpose.msra.mxu0 0.0
    %6389 = vmatprep.subr.mxu0 0.0
    %6390 = vmatpush1.xpose.msra.mxu0 0.0
    %6391 = vmatprep.subr.mxu0 0.0
    %6392 = vmatpush1.xpose.msra.mxu0 0.0
    %6393 = vmatprep.subr.mxu0 0.0
    %6394 = vmatpush1.xpose.msra.mxu0 0.0
    %6395 = vmatprep.subr.mxu0 0.0
    %6396 = vmatpush1.xpose.msra.mxu0 0.0
    %6397 = vmatprep.subr.mxu0 0.0
    %6398 = vmatpush1.xpose.msra.mxu0 0.0
    %6399 = vmatprep.subr.mxu0 0.0
    %6400 = vmatpush1.xpose.msra.mxu0 0.0
    %6401 = vmatprep.subr.mxu0 0.0
    %6402 = vmatpush1.xpose.msra.mxu0 0.0
    %6403 = vmatprep.subr.mxu0 0.0
    %6404 = vmatpush1.xpose.msra.mxu0 0.0
    %6405 = vmatprep.subr.mxu0 0.0
    %6406 = vmatpush1.xpose.msra.mxu0 0.0
    %6407 = vmatprep.subr.mxu0 0.0
    %6408 = vmatpush1.xpose.msra.mxu0 0.0
    %6409 = vmatprep.subr.mxu0 0.0
    %6410 = vmatpush1.xpose.msra.mxu0 0.0
    %6411 = vmatprep.subr.mxu0 0.0
    %6412 = vmatpush1.xpose.msra.mxu0 0.0
    %6413 = vmatprep.subr.mxu0 0.0
    %6414 = vmatpush1.xpose.msra.mxu0 0.0
    %6415 = vmatprep.subr.mxu0 0.0
    %6416 = vmatpush1.xpose.msra.mxu0 0.0
    %6417 = vmatprep.subr.mxu0 0.0
    %6418 = vmatpush1.xpose.msra.mxu0 0.0
    %6419 = vmatprep.subr.mxu0 0.0
    %6420 = vmatpush1.xpose.msra.mxu0 0.0
    %6421 = vmatprep.subr.mxu0 0.0
    %6422 = vmatpush1.xpose.msra.mxu0 0.0
    %6423 = vmatprep.subr.mxu0 0.0
    %6424 = vmatpush1.xpose.msra.mxu0 0.0
    %6425 = vmatprep.subr.mxu0 0.0
    %6426 = vmatpush1.xpose.msra.mxu0 0.0
    %6427 = vmatprep.subr.mxu0 0.0
    %6428 = vmatpush1.xpose.msra.mxu0 0.0
    %6429 = vmatprep.subr.mxu0 0.0
    %6430 = vmatpush1.xpose.msra.mxu0 0.0
    %6431 = vmatprep.subr.mxu0 0.0
    %6432 = vmatpush1.xpose.msra.mxu0 0.0
    %6433 = vmatprep.subr.mxu0 0.0
    %6434 = vmatpush1.xpose.msra.mxu0 0.0
    %6435 = vmatprep.subr.mxu0 0.0
    %6436 = vmatpush1.xpose.msra.mxu0 0.0
    %6437 = vmatprep.subr.mxu0 0.0
    %6438 = vmatpush1.xpose.msra.mxu0 0.0
    %6439 = vmatprep.subr.mxu0 0.0
    %6440 = vmatpush1.xpose.msra.mxu0 0.0
    %6441 = vmatprep.subr.mxu0 0.0
    %6442 = vmatpush1.xpose.msra.mxu0 0.0
    %6443 = vmatprep.subr.mxu0 0.0
    %6444 = vmatpush1.xpose.msra.mxu0 0.0
    %6445 = vmatprep.subr.mxu0 0.0
    %6446 = vmatpush1.xpose.msra.mxu0 0.0
    %6447 = vmatprep.mubr.f32.mxu0 0.0
    %6448 = vmatmul.mubr.f32.gmra.mrb[0].mxu0 %v4834
    %v6449 = vpop.f32.mrb[0].mxu0
    %v6450 = vadd.f32 0.0, %v6449
    %v6451 = vpop.f32.mrb[0].mxu0
    %6452 = vmatprep.mubr.f32.mxu0 0.0
    %6453 = vmatmul.mubr.f32.gmra.mrb[0].mxu0 %v4837
    %v6454 = vpop.f32.mrb[0].mxu0
    %v6455 = vadd.f32 0.0, %v6454
    %v6456 = vpop.f32.mrb[0].mxu0
    %6457 = vdwg.mxu0
    %v6459 = vsel %vm126, %v6378, 0
    %6461 = vmatprep.subr.mxu0 0.0
    %6462 = vmatpush1.xpose.msra.mxu0 %v6459
    %6463 = vmatprep.subr.mxu0 0.0
    %6464 = vmatpush1.xpose.msra.mxu0 0.0
    %6465 = vmatprep.subr.mxu0 0.0
    %6466 = vmatpush1.xpose.msra.mxu0 0.0
    %6467 = vmatprep.subr.mxu0 0.0
    %6468 = vmatpush1.xpose.msra.mxu0 0.0
    %6469 = vmatprep.subr.mxu0 0.0
    %6470 = vmatpush1.xpose.msra.mxu0 0.0
    %6471 = vmatprep.subr.mxu0 0.0
    %6472 = vmatpush1.xpose.msra.mxu0 0.0
    %6473 = vmatprep.subr.mxu0 0.0
    %6474 = vmatpush1.xpose.msra.mxu0 0.0
    %6475 = vmatprep.subr.mxu0 0.0
    %6476 = vmatpush1.xpose.msra.mxu0 0.0
    %6477 = vmatprep.subr.mxu0 0.0
    %6478 = vmatpush1.xpose.msra.mxu0 0.0
    %6479 = vmatprep.subr.mxu0 0.0
    %6480 = vmatpush1.xpose.msra.mxu0 0.0
    %6481 = vmatprep.subr.mxu0 0.0
    %6482 = vmatpush1.xpose.msra.mxu0 0.0
    %6483 = vmatprep.subr.mxu0 0.0
    %6484 = vmatpush1.xpose.msra.mxu0 0.0
    %6485 = vmatprep.subr.mxu0 0.0
    %6486 = vmatpush1.xpose.msra.mxu0 0.0
    %6487 = vmatprep.subr.mxu0 0.0
    %6488 = vmatpush1.xpose.msra.mxu0 0.0
    %6489 = vmatprep.subr.mxu0 0.0
    %6490 = vmatpush1.xpose.msra.mxu0 0.0
    %6491 = vmatprep.subr.mxu0 0.0
    %6492 = vmatpush1.xpose.msra.mxu0 0.0
    %6493 = vmatprep.subr.mxu0 0.0
    %6494 = vmatpush1.xpose.msra.mxu0 0.0
    %6495 = vmatprep.subr.mxu0 0.0
    %6496 = vmatpush1.xpose.msra.mxu0 0.0
    %6497 = vmatprep.subr.mxu0 0.0
    %6498 = vmatpush1.xpose.msra.mxu0 0.0
    %6499 = vmatprep.subr.mxu0 0.0
    %6500 = vmatpush1.xpose.msra.mxu0 0.0
    %6501 = vmatprep.subr.mxu0 0.0
    %6502 = vmatpush1.xpose.msra.mxu0 0.0
    %6503 = vmatprep.subr.mxu0 0.0
    %6504 = vmatpush1.xpose.msra.mxu0 0.0
    %6505 = vmatprep.subr.mxu0 0.0
    %6506 = vmatpush1.xpose.msra.mxu0 0.0
    %6507 = vmatprep.subr.mxu0 0.0
    %6508 = vmatpush1.xpose.msra.mxu0 0.0
    %6509 = vmatprep.subr.mxu0 0.0
    %6510 = vmatpush1.xpose.msra.mxu0 0.0
    %6511 = vmatprep.subr.mxu0 0.0
    %6512 = vmatpush1.xpose.msra.mxu0 0.0
    %6513 = vmatprep.subr.mxu0 0.0
    %6514 = vmatpush1.xpose.msra.mxu0 0.0
    %6515 = vmatprep.subr.mxu0 0.0
    %6516 = vmatpush1.xpose.msra.mxu0 0.0
    %6517 = vmatprep.subr.mxu0 0.0
    %6518 = vmatpush1.xpose.msra.mxu0 0.0
    %6519 = vmatprep.subr.mxu0 0.0
    %6520 = vmatpush1.xpose.msra.mxu0 0.0
    %6521 = vmatprep.subr.mxu0 0.0
    %6522 = vmatpush1.xpose.msra.mxu0 0.0
    %6523 = vmatprep.subr.mxu0 0.0
    %6524 = vmatpush1.xpose.msra.mxu0 0.0
    %6525 = vmatprep.mubr.f32.mxu0 0.0
    %6526 = vmatmul.mubr.f32.gmra.mrb[0].mxu0 %v4834
    %v6527 = vpop.f32.mrb[0].mxu0
    %v6528 = vadd.f32 0.0, %v6527
    %v6529 = vpop.f32.mrb[0].mxu0
    %6530 = vmatprep.mubr.f32.mxu0 0.0
    %6531 = vmatmul.mubr.f32.gmra.mrb[0].mxu0 %v4837
    %v6532 = vpop.f32.mrb[0].mxu0
    %v6533 = vadd.f32 0.0, %v6532
    %v6534 = vpop.f32.mrb[0].mxu0
    %6535 = vdwg.mxu0
    %v6537 = vsel %vm126, %v6379, 0
    %6539 = vmatprep.subr.mxu0 0.0
    %6540 = vmatpush1.xpose.msra.mxu0 %v6537
    %6541 = vmatprep.subr.mxu0 0.0
    %6542 = vmatpush1.xpose.msra.mxu0 0.0
    %6543 = vmatprep.subr.mxu0 0.0
    %6544 = vmatpush1.xpose.msra.mxu0 0.0
    %6545 = vmatprep.subr.mxu0 0.0
    %6546 = vmatpush1.xpose.msra.mxu0 0.0
    %6547 = vmatprep.subr.mxu0 0.0
    %6548 = vmatpush1.xpose.msra.mxu0 0.0
    %6549 = vmatprep.subr.mxu0 0.0
    %6550 = vmatpush1.xpose.msra.mxu0 0.0
    %6551 = vmatprep.subr.mxu0 0.0
    %6552 = vmatpush1.xpose.msra.mxu0 0.0
    %6553 = vmatprep.subr.mxu0 0.0
    %6554 = vmatpush1.xpose.msra.mxu0 0.0
    %6555 = vmatprep.subr.mxu0 0.0
    %6556 = vmatpush1.xpose.msra.mxu0 0.0
    %6557 = vmatprep.subr.mxu0 0.0
    %6558 = vmatpush1.xpose.msra.mxu0 0.0
    %6559 = vmatprep.subr.mxu0 0.0
    %6560 = vmatpush1.xpose.msra.mxu0 0.0
    %6561 = vmatprep.subr.mxu0 0.0
    %6562 = vmatpush1.xpose.msra.mxu0 0.0
    %6563 = vmatprep.subr.mxu0 0.0
    %6564 = vmatpush1.xpose.msra.mxu0 0.0
    %6565 = vmatprep.subr.mxu0 0.0
    %6566 = vmatpush1.xpose.msra.mxu0 0.0
    %6567 = vmatprep.subr.mxu0 0.0
    %6568 = vmatpush1.xpose.msra.mxu0 0.0
    %6569 = vmatprep.subr.mxu0 0.0
    %6570 = vmatpush1.xpose.msra.mxu0 0.0
    %6571 = vmatprep.subr.mxu0 0.0
    %6572 = vmatpush1.xpose.msra.mxu0 0.0
    %6573 = vmatprep.subr.mxu0 0.0
    %6574 = vmatpush1.xpose.msra.mxu0 0.0
    %6575 = vmatprep.subr.mxu0 0.0
    %6576 = vmatpush1.xpose.msra.mxu0 0.0
    %6577 = vmatprep.subr.mxu0 0.0
    %6578 = vmatpush1.xpose.msra.mxu0 0.0
    %6579 = vmatprep.subr.mxu0 0.0
    %6580 = vmatpush1.xpose.msra.mxu0 0.0
    %6581 = vmatprep.subr.mxu0 0.0
    %6582 = vmatpush1.xpose.msra.mxu0 0.0
    %6583 = vmatprep.subr.mxu0 0.0
    %6584 = vmatpush1.xpose.msra.mxu0 0.0
    %6585 = vmatprep.subr.mxu0 0.0
    %6586 = vmatpush1.xpose.msra.mxu0 0.0
    %6587 = vmatprep.subr.mxu0 0.0
    %6588 = vmatpush1.xpose.msra.mxu0 0.0
    %6589 = vmatprep.subr.mxu0 0.0
    %6590 = vmatpush1.xpose.msra.mxu0 0.0
    %6591 = vmatprep.subr.mxu0 0.0
    %6592 = vmatpush1.xpose.msra.mxu0 0.0
    %6593 = vmatprep.subr.mxu0 0.0
    %6594 = vmatpush1.xpose.msra.mxu0 0.0
    %6595 = vmatprep.subr.mxu0 0.0
    %6596 = vmatpush1.xpose.msra.mxu0 0.0
    %6597 = vmatprep.subr.mxu0 0.0
    %6598 = vmatpush1.xpose.msra.mxu0 0.0
    %6599 = vmatprep.subr.mxu0 0.0
    %6600 = vmatpush1.xpose.msra.mxu0 0.0
    %6601 = vmatprep.subr.mxu0 0.0
    %6602 = vmatpush1.xpose.msra.mxu0 0.0
    %6603 = vmatprep.mubr.f32.mxu0 0.0
    %6604 = vmatmul.mubr.f32.gmra.mrb[0].mxu0 %v4834
    %v6605 = vpop.f32.mrb[0].mxu0
    %v6606 = vadd.f32 0.0, %v6605
    %v6607 = vpop.f32.mrb[0].mxu0
    %6608 = vmatprep.mubr.f32.mxu0 0.0
    %6609 = vmatmul.mubr.f32.gmra.mrb[0].mxu0 %v4837
    %v6610 = vpop.f32.mrb[0].mxu0
    %v6611 = vadd.f32 0.0, %v6610
    %v6612 = vpop.f32.mrb[0].mxu0
    %6613 = vdwg.mxu0
    %v6615 = vsel %vm409, %v6528, 0
    %v6618 = vsel %vm409, %v6533, 0
    %v6621 = vsel %vm409, %v6450, 0
    %v6624 = vsel %vm409, %v6455, 0
    %6626 = vmatprep.subr.mxu0 0.0
    %6627 = vmatpush1.xpose.msra.mxu0 %v6621
    %6628 = vmatprep.subr.mxu0 0.0
    %6629 = vmatpush1.xpose.msra.mxu0 %v6624
    %6630 = vmatprep.subr.mxu0 0.0
    %6631 = vmatpush1.xpose.msra.mxu0 0.0
    %6632 = vmatprep.subr.mxu0 0.0
    %6633 = vmatpush1.xpose.msra.mxu0 0.0
    %6634 = vmatprep.subr.mxu0 0.0
    %6635 = vmatpush1.xpose.msra.mxu0 0.0
    %6636 = vmatprep.subr.mxu0 0.0
    %6637 = vmatpush1.xpose.msra.mxu0 0.0
    %6638 = vmatprep.subr.mxu0 0.0
    %6639 = vmatpush1.xpose.msra.mxu0 0.0
    %6640 = vmatprep.subr.mxu0 0.0
    %6641 = vmatpush1.xpose.msra.mxu0 0.0
    %6642 = vmatprep.subr.mxu0 0.0
    %6643 = vmatpush1.xpose.msra.mxu0 0.0
    %6644 = vmatprep.subr.mxu0 0.0
    %6645 = vmatpush1.xpose.msra.mxu0 0.0
    %6646 = vmatprep.subr.mxu0 0.0
    %6647 = vmatpush1.xpose.msra.mxu0 0.0
    %6648 = vmatprep.subr.mxu0 0.0
    %6649 = vmatpush1.xpose.msra.mxu0 0.0
    %6650 = vmatprep.subr.mxu0 0.0
    %6651 = vmatpush1.xpose.msra.mxu0 0.0
    %6652 = vmatprep.subr.mxu0 0.0
    %6653 = vmatpush1.xpose.msra.mxu0 0.0
    %6654 = vmatprep.subr.mxu0 0.0
    %6655 = vmatpush1.xpose.msra.mxu0 0.0
    %6656 = vmatprep.subr.mxu0 0.0
    %6657 = vmatpush1.xpose.msra.mxu0 0.0
    %6658 = vmatprep.subr.mxu0 0.0
    %6659 = vmatpush1.xpose.msra.mxu0 0.0
    %6660 = vmatprep.subr.mxu0 0.0
    %6661 = vmatpush1.xpose.msra.mxu0 0.0
    %6662 = vmatprep.subr.mxu0 0.0
    %6663 = vmatpush1.xpose.msra.mxu0 0.0
    %6664 = vmatprep.subr.mxu0 0.0
    %6665 = vmatpush1.xpose.msra.mxu0 0.0
    %6666 = vmatprep.subr.mxu0 0.0
    %6667 = vmatpush1.xpose.msra.mxu0 0.0
    %6668 = vmatprep.subr.mxu0 0.0
    %6669 = vmatpush1.xpose.msra.mxu0 0.0
    %6670 = vmatprep.subr.mxu0 0.0
    %6671 = vmatpush1.xpose.msra.mxu0 0.0
    %6672 = vmatprep.subr.mxu0 0.0
    %6673 = vmatpush1.xpose.msra.mxu0 0.0
    %6674 = vmatprep.subr.mxu0 0.0
    %6675 = vmatpush1.xpose.msra.mxu0 0.0
    %6676 = vmatprep.subr.mxu0 0.0
    %6677 = vmatpush1.xpose.msra.mxu0 0.0
    %6678 = vmatprep.subr.mxu0 0.0
    %6679 = vmatpush1.xpose.msra.mxu0 0.0
    %6680 = vmatprep.subr.mxu0 0.0
    %6681 = vmatpush1.xpose.msra.mxu0 0.0
    %6682 = vmatprep.subr.mxu0 0.0
    %6683 = vmatpush1.xpose.msra.mxu0 0.0
    %6684 = vmatprep.subr.mxu0 0.0
    %6685 = vmatpush1.xpose.msra.mxu0 0.0
    %6686 = vmatprep.subr.mxu0 0.0
    %6687 = vmatpush1.xpose.msra.mxu0 0.0
    %6688 = vmatprep.subr.mxu0 0.0
    %6689 = vmatpush1.xpose.msra.mxu0 0.0
    %6690 = vmatprep.mubr.f32.mxu0 0.0
    %6691 = vmatmul.mubr.f32.gmra.mrb[0].mxu0 %v6615
    %v6692 = vpop.f32.mrb[0].mxu0
    %v6693 = vadd.f32 0.0, %v6692
    %v6694 = vpop.f32.mrb[0].mxu0
    %6695 = vmatprep.mubr.f32.mxu0 0.0
    %6696 = vmatmul.mubr.f32.gmra.mrb[0].mxu0 %v6618
    %v6697 = vpop.f32.mrb[0].mxu0
    %v6698 = vadd.f32 0.0, %v6697
    %v6699 = vpop.f32.mrb[0].mxu0
    %6700 = vdwg.mxu0
    %v6701 = vmul.f32 %v6693, 0.17677669
    %v6702 = vmul.f32 %v6698, 0.17677669
    %v6703 = vadd.f32 %v6701, %v122
    %v6704 = vadd.f32 %v6702, %v123
    %v6705 = vsel %vm501, %v6703, -inf
    %6706 = vmax.xlane.f32.xlu0 %v6705
    %v6707 = vpop.xlane.xlu0 %6706
    %v6708 = vsel %vm501, %v6704, -inf
    %6709 = vmax.xlane.f32.xlu0 %v6708
    %v6710 = vpop.xlane.xlu0 %6709
    %v6711 = vsub.f32 %v6703, %v6707
    %v6712 = vsub.f32 %v6704, %v6710
    %v6713 = vmul.f32 %v6711, 1.442695
    %v6714 = vpow.pop %v6713
    %v6715 = vmul.f32 %v6712, 1.442695
    %v6716 = vpow.pop %v6715
    %v6717 = vsel %vm501, %v6714, 0.0
    %6718 = vadd.xlane.f32.xlu0 %v6717
    %v6719 = vpop.xlane.xlu0 %6718
    %v6720 = vsel %vm501, %v6716, 0.0
    %6721 = vadd.xlane.f32.xlu0 %v6720
    %v6722 = vpop.xlane.xlu0 %6721
    %v6723 = vrcp.pop %v6719
    %v6724 = vmul.f32 %v6714, %v6723
    %v6725 = vrcp.pop %v6722
    %v6726 = vmul.f32 %v6716, %v6725
    %v6728 = vsel %vm501, %v6724, 0
    %v6731 = vsel %vm501, %v6726, 0
    %6733 = vmatprep.subr.mxu0 0.0
    %6734 = vmatpush1.msra.mxu0 %v6606
    %6735 = vmatprep.subr.mxu0 0.0
    %6736 = vmatpush1.msra.mxu0 %v6611
    %6737 = vmatprep.subr.mxu0 0.0
    %6738 = vmatpush1.msra.mxu0 0.0
    %6739 = vmatprep.subr.mxu0 0.0
    %6740 = vmatpush1.msra.mxu0 0.0
    %6741 = vmatprep.subr.mxu0 0.0
    %6742 = vmatpush1.msra.mxu0 0.0
    %6743 = vmatprep.subr.mxu0 0.0
    %6744 = vmatpush1.msra.mxu0 0.0
    %6745 = vmatprep.subr.mxu0 0.0
    %6746 = vmatpush1.msra.mxu0 0.0
    %6747 = vmatprep.subr.mxu0 0.0
    %6748 = vmatpush1.msra.mxu0 0.0
    %6749 = vmatprep.subr.mxu0 0.0
    %6750 = vmatpush1.msra.mxu0 0.0
    %6751 = vmatprep.subr.mxu0 0.0
    %6752 = vmatpush1.msra.mxu0 0.0
    %6753 = vmatprep.subr.mxu0 0.0
    %6754 = vmatpush1.msra.mxu0 0.0
    %6755 = vmatprep.subr.mxu0 0.0
    %6756 = vmatpush1.msra.mxu0 0.0
    %6757 = vmatprep.subr.mxu0 0.0
    %6758 = vmatpush1.msra.mxu0 0.0
    %6759 = vmatprep.subr.mxu0 0.0
    %6760 = vmatpush1.msra.mxu0 0.0
    %6761 = vmatprep.subr.mxu0 0.0
    %6762 = vmatpush1.msra.mxu0 0.0
    %6763 = vmatprep.subr.mxu0 0.0
    %6764 = vmatpush1.msra.mxu0 0.0
    %6765 = vmatprep.subr.mxu0 0.0
    %6766 = vmatpush1.msra.mxu0 0.0
    %6767 = vmatprep.subr.mxu0 0.0
    %6768 = vmatpush1.msra.mxu0 0.0
    %6769 = vmatprep.subr.mxu0 0.0
    %6770 = vmatpush1.msra.mxu0 0.0
    %6771 = vmatprep.subr.mxu0 0.0
    %6772 = vmatpush1.msra.mxu0 0.0
    %6773 = vmatprep.subr.mxu0 0.0
    %6774 = vmatpush1.msra.mxu0 0.0
    %6775 = vmatprep.subr.mxu0 0.0
    %6776 = vmatpush1.msra.mxu0 0.0
    %6777 = vmatprep.subr.mxu0 0.0
    %6778 = vmatpush1.msra.mxu0 0.0
    %6779 = vmatprep.subr.mxu0 0.0
    %6780 = vmatpush1.msra.mxu0 0.0
    %6781 = vmatprep.subr.mxu0 0.0
    %6782 = vmatpush1.msra.mxu0 0.0
    %6783 = vmatprep.subr.mxu0 0.0
    %6784 = vmatpush1.msra.mxu0 0.0
    %6785 = vmatprep.subr.mxu0 0.0
    %6786 = vmatpush1.msra.mxu0 0.0
    %6787 = vmatprep.subr.mxu0 0.0
    %6788 = vmatpush1.msra.mxu0 0.0
    %6789 = vmatprep.subr.mxu0 0.0
    %6790 = vmatpush1.msra.mxu0 0.0
    %6791 = vmatprep.subr.mxu0 0.0
    %6792 = vmatpush1.msra.mxu0 0.0
    %6793 = vmatprep.subr.mxu0 0.0
    %6794 = vmatpush1.msra.mxu0 0.0
    %6795 = vmatprep.subr.mxu0 0.0
    %6796 = vmatpush1.msra.mxu0 0.0
    %6797 = vmatprep.mubr.f32.mxu0 0.0
    %6798 = vmatmul.mubr.f32.gmra.mrb[0].mxu0 %v6728
    %v6799 = vpop.f32.mrb[0].mxu0
    %v6800 = vadd.f32 0.0, %v6799
    %v6801 = vpop.f32.mrb[0].mxu0
    %6802 = vmatprep.mubr.f32.mxu0 0.0
    %6803 = vmatmul.mubr.f32.gmra.mrb[0].mxu0 %v6731
    %v6804 = vpop.f32.mrb[0].mxu0
    %v6805 = vadd.f32 0.0, %v6804
    %v6806 = vpop.f32.mrb[0].mxu0
    %6807 = vdwg.mxu0
    %v6808 = vld [vmem:[#allocation2 + $0x250] sm:$0xff]
    %v6810 = vsel %vm409, %v6800, 0
    %v6813 = vsel %vm409, %v6805, 0
    %6815 = vmatprep.subr.mxu0 0.0
    %6816 = vmatpush1.msra.mxu0 %v6808
    %6817 = vmatprep.subr.mxu0 0.0
    %6818 = vmatpush1.msra.mxu0 0.0
    %6819 = vmatprep.subr.mxu0 0.0
    %6820 = vmatpush1.msra.mxu0 0.0
    %6821 = vmatprep.subr.mxu0 0.0
    %6822 = vmatpush1.msra.mxu0 0.0
    %6823 = vmatprep.subr.mxu0 0.0
    %6824 = vmatpush1.msra.mxu0 0.0
    %6825 = vmatprep.subr.mxu0 0.0
    %6826 = vmatpush1.msra.mxu0 0.0
    %6827 = vmatprep.subr.mxu0 0.0
    %6828 = vmatpush1.msra.mxu0 0.0
    %6829 = vmatprep.subr.mxu0 0.0
    %6830 = vmatpush1.msra.mxu0 0.0
    %6831 = vmatprep.subr.mxu0 0.0
    %6832 = vmatpush1.msra.mxu0 0.0
    %6833 = vmatprep.subr.mxu0 0.0
    %6834 = vmatpush1.msra.mxu0 0.0
    %6835 = vmatprep.subr.mxu0 0.0
    %6836 = vmatpush1.msra.mxu0 0.0
    %6837 = vmatprep.subr.mxu0 0.0
    %6838 = vmatpush1.msra.mxu0 0.0
    %6839 = vmatprep.subr.mxu0 0.0
    %6840 = vmatpush1.msra.mxu0 0.0
    %6841 = vmatprep.subr.mxu0 0.0
    %6842 = vmatpush1.msra.mxu0 0.0
    %6843 = vmatprep.subr.mxu0 0.0
    %6844 = vmatpush1.msra.mxu0 0.0
    %6845 = vmatprep.subr.mxu0 0.0
    %6846 = vmatpush1.msra.mxu0 0.0
    %6847 = vmatprep.subr.mxu0 0.0
    %6848 = vmatpush1.msra.mxu0 0.0
    %6849 = vmatprep.subr.mxu0 0.0
    %6850 = vmatpush1.msra.mxu0 0.0
    %6851 = vmatprep.subr.mxu0 0.0
    %6852 = vmatpush1.msra.mxu0 0.0
    %6853 = vmatprep.subr.mxu0 0.0
    %6854 = vmatpush1.msra.mxu0 0.0
    %6855 = vmatprep.subr.mxu0 0.0
    %6856 = vmatpush1.msra.mxu0 0.0
    %6857 = vmatprep.subr.mxu0 0.0
    %6858 = vmatpush1.msra.mxu0 0.0
    %6859 = vmatprep.subr.mxu0 0.0
    %6860 = vmatpush1.msra.mxu0 0.0
    %6861 = vmatprep.subr.mxu0 0.0
    %6862 = vmatpush1.msra.mxu0 0.0
    %6863 = vmatprep.subr.mxu0 0.0
    %6864 = vmatpush1.msra.mxu0 0.0
    %6865 = vmatprep.subr.mxu0 0.0
    %6866 = vmatpush1.msra.mxu0 0.0
    %6867 = vmatprep.subr.mxu0 0.0
    %6868 = vmatpush1.msra.mxu0 0.0
    %6869 = vmatprep.subr.mxu0 0.0
    %6870 = vmatpush1.msra.mxu0 0.0
    %6871 = vmatprep.subr.mxu0 0.0
    %6872 = vmatpush1.msra.mxu0 0.0
    %6873 = vmatprep.subr.mxu0 0.0
    %6874 = vmatpush1.msra.mxu0 0.0
    %6875 = vmatprep.subr.mxu0 0.0
    %6876 = vmatpush1.msra.mxu0 0.0
    %6877 = vmatprep.subr.mxu0 0.0
    %6878 = vmatpush1.msra.mxu0 0.0
    %6879 = vmatprep.mubr.f32.mxu0 0.0
    %6880 = vmatmul.mubr.f32.gmra.mrb[0].mxu0 %v6810
    %v6881 = vpop.f32.mrb[0].mxu0
    %v6882 = vadd.f32 0.0, %v6881
    %v6883 = vpop.f32.mrb[0].mxu0
    %6884 = vmatprep.mubr.f32.mxu0 0.0
    %6885 = vmatmul.mubr.f32.gmra.mrb[0].mxu0 %v6813
    %v6886 = vpop.f32.mrb[0].mxu0
    %v6887 = vadd.f32 0.0, %v6886
    %v6888 = vpop.f32.mrb[0].mxu0
    %6889 = vdwg.mxu0
    %v6890 = vadd.f32 %v6375, %v6882
    %v6891 = vadd.f32 %v6376, %v6887
    %v6892 = vadd.f32 %v4788, %v6890
    %v6893 = vadd.f32 %v4789, %v6891
    %v6894 = vld [vmem:[#allocation2 + $0x1d2] sm:$0x1]
    %v6895 = vlaneseq
    %v6896 = vshrl.u32 %v6895, 7
    %v6897 = vsub.s32 0, %v6896
    %v6898 = vrot.slane %v6894, %v6897
    %v6899 = vadd.f32 %v6892, %v6898
    %v6900 = vadd.f32 %v6893, %v6898
    %v6901 = vld [vmem:[#allocation2 + $0x1d3] sm:$0x1]
    %v6902 = vld [vmem:[#allocation2 + $0x1d4] sm:$0x1]
    %v6903 = vsel %vm126, %v6899, 0.0
    %6904 = vadd.xlane.f32.xlu0 %v6903
    %v6905 = vpop.xlane.xlu0 %6904
    %v6906 = vsel %vm126, %v6900, 0.0
    %6907 = vadd.xlane.f32.xlu0 %v6906
    %v6908 = vpop.xlane.xlu0 %6907
    %v6909 = vmul.f32 %v6905, %v133
    %v6910 = vmul.f32 %v6908, %v133
    %v6911 = vsub.f32 %v6899, %v6909
    %v6912 = vsub.f32 %v6900, %v6910
    %v6913 = vmul.f32 %v6911, %v6911
    %v6914 = vmul.f32 %v6912, %v6912
    %v6915 = vsel %vm126, %v6913, 0.0
    %6916 = vadd.xlane.f32.xlu0 %v6915
    %v6917 = vpop.xlane.xlu0 %6916
    %v6918 = vsel %vm126, %v6914, 0.0
    %6919 = vadd.xlane.f32.xlu0 %v6918
    %v6920 = vpop.xlane.xlu0 %6919
    %v6921 = vmul.f32 %v6917, %v133
    %v6922 = vmul.f32 %v6920, %v133
    %v6923 = vadd.f32 %v6921, 1e-05
    %v6924 = vadd.f32 %v6922, 1e-05
    %v6925 = vrsqrt.pop %v6923
    %v6926 = vrsqrt.pop %v6924
    %v6927 = vmul.f32 %v6911, %v6925
    %v6928 = vmul.f32 %v6912, %v6926
    %v6929 = vlaneseq
    %v6930 = vshrl.u32 %v6929, 7
    %v6931 = vsub.s32 0, %v6930
    %v6932 = vrot.slane %v6901, %v6931
    %v6933 = vmul.f32 %v6927, %v6932
    %v6934 = vmul.f32 %v6928, %v6932
    %v6935 = vlaneseq
    %v6936 = vshrl.u32 %v6935, 7
    %v6937 = vsub.s32 0, %v6936
    %v6938 = vrot.slane %v6902, %v6937
    %v6939 = vadd.f32 %v6933, %v6938
    %v6940 = vadd.f32 %v6934, %v6938
    %v6941 = vld [vmem:[#allocation2 + $0x258] sm:$0xff]
    %v6942 = vld [vmem:[#allocation2 + $0x260] sm:$0xff]
    %v6943 = vld [vmem:[#allocation2 + $0x268] sm:$0xff]
    %v6944 = vld [vmem:[#allocation2 + $0x270] sm:$0xff]
    %v6945 = vld [vmem:[#allocation2 + $0x1d6] sm:$0x1]
    %v6946 = vlaneseq
    %v6947 = vshrl.u32 %v6946, 7
    %v6948 = vsub.s32 0, %v6947
    %v6949 = vrot.slane %v6945, %v6948
    %v6951 = vsel %vm126, %v6939, 0
    %v6954 = vsel %vm126, %v6940, 0
    %6956 = vmatprep.subr.mxu0 0.0
    %6957 = vmatpush1.msra.mxu0 %v6941
    %6958 = vmatprep.subr.mxu0 0.0
    %6959 = vmatpush1.msra.mxu0 %v6942
    %6960 = vmatprep.subr.mxu0 0.0
    %6961 = vmatpush1.msra.mxu0 %v6943
    %6962 = vmatprep.subr.mxu0 0.0
    %6963 = vmatpush1.msra.mxu0 %v6944
    %6964 = vmatprep.subr.mxu0 0.0
    %6965 = vmatpush1.msra.mxu0 0.0
    %6966 = vmatprep.subr.mxu0 0.0
    %6967 = vmatpush1.msra.mxu0 0.0
    %6968 = vmatprep.subr.mxu0 0.0
    %6969 = vmatpush1.msra.mxu0 0.0
    %6970 = vmatprep.subr.mxu0 0.0
    %6971 = vmatpush1.msra.mxu0 0.0
    %6972 = vmatprep.subr.mxu0 0.0
    %6973 = vmatpush1.msra.mxu0 0.0
    %6974 = vmatprep.subr.mxu0 0.0
    %6975 = vmatpush1.msra.mxu0 0.0
    %6976 = vmatprep.subr.mxu0 0.0
    %6977 = vmatpush1.msra.mxu0 0.0
    %6978 = vmatprep.subr.mxu0 0.0
    %6979 = vmatpush1.msra.mxu0 0.0
    %6980 = vmatprep.subr.mxu0 0.0
    %6981 = vmatpush1.msra.mxu0 0.0
    %6982 = vmatprep.subr.mxu0 0.0
    %6983 = vmatpush1.msra.mxu0 0.0
    %6984 = vmatprep.subr.mxu0 0.0
    %6985 = vmatpush1.msra.mxu0 0.0
    %6986 = vmatprep.subr.mxu0 0.0
    %6987 = vmatpush1.msra.mxu0 0.0
    %6988 = vmatprep.subr.mxu0 0.0
    %6989 = vmatpush1.msra.mxu0 0.0
    %6990 = vmatprep.subr.mxu0 0.0
    %6991 = vmatpush1.msra.mxu0 0.0
    %6992 = vmatprep.subr.mxu0 0.0
    %6993 = vmatpush1.msra.mxu0 0.0
    %6994 = vmatprep.subr.mxu0 0.0
    %6995 = vmatpush1.msra.mxu0 0.0
    %6996 = vmatprep.subr.mxu0 0.0
    %6997 = vmatpush1.msra.mxu0 0.0
    %6998 = vmatprep.subr.mxu0 0.0
    %6999 = vmatpush1.msra.mxu0 0.0
    %7000 = vmatprep.subr.mxu0 0.0
    %7001 = vmatpush1.msra.mxu0 0.0
    %7002 = vmatprep.subr.mxu0 0.0
    %7003 = vmatpush1.msra.mxu0 0.0
    %7004 = vmatprep.subr.mxu0 0.0
    %7005 = vmatpush1.msra.mxu0 0.0
    %7006 = vmatprep.subr.mxu0 0.0
    %7007 = vmatpush1.msra.mxu0 0.0
    %7008 = vmatprep.subr.mxu0 0.0
    %7009 = vmatpush1.msra.mxu0 0.0
    %7010 = vmatprep.subr.mxu0 0.0
    %7011 = vmatpush1.msra.mxu0 0.0
    %7012 = vmatprep.subr.mxu0 0.0
    %7013 = vmatpush1.msra.mxu0 0.0
    %7014 = vmatprep.subr.mxu0 0.0
    %7015 = vmatpush1.msra.mxu0 0.0
    %7016 = vmatprep.subr.mxu0 0.0
    %7017 = vmatpush1.msra.mxu0 0.0
    %7018 = vmatprep.subr.mxu0 0.0
    %7019 = vmatpush1.msra.mxu0 0.0
    %7020 = vmatprep.mubr.f32.mxu0 0.0
    %7021 = vmatmul.mubr.f32.gmra.mrb[0].mxu0 %v6951
    %v7022 = vpop.f32.mrb[0].mxu0
    %v7023 = vadd.f32 %v6949, %v7022
    %v7024 = vpop.f32.mrb[0].mxu0
    %7025 = vmatprep.mubr.f32.mxu0 0.0
    %7026 = vmatmul.mubr.f32.gmra.mrb[0].mxu0 %v6954
    %v7027 = vpop.f32.mrb[0].mxu0
    %v7028 = vadd.f32 %v6949, %v7027
    %v7029 = vpop.f32.mrb[0].mxu0
    %7030 = vdwg.mxu0
    %v7031 = vmax.f32 %v7023, 0.0
    %v7032 = vmax.f32 %v7028, 0.0
    %v7033 = vld [vmem:[#allocation2 + $0x278] sm:$0xff]
    %v7034 = vld [vmem:[#allocation2 + $0x280] sm:$0xff]
    %v7035 = vld [vmem:[#allocation2 + $0x288] sm:$0xff]
    %v7036 = vld [vmem:[#allocation2 + $0x290] sm:$0xff]
    %7037 = vmatprep.subr.mxu0 0.0
    %7038 = vmatpush1.xpose.msra.mxu0 %v7033
    %7039 = vmatprep.subr.mxu0 0.0
    %7040 = vmatpush1.xpose.msra.mxu0 %v7034
    %7041 = vmatprep.subr.mxu0 0.0
    %7042 = vmatpush1.xpose.msra.mxu0 %v7035
    %7043 = vmatprep.subr.mxu0 0.0
    %7044 = vmatpush1.xpose.msra.mxu0 %v7036
    %7045 = vmatprep.subr.mxu0 0.0
    %7046 = vmatpush1.xpose.msra.mxu0 0.0
    %7047 = vmatprep.subr.mxu0 0.0
    %7048 = vmatpush1.xpose.msra.mxu0 0.0
    %7049 = vmatprep.subr.mxu0 0.0
    %7050 = vmatpush1.xpose.msra.mxu0 0.0
    %7051 = vmatprep.subr.mxu0 0.0
    %7052 = vmatpush1.xpose.msra.mxu0 0.0
    %7053 = vmatprep.subr.mxu0 0.0
    %7054 = vmatpush1.xpose.msra.mxu0 0.0
    %7055 = vmatprep.subr.mxu0 0.0
    %7056 = vmatpush1.xpose.msra.mxu0 0.0
    %7057 = vmatprep.subr.mxu0 0.0
    %7058 = vmatpush1.xpose.msra.mxu0 0.0
    %7059 = vmatprep.subr.mxu0 0.0
    %7060 = vmatpush1.xpose.msra.mxu0 0.0
    %7061 = vmatprep.subr.mxu0 0.0
    %7062 = vmatpush1.xpose.msra.mxu0 0.0
    %7063 = vmatprep.subr.mxu0 0.0
    %7064 = vmatpush1.xpose.msra.mxu0 0.0
    %7065 = vmatprep.subr.mxu0 0.0
    %7066 = vmatpush1.xpose.msra.mxu0 0.0
    %7067 = vmatprep.subr.mxu0 0.0
    %7068 = vmatpush1.xpose.msra.mxu0 0.0
    %7069 = vmatprep.subr.mxu0 0.0
    %7070 = vmatpush1.xpose.msra.mxu0 0.0
    %7071 = vmatprep.subr.mxu0 0.0
    %7072 = vmatpush1.xpose.msra.mxu0 0.0
    %7073 = vmatprep.subr.mxu0 0.0
    %7074 = vmatpush1.xpose.msra.mxu0 0.0
    %7075 = vmatprep.subr.mxu0 0.0
    %7076 = vmatpush1.xpose.msra.mxu0 0.0
    %7077 = vmatprep.subr.mxu0 0.0
    %7078 = vmatpush1.xpose.msra.mxu0 0.0
    %7079 = vmatprep.subr.mxu0 0.0
    %7080 = vmatpush1.xpose.msra.mxu0 0.0
    %7081 = vmatprep.subr.mxu0 0.0
    %7082 = vmatpush1.xpose.msra.mxu0 0.0
    %7083 = vmatprep.subr.mxu0 0.0
    %7084 = vmatpush1.xpose.msra.mxu0 0.0
    %7085 = vmatprep.subr.mxu0 0.0
    %7086 = vmatpush1.xpose.msra.mxu0 0.0
    %7087 = vmatprep.subr.mxu0 0.0
    %7088 = vmatpush1.xpose.msra.mxu0 0.0
    %7089 = vmatprep.subr.mxu0 0.0
    %7090 = vmatpush1.xpose.msra.mxu0 0.0
    %7091 = vmatprep.subr.mxu0 0.0
    %7092 = vmatpush1.xpose.msra.mxu0 0.0
    %7093 = vmatprep.subr.mxu0 0.0
    %7094 = vmatpush1.xpose.msra.mxu0 0.0
    %7095 = vmatprep.subr.mxu0 0.0
    %7096 = vmatpush1.xpose.msra.mxu0 0.0
    %7097 = vmatprep.subr.mxu0 0.0
    %7098 = vmatpush1.xpose.msra.mxu0 0.0
    %7099 = vmatprep.subr.mxu0 0.0
    %7100 = vmatpush1.xpose.msra.mxu0 0.0
    %7101 = vmatprep.mubr.f32.mxu0 0.0
    %7102 = vmatmul.mubr.f32.gmra.mrb[0].mxu0 %v7031
    %v7103 = vpop.f32.mrb[0].mxu0
    %v7104 = vadd.f32 0.0, %v7103
    %v7105 = vpop.f32.mrb[0].mxu0
    %7106 = vmatprep.mubr.f32.mxu0 0.0
    %7107 = vmatmul.mubr.f32.gmra.mrb[0].mxu0 %v7032
    %v7108 = vpop.f32.mrb[0].mxu0
    %v7109 = vadd.f32 0.0, %v7108
    %v7110 = vpop.f32.mrb[0].mxu0
    %7111 = vdwg.mxu0
    %v7112 = vadd.f32 %v6899, %v7104
    %v7113 = vadd.f32 %v6900, %v7109
    %v7114 = vld [vmem:[#allocation2 + $0x1d5] sm:$0x1]
    %v7115 = vlaneseq
    %v7116 = vshrl.u32 %v7115, 7
    %v7117 = vsub.s32 0, %v7116
    %v7118 = vrot.slane %v7114, %v7117
    %v7119 = vadd.f32 %v7112, %v7118
    %v7120 = vadd.f32 %v7113, %v7118
    %v7121 = vld [vmem:[#allocation2 + $0x298] sm:$0x1]
    %v7122 = vld [vmem:[#allocation2 + $0x299] sm:$0x1]
    %v7123 = vsel %vm126, %v7119, 0.0
    %7124 = vadd.xlane.f32.xlu0 %v7123
    %v7125 = vpop.xlane.xlu0 %7124
    %v7126 = vsel %vm126, %v7120, 0.0
    %7127 = vadd.xlane.f32.xlu0 %v7126
    %v7128 = vpop.xlane.xlu0 %7127
    %v7129 = vmul.f32 %v7125, %v133
    %v7130 = vmul.f32 %v7128, %v133
    %v7131 = vsub.f32 %v7119, %v7129
    %v7132 = vsub.f32 %v7120, %v7130
    %v7133 = vmul.f32 %v7131, %v7131
    %v7134 = vmul.f32 %v7132, %v7132
    %v7135 = vsel %vm126, %v7133, 0.0
    %7136 = vadd.xlane.f32.xlu0 %v7135
    %v7137 = vpop.xlane.xlu0 %7136
    %v7138 = vsel %vm126, %v7134, 0.0
    %7139 = vadd.xlane.f32.xlu0 %v7138
    %v7140 = vpop.xlane.xlu0 %7139
    %v7141 = vmul.f32 %v7137, %v133
    %v7142 = vmul.f32 %v7140, %v133
    %v7143 = vadd.f32 %v7141, 1e-05
    %v7144 = vadd.f32 %v7142, 1e-05
    %v7145 = vrsqrt.pop %v7143
    %v7146 = vrsqrt.pop %v7144
    %v7147 = vmul.f32 %v7131, %v7145
    %v7148 = vmul.f32 %v7132, %v7146
    %v7149 = vlaneseq
    %v7150 = vshrl.u32 %v7149, 7
    %v7151 = vsub.s32 0, %v7150
    %v7152 = vrot.slane %v7121, %v7151
    %v7153 = vmul.f32 %v7147, %v7152
    %v7154 = vmul.f32 %v7148, %v7152
    %v7155 = vlaneseq
    %v7156 = vshrl.u32 %v7155, 7
    %v7157 = vsub.s32 0, %v7156
    %v7158 = vrot.slane %v7122, %v7157
    %v7159 = vadd.f32 %v7153, %v7158
    %v7160 = vadd.f32 %v7154, %v7158
    %v7161 = vld [vmem:[#allocation2 + $0x2a0] sm:$0xff]
    %v7162 = vld [vmem:[#allocation2 + $0x2a8] sm:$0xff]
    %v7163 = vld [vmem:[#allocation2 + $0x2b0] sm:$0xff]
    %v7165 = vsel %vm126, %v7159, 0
    %v7168 = vsel %vm126, %v7160, 0
    %v7171 = vsel %vm126, %v7161, 0
    %7173 = vmatprep.subr.mxu0 0.0
    %7174 = vmatpush1.xpose.msra.mxu0 %v7171
    %7175 = vmatprep.subr.mxu0 0.0
    %7176 = vmatpush1.xpose.msra.mxu0 0.0
    %7177 = vmatprep.subr.mxu0 0.0
    %7178 = vmatpush1.xpose.msra.mxu0 0.0
    %7179 = vmatprep.subr.mxu0 0.0
    %7180 = vmatpush1.xpose.msra.mxu0 0.0
    %7181 = vmatprep.subr.mxu0 0.0
    %7182 = vmatpush1.xpose.msra.mxu0 0.0
    %7183 = vmatprep.subr.mxu0 0.0
    %7184 = vmatpush1.xpose.msra.mxu0 0.0
    %7185 = vmatprep.subr.mxu0 0.0
    %7186 = vmatpush1.xpose.msra.mxu0 0.0
    %7187 = vmatprep.subr.mxu0 0.0
    %7188 = vmatpush1.xpose.msra.mxu0 0.0
    %7189 = vmatprep.subr.mxu0 0.0
    %7190 = vmatpush1.xpose.msra.mxu0 0.0
    %7191 = vmatprep.subr.mxu0 0.0
    %7192 = vmatpush1.xpose.msra.mxu0 0.0
    %7193 = vmatprep.subr.mxu0 0.0
    %7194 = vmatpush1.xpose.msra.mxu0 0.0
    %7195 = vmatprep.subr.mxu0 0.0
    %7196 = vmatpush1.xpose.msra.mxu0 0.0
    %7197 = vmatprep.subr.mxu0 0.0
    %7198 = vmatpush1.xpose.msra.mxu0 0.0
    %7199 = vmatprep.subr.mxu0 0.0
    %7200 = vmatpush1.xpose.msra.mxu0 0.0
    %7201 = vmatprep.subr.mxu0 0.0
    %7202 = vmatpush1.xpose.msra.mxu0 0.0
    %7203 = vmatprep.subr.mxu0 0.0
    %7204 = vmatpush1.xpose.msra.mxu0 0.0
    %7205 = vmatprep.subr.mxu0 0.0
    %7206 = vmatpush1.xpose.msra.mxu0 0.0
    %7207 = vmatprep.subr.mxu0 0.0
    %7208 = vmatpush1.xpose.msra.mxu0 0.0
    %7209 = vmatprep.subr.mxu0 0.0
    %7210 = vmatpush1.xpose.msra.mxu0 0.0
    %7211 = vmatprep.subr.mxu0 0.0
    %7212 = vmatpush1.xpose.msra.mxu0 0.0
    %7213 = vmatprep.subr.mxu0 0.0
    %7214 = vmatpush1.xpose.msra.mxu0 0.0
    %7215 = vmatprep.subr.mxu0 0.0
    %7216 = vmatpush1.xpose.msra.mxu0 0.0
    %7217 = vmatprep.subr.mxu0 0.0
    %7218 = vmatpush1.xpose.msra.mxu0 0.0
    %7219 = vmatprep.subr.mxu0 0.0
    %7220 = vmatpush1.xpose.msra.mxu0 0.0
    %7221 = vmatprep.subr.mxu0 0.0
    %7222 = vmatpush1.xpose.msra.mxu0 0.0
    %7223 = vmatprep.subr.mxu0 0.0
    %7224 = vmatpush1.xpose.msra.mxu0 0.0
    %7225 = vmatprep.subr.mxu0 0.0
    %7226 = vmatpush1.xpose.msra.mxu0 0.0
    %7227 = vmatprep.subr.mxu0 0.0
    %7228 = vmatpush1.xpose.msra.mxu0 0.0
    %7229 = vmatprep.subr.mxu0 0.0
    %7230 = vmatpush1.xpose.msra.mxu0 0.0
    %7231 = vmatprep.subr.mxu0 0.0
    %7232 = vmatpush1.xpose.msra.mxu0 0.0
    %7233 = vmatprep.subr.mxu0 0.0
    %7234 = vmatpush1.xpose.msra.mxu0 0.0
    %7235 = vmatprep.subr.mxu0 0.0
    %7236 = vmatpush1.xpose.msra.mxu0 0.0
    %7237 = vmatprep.mubr.f32.mxu0 0.0
    %7238 = vmatmul.mubr.f32.gmra.mrb[0].mxu0 %v7165
    %v7239 = vpop.f32.mrb[0].mxu0
    %v7240 = vadd.f32 0.0, %v7239
    %v7241 = vpop.f32.mrb[0].mxu0
    %7242 = vmatprep.mubr.f32.mxu0 0.0
    %7243 = vmatmul.mubr.f32.gmra.mrb[0].mxu0 %v7168
    %v7244 = vpop.f32.mrb[0].mxu0
    %v7245 = vadd.f32 0.0, %v7244
    %v7246 = vpop.f32.mrb[0].mxu0
    %7247 = vdwg.mxu0
    %v7249 = vsel %vm126, %v7162, 0
    %7251 = vmatprep.subr.mxu0 0.0
    %7252 = vmatpush1.xpose.msra.mxu0 %v7249
    %7253 = vmatprep.subr.mxu0 0.0
    %7254 = vmatpush1.xpose.msra.mxu0 0.0
    %7255 = vmatprep.subr.mxu0 0.0
    %7256 = vmatpush1.xpose.msra.mxu0 0.0
    %7257 = vmatprep.subr.mxu0 0.0
    %7258 = vmatpush1.xpose.msra.mxu0 0.0
    %7259 = vmatprep.subr.mxu0 0.0
    %7260 = vmatpush1.xpose.msra.mxu0 0.0
    %7261 = vmatprep.subr.mxu0 0.0
    %7262 = vmatpush1.xpose.msra.mxu0 0.0
    %7263 = vmatprep.subr.mxu0 0.0
    %7264 = vmatpush1.xpose.msra.mxu0 0.0
    %7265 = vmatprep.subr.mxu0 0.0
    %7266 = vmatpush1.xpose.msra.mxu0 0.0
    %7267 = vmatprep.subr.mxu0 0.0
    %7268 = vmatpush1.xpose.msra.mxu0 0.0
    %7269 = vmatprep.subr.mxu0 0.0
    %7270 = vmatpush1.xpose.msra.mxu0 0.0
    %7271 = vmatprep.subr.mxu0 0.0
    %7272 = vmatpush1.xpose.msra.mxu0 0.0
    %7273 = vmatprep.subr.mxu0 0.0
    %7274 = vmatpush1.xpose.msra.mxu0 0.0
    %7275 = vmatprep.subr.mxu0 0.0
    %7276 = vmatpush1.xpose.msra.mxu0 0.0
    %7277 = vmatprep.subr.mxu0 0.0
    %7278 = vmatpush1.xpose.msra.mxu0 0.0
    %7279 = vmatprep.subr.mxu0 0.0
    %7280 = vmatpush1.xpose.msra.mxu0 0.0
    %7281 = vmatprep.subr.mxu0 0.0
    %7282 = vmatpush1.xpose.msra.mxu0 0.0
    %7283 = vmatprep.subr.mxu0 0.0
    %7284 = vmatpush1.xpose.msra.mxu0 0.0
    %7285 = vmatprep.subr.mxu0 0.0
    %7286 = vmatpush1.xpose.msra.mxu0 0.0
    %7287 = vmatprep.subr.mxu0 0.0
    %7288 = vmatpush1.xpose.msra.mxu0 0.0
    %7289 = vmatprep.subr.mxu0 0.0
    %7290 = vmatpush1.xpose.msra.mxu0 0.0
    %7291 = vmatprep.subr.mxu0 0.0
    %7292 = vmatpush1.xpose.msra.mxu0 0.0
    %7293 = vmatprep.subr.mxu0 0.0
    %7294 = vmatpush1.xpose.msra.mxu0 0.0
    %7295 = vmatprep.subr.mxu0 0.0
    %7296 = vmatpush1.xpose.msra.mxu0 0.0
    %7297 = vmatprep.subr.mxu0 0.0
    %7298 = vmatpush1.xpose.msra.mxu0 0.0
    %7299 = vmatprep.subr.mxu0 0.0
    %7300 = vmatpush1.xpose.msra.mxu0 0.0
    %7301 = vmatprep.subr.mxu0 0.0
    %7302 = vmatpush1.xpose.msra.mxu0 0.0
    %7303 = vmatprep.subr.mxu0 0.0
    %7304 = vmatpush1.xpose.msra.mxu0 0.0
    %7305 = vmatprep.subr.mxu0 0.0
    %7306 = vmatpush1.xpose.msra.mxu0 0.0
    %7307 = vmatprep.subr.mxu0 0.0
    %7308 = vmatpush1.xpose.msra.mxu0 0.0
    %7309 = vmatprep.subr.mxu0 0.0
    %7310 = vmatpush1.xpose.msra.mxu0 0.0
    %7311 = vmatprep.subr.mxu0 0.0
    %7312 = vmatpush1.xpose.msra.mxu0 0.0
    %7313 = vmatprep.subr.mxu0 0.0
    %7314 = vmatpush1.xpose.msra.mxu0 0.0
    %7315 = vmatprep.mubr.f32.mxu0 0.0
    %7316 = vmatmul.mubr.f32.gmra.mrb[0].mxu0 %v7165
    %v7317 = vpop.f32.mrb[0].mxu0
    %v7318 = vadd.f32 0.0, %v7317
    %v7319 = vpop.f32.mrb[0].mxu0
    %7320 = vmatprep.mubr.f32.mxu0 0.0
    %7321 = vmatmul.mubr.f32.gmra.mrb[0].mxu0 %v7168
    %v7322 = vpop.f32.mrb[0].mxu0
    %v7323 = vadd.f32 0.0, %v7322
    %v7324 = vpop.f32.mrb[0].mxu0
    %7325 = vdwg.mxu0
    %v7327 = vsel %vm126, %v7163, 0
    %7329 = vmatprep.subr.mxu0 0.0
    %7330 = vmatpush1.xpose.msra.mxu0 %v7327
    %7331 = vmatprep.subr.mxu0 0.0
    %7332 = vmatpush1.xpose.msra.mxu0 0.0
    %7333 = vmatprep.subr.mxu0 0.0
    %7334 = vmatpush1.xpose.msra.mxu0 0.0
    %7335 = vmatprep.subr.mxu0 0.0
    %7336 = vmatpush1.xpose.msra.mxu0 0.0
    %7337 = vmatprep.subr.mxu0 0.0
    %7338 = vmatpush1.xpose.msra.mxu0 0.0
    %7339 = vmatprep.subr.mxu0 0.0
    %7340 = vmatpush1.xpose.msra.mxu0 0.0
    %7341 = vmatprep.subr.mxu0 0.0
    %7342 = vmatpush1.xpose.msra.mxu0 0.0
    %7343 = vmatprep.subr.mxu0 0.0
    %7344 = vmatpush1.xpose.msra.mxu0 0.0
    %7345 = vmatprep.subr.mxu0 0.0
    %7346 = vmatpush1.xpose.msra.mxu0 0.0
    %7347 = vmatprep.subr.mxu0 0.0
    %7348 = vmatpush1.xpose.msra.mxu0 0.0
    %7349 = vmatprep.subr.mxu0 0.0
    %7350 = vmatpush1.xpose.msra.mxu0 0.0
    %7351 = vmatprep.subr.mxu0 0.0
    %7352 = vmatpush1.xpose.msra.mxu0 0.0
    %7353 = vmatprep.subr.mxu0 0.0
    %7354 = vmatpush1.xpose.msra.mxu0 0.0
    %7355 = vmatprep.subr.mxu0 0.0
    %7356 = vmatpush1.xpose.msra.mxu0 0.0
    %7357 = vmatprep.subr.mxu0 0.0
    %7358 = vmatpush1.xpose.msra.mxu0 0.0
    %7359 = vmatprep.subr.mxu0 0.0
    %7360 = vmatpush1.xpose.msra.mxu0 0.0
    %7361 = vmatprep.subr.mxu0 0.0
    %7362 = vmatpush1.xpose.msra.mxu0 0.0
    %7363 = vmatprep.subr.mxu0 0.0
    %7364 = vmatpush1.xpose.msra.mxu0 0.0
    %7365 = vmatprep.subr.mxu0 0.0
    %7366 = vmatpush1.xpose.msra.mxu0 0.0
    %7367 = vmatprep.subr.mxu0 0.0
    %7368 = vmatpush1.xpose.msra.mxu0 0.0
    %7369 = vmatprep.subr.mxu0 0.0
    %7370 = vmatpush1.xpose.msra.mxu0 0.0
    %7371 = vmatprep.subr.mxu0 0.0
    %7372 = vmatpush1.xpose.msra.mxu0 0.0
    %7373 = vmatprep.subr.mxu0 0.0
    %7374 = vmatpush1.xpose.msra.mxu0 0.0
    %7375 = vmatprep.subr.mxu0 0.0
    %7376 = vmatpush1.xpose.msra.mxu0 0.0
    %7377 = vmatprep.subr.mxu0 0.0
    %7378 = vmatpush1.xpose.msra.mxu0 0.0
    %7379 = vmatprep.subr.mxu0 0.0
    %7380 = vmatpush1.xpose.msra.mxu0 0.0
    %7381 = vmatprep.subr.mxu0 0.0
    %7382 = vmatpush1.xpose.msra.mxu0 0.0
    %7383 = vmatprep.subr.mxu0 0.0
    %7384 = vmatpush1.xpose.msra.mxu0 0.0
    %7385 = vmatprep.subr.mxu0 0.0
    %7386 = vmatpush1.xpose.msra.mxu0 0.0
    %7387 = vmatprep.subr.mxu0 0.0
    %7388 = vmatpush1.xpose.msra.mxu0 0.0
    %7389 = vmatprep.subr.mxu0 0.0
    %7390 = vmatpush1.xpose.msra.mxu0 0.0
    %7391 = vmatprep.subr.mxu0 0.0
    %7392 = vmatpush1.xpose.msra.mxu0 0.0
    %7393 = vmatprep.mubr.f32.mxu0 0.0
    %7394 = vmatmul.mubr.f32.gmra.mrb[0].mxu0 %v7165
    %v7395 = vpop.f32.mrb[0].mxu0
    %v7396 = vadd.f32 0.0, %v7395
    %v7397 = vpop.f32.mrb[0].mxu0
    %7398 = vmatprep.mubr.f32.mxu0 0.0
    %7399 = vmatmul.mubr.f32.gmra.mrb[0].mxu0 %v7168
    %v7400 = vpop.f32.mrb[0].mxu0
    %v7401 = vadd.f32 0.0, %v7400
    %v7402 = vpop.f32.mrb[0].mxu0
    %7403 = vdwg.mxu0
    %v7405 = vsel %vm409, %v7318, 0
    %v7408 = vsel %vm409, %v7323, 0
    %v7411 = vsel %vm409, %v7240, 0
    %v7414 = vsel %vm409, %v7245, 0
    %7416 = vmatprep.subr.mxu0 0.0
    %7417 = vmatpush1.xpose.msra.mxu0 %v7411
    %7418 = vmatprep.subr.mxu0 0.0
    %7419 = vmatpush1.xpose.msra.mxu0 %v7414
    %7420 = vmatprep.subr.mxu0 0.0
    %7421 = vmatpush1.xpose.msra.mxu0 0.0
    %7422 = vmatprep.subr.mxu0 0.0
    %7423 = vmatpush1.xpose.msra.mxu0 0.0
    %7424 = vmatprep.subr.mxu0 0.0
    %7425 = vmatpush1.xpose.msra.mxu0 0.0
    %7426 = vmatprep.subr.mxu0 0.0
    %7427 = vmatpush1.xpose.msra.mxu0 0.0
    %7428 = vmatprep.subr.mxu0 0.0
    %7429 = vmatpush1.xpose.msra.mxu0 0.0
    %7430 = vmatprep.subr.mxu0 0.0
    %7431 = vmatpush1.xpose.msra.mxu0 0.0
    %7432 = vmatprep.subr.mxu0 0.0
    %7433 = vmatpush1.xpose.msra.mxu0 0.0
    %7434 = vmatprep.subr.mxu0 0.0
    %7435 = vmatpush1.xpose.msra.mxu0 0.0
    %7436 = vmatprep.subr.mxu0 0.0
    %7437 = vmatpush1.xpose.msra.mxu0 0.0
    %7438 = vmatprep.subr.mxu0 0.0
    %7439 = vmatpush1.xpose.msra.mxu0 0.0
    %7440 = vmatprep.subr.mxu0 0.0
    %7441 = vmatpush1.xpose.msra.mxu0 0.0
    %7442 = vmatprep.subr.mxu0 0.0
    %7443 = vmatpush1.xpose.msra.mxu0 0.0
    %7444 = vmatprep.subr.mxu0 0.0
    %7445 = vmatpush1.xpose.msra.mxu0 0.0
    %7446 = vmatprep.subr.mxu0 0.0
    %7447 = vmatpush1.xpose.msra.mxu0 0.0
    %7448 = vmatprep.subr.mxu0 0.0
    %7449 = vmatpush1.xpose.msra.mxu0 0.0
    %7450 = vmatprep.subr.mxu0 0.0
    %7451 = vmatpush1.xpose.msra.mxu0 0.0
    %7452 = vmatprep.subr.mxu0 0.0
    %7453 = vmatpush1.xpose.msra.mxu0 0.0
    %7454 = vmatprep.subr.mxu0 0.0
    %7455 = vmatpush1.xpose.msra.mxu0 0.0
    %7456 = vmatprep.subr.mxu0 0.0
    %7457 = vmatpush1.xpose.msra.mxu0 0.0
    %7458 = vmatprep.subr.mxu0 0.0
    %7459 = vmatpush1.xpose.msra.mxu0 0.0
    %7460 = vmatprep.subr.mxu0 0.0
    %7461 = vmatpush1.xpose.msra.mxu0 0.0
    %7462 = vmatprep.subr.mxu0 0.0
    %7463 = vmatpush1.xpose.msra.mxu0 0.0
    %7464 = vmatprep.subr.mxu0 0.0
    %7465 = vmatpush1.xpose.msra.mxu0 0.0
    %7466 = vmatprep.subr.mxu0 0.0
    %7467 = vmatpush1.xpose.msra.mxu0 0.0
    %7468 = vmatprep.subr.mxu0 0.0
    %7469 = vmatpush1.xpose.msra.mxu0 0.0
    %7470 = vmatprep.subr.mxu0 0.0
    %7471 = vmatpush1.xpose.msra.mxu0 0.0
    %7472 = vmatprep.subr.mxu0 0.0
    %7473 = vmatpush1.xpose.msra.mxu0 0.0
    %7474 = vmatprep.subr.mxu0 0.0
    %7475 = vmatpush1.xpose.msra.mxu0 0.0
    %7476 = vmatprep.subr.mxu0 0.0
    %7477 = vmatpush1.xpose.msra.mxu0 0.0
    %7478 = vmatprep.subr.mxu0 0.0
    %7479 = vmatpush1.xpose.msra.mxu0 0.0
    %7480 = vmatprep.mubr.f32.mxu0 0.0
    %7481 = vmatmul.mubr.f32.gmra.mrb[0].mxu0 %v7405
    %v7482 = vpop.f32.mrb[0].mxu0
    %v7483 = vadd.f32 0.0, %v7482
    %v7484 = vpop.f32.mrb[0].mxu0
    %7485 = vmatprep.mubr.f32.mxu0 0.0
    %7486 = vmatmul.mubr.f32.gmra.mrb[0].mxu0 %v7408
    %v7487 = vpop.f32.mrb[0].mxu0
    %v7488 = vadd.f32 0.0, %v7487
    %v7489 = vpop.f32.mrb[0].mxu0
    %7490 = vdwg.mxu0
    %v7491 = vmul.f32 %v7483, 0.17677669
    %v7492 = vmul.f32 %v7488, 0.17677669
    %v7493 = vadd.f32 %v7491, %v122
    %v7494 = vadd.f32 %v7492, %v123
    %v7495 = vsel %vm501, %v7493, -inf
    %7496 = vmax.xlane.f32.xlu0 %v7495
    %v7497 = vpop.xlane.xlu0 %7496
    %v7498 = vsel %vm501, %v7494, -inf
    %7499 = vmax.xlane.f32.xlu0 %v7498
    %v7500 = vpop.xlane.xlu0 %7499
    %v7501 = vsub.f32 %v7493, %v7497
    %v7502 = vsub.f32 %v7494, %v7500
    %v7503 = vmul.f32 %v7501, 1.442695
    %v7504 = vpow.pop %v7503
    %v7505 = vmul.f32 %v7502, 1.442695
    %v7506 = vpow.pop %v7505
    %v7507 = vsel %vm501, %v7504, 0.0
    %7508 = vadd.xlane.f32.xlu0 %v7507
    %v7509 = vpop.xlane.xlu0 %7508
    %v7510 = vsel %vm501, %v7506, 0.0
    %7511 = vadd.xlane.f32.xlu0 %v7510
    %v7512 = vpop.xlane.xlu0 %7511
    %v7513 = vrcp.pop %v7509
    %v7514 = vmul.f32 %v7504, %v7513
    %v7515 = vrcp.pop %v7512
    %v7516 = vmul.f32 %v7506, %v7515
    %v7518 = vsel %vm501, %v7514, 0
    %v7521 = vsel %vm501, %v7516, 0
    %7523 = vmatprep.subr.mxu0 0.0
    %7524 = vmatpush1.msra.mxu0 %v7396
    %7525 = vmatprep.subr.mxu0 0.0
    %7526 = vmatpush1.msra.mxu0 %v7401
    %7527 = vmatprep.subr.mxu0 0.0
    %7528 = vmatpush1.msra.mxu0 0.0
    %7529 = vmatprep.subr.mxu0 0.0
    %7530 = vmatpush1.msra.mxu0 0.0
    %7531 = vmatprep.subr.mxu0 0.0
    %7532 = vmatpush1.msra.mxu0 0.0
    %7533 = vmatprep.subr.mxu0 0.0
    %7534 = vmatpush1.msra.mxu0 0.0
    %7535 = vmatprep.subr.mxu0 0.0
    %7536 = vmatpush1.msra.mxu0 0.0
    %7537 = vmatprep.subr.mxu0 0.0
    %7538 = vmatpush1.msra.mxu0 0.0
    %7539 = vmatprep.subr.mxu0 0.0
    %7540 = vmatpush1.msra.mxu0 0.0
    %7541 = vmatprep.subr.mxu0 0.0
    %7542 = vmatpush1.msra.mxu0 0.0
    %7543 = vmatprep.subr.mxu0 0.0
    %7544 = vmatpush1.msra.mxu0 0.0
    %7545 = vmatprep.subr.mxu0 0.0
    %7546 = vmatpush1.msra.mxu0 0.0
    %7547 = vmatprep.subr.mxu0 0.0
    %7548 = vmatpush1.msra.mxu0 0.0
    %7549 = vmatprep.subr.mxu0 0.0
    %7550 = vmatpush1.msra.mxu0 0.0
    %7551 = vmatprep.subr.mxu0 0.0
    %7552 = vmatpush1.msra.mxu0 0.0
    %7553 = vmatprep.subr.mxu0 0.0
    %7554 = vmatpush1.msra.mxu0 0.0
    %7555 = vmatprep.subr.mxu0 0.0
    %7556 = vmatpush1.msra.mxu0 0.0
    %7557 = vmatprep.subr.mxu0 0.0
    %7558 = vmatpush1.msra.mxu0 0.0
    %7559 = vmatprep.subr.mxu0 0.0
    %7560 = vmatpush1.msra.mxu0 0.0
    %7561 = vmatprep.subr.mxu0 0.0
    %7562 = vmatpush1.msra.mxu0 0.0
    %7563 = vmatprep.subr.mxu0 0.0
    %7564 = vmatpush1.msra.mxu0 0.0
    %7565 = vmatprep.subr.mxu0 0.0
    %7566 = vmatpush1.msra.mxu0 0.0
    %7567 = vmatprep.subr.mxu0 0.0
    %7568 = vmatpush1.msra.mxu0 0.0
    %7569 = vmatprep.subr.mxu0 0.0
    %7570 = vmatpush1.msra.mxu0 0.0
    %7571 = vmatprep.subr.mxu0 0.0
    %7572 = vmatpush1.msra.mxu0 0.0
    %7573 = vmatprep.subr.mxu0 0.0
    %7574 = vmatpush1.msra.mxu0 0.0
    %7575 = vmatprep.subr.mxu0 0.0
    %7576 = vmatpush1.msra.mxu0 0.0
    %7577 = vmatprep.subr.mxu0 0.0
    %7578 = vmatpush1.msra.mxu0 0.0
    %7579 = vmatprep.subr.mxu0 0.0
    %7580 = vmatpush1.msra.mxu0 0.0
    %7581 = vmatprep.subr.mxu0 0.0
    %7582 = vmatpush1.msra.mxu0 0.0
    %7583 = vmatprep.subr.mxu0 0.0
    %7584 = vmatpush1.msra.mxu0 0.0
    %7585 = vmatprep.subr.mxu0 0.0
    %7586 = vmatpush1.msra.mxu0 0.0
    %7587 = vmatprep.mubr.f32.mxu0 0.0
    %7588 = vmatmul.mubr.f32.gmra.mrb[0].mxu0 %v7518
    %v7589 = vpop.f32.mrb[0].mxu0
    %v7590 = vadd.f32 0.0, %v7589
    %v7591 = vpop.f32.mrb[0].mxu0
    %7592 = vmatprep.mubr.f32.mxu0 0.0
    %7593 = vmatmul.mubr.f32.gmra.mrb[0].mxu0 %v7521
    %v7594 = vpop.f32.mrb[0].mxu0
    %v7595 = vadd.f32 0.0, %v7594
    %v7596 = vpop.f32.mrb[0].mxu0
    %7597 = vdwg.mxu0
    %v7598 = vld [vmem:[#allocation2 + $0x300] sm:$0xff]
    %v7599 = vld [vmem:[#allocation2 + $0x2b8] sm:$0xff]
    %v7600 = vld [vmem:[#allocation2 + $0x2c0] sm:$0xff]
    %v7601 = vld [vmem:[#allocation2 + $0x2c8] sm:$0xff]
    %v7603 = vsel %vm126, %v7599, 0
    %7605 = vmatprep.subr.mxu0 0.0
    %7606 = vmatpush1.xpose.msra.mxu0 %v7603
    %7607 = vmatprep.subr.mxu0 0.0
    %7608 = vmatpush1.xpose.msra.mxu0 0.0
    %7609 = vmatprep.subr.mxu0 0.0
    %7610 = vmatpush1.xpose.msra.mxu0 0.0
    %7611 = vmatprep.subr.mxu0 0.0
    %7612 = vmatpush1.xpose.msra.mxu0 0.0
    %7613 = vmatprep.subr.mxu0 0.0
    %7614 = vmatpush1.xpose.msra.mxu0 0.0
    %7615 = vmatprep.subr.mxu0 0.0
    %7616 = vmatpush1.xpose.msra.mxu0 0.0
    %7617 = vmatprep.subr.mxu0 0.0
    %7618 = vmatpush1.xpose.msra.mxu0 0.0
    %7619 = vmatprep.subr.mxu0 0.0
    %7620 = vmatpush1.xpose.msra.mxu0 0.0
    %7621 = vmatprep.subr.mxu0 0.0
    %7622 = vmatpush1.xpose.msra.mxu0 0.0
    %7623 = vmatprep.subr.mxu0 0.0
    %7624 = vmatpush1.xpose.msra.mxu0 0.0
    %7625 = vmatprep.subr.mxu0 0.0
    %7626 = vmatpush1.xpose.msra.mxu0 0.0
    %7627 = vmatprep.subr.mxu0 0.0
    %7628 = vmatpush1.xpose.msra.mxu0 0.0
    %7629 = vmatprep.subr.mxu0 0.0
    %7630 = vmatpush1.xpose.msra.mxu0 0.0
    %7631 = vmatprep.subr.mxu0 0.0
    %7632 = vmatpush1.xpose.msra.mxu0 0.0
    %7633 = vmatprep.subr.mxu0 0.0
    %7634 = vmatpush1.xpose.msra.mxu0 0.0
    %7635 = vmatprep.subr.mxu0 0.0
    %7636 = vmatpush1.xpose.msra.mxu0 0.0
    %7637 = vmatprep.subr.mxu0 0.0
    %7638 = vmatpush1.xpose.msra.mxu0 0.0
    %7639 = vmatprep.subr.mxu0 0.0
    %7640 = vmatpush1.xpose.msra.mxu0 0.0
    %7641 = vmatprep.subr.mxu0 0.0
    %7642 = vmatpush1.xpose.msra.mxu0 0.0
    %7643 = vmatprep.subr.mxu0 0.0
    %7644 = vmatpush1.xpose.msra.mxu0 0.0
    %7645 = vmatprep.subr.mxu0 0.0
    %7646 = vmatpush1.xpose.msra.mxu0 0.0
    %7647 = vmatprep.subr.mxu0 0.0
    %7648 = vmatpush1.xpose.msra.mxu0 0.0
    %7649 = vmatprep.subr.mxu0 0.0
    %7650 = vmatpush1.xpose.msra.mxu0 0.0
    %7651 = vmatprep.subr.mxu0 0.0
    %7652 = vmatpush1.xpose.msra.mxu0 0.0
    %7653 = vmatprep.subr.mxu0 0.0
    %7654 = vmatpush1.xpose.msra.mxu0 0.0
    %7655 = vmatprep.subr.mxu0 0.0
    %7656 = vmatpush1.xpose.msra.mxu0 0.0
    %7657 = vmatprep.subr.mxu0 0.0
    %7658 = vmatpush1.xpose.msra.mxu0 0.0
    %7659 = vmatprep.subr.mxu0 0.0
    %7660 = vmatpush1.xpose.msra.mxu0 0.0
    %7661 = vmatprep.subr.mxu0 0.0
    %7662 = vmatpush1.xpose.msra.mxu0 0.0
    %7663 = vmatprep.subr.mxu0 0.0
    %7664 = vmatpush1.xpose.msra.mxu0 0.0
    %7665 = vmatprep.subr.mxu0 0.0
    %7666 = vmatpush1.xpose.msra.mxu0 0.0
    %7667 = vmatprep.subr.mxu0 0.0
    %7668 = vmatpush1.xpose.msra.mxu0 0.0
    %7669 = vmatprep.mubr.f32.mxu0 0.0
    %7670 = vmatmul.mubr.f32.gmra.mrb[0].mxu0 %v7165
    %v7671 = vpop.f32.mrb[0].mxu0
    %v7672 = vadd.f32 0.0, %v7671
    %v7673 = vpop.f32.mrb[0].mxu0
    %7674 = vmatprep.mubr.f32.mxu0 0.0
    %7675 = vmatmul.mubr.f32.gmra.mrb[0].mxu0 %v7168
    %v7676 = vpop.f32.mrb[0].mxu0
    %v7677 = vadd.f32 0.0, %v7676
    %v7678 = vpop.f32.mrb[0].mxu0
    %7679 = vdwg.mxu0
    %v7681 = vsel %vm126, %v7600, 0
    %7683 = vmatprep.subr.mxu0 0.0
    %7684 = vmatpush1.xpose.msra.mxu0 %v7681
    %7685 = vmatprep.subr.mxu0 0.0
    %7686 = vmatpush1.xpose.msra.mxu0 0.0
    %7687 = vmatprep.subr.mxu0 0.0
    %7688 = vmatpush1.xpose.msra.mxu0 0.0
    %7689 = vmatprep.subr.mxu0 0.0
    %7690 = vmatpush1.xpose.msra.mxu0 0.0
    %7691 = vmatprep.subr.mxu0 0.0
    %7692 = vmatpush1.xpose.msra.mxu0 0.0
    %7693 = vmatprep.subr.mxu0 0.0
    %7694 = vmatpush1.xpose.msra.mxu0 0.0
    %7695 = vmatprep.subr.mxu0 0.0
    %7696 = vmatpush1.xpose.msra.mxu0 0.0
    %7697 = vmatprep.subr.mxu0 0.0
    %7698 = vmatpush1.xpose.msra.mxu0 0.0
    %7699 = vmatprep.subr.mxu0 0.0
    %7700 = vmatpush1.xpose.msra.mxu0 0.0
    %7701 = vmatprep.subr.mxu0 0.0
    %7702 = vmatpush1.xpose.msra.mxu0 0.0
    %7703 = vmatprep.subr.mxu0 0.0
    %7704 = vmatpush1.xpose.msra.mxu0 0.0
    %7705 = vmatprep.subr.mxu0 0.0
    %7706 = vmatpush1.xpose.msra.mxu0 0.0
    %7707 = vmatprep.subr.mxu0 0.0
    %7708 = vmatpush1.xpose.msra.mxu0 0.0
    %7709 = vmatprep.subr.mxu0 0.0
    %7710 = vmatpush1.xpose.msra.mxu0 0.0
    %7711 = vmatprep.subr.mxu0 0.0
    %7712 = vmatpush1.xpose.msra.mxu0 0.0
    %7713 = vmatprep.subr.mxu0 0.0
    %7714 = vmatpush1.xpose.msra.mxu0 0.0
    %7715 = vmatprep.subr.mxu0 0.0
    %7716 = vmatpush1.xpose.msra.mxu0 0.0
    %7717 = vmatprep.subr.mxu0 0.0
    %7718 = vmatpush1.xpose.msra.mxu0 0.0
    %7719 = vmatprep.subr.mxu0 0.0
    %7720 = vmatpush1.xpose.msra.mxu0 0.0
    %7721 = vmatprep.subr.mxu0 0.0
    %7722 = vmatpush1.xpose.msra.mxu0 0.0
    %7723 = vmatprep.subr.mxu0 0.0
    %7724 = vmatpush1.xpose.msra.mxu0 0.0
    %7725 = vmatprep.subr.mxu0 0.0
    %7726 = vmatpush1.xpose.msra.mxu0 0.0
    %7727 = vmatprep.subr.mxu0 0.0
    %7728 = vmatpush1.xpose.msra.mxu0 0.0
    %7729 = vmatprep.subr.mxu0 0.0
    %7730 = vmatpush1.xpose.msra.mxu0 0.0
    %7731 = vmatprep.subr.mxu0 0.0
    %7732 = vmatpush1.xpose.msra.mxu0 0.0
    %7733 = vmatprep.subr.mxu0 0.0
    %7734 = vmatpush1.xpose.msra.mxu0 0.0
    %7735 = vmatprep.subr.mxu0 0.0
    %7736 = vmatpush1.xpose.msra.mxu0 0.0
    %7737 = vmatprep.subr.mxu0 0.0
    %7738 = vmatpush1.xpose.msra.mxu0 0.0
    %7739 = vmatprep.subr.mxu0 0.0
    %7740 = vmatpush1.xpose.msra.mxu0 0.0
    %7741 = vmatprep.subr.mxu0 0.0
    %7742 = vmatpush1.xpose.msra.mxu0 0.0
    %7743 = vmatprep.subr.mxu0 0.0
    %7744 = vmatpush1.xpose.msra.mxu0 0.0
    %7745 = vmatprep.subr.mxu0 0.0
    %7746 = vmatpush1.xpose.msra.mxu0 0.0
    %7747 = vmatprep.mubr.f32.mxu0 0.0
    %7748 = vmatmul.mubr.f32.gmra.mrb[0].mxu0 %v7165
    %v7749 = vpop.f32.mrb[0].mxu0
    %v7750 = vadd.f32 0.0, %v7749
    %v7751 = vpop.f32.mrb[0].mxu0
    %7752 = vmatprep.mubr.f32.mxu0 0.0
    %7753 = vmatmul.mubr.f32.gmra.mrb[0].mxu0 %v7168
    %v7754 = vpop.f32.mrb[0].mxu0
    %v7755 = vadd.f32 0.0, %v7754
    %v7756 = vpop.f32.mrb[0].mxu0
    %7757 = vdwg.mxu0
    %v7759 = vsel %vm126, %v7601, 0
    %7761 = vmatprep.subr.mxu0 0.0
    %7762 = vmatpush1.xpose.msra.mxu0 %v7759
    %7763 = vmatprep.subr.mxu0 0.0
    %7764 = vmatpush1.xpose.msra.mxu0 0.0
    %7765 = vmatprep.subr.mxu0 0.0
    %7766 = vmatpush1.xpose.msra.mxu0 0.0
    %7767 = vmatprep.subr.mxu0 0.0
    %7768 = vmatpush1.xpose.msra.mxu0 0.0
    %7769 = vmatprep.subr.mxu0 0.0
    %7770 = vmatpush1.xpose.msra.mxu0 0.0
    %7771 = vmatprep.subr.mxu0 0.0
    %7772 = vmatpush1.xpose.msra.mxu0 0.0
    %7773 = vmatprep.subr.mxu0 0.0
    %7774 = vmatpush1.xpose.msra.mxu0 0.0
    %7775 = vmatprep.subr.mxu0 0.0
    %7776 = vmatpush1.xpose.msra.mxu0 0.0
    %7777 = vmatprep.subr.mxu0 0.0
    %7778 = vmatpush1.xpose.msra.mxu0 0.0
    %7779 = vmatprep.subr.mxu0 0.0
    %7780 = vmatpush1.xpose.msra.mxu0 0.0
    %7781 = vmatprep.subr.mxu0 0.0
    %7782 = vmatpush1.xpose.msra.mxu0 0.0
    %7783 = vmatprep.subr.mxu0 0.0
    %7784 = vmatpush1.xpose.msra.mxu0 0.0
    %7785 = vmatprep.subr.mxu0 0.0
    %7786 = vmatpush1.xpose.msra.mxu0 0.0
    %7787 = vmatprep.subr.mxu0 0.0
    %7788 = vmatpush1.xpose.msra.mxu0 0.0
    %7789 = vmatprep.subr.mxu0 0.0
    %7790 = vmatpush1.xpose.msra.mxu0 0.0
    %7791 = vmatprep.subr.mxu0 0.0
    %7792 = vmatpush1.xpose.msra.mxu0 0.0
    %7793 = vmatprep.subr.mxu0 0.0
    %7794 = vmatpush1.xpose.msra.mxu0 0.0
    %7795 = vmatprep.subr.mxu0 0.0
    %7796 = vmatpush1.xpose.msra.mxu0 0.0
    %7797 = vmatprep.subr.mxu0 0.0
    %7798 = vmatpush1.xpose.msra.mxu0 0.0
    %7799 = vmatprep.subr.mxu0 0.0
    %7800 = vmatpush1.xpose.msra.mxu0 0.0
    %7801 = vmatprep.subr.mxu0 0.0
    %7802 = vmatpush1.xpose.msra.mxu0 0.0
    %7803 = vmatprep.subr.mxu0 0.0
    %7804 = vmatpush1.xpose.msra.mxu0 0.0
    %7805 = vmatprep.subr.mxu0 0.0
    %7806 = vmatpush1.xpose.msra.mxu0 0.0
    %7807 = vmatprep.subr.mxu0 0.0
    %7808 = vmatpush1.xpose.msra.mxu0 0.0
    %7809 = vmatprep.subr.mxu0 0.0
    %7810 = vmatpush1.xpose.msra.mxu0 0.0
    %7811 = vmatprep.subr.mxu0 0.0
    %7812 = vmatpush1.xpose.msra.mxu0 0.0
    %7813 = vmatprep.subr.mxu0 0.0
    %7814 = vmatpush1.xpose.msra.mxu0 0.0
    %7815 = vmatprep.subr.mxu0 0.0
    %7816 = vmatpush1.xpose.msra.mxu0 0.0
    %7817 = vmatprep.subr.mxu0 0.0
    %7818 = vmatpush1.xpose.msra.mxu0 0.0
    %7819 = vmatprep.subr.mxu0 0.0
    %7820 = vmatpush1.xpose.msra.mxu0 0.0
    %7821 = vmatprep.subr.mxu0 0.0
    %7822 = vmatpush1.xpose.msra.mxu0 0.0
    %7823 = vmatprep.subr.mxu0 0.0
    %7824 = vmatpush1.xpose.msra.mxu0 0.0
    %7825 = vmatprep.mubr.f32.mxu0 0.0
    %7826 = vmatmul.mubr.f32.gmra.mrb[0].mxu0 %v7165
    %v7827 = vpop.f32.mrb[0].mxu0
    %v7828 = vadd.f32 0.0, %v7827
    %v7829 = vpop.f32.mrb[0].mxu0
    %7830 = vmatprep.mubr.f32.mxu0 0.0
    %7831 = vmatmul.mubr.f32.gmra.mrb[0].mxu0 %v7168
    %v7832 = vpop.f32.mrb[0].mxu0
    %v7833 = vadd.f32 0.0, %v7832
    %v7834 = vpop.f32.mrb[0].mxu0
    %7835 = vdwg.mxu0
    %v7837 = vsel %vm409, %v7750, 0
    %v7840 = vsel %vm409, %v7755, 0
    %v7843 = vsel %vm409, %v7672, 0
    %v7846 = vsel %vm409, %v7677, 0
    %7848 = vmatprep.subr.mxu0 0.0
    %7849 = vmatpush1.xpose.msra.mxu0 %v7843
    %7850 = vmatprep.subr.mxu0 0.0
    %7851 = vmatpush1.xpose.msra.mxu0 %v7846
    %7852 = vmatprep.subr.mxu0 0.0
    %7853 = vmatpush1.xpose.msra.mxu0 0.0
    %7854 = vmatprep.subr.mxu0 0.0
    %7855 = vmatpush1.xpose.msra.mxu0 0.0
    %7856 = vmatprep.subr.mxu0 0.0
    %7857 = vmatpush1.xpose.msra.mxu0 0.0
    %7858 = vmatprep.subr.mxu0 0.0
    %7859 = vmatpush1.xpose.msra.mxu0 0.0
    %7860 = vmatprep.subr.mxu0 0.0
    %7861 = vmatpush1.xpose.msra.mxu0 0.0
    %7862 = vmatprep.subr.mxu0 0.0
    %7863 = vmatpush1.xpose.msra.mxu0 0.0
    %7864 = vmatprep.subr.mxu0 0.0
    %7865 = vmatpush1.xpose.msra.mxu0 0.0
    %7866 = vmatprep.subr.mxu0 0.0
    %7867 = vmatpush1.xpose.msra.mxu0 0.0
    %7868 = vmatprep.subr.mxu0 0.0
    %7869 = vmatpush1.xpose.msra.mxu0 0.0
    %7870 = vmatprep.subr.mxu0 0.0
    %7871 = vmatpush1.xpose.msra.mxu0 0.0
    %7872 = vmatprep.subr.mxu0 0.0
    %7873 = vmatpush1.xpose.msra.mxu0 0.0
    %7874 = vmatprep.subr.mxu0 0.0
    %7875 = vmatpush1.xpose.msra.mxu0 0.0
    %7876 = vmatprep.subr.mxu0 0.0
    %7877 = vmatpush1.xpose.msra.mxu0 0.0
    %7878 = vmatprep.subr.mxu0 0.0
    %7879 = vmatpush1.xpose.msra.mxu0 0.0
    %7880 = vmatprep.subr.mxu0 0.0
    %7881 = vmatpush1.xpose.msra.mxu0 0.0
    %7882 = vmatprep.subr.mxu0 0.0
    %7883 = vmatpush1.xpose.msra.mxu0 0.0
    %7884 = vmatprep.subr.mxu0 0.0
    %7885 = vmatpush1.xpose.msra.mxu0 0.0
    %7886 = vmatprep.subr.mxu0 0.0
    %7887 = vmatpush1.xpose.msra.mxu0 0.0
    %7888 = vmatprep.subr.mxu0 0.0
    %7889 = vmatpush1.xpose.msra.mxu0 0.0
    %7890 = vmatprep.subr.mxu0 0.0
    %7891 = vmatpush1.xpose.msra.mxu0 0.0
    %7892 = vmatprep.subr.mxu0 0.0
    %7893 = vmatpush1.xpose.msra.mxu0 0.0
    %7894 = vmatprep.subr.mxu0 0.0
    %7895 = vmatpush1.xpose.msra.mxu0 0.0
    %7896 = vmatprep.subr.mxu0 0.0
    %7897 = vmatpush1.xpose.msra.mxu0 0.0
    %7898 = vmatprep.subr.mxu0 0.0
    %7899 = vmatpush1.xpose.msra.mxu0 0.0
    %7900 = vmatprep.subr.mxu0 0.0
    %7901 = vmatpush1.xpose.msra.mxu0 0.0
    %7902 = vmatprep.subr.mxu0 0.0
    %7903 = vmatpush1.xpose.msra.mxu0 0.0
    %7904 = vmatprep.subr.mxu0 0.0
    %7905 = vmatpush1.xpose.msra.mxu0 0.0
    %7906 = vmatprep.subr.mxu0 0.0
    %7907 = vmatpush1.xpose.msra.mxu0 0.0
    %7908 = vmatprep.subr.mxu0 0.0
    %7909 = vmatpush1.xpose.msra.mxu0 0.0
    %7910 = vmatprep.subr.mxu0 0.0
    %7911 = vmatpush1.xpose.msra.mxu0 0.0
    %7912 = vmatprep.mubr.f32.mxu0 0.0
    %7913 = vmatmul.mubr.f32.gmra.mrb[0].mxu0 %v7837
    %v7914 = vpop.f32.mrb[0].mxu0
    %v7915 = vadd.f32 0.0, %v7914
    %v7916 = vpop.f32.mrb[0].mxu0
    %7917 = vmatprep.mubr.f32.mxu0 0.0
    %7918 = vmatmul.mubr.f32.gmra.mrb[0].mxu0 %v7840
    %v7919 = vpop.f32.mrb[0].mxu0
    %v7920 = vadd.f32 0.0, %v7919
    %v7921 = vpop.f32.mrb[0].mxu0
    %7922 = vdwg.mxu0
    %v7923 = vmul.f32 %v7915, 0.17677669
    %v7924 = vmul.f32 %v7920, 0.17677669
    %v7925 = vadd.f32 %v7923, %v122
    %v7926 = vadd.f32 %v7924, %v123
    %v7927 = vsel %vm501, %v7925, -inf
    %7928 = vmax.xlane.f32.xlu0 %v7927
    %v7929 = vpop.xlane.xlu0 %7928
    %v7930 = vsel %vm501, %v7926, -inf
    %7931 = vmax.xlane.f32.xlu0 %v7930
    %v7932 = vpop.xlane.xlu0 %7931
    %v7933 = vsub.f32 %v7925, %v7929
    %v7934 = vsub.f32 %v7926, %v7932
    %v7935 = vmul.f32 %v7933, 1.442695
    %v7936 = vpow.pop %v7935
    %v7937 = vmul.f32 %v7934, 1.442695
    %v7938 = vpow.pop %v7937
    %v7939 = vsel %vm501, %v7936, 0.0
    %7940 = vadd.xlane.f32.xlu0 %v7939
    %v7941 = vpop.xlane.xlu0 %7940
    %v7942 = vsel %vm501, %v7938, 0.0
    %7943 = vadd.xlane.f32.xlu0 %v7942
    %v7944 = vpop.xlane.xlu0 %7943
    %v7945 = vrcp.pop %v7941
    %v7946 = vmul.f32 %v7936, %v7945
    %v7947 = vrcp.pop %v7944
    %v7948 = vmul.f32 %v7938, %v7947
    %v7950 = vsel %vm501, %v7946, 0
    %v7953 = vsel %vm501, %v7948, 0
    %7955 = vmatprep.subr.mxu0 0.0
    %7956 = vmatpush1.msra.mxu0 %v7828
    %7957 = vmatprep.subr.mxu0 0.0
    %7958 = vmatpush1.msra.mxu0 %v7833
    %7959 = vmatprep.subr.mxu0 0.0
    %7960 = vmatpush1.msra.mxu0 0.0
    %7961 = vmatprep.subr.mxu0 0.0
    %7962 = vmatpush1.msra.mxu0 0.0
    %7963 = vmatprep.subr.mxu0 0.0
    %7964 = vmatpush1.msra.mxu0 0.0
    %7965 = vmatprep.subr.mxu0 0.0
    %7966 = vmatpush1.msra.mxu0 0.0
    %7967 = vmatprep.subr.mxu0 0.0
    %7968 = vmatpush1.msra.mxu0 0.0
    %7969 = vmatprep.subr.mxu0 0.0
    %7970 = vmatpush1.msra.mxu0 0.0
    %7971 = vmatprep.subr.mxu0 0.0
    %7972 = vmatpush1.msra.mxu0 0.0
    %7973 = vmatprep.subr.mxu0 0.0
    %7974 = vmatpush1.msra.mxu0 0.0
    %7975 = vmatprep.subr.mxu0 0.0
    %7976 = vmatpush1.msra.mxu0 0.0
    %7977 = vmatprep.subr.mxu0 0.0
    %7978 = vmatpush1.msra.mxu0 0.0
    %7979 = vmatprep.subr.mxu0 0.0
    %7980 = vmatpush1.msra.mxu0 0.0
    %7981 = vmatprep.subr.mxu0 0.0
    %7982 = vmatpush1.msra.mxu0 0.0
    %7983 = vmatprep.subr.mxu0 0.0
    %7984 = vmatpush1.msra.mxu0 0.0
    %7985 = vmatprep.subr.mxu0 0.0
    %7986 = vmatpush1.msra.mxu0 0.0
    %7987 = vmatprep.subr.mxu0 0.0
    %7988 = vmatpush1.msra.mxu0 0.0
    %7989 = vmatprep.subr.mxu0 0.0
    %7990 = vmatpush1.msra.mxu0 0.0
    %7991 = vmatprep.subr.mxu0 0.0
    %7992 = vmatpush1.msra.mxu0 0.0
    %7993 = vmatprep.subr.mxu0 0.0
    %7994 = vmatpush1.msra.mxu0 0.0
    %7995 = vmatprep.subr.mxu0 0.0
    %7996 = vmatpush1.msra.mxu0 0.0
    %7997 = vmatprep.subr.mxu0 0.0
    %7998 = vmatpush1.msra.mxu0 0.0
    %7999 = vmatprep.subr.mxu0 0.0
    %8000 = vmatpush1.msra.mxu0 0.0
    %8001 = vmatprep.subr.mxu0 0.0
    %8002 = vmatpush1.msra.mxu0 0.0
    %8003 = vmatprep.subr.mxu0 0.0
    %8004 = vmatpush1.msra.mxu0 0.0
    %8005 = vmatprep.subr.mxu0 0.0
    %8006 = vmatpush1.msra.mxu0 0.0
    %8007 = vmatprep.subr.mxu0 0.0
    %8008 = vmatpush1.msra.mxu0 0.0
    %8009 = vmatprep.subr.mxu0 0.0
    %8010 = vmatpush1.msra.mxu0 0.0
    %8011 = vmatprep.subr.mxu0 0.0
    %8012 = vmatpush1.msra.mxu0 0.0
    %8013 = vmatprep.subr.mxu0 0.0
    %8014 = vmatpush1.msra.mxu0 0.0
    %8015 = vmatprep.subr.mxu0 0.0
    %8016 = vmatpush1.msra.mxu0 0.0
    %8017 = vmatprep.subr.mxu0 0.0
    %8018 = vmatpush1.msra.mxu0 0.0
    %8019 = vmatprep.mubr.f32.mxu0 0.0
    %8020 = vmatmul.mubr.f32.gmra.mrb[0].mxu0 %v7950
    %v8021 = vpop.f32.mrb[0].mxu0
    %v8022 = vadd.f32 0.0, %v8021
    %v8023 = vpop.f32.mrb[0].mxu0
    %8024 = vmatprep.mubr.f32.mxu0 0.0
    %8025 = vmatmul.mubr.f32.gmra.mrb[0].mxu0 %v7953
    %v8026 = vpop.f32.mrb[0].mxu0
    %v8027 = vadd.f32 0.0, %v8026
    %v8028 = vpop.f32.mrb[0].mxu0
    %8029 = vdwg.mxu0
    %v8030 = vld [vmem:[#allocation2 + $0x308] sm:$0xff]
    %v8032 = vsel %vm409, %v8022, 0
    %v8035 = vsel %vm409, %v8027, 0
    %8037 = vmatprep.subr.mxu0 0.0
    %8038 = vmatpush1.msra.mxu0 %v8030
    %8039 = vmatprep.subr.mxu0 0.0
    %8040 = vmatpush1.msra.mxu0 0.0
    %8041 = vmatprep.subr.mxu0 0.0
    %8042 = vmatpush1.msra.mxu0 0.0
    %8043 = vmatprep.subr.mxu0 0.0
    %8044 = vmatpush1.msra.mxu0 0.0
    %8045 = vmatprep.subr.mxu0 0.0
    %8046 = vmatpush1.msra.mxu0 0.0
    %8047 = vmatprep.subr.mxu0 0.0
    %8048 = vmatpush1.msra.mxu0 0.0
    %8049 = vmatprep.subr.mxu0 0.0
    %8050 = vmatpush1.msra.mxu0 0.0
    %8051 = vmatprep.subr.mxu0 0.0
    %8052 = vmatpush1.msra.mxu0 0.0
    %8053 = vmatprep.subr.mxu0 0.0
    %8054 = vmatpush1.msra.mxu0 0.0
    %8055 = vmatprep.subr.mxu0 0.0
    %8056 = vmatpush1.msra.mxu0 0.0
    %8057 = vmatprep.subr.mxu0 0.0
    %8058 = vmatpush1.msra.mxu0 0.0
    %8059 = vmatprep.subr.mxu0 0.0
    %8060 = vmatpush1.msra.mxu0 0.0
    %8061 = vmatprep.subr.mxu0 0.0
    %8062 = vmatpush1.msra.mxu0 0.0
    %8063 = vmatprep.subr.mxu0 0.0
    %8064 = vmatpush1.msra.mxu0 0.0
    %8065 = vmatprep.subr.mxu0 0.0
    %8066 = vmatpush1.msra.mxu0 0.0
    %8067 = vmatprep.subr.mxu0 0.0
    %8068 = vmatpush1.msra.mxu0 0.0
    %8069 = vmatprep.subr.mxu0 0.0
    %8070 = vmatpush1.msra.mxu0 0.0
    %8071 = vmatprep.subr.mxu0 0.0
    %8072 = vmatpush1.msra.mxu0 0.0
    %8073 = vmatprep.subr.mxu0 0.0
    %8074 = vmatpush1.msra.mxu0 0.0
    %8075 = vmatprep.subr.mxu0 0.0
    %8076 = vmatpush1.msra.mxu0 0.0
    %8077 = vmatprep.subr.mxu0 0.0
    %8078 = vmatpush1.msra.mxu0 0.0
    %8079 = vmatprep.subr.mxu0 0.0
    %8080 = vmatpush1.msra.mxu0 0.0
    %8081 = vmatprep.subr.mxu0 0.0
    %8082 = vmatpush1.msra.mxu0 0.0
    %8083 = vmatprep.subr.mxu0 0.0
    %8084 = vmatpush1.msra.mxu0 0.0
    %8085 = vmatprep.subr.mxu0 0.0
    %8086 = vmatpush1.msra.mxu0 0.0
    %8087 = vmatprep.subr.mxu0 0.0
    %8088 = vmatpush1.msra.mxu0 0.0
    %8089 = vmatprep.subr.mxu0 0.0
    %8090 = vmatpush1.msra.mxu0 0.0
    %8091 = vmatprep.subr.mxu0 0.0
    %8092 = vmatpush1.msra.mxu0 0.0
    %8093 = vmatprep.subr.mxu0 0.0
    %8094 = vmatpush1.msra.mxu0 0.0
    %8095 = vmatprep.subr.mxu0 0.0
    %8096 = vmatpush1.msra.mxu0 0.0
    %8097 = vmatprep.subr.mxu0 0.0
    %8098 = vmatpush1.msra.mxu0 0.0
    %8099 = vmatprep.subr.mxu0 0.0
    %8100 = vmatpush1.msra.mxu0 0.0
    %8101 = vmatprep.mubr.f32.mxu0 0.0
    %8102 = vmatmul.mubr.f32.gmra.mrb[0].mxu0 %v8032
    %v8103 = vpop.f32.mrb[0].mxu0
    %v8104 = vadd.f32 0.0, %v8103
    %v8105 = vpop.f32.mrb[0].mxu0
    %8106 = vmatprep.mubr.f32.mxu0 0.0
    %8107 = vmatmul.mubr.f32.gmra.mrb[0].mxu0 %v8035
    %v8108 = vpop.f32.mrb[0].mxu0
    %v8109 = vadd.f32 0.0, %v8108
    %v8110 = vpop.f32.mrb[0].mxu0
    %8111 = vdwg.mxu0
    %v8113 = vsel %vm409, %v7590, 0
    %v8116 = vsel %vm409, %v7595, 0
    %8118 = vmatprep.subr.mxu0 0.0
    %8119 = vmatpush1.msra.mxu0 %v7598
    %8120 = vmatprep.subr.mxu0 0.0
    %8121 = vmatpush1.msra.mxu0 0.0
    %8122 = vmatprep.subr.mxu0 0.0
    %8123 = vmatpush1.msra.mxu0 0.0
    %8124 = vmatprep.subr.mxu0 0.0
    %8125 = vmatpush1.msra.mxu0 0.0
    %8126 = vmatprep.subr.mxu0 0.0
    %8127 = vmatpush1.msra.mxu0 0.0
    %8128 = vmatprep.subr.mxu0 0.0
    %8129 = vmatpush1.msra.mxu0 0.0
    %8130 = vmatprep.subr.mxu0 0.0
    %8131 = vmatpush1.msra.mxu0 0.0
    %8132 = vmatprep.subr.mxu0 0.0
    %8133 = vmatpush1.msra.mxu0 0.0
    %8134 = vmatprep.subr.mxu0 0.0
    %8135 = vmatpush1.msra.mxu0 0.0
    %8136 = vmatprep.subr.mxu0 0.0
    %8137 = vmatpush1.msra.mxu0 0.0
    %8138 = vmatprep.subr.mxu0 0.0
    %8139 = vmatpush1.msra.mxu0 0.0
    %8140 = vmatprep.subr.mxu0 0.0
    %8141 = vmatpush1.msra.mxu0 0.0
    %8142 = vmatprep.subr.mxu0 0.0
    %8143 = vmatpush1.msra.mxu0 0.0
    %8144 = vmatprep.subr.mxu0 0.0
    %8145 = vmatpush1.msra.mxu0 0.0
    %8146 = vmatprep.subr.mxu0 0.0
    %8147 = vmatpush1.msra.mxu0 0.0
    %8148 = vmatprep.subr.mxu0 0.0
    %8149 = vmatpush1.msra.mxu0 0.0
    %8150 = vmatprep.subr.mxu0 0.0
    %8151 = vmatpush1.msra.mxu0 0.0
    %8152 = vmatprep.subr.mxu0 0.0
    %8153 = vmatpush1.msra.mxu0 0.0
    %8154 = vmatprep.subr.mxu0 0.0
    %8155 = vmatpush1.msra.mxu0 0.0
    %8156 = vmatprep.subr.mxu0 0.0
    %8157 = vmatpush1.msra.mxu0 0.0
    %8158 = vmatprep.subr.mxu0 0.0
    %8159 = vmatpush1.msra.mxu0 0.0
    %8160 = vmatprep.subr.mxu0 0.0
    %8161 = vmatpush1.msra.mxu0 0.0
    %8162 = vmatprep.subr.mxu0 0.0
    %8163 = vmatpush1.msra.mxu0 0.0
    %8164 = vmatprep.subr.mxu0 0.0
    %8165 = vmatpush1.msra.mxu0 0.0
    %8166 = vmatprep.subr.mxu0 0.0
    %8167 = vmatpush1.msra.mxu0 0.0
    %8168 = vmatprep.subr.mxu0 0.0
    %8169 = vmatpush1.msra.mxu0 0.0
    %8170 = vmatprep.subr.mxu0 0.0
    %8171 = vmatpush1.msra.mxu0 0.0
    %8172 = vmatprep.subr.mxu0 0.0
    %8173 = vmatpush1.msra.mxu0 0.0
    %8174 = vmatprep.subr.mxu0 0.0
    %8175 = vmatpush1.msra.mxu0 0.0
    %8176 = vmatprep.subr.mxu0 0.0
    %8177 = vmatpush1.msra.mxu0 0.0
    %8178 = vmatprep.subr.mxu0 0.0
    %8179 = vmatpush1.msra.mxu0 0.0
    %8180 = vmatprep.subr.mxu0 0.0
    %8181 = vmatpush1.msra.mxu0 0.0
    %8182 = vmatprep.mubr.f32.mxu0 0.0
    %8183 = vmatmul.mubr.f32.gmra.mrb[0].mxu0 %v8113
    %v8184 = vpop.f32.mrb[0].mxu0
    %v8185 = vadd.f32 %v8104, %v8184
    %v8186 = vpop.f32.mrb[0].mxu0
    %8187 = vmatprep.mubr.f32.mxu0 0.0
    %8188 = vmatmul.mubr.f32.gmra.mrb[0].mxu0 %v8116
    %v8189 = vpop.f32.mrb[0].mxu0
    %v8190 = vadd.f32 %v8109, %v8189
    %v8191 = vpop.f32.mrb[0].mxu0
    %8192 = vdwg.mxu0
    %v8193 = vld [vmem:[#allocation2 + $0x2d0] sm:$0xff]
    %v8194 = vld [vmem:[#allocation2 + $0x2d8] sm:$0xff]
    %v8195 = vld [vmem:[#allocation2 + $0x2e0] sm:$0xff]
    %v8197 = vsel %vm126, %v8193, 0
    %8199 = vmatprep.subr.mxu0 0.0
    %8200 = vmatpush1.xpose.msra.mxu0 %v8197
    %8201 = vmatprep.subr.mxu0 0.0
    %8202 = vmatpush1.xpose.msra.mxu0 0.0
    %8203 = vmatprep.subr.mxu0 0.0
    %8204 = vmatpush1.xpose.msra.mxu0 0.0
    %8205 = vmatprep.subr.mxu0 0.0
    %8206 = vmatpush1.xpose.msra.mxu0 0.0
    %8207 = vmatprep.subr.mxu0 0.0
    %8208 = vmatpush1.xpose.msra.mxu0 0.0
    %8209 = vmatprep.subr.mxu0 0.0
    %8210 = vmatpush1.xpose.msra.mxu0 0.0
    %8211 = vmatprep.subr.mxu0 0.0
    %8212 = vmatpush1.xpose.msra.mxu0 0.0
    %8213 = vmatprep.subr.mxu0 0.0
    %8214 = vmatpush1.xpose.msra.mxu0 0.0
    %8215 = vmatprep.subr.mxu0 0.0
    %8216 = vmatpush1.xpose.msra.mxu0 0.0
    %8217 = vmatprep.subr.mxu0 0.0
    %8218 = vmatpush1.xpose.msra.mxu0 0.0
    %8219 = vmatprep.subr.mxu0 0.0
    %8220 = vmatpush1.xpose.msra.mxu0 0.0
    %8221 = vmatprep.subr.mxu0 0.0
    %8222 = vmatpush1.xpose.msra.mxu0 0.0
    %8223 = vmatprep.subr.mxu0 0.0
    %8224 = vmatpush1.xpose.msra.mxu0 0.0
    %8225 = vmatprep.subr.mxu0 0.0
    %8226 = vmatpush1.xpose.msra.mxu0 0.0
    %8227 = vmatprep.subr.mxu0 0.0
    %8228 = vmatpush1.xpose.msra.mxu0 0.0
    %8229 = vmatprep.subr.mxu0 0.0
    %8230 = vmatpush1.xpose.msra.mxu0 0.0
    %8231 = vmatprep.subr.mxu0 0.0
    %8232 = vmatpush1.xpose.msra.mxu0 0.0
    %8233 = vmatprep.subr.mxu0 0.0
    %8234 = vmatpush1.xpose.msra.mxu0 0.0
    %8235 = vmatprep.subr.mxu0 0.0
    %8236 = vmatpush1.xpose.msra.mxu0 0.0
    %8237 = vmatprep.subr.mxu0 0.0
    %8238 = vmatpush1.xpose.msra.mxu0 0.0
    %8239 = vmatprep.subr.mxu0 0.0
    %8240 = vmatpush1.xpose.msra.mxu0 0.0
    %8241 = vmatprep.subr.mxu0 0.0
    %8242 = vmatpush1.xpose.msra.mxu0 0.0
    %8243 = vmatprep.subr.mxu0 0.0
    %8244 = vmatpush1.xpose.msra.mxu0 0.0
    %8245 = vmatprep.subr.mxu0 0.0
    %8246 = vmatpush1.xpose.msra.mxu0 0.0
    %8247 = vmatprep.subr.mxu0 0.0
    %8248 = vmatpush1.xpose.msra.mxu0 0.0
    %8249 = vmatprep.subr.mxu0 0.0
    %8250 = vmatpush1.xpose.msra.mxu0 0.0
    %8251 = vmatprep.subr.mxu0 0.0
    %8252 = vmatpush1.xpose.msra.mxu0 0.0
    %8253 = vmatprep.subr.mxu0 0.0
    %8254 = vmatpush1.xpose.msra.mxu0 0.0
    %8255 = vmatprep.subr.mxu0 0.0
    %8256 = vmatpush1.xpose.msra.mxu0 0.0
    %8257 = vmatprep.subr.mxu0 0.0
    %8258 = vmatpush1.xpose.msra.mxu0 0.0
    %8259 = vmatprep.subr.mxu0 0.0
    %8260 = vmatpush1.xpose.msra.mxu0 0.0
    %8261 = vmatprep.subr.mxu0 0.0
    %8262 = vmatpush1.xpose.msra.mxu0 0.0
    %8263 = vmatprep.mubr.f32.mxu0 0.0
    %8264 = vmatmul.mubr.f32.gmra.mrb[0].mxu0 %v7165
    %v8265 = vpop.f32.mrb[0].mxu0
    %v8266 = vadd.f32 0.0, %v8265
    %v8267 = vpop.f32.mrb[0].mxu0
    %8268 = vmatprep.mubr.f32.mxu0 0.0
    %8269 = vmatmul.mubr.f32.gmra.mrb[0].mxu0 %v7168
    %v8270 = vpop.f32.mrb[0].mxu0
    %v8271 = vadd.f32 0.0, %v8270
    %v8272 = vpop.f32.mrb[0].mxu0
    %8273 = vdwg.mxu0
    %v8275 = vsel %vm126, %v8194, 0
    %8277 = vmatprep.subr.mxu0 0.0
    %8278 = vmatpush1.xpose.msra.mxu0 %v8275
    %8279 = vmatprep.subr.mxu0 0.0
    %8280 = vmatpush1.xpose.msra.mxu0 0.0
    %8281 = vmatprep.subr.mxu0 0.0
    %8282 = vmatpush1.xpose.msra.mxu0 0.0
    %8283 = vmatprep.subr.mxu0 0.0
    %8284 = vmatpush1.xpose.msra.mxu0 0.0
    %8285 = vmatprep.subr.mxu0 0.0
    %8286 = vmatpush1.xpose.msra.mxu0 0.0
    %8287 = vmatprep.subr.mxu0 0.0
    %8288 = vmatpush1.xpose.msra.mxu0 0.0
    %8289 = vmatprep.subr.mxu0 0.0
    %8290 = vmatpush1.xpose.msra.mxu0 0.0
    %8291 = vmatprep.subr.mxu0 0.0
    %8292 = vmatpush1.xpose.msra.mxu0 0.0
    %8293 = vmatprep.subr.mxu0 0.0
    %8294 = vmatpush1.xpose.msra.mxu0 0.0
    %8295 = vmatprep.subr.mxu0 0.0
    %8296 = vmatpush1.xpose.msra.mxu0 0.0
    %8297 = vmatprep.subr.mxu0 0.0
    %8298 = vmatpush1.xpose.msra.mxu0 0.0
    %8299 = vmatprep.subr.mxu0 0.0
    %8300 = vmatpush1.xpose.msra.mxu0 0.0
    %8301 = vmatprep.subr.mxu0 0.0
    %8302 = vmatpush1.xpose.msra.mxu0 0.0
    %8303 = vmatprep.subr.mxu0 0.0
    %8304 = vmatpush1.xpose.msra.mxu0 0.0
    %8305 = vmatprep.subr.mxu0 0.0
    %8306 = vmatpush1.xpose.msra.mxu0 0.0
    %8307 = vmatprep.subr.mxu0 0.0
    %8308 = vmatpush1.xpose.msra.mxu0 0.0
    %8309 = vmatprep.subr.mxu0 0.0
    %8310 = vmatpush1.xpose.msra.mxu0 0.0
    %8311 = vmatprep.subr.mxu0 0.0
    %8312 = vmatpush1.xpose.msra.mxu0 0.0
    %8313 = vmatprep.subr.mxu0 0.0
    %8314 = vmatpush1.xpose.msra.mxu0 0.0
    %8315 = vmatprep.subr.mxu0 0.0
    %8316 = vmatpush1.xpose.msra.mxu0 0.0
    %8317 = vmatprep.subr.mxu0 0.0
    %8318 = vmatpush1.xpose.msra.mxu0 0.0
    %8319 = vmatprep.subr.mxu0 0.0
    %8320 = vmatpush1.xpose.msra.mxu0 0.0
    %8321 = vmatprep.subr.mxu0 0.0
    %8322 = vmatpush1.xpose.msra.mxu0 0.0
    %8323 = vmatprep.subr.mxu0 0.0
    %8324 = vmatpush1.xpose.msra.mxu0 0.0
    %8325 = vmatprep.subr.mxu0 0.0
    %8326 = vmatpush1.xpose.msra.mxu0 0.0
    %8327 = vmatprep.subr.mxu0 0.0
    %8328 = vmatpush1.xpose.msra.mxu0 0.0
    %8329 = vmatprep.subr.mxu0 0.0
    %8330 = vmatpush1.xpose.msra.mxu0 0.0
    %8331 = vmatprep.subr.mxu0 0.0
    %8332 = vmatpush1.xpose.msra.mxu0 0.0
    %8333 = vmatprep.subr.mxu0 0.0
    %8334 = vmatpush1.xpose.msra.mxu0 0.0
    %8335 = vmatprep.subr.mxu0 0.0
    %8336 = vmatpush1.xpose.msra.mxu0 0.0
    %8337 = vmatprep.subr.mxu0 0.0
    %8338 = vmatpush1.xpose.msra.mxu0 0.0
    %8339 = vmatprep.subr.mxu0 0.0
    %8340 = vmatpush1.xpose.msra.mxu0 0.0
    %8341 = vmatprep.mubr.f32.mxu0 0.0
    %8342 = vmatmul.mubr.f32.gmra.mrb[0].mxu0 %v7165
    %v8343 = vpop.f32.mrb[0].mxu0
    %v8344 = vadd.f32 0.0, %v8343
    %v8345 = vpop.f32.mrb[0].mxu0
    %8346 = vmatprep.mubr.f32.mxu0 0.0
    %8347 = vmatmul.mubr.f32.gmra.mrb[0].mxu0 %v7168
    %v8348 = vpop.f32.mrb[0].mxu0
    %v8349 = vadd.f32 0.0, %v8348
    %v8350 = vpop.f32.mrb[0].mxu0
    %8351 = vdwg.mxu0
    %v8353 = vsel %vm126, %v8195, 0
    %8355 = vmatprep.subr.mxu0 0.0
    %8356 = vmatpush1.xpose.msra.mxu0 %v8353
    %8357 = vmatprep.subr.mxu0 0.0
    %8358 = vmatpush1.xpose.msra.mxu0 0.0
    %8359 = vmatprep.subr.mxu0 0.0
    %8360 = vmatpush1.xpose.msra.mxu0 0.0
    %8361 = vmatprep.subr.mxu0 0.0
    %8362 = vmatpush1.xpose.msra.mxu0 0.0
    %8363 = vmatprep.subr.mxu0 0.0
    %8364 = vmatpush1.xpose.msra.mxu0 0.0
    %8365 = vmatprep.subr.mxu0 0.0
    %8366 = vmatpush1.xpose.msra.mxu0 0.0
    %8367 = vmatprep.subr.mxu0 0.0
    %8368 = vmatpush1.xpose.msra.mxu0 0.0
    %8369 = vmatprep.subr.mxu0 0.0
    %8370 = vmatpush1.xpose.msra.mxu0 0.0
    %8371 = vmatprep.subr.mxu0 0.0
    %8372 = vmatpush1.xpose.msra.mxu0 0.0
    %8373 = vmatprep.subr.mxu0 0.0
    %8374 = vmatpush1.xpose.msra.mxu0 0.0
    %8375 = vmatprep.subr.mxu0 0.0
    %8376 = vmatpush1.xpose.msra.mxu0 0.0
    %8377 = vmatprep.subr.mxu0 0.0
    %8378 = vmatpush1.xpose.msra.mxu0 0.0
    %8379 = vmatprep.subr.mxu0 0.0
    %8380 = vmatpush1.xpose.msra.mxu0 0.0
    %8381 = vmatprep.subr.mxu0 0.0
    %8382 = vmatpush1.xpose.msra.mxu0 0.0
    %8383 = vmatprep.subr.mxu0 0.0
    %8384 = vmatpush1.xpose.msra.mxu0 0.0
    %8385 = vmatprep.subr.mxu0 0.0
    %8386 = vmatpush1.xpose.msra.mxu0 0.0
    %8387 = vmatprep.subr.mxu0 0.0
    %8388 = vmatpush1.xpose.msra.mxu0 0.0
    %8389 = vmatprep.subr.mxu0 0.0
    %8390 = vmatpush1.xpose.msra.mxu0 0.0
    %8391 = vmatprep.subr.mxu0 0.0
    %8392 = vmatpush1.xpose.msra.mxu0 0.0
    %8393 = vmatprep.subr.mxu0 0.0
    %8394 = vmatpush1.xpose.msra.mxu0 0.0
    %8395 = vmatprep.subr.mxu0 0.0
    %8396 = vmatpush1.xpose.msra.mxu0 0.0
    %8397 = vmatprep.subr.mxu0 0.0
    %8398 = vmatpush1.xpose.msra.mxu0 0.0
    %8399 = vmatprep.subr.mxu0 0.0
    %8400 = vmatpush1.xpose.msra.mxu0 0.0
    %8401 = vmatprep.subr.mxu0 0.0
    %8402 = vmatpush1.xpose.msra.mxu0 0.0
    %8403 = vmatprep.subr.mxu0 0.0
    %8404 = vmatpush1.xpose.msra.mxu0 0.0
    %8405 = vmatprep.subr.mxu0 0.0
    %8406 = vmatpush1.xpose.msra.mxu0 0.0
    %8407 = vmatprep.subr.mxu0 0.0
    %8408 = vmatpush1.xpose.msra.mxu0 0.0
    %8409 = vmatprep.subr.mxu0 0.0
    %8410 = vmatpush1.xpose.msra.mxu0 0.0
    %8411 = vmatprep.subr.mxu0 0.0
    %8412 = vmatpush1.xpose.msra.mxu0 0.0
    %8413 = vmatprep.subr.mxu0 0.0
    %8414 = vmatpush1.xpose.msra.mxu0 0.0
    %8415 = vmatprep.subr.mxu0 0.0
    %8416 = vmatpush1.xpose.msra.mxu0 0.0
    %8417 = vmatprep.subr.mxu0 0.0
    %8418 = vmatpush1.xpose.msra.mxu0 0.0
    %8419 = vmatprep.mubr.f32.mxu0 0.0
    %8420 = vmatmul.mubr.f32.gmra.mrb[0].mxu0 %v7165
    %v8421 = vpop.f32.mrb[0].mxu0
    %v8422 = vadd.f32 0.0, %v8421
    %v8423 = vpop.f32.mrb[0].mxu0
    %8424 = vmatprep.mubr.f32.mxu0 0.0
    %8425 = vmatmul.mubr.f32.gmra.mrb[0].mxu0 %v7168
    %v8426 = vpop.f32.mrb[0].mxu0
    %v8427 = vadd.f32 0.0, %v8426
    %v8428 = vpop.f32.mrb[0].mxu0
    %8429 = vdwg.mxu0
    %v8431 = vsel %vm409, %v8344, 0
    %v8434 = vsel %vm409, %v8349, 0
    %v8437 = vsel %vm409, %v8266, 0
    %v8440 = vsel %vm409, %v8271, 0
    %8442 = vmatprep.subr.mxu0 0.0
    %8443 = vmatpush1.xpose.msra.mxu0 %v8437
    %8444 = vmatprep.subr.mxu0 0.0
    %8445 = vmatpush1.xpose.msra.mxu0 %v8440
    %8446 = vmatprep.subr.mxu0 0.0
    %8447 = vmatpush1.xpose.msra.mxu0 0.0
    %8448 = vmatprep.subr.mxu0 0.0
    %8449 = vmatpush1.xpose.msra.mxu0 0.0
    %8450 = vmatprep.subr.mxu0 0.0
    %8451 = vmatpush1.xpose.msra.mxu0 0.0
    %8452 = vmatprep.subr.mxu0 0.0
    %8453 = vmatpush1.xpose.msra.mxu0 0.0
    %8454 = vmatprep.subr.mxu0 0.0
    %8455 = vmatpush1.xpose.msra.mxu0 0.0
    %8456 = vmatprep.subr.mxu0 0.0
    %8457 = vmatpush1.xpose.msra.mxu0 0.0
    %8458 = vmatprep.subr.mxu0 0.0
    %8459 = vmatpush1.xpose.msra.mxu0 0.0
    %8460 = vmatprep.subr.mxu0 0.0
    %8461 = vmatpush1.xpose.msra.mxu0 0.0
    %8462 = vmatprep.subr.mxu0 0.0
    %8463 = vmatpush1.xpose.msra.mxu0 0.0
    %8464 = vmatprep.subr.mxu0 0.0
    %8465 = vmatpush1.xpose.msra.mxu0 0.0
    %8466 = vmatprep.subr.mxu0 0.0
    %8467 = vmatpush1.xpose.msra.mxu0 0.0
    %8468 = vmatprep.subr.mxu0 0.0
    %8469 = vmatpush1.xpose.msra.mxu0 0.0
    %8470 = vmatprep.subr.mxu0 0.0
    %8471 = vmatpush1.xpose.msra.mxu0 0.0
    %8472 = vmatprep.subr.mxu0 0.0
    %8473 = vmatpush1.xpose.msra.mxu0 0.0
    %8474 = vmatprep.subr.mxu0 0.0
    %8475 = vmatpush1.xpose.msra.mxu0 0.0
    %8476 = vmatprep.subr.mxu0 0.0
    %8477 = vmatpush1.xpose.msra.mxu0 0.0
    %8478 = vmatprep.subr.mxu0 0.0
    %8479 = vmatpush1.xpose.msra.mxu0 0.0
    %8480 = vmatprep.subr.mxu0 0.0
    %8481 = vmatpush1.xpose.msra.mxu0 0.0
    %8482 = vmatprep.subr.mxu0 0.0
    %8483 = vmatpush1.xpose.msra.mxu0 0.0
    %8484 = vmatprep.subr.mxu0 0.0
    %8485 = vmatpush1.xpose.msra.mxu0 0.0
    %8486 = vmatprep.subr.mxu0 0.0
    %8487 = vmatpush1.xpose.msra.mxu0 0.0
    %8488 = vmatprep.subr.mxu0 0.0
    %8489 = vmatpush1.xpose.msra.mxu0 0.0
    %8490 = vmatprep.subr.mxu0 0.0
    %8491 = vmatpush1.xpose.msra.mxu0 0.0
    %8492 = vmatprep.subr.mxu0 0.0
    %8493 = vmatpush1.xpose.msra.mxu0 0.0
    %8494 = vmatprep.subr.mxu0 0.0
    %8495 = vmatpush1.xpose.msra.mxu0 0.0
    %8496 = vmatprep.subr.mxu0 0.0
    %8497 = vmatpush1.xpose.msra.mxu0 0.0
    %8498 = vmatprep.subr.mxu0 0.0
    %8499 = vmatpush1.xpose.msra.mxu0 0.0
    %8500 = vmatprep.subr.mxu0 0.0
    %8501 = vmatpush1.xpose.msra.mxu0 0.0
    %8502 = vmatprep.subr.mxu0 0.0
    %8503 = vmatpush1.xpose.msra.mxu0 0.0
    %8504 = vmatprep.subr.mxu0 0.0
    %8505 = vmatpush1.xpose.msra.mxu0 0.0
    %8506 = vmatprep.mubr.f32.mxu0 0.0
    %8507 = vmatmul.mubr.f32.gmra.mrb[0].mxu0 %v8431
    %v8508 = vpop.f32.mrb[0].mxu0
    %v8509 = vadd.f32 0.0, %v8508
    %v8510 = vpop.f32.mrb[0].mxu0
    %8511 = vmatprep.mubr.f32.mxu0 0.0
    %8512 = vmatmul.mubr.f32.gmra.mrb[0].mxu0 %v8434
    %v8513 = vpop.f32.mrb[0].mxu0
    %v8514 = vadd.f32 0.0, %v8513
    %v8515 = vpop.f32.mrb[0].mxu0
    %8516 = vdwg.mxu0
    %v8517 = vmul.f32 %v8509, 0.17677669
    %v8518 = vmul.f32 %v8514, 0.17677669
    %v8519 = vadd.f32 %v8517, %v122
    %v8520 = vadd.f32 %v8518, %v123
    %v8521 = vsel %vm501, %v8519, -inf
    %8522 = vmax.xlane.f32.xlu0 %v8521
    %v8523 = vpop.xlane.xlu0 %8522
    %v8524 = vsel %vm501, %v8520, -inf
    %8525 = vmax.xlane.f32.xlu0 %v8524
    %v8526 = vpop.xlane.xlu0 %8525
    %v8527 = vsub.f32 %v8519, %v8523
    %v8528 = vsub.f32 %v8520, %v8526
    %v8529 = vmul.f32 %v8527, 1.442695
    %v8530 = vpow.pop %v8529
    %v8531 = vmul.f32 %v8528, 1.442695
    %v8532 = vpow.pop %v8531
    %v8533 = vsel %vm501, %v8530, 0.0
    %8534 = vadd.xlane.f32.xlu0 %v8533
    %v8535 = vpop.xlane.xlu0 %8534
    %v8536 = vsel %vm501, %v8532, 0.0
    %8537 = vadd.xlane.f32.xlu0 %v8536
    %v8538 = vpop.xlane.xlu0 %8537
    %v8539 = vrcp.pop %v8535
    %v8540 = vmul.f32 %v8530, %v8539
    %v8541 = vrcp.pop %v8538
    %v8542 = vmul.f32 %v8532, %v8541
    %v8544 = vsel %vm501, %v8540, 0
    %v8547 = vsel %vm501, %v8542, 0
    %8549 = vmatprep.subr.mxu0 0.0
    %8550 = vmatpush1.msra.mxu0 %v8422
    %8551 = vmatprep.subr.mxu0 0.0
    %8552 = vmatpush1.msra.mxu0 %v8427
    %8553 = vmatprep.subr.mxu0 0.0
    %8554 = vmatpush1.msra.mxu0 0.0
    %8555 = vmatprep.subr.mxu0 0.0
    %8556 = vmatpush1.msra.mxu0 0.0
    %8557 = vmatprep.subr.mxu0 0.0
    %8558 = vmatpush1.msra.mxu0 0.0
    %8559 = vmatprep.subr.mxu0 0.0
    %8560 = vmatpush1.msra.mxu0 0.0
    %8561 = vmatprep.subr.mxu0 0.0
    %8562 = vmatpush1.msra.mxu0 0.0
    %8563 = vmatprep.subr.mxu0 0.0
    %8564 = vmatpush1.msra.mxu0 0.0
    %8565 = vmatprep.subr.mxu0 0.0
    %8566 = vmatpush1.msra.mxu0 0.0
    %8567 = vmatprep.subr.mxu0 0.0
    %8568 = vmatpush1.msra.mxu0 0.0
    %8569 = vmatprep.subr.mxu0 0.0
    %8570 = vmatpush1.msra.mxu0 0.0
    %8571 = vmatprep.subr.mxu0 0.0
    %8572 = vmatpush1.msra.mxu0 0.0
    %8573 = vmatprep.subr.mxu0 0.0
    %8574 = vmatpush1.msra.mxu0 0.0
    %8575 = vmatprep.subr.mxu0 0.0
    %8576 = vmatpush1.msra.mxu0 0.0
    %8577 = vmatprep.subr.mxu0 0.0
    %8578 = vmatpush1.msra.mxu0 0.0
    %8579 = vmatprep.subr.mxu0 0.0
    %8580 = vmatpush1.msra.mxu0 0.0
    %8581 = vmatprep.subr.mxu0 0.0
    %8582 = vmatpush1.msra.mxu0 0.0
    %8583 = vmatprep.subr.mxu0 0.0
    %8584 = vmatpush1.msra.mxu0 0.0
    %8585 = vmatprep.subr.mxu0 0.0
    %8586 = vmatpush1.msra.mxu0 0.0
    %8587 = vmatprep.subr.mxu0 0.0
    %8588 = vmatpush1.msra.mxu0 0.0
    %8589 = vmatprep.subr.mxu0 0.0
    %8590 = vmatpush1.msra.mxu0 0.0
    %8591 = vmatprep.subr.mxu0 0.0
    %8592 = vmatpush1.msra.mxu0 0.0
    %8593 = vmatprep.subr.mxu0 0.0
    %8594 = vmatpush1.msra.mxu0 0.0
    %8595 = vmatprep.subr.mxu0 0.0
    %8596 = vmatpush1.msra.mxu0 0.0
    %8597 = vmatprep.subr.mxu0 0.0
    %8598 = vmatpush1.msra.mxu0 0.0
    %8599 = vmatprep.subr.mxu0 0.0
    %8600 = vmatpush1.msra.mxu0 0.0
    %8601 = vmatprep.subr.mxu0 0.0
    %8602 = vmatpush1.msra.mxu0 0.0
    %8603 = vmatprep.subr.mxu0 0.0
    %8604 = vmatpush1.msra.mxu0 0.0
    %8605 = vmatprep.subr.mxu0 0.0
    %8606 = vmatpush1.msra.mxu0 0.0
    %8607 = vmatprep.subr.mxu0 0.0
    %8608 = vmatpush1.msra.mxu0 0.0
    %8609 = vmatprep.subr.mxu0 0.0
    %8610 = vmatpush1.msra.mxu0 0.0
    %8611 = vmatprep.subr.mxu0 0.0
    %8612 = vmatpush1.msra.mxu0 0.0
    %8613 = vmatprep.mubr.f32.mxu0 0.0
    %8614 = vmatmul.mubr.f32.gmra.mrb[0].mxu0 %v8544
    %v8615 = vpop.f32.mrb[0].mxu0
    %v8616 = vadd.f32 0.0, %v8615
    %v8617 = vpop.f32.mrb[0].mxu0
    %8618 = vmatprep.mubr.f32.mxu0 0.0
    %8619 = vmatmul.mubr.f32.gmra.mrb[0].mxu0 %v8547
    %v8620 = vpop.f32.mrb[0].mxu0
    %v8621 = vadd.f32 0.0, %v8620
    %v8622 = vpop.f32.mrb[0].mxu0
    %8623 = vdwg.mxu0
    %v8624 = vld [vmem:[#allocation2 + $0x310] sm:$0xff]
    %v8626 = vsel %vm409, %v8616, 0
    %v8629 = vsel %vm409, %v8621, 0
    %8631 = vmatprep.subr.mxu0 0.0
    %8632 = vmatpush1.msra.mxu0 %v8624
    %8633 = vmatprep.subr.mxu0 0.0
    %8634 = vmatpush1.msra.mxu0 0.0
    %8635 = vmatprep.subr.mxu0 0.0
    %8636 = vmatpush1.msra.mxu0 0.0
    %8637 = vmatprep.subr.mxu0 0.0
    %8638 = vmatpush1.msra.mxu0 0.0
    %8639 = vmatprep.subr.mxu0 0.0
    %8640 = vmatpush1.msra.mxu0 0.0
    %8641 = vmatprep.subr.mxu0 0.0
    %8642 = vmatpush1.msra.mxu0 0.0
    %8643 = vmatprep.subr.mxu0 0.0
    %8644 = vmatpush1.msra.mxu0 0.0
    %8645 = vmatprep.subr.mxu0 0.0
    %8646 = vmatpush1.msra.mxu0 0.0
    %8647 = vmatprep.subr.mxu0 0.0
    %8648 = vmatpush1.msra.mxu0 0.0
    %8649 = vmatprep.subr.mxu0 0.0
    %8650 = vmatpush1.msra.mxu0 0.0
    %8651 = vmatprep.subr.mxu0 0.0
    %8652 = vmatpush1.msra.mxu0 0.0
    %8653 = vmatprep.subr.mxu0 0.0
    %8654 = vmatpush1.msra.mxu0 0.0
    %8655 = vmatprep.subr.mxu0 0.0
    %8656 = vmatpush1.msra.mxu0 0.0
    %8657 = vmatprep.subr.mxu0 0.0
    %8658 = vmatpush1.msra.mxu0 0.0
    %8659 = vmatprep.subr.mxu0 0.0
    %8660 = vmatpush1.msra.mxu0 0.0
    %8661 = vmatprep.subr.mxu0 0.0
    %8662 = vmatpush1.msra.mxu0 0.0
    %8663 = vmatprep.subr.mxu0 0.0
    %8664 = vmatpush1.msra.mxu0 0.0
    %8665 = vmatprep.subr.mxu0 0.0
    %8666 = vmatpush1.msra.mxu0 0.0
    %8667 = vmatprep.subr.mxu0 0.0
    %8668 = vmatpush1.msra.mxu0 0.0
    %8669 = vmatprep.subr.mxu0 0.0
    %8670 = vmatpush1.msra.mxu0 0.0
    %8671 = vmatprep.subr.mxu0 0.0
    %8672 = vmatpush1.msra.mxu0 0.0
    %8673 = vmatprep.subr.mxu0 0.0
    %8674 = vmatpush1.msra.mxu0 0.0
    %8675 = vmatprep.subr.mxu0 0.0
    %8676 = vmatpush1.msra.mxu0 0.0
    %8677 = vmatprep.subr.mxu0 0.0
    %8678 = vmatpush1.msra.mxu0 0.0
    %8679 = vmatprep.subr.mxu0 0.0
    %8680 = vmatpush1.msra.mxu0 0.0
    %8681 = vmatprep.subr.mxu0 0.0
    %8682 = vmatpush1.msra.mxu0 0.0
    %8683 = vmatprep.subr.mxu0 0.0
    %8684 = vmatpush1.msra.mxu0 0.0
    %8685 = vmatprep.subr.mxu0 0.0
    %8686 = vmatpush1.msra.mxu0 0.0
    %8687 = vmatprep.subr.mxu0 0.0
    %8688 = vmatpush1.msra.mxu0 0.0
    %8689 = vmatprep.subr.mxu0 0.0
    %8690 = vmatpush1.msra.mxu0 0.0
    %8691 = vmatprep.subr.mxu0 0.0
    %8692 = vmatpush1.msra.mxu0 0.0
    %8693 = vmatprep.subr.mxu0 0.0
    %8694 = vmatpush1.msra.mxu0 0.0
    %8695 = vmatprep.mubr.f32.mxu0 0.0
    %8696 = vmatmul.mubr.f32.gmra.mrb[0].mxu0 %v8626
    %v8697 = vpop.f32.mrb[0].mxu0
    %v8698 = vadd.f32 0.0, %v8697
    %v8699 = vpop.f32.mrb[0].mxu0
    %8700 = vmatprep.mubr.f32.mxu0 0.0
    %8701 = vmatmul.mubr.f32.gmra.mrb[0].mxu0 %v8629
    %v8702 = vpop.f32.mrb[0].mxu0
    %v8703 = vadd.f32 0.0, %v8702
    %v8704 = vpop.f32.mrb[0].mxu0
    %8705 = vdwg.mxu0
    %v8706 = vadd.f32 %v8185, %v8698
    %v8707 = vadd.f32 %v8190, %v8703
    %v8708 = vld [vmem:[#allocation2 + $0x2e8] sm:$0xff]
    %v8709 = vld [vmem:[#allocation2 + $0x2f0] sm:$0xff]
    %v8710 = vld [vmem:[#allocation2 + $0x2f8] sm:$0xff]
    %v8712 = vsel %vm126, %v8708, 0
    %8714 = vmatprep.subr.mxu0 0.0
    %8715 = vmatpush1.xpose.msra.mxu0 %v8712
    %8716 = vmatprep.subr.mxu0 0.0
    %8717 = vmatpush1.xpose.msra.mxu0 0.0
    %8718 = vmatprep.subr.mxu0 0.0
    %8719 = vmatpush1.xpose.msra.mxu0 0.0
    %8720 = vmatprep.subr.mxu0 0.0
    %8721 = vmatpush1.xpose.msra.mxu0 0.0
    %8722 = vmatprep.subr.mxu0 0.0
    %8723 = vmatpush1.xpose.msra.mxu0 0.0
    %8724 = vmatprep.subr.mxu0 0.0
    %8725 = vmatpush1.xpose.msra.mxu0 0.0
    %8726 = vmatprep.subr.mxu0 0.0
    %8727 = vmatpush1.xpose.msra.mxu0 0.0
    %8728 = vmatprep.subr.mxu0 0.0
    %8729 = vmatpush1.xpose.msra.mxu0 0.0
    %8730 = vmatprep.subr.mxu0 0.0
    %8731 = vmatpush1.xpose.msra.mxu0 0.0
    %8732 = vmatprep.subr.mxu0 0.0
    %8733 = vmatpush1.xpose.msra.mxu0 0.0
    %8734 = vmatprep.subr.mxu0 0.0
    %8735 = vmatpush1.xpose.msra.mxu0 0.0
    %8736 = vmatprep.subr.mxu0 0.0
    %8737 = vmatpush1.xpose.msra.mxu0 0.0
    %8738 = vmatprep.subr.mxu0 0.0
    %8739 = vmatpush1.xpose.msra.mxu0 0.0
    %8740 = vmatprep.subr.mxu0 0.0
    %8741 = vmatpush1.xpose.msra.mxu0 0.0
    %8742 = vmatprep.subr.mxu0 0.0
    %8743 = vmatpush1.xpose.msra.mxu0 0.0
    %8744 = vmatprep.subr.mxu0 0.0
    %8745 = vmatpush1.xpose.msra.mxu0 0.0
    %8746 = vmatprep.subr.mxu0 0.0
    %8747 = vmatpush1.xpose.msra.mxu0 0.0
    %8748 = vmatprep.subr.mxu0 0.0
    %8749 = vmatpush1.xpose.msra.mxu0 0.0
    %8750 = vmatprep.subr.mxu0 0.0
    %8751 = vmatpush1.xpose.msra.mxu0 0.0
    %8752 = vmatprep.subr.mxu0 0.0
    %8753 = vmatpush1.xpose.msra.mxu0 0.0
    %8754 = vmatprep.subr.mxu0 0.0
    %8755 = vmatpush1.xpose.msra.mxu0 0.0
    %8756 = vmatprep.subr.mxu0 0.0
    %8757 = vmatpush1.xpose.msra.mxu0 0.0
    %8758 = vmatprep.subr.mxu0 0.0
    %8759 = vmatpush1.xpose.msra.mxu0 0.0
    %8760 = vmatprep.subr.mxu0 0.0
    %8761 = vmatpush1.xpose.msra.mxu0 0.0
    %8762 = vmatprep.subr.mxu0 0.0
    %8763 = vmatpush1.xpose.msra.mxu0 0.0
    %8764 = vmatprep.subr.mxu0 0.0
    %8765 = vmatpush1.xpose.msra.mxu0 0.0
    %8766 = vmatprep.subr.mxu0 0.0
    %8767 = vmatpush1.xpose.msra.mxu0 0.0
    %8768 = vmatprep.subr.mxu0 0.0
    %8769 = vmatpush1.xpose.msra.mxu0 0.0
    %8770 = vmatprep.subr.mxu0 0.0
    %8771 = vmatpush1.xpose.msra.mxu0 0.0
    %8772 = vmatprep.subr.mxu0 0.0
    %8773 = vmatpush1.xpose.msra.mxu0 0.0
    %8774 = vmatprep.subr.mxu0 0.0
    %8775 = vmatpush1.xpose.msra.mxu0 0.0
    %8776 = vmatprep.subr.mxu0 0.0
    %8777 = vmatpush1.xpose.msra.mxu0 0.0
    %8778 = vmatprep.mubr.f32.mxu0 0.0
    %8779 = vmatmul.mubr.f32.gmra.mrb[0].mxu0 %v7165
    %v8780 = vpop.f32.mrb[0].mxu0
    %v8781 = vadd.f32 0.0, %v8780
    %v8782 = vpop.f32.mrb[0].mxu0
    %8783 = vmatprep.mubr.f32.mxu0 0.0
    %8784 = vmatmul.mubr.f32.gmra.mrb[0].mxu0 %v7168
    %v8785 = vpop.f32.mrb[0].mxu0
    %v8786 = vadd.f32 0.0, %v8785
    %v8787 = vpop.f32.mrb[0].mxu0
    %8788 = vdwg.mxu0
    %v8790 = vsel %vm126, %v8709, 0
    %8792 = vmatprep.subr.mxu0 0.0
    %8793 = vmatpush1.xpose.msra.mxu0 %v8790
    %8794 = vmatprep.subr.mxu0 0.0
    %8795 = vmatpush1.xpose.msra.mxu0 0.0
    %8796 = vmatprep.subr.mxu0 0.0
    %8797 = vmatpush1.xpose.msra.mxu0 0.0
    %8798 = vmatprep.subr.mxu0 0.0
    %8799 = vmatpush1.xpose.msra.mxu0 0.0
    %8800 = vmatprep.subr.mxu0 0.0
    %8801 = vmatpush1.xpose.msra.mxu0 0.0
    %8802 = vmatprep.subr.mxu0 0.0
    %8803 = vmatpush1.xpose.msra.mxu0 0.0
    %8804 = vmatprep.subr.mxu0 0.0
    %8805 = vmatpush1.xpose.msra.mxu0 0.0
    %8806 = vmatprep.subr.mxu0 0.0
    %8807 = vmatpush1.xpose.msra.mxu0 0.0
    %8808 = vmatprep.subr.mxu0 0.0
    %8809 = vmatpush1.xpose.msra.mxu0 0.0
    %8810 = vmatprep.subr.mxu0 0.0
    %8811 = vmatpush1.xpose.msra.mxu0 0.0
    %8812 = vmatprep.subr.mxu0 0.0
    %8813 = vmatpush1.xpose.msra.mxu0 0.0
    %8814 = vmatprep.subr.mxu0 0.0
    %8815 = vmatpush1.xpose.msra.mxu0 0.0
    %8816 = vmatprep.subr.mxu0 0.0
    %8817 = vmatpush1.xpose.msra.mxu0 0.0
    %8818 = vmatprep.subr.mxu0 0.0
    %8819 = vmatpush1.xpose.msra.mxu0 0.0
    %8820 = vmatprep.subr.mxu0 0.0
    %8821 = vmatpush1.xpose.msra.mxu0 0.0
    %8822 = vmatprep.subr.mxu0 0.0
    %8823 = vmatpush1.xpose.msra.mxu0 0.0
    %8824 = vmatprep.subr.mxu0 0.0
    %8825 = vmatpush1.xpose.msra.mxu0 0.0
    %8826 = vmatprep.subr.mxu0 0.0
    %8827 = vmatpush1.xpose.msra.mxu0 0.0
    %8828 = vmatprep.subr.mxu0 0.0
    %8829 = vmatpush1.xpose.msra.mxu0 0.0
    %8830 = vmatprep.subr.mxu0 0.0
    %8831 = vmatpush1.xpose.msra.mxu0 0.0
    %8832 = vmatprep.subr.mxu0 0.0
    %8833 = vmatpush1.xpose.msra.mxu0 0.0
    %8834 = vmatprep.subr.mxu0 0.0
    %8835 = vmatpush1.xpose.msra.mxu0 0.0
    %8836 = vmatprep.subr.mxu0 0.0
    %8837 = vmatpush1.xpose.msra.mxu0 0.0
    %8838 = vmatprep.subr.mxu0 0.0
    %8839 = vmatpush1.xpose.msra.mxu0 0.0
    %8840 = vmatprep.subr.mxu0 0.0
    %8841 = vmatpush1.xpose.msra.mxu0 0.0
    %8842 = vmatprep.subr.mxu0 0.0
    %8843 = vmatpush1.xpose.msra.mxu0 0.0
    %8844 = vmatprep.subr.mxu0 0.0
    %8845 = vmatpush1.xpose.msra.mxu0 0.0
    %8846 = vmatprep.subr.mxu0 0.0
    %8847 = vmatpush1.xpose.msra.mxu0 0.0
    %8848 = vmatprep.subr.mxu0 0.0
    %8849 = vmatpush1.xpose.msra.mxu0 0.0
    %8850 = vmatprep.subr.mxu0 0.0
    %8851 = vmatpush1.xpose.msra.mxu0 0.0
    %8852 = vmatprep.subr.mxu0 0.0
    %8853 = vmatpush1.xpose.msra.mxu0 0.0
    %8854 = vmatprep.subr.mxu0 0.0
    %8855 = vmatpush1.xpose.msra.mxu0 0.0
    %8856 = vmatprep.mubr.f32.mxu0 0.0
    %8857 = vmatmul.mubr.f32.gmra.mrb[0].mxu0 %v7165
    %v8858 = vpop.f32.mrb[0].mxu0
    %v8859 = vadd.f32 0.0, %v8858
    %v8860 = vpop.f32.mrb[0].mxu0
    %8861 = vmatprep.mubr.f32.mxu0 0.0
    %8862 = vmatmul.mubr.f32.gmra.mrb[0].mxu0 %v7168
    %v8863 = vpop.f32.mrb[0].mxu0
    %v8864 = vadd.f32 0.0, %v8863
    %v8865 = vpop.f32.mrb[0].mxu0
    %8866 = vdwg.mxu0
    %v8868 = vsel %vm126, %v8710, 0
    %8870 = vmatprep.subr.mxu0 0.0
    %8871 = vmatpush1.xpose.msra.mxu0 %v8868
    %8872 = vmatprep.subr.mxu0 0.0
    %8873 = vmatpush1.xpose.msra.mxu0 0.0
    %8874 = vmatprep.subr.mxu0 0.0
    %8875 = vmatpush1.xpose.msra.mxu0 0.0
    %8876 = vmatprep.subr.mxu0 0.0
    %8877 = vmatpush1.xpose.msra.mxu0 0.0
    %8878 = vmatprep.subr.mxu0 0.0
    %8879 = vmatpush1.xpose.msra.mxu0 0.0
    %8880 = vmatprep.subr.mxu0 0.0
    %8881 = vmatpush1.xpose.msra.mxu0 0.0
    %8882 = vmatprep.subr.mxu0 0.0
    %8883 = vmatpush1.xpose.msra.mxu0 0.0
    %8884 = vmatprep.subr.mxu0 0.0
    %8885 = vmatpush1.xpose.msra.mxu0 0.0
    %8886 = vmatprep.subr.mxu0 0.0
    %8887 = vmatpush1.xpose.msra.mxu0 0.0
    %8888 = vmatprep.subr.mxu0 0.0
    %8889 = vmatpush1.xpose.msra.mxu0 0.0
    %8890 = vmatprep.subr.mxu0 0.0
    %8891 = vmatpush1.xpose.msra.mxu0 0.0
    %8892 = vmatprep.subr.mxu0 0.0
    %8893 = vmatpush1.xpose.msra.mxu0 0.0
    %8894 = vmatprep.subr.mxu0 0.0
    %8895 = vmatpush1.xpose.msra.mxu0 0.0
    %8896 = vmatprep.subr.mxu0 0.0
    %8897 = vmatpush1.xpose.msra.mxu0 0.0
    %8898 = vmatprep.subr.mxu0 0.0
    %8899 = vmatpush1.xpose.msra.mxu0 0.0
    %8900 = vmatprep.subr.mxu0 0.0
    %8901 = vmatpush1.xpose.msra.mxu0 0.0
    %8902 = vmatprep.subr.mxu0 0.0
    %8903 = vmatpush1.xpose.msra.mxu0 0.0
    %8904 = vmatprep.subr.mxu0 0.0
    %8905 = vmatpush1.xpose.msra.mxu0 0.0
    %8906 = vmatprep.subr.mxu0 0.0
    %8907 = vmatpush1.xpose.msra.mxu0 0.0
    %8908 = vmatprep.subr.mxu0 0.0
    %8909 = vmatpush1.xpose.msra.mxu0 0.0
    %8910 = vmatprep.subr.mxu0 0.0
    %8911 = vmatpush1.xpose.msra.mxu0 0.0
    %8912 = vmatprep.subr.mxu0 0.0
    %8913 = vmatpush1.xpose.msra.mxu0 0.0
    %8914 = vmatprep.subr.mxu0 0.0
    %8915 = vmatpush1.xpose.msra.mxu0 0.0
    %8916 = vmatprep.subr.mxu0 0.0
    %8917 = vmatpush1.xpose.msra.mxu0 0.0
    %8918 = vmatprep.subr.mxu0 0.0
    %8919 = vmatpush1.xpose.msra.mxu0 0.0
    %8920 = vmatprep.subr.mxu0 0.0
    %8921 = vmatpush1.xpose.msra.mxu0 0.0
    %8922 = vmatprep.subr.mxu0 0.0
    %8923 = vmatpush1.xpose.msra.mxu0 0.0
    %8924 = vmatprep.subr.mxu0 0.0
    %8925 = vmatpush1.xpose.msra.mxu0 0.0
    %8926 = vmatprep.subr.mxu0 0.0
    %8927 = vmatpush1.xpose.msra.mxu0 0.0
    %8928 = vmatprep.subr.mxu0 0.0
    %8929 = vmatpush1.xpose.msra.mxu0 0.0
    %8930 = vmatprep.subr.mxu0 0.0
    %8931 = vmatpush1.xpose.msra.mxu0 0.0
    %8932 = vmatprep.subr.mxu0 0.0
    %8933 = vmatpush1.xpose.msra.mxu0 0.0
    %8934 = vmatprep.mubr.f32.mxu0 0.0
    %8935 = vmatmul.mubr.f32.gmra.mrb[0].mxu0 %v7165
    %v8936 = vpop.f32.mrb[0].mxu0
    %v8937 = vadd.f32 0.0, %v8936
    %v8938 = vpop.f32.mrb[0].mxu0
    %8939 = vmatprep.mubr.f32.mxu0 0.0
    %8940 = vmatmul.mubr.f32.gmra.mrb[0].mxu0 %v7168
    %v8941 = vpop.f32.mrb[0].mxu0
    %v8942 = vadd.f32 0.0, %v8941
    %v8943 = vpop.f32.mrb[0].mxu0
    %8944 = vdwg.mxu0
    %v8946 = vsel %vm409, %v8859, 0
    %v8949 = vsel %vm409, %v8864, 0
    %v8952 = vsel %vm409, %v8781, 0
    %v8955 = vsel %vm409, %v8786, 0
    %8957 = vmatprep.subr.mxu0 0.0
    %8958 = vmatpush1.xpose.msra.mxu0 %v8952
    %8959 = vmatprep.subr.mxu0 0.0
    %8960 = vmatpush1.xpose.msra.mxu0 %v8955
    %8961 = vmatprep.subr.mxu0 0.0
    %8962 = vmatpush1.xpose.msra.mxu0 0.0
    %8963 = vmatprep.subr.mxu0 0.0
    %8964 = vmatpush1.xpose.msra.mxu0 0.0
    %8965 = vmatprep.subr.mxu0 0.0
    %8966 = vmatpush1.xpose.msra.mxu0 0.0
    %8967 = vmatprep.subr.mxu0 0.0
    %8968 = vmatpush1.xpose.msra.mxu0 0.0
    %8969 = vmatprep.subr.mxu0 0.0
    %8970 = vmatpush1.xpose.msra.mxu0 0.0
    %8971 = vmatprep.subr.mxu0 0.0
    %8972 = vmatpush1.xpose.msra.mxu0 0.0
    %8973 = vmatprep.subr.mxu0 0.0
    %8974 = vmatpush1.xpose.msra.mxu0 0.0
    %8975 = vmatprep.subr.mxu0 0.0
    %8976 = vmatpush1.xpose.msra.mxu0 0.0
    %8977 = vmatprep.subr.mxu0 0.0
    %8978 = vmatpush1.xpose.msra.mxu0 0.0
    %8979 = vmatprep.subr.mxu0 0.0
    %8980 = vmatpush1.xpose.msra.mxu0 0.0
    %8981 = vmatprep.subr.mxu0 0.0
    %8982 = vmatpush1.xpose.msra.mxu0 0.0
    %8983 = vmatprep.subr.mxu0 0.0
    %8984 = vmatpush1.xpose.msra.mxu0 0.0
    %8985 = vmatprep.subr.mxu0 0.0
    %8986 = vmatpush1.xpose.msra.mxu0 0.0
    %8987 = vmatprep.subr.mxu0 0.0
    %8988 = vmatpush1.xpose.msra.mxu0 0.0
    %8989 = vmatprep.subr.mxu0 0.0
    %8990 = vmatpush1.xpose.msra.mxu0 0.0
    %8991 = vmatprep.subr.mxu0 0.0
    %8992 = vmatpush1.xpose.msra.mxu0 0.0
    %8993 = vmatprep.subr.mxu0 0.0
    %8994 = vmatpush1.xpose.msra.mxu0 0.0
    %8995 = vmatprep.subr.mxu0 0.0
    %8996 = vmatpush1.xpose.msra.mxu0 0.0
    %8997 = vmatprep.subr.mxu0 0.0
    %8998 = vmatpush1.xpose.msra.mxu0 0.0
    %8999 = vmatprep.subr.mxu0 0.0
    %9000 = vmatpush1.xpose.msra.mxu0 0.0
    %9001 = vmatprep.subr.mxu0 0.0
    %9002 = vmatpush1.xpose.msra.mxu0 0.0
    %9003 = vmatprep.subr.mxu0 0.0
    %9004 = vmatpush1.xpose.msra.mxu0 0.0
    %9005 = vmatprep.subr.mxu0 0.0
    %9006 = vmatpush1.xpose.msra.mxu0 0.0
    %9007 = vmatprep.subr.mxu0 0.0
    %9008 = vmatpush1.xpose.msra.mxu0 0.0
    %9009 = vmatprep.subr.mxu0 0.0
    %9010 = vmatpush1.xpose.msra.mxu0 0.0
    %9011 = vmatprep.subr.mxu0 0.0
    %9012 = vmatpush1.xpose.msra.mxu0 0.0
    %9013 = vmatprep.subr.mxu0 0.0
    %9014 = vmatpush1.xpose.msra.mxu0 0.0
    %9015 = vmatprep.subr.mxu0 0.0
    %9016 = vmatpush1.xpose.msra.mxu0 0.0
    %9017 = vmatprep.subr.mxu0 0.0
    %9018 = vmatpush1.xpose.msra.mxu0 0.0
    %9019 = vmatprep.subr.mxu0 0.0
    %9020 = vmatpush1.xpose.msra.mxu0 0.0
    %9021 = vmatprep.mubr.f32.mxu0 0.0
    %9022 = vmatmul.mubr.f32.gmra.mrb[0].mxu0 %v8946
    %v9023 = vpop.f32.mrb[0].mxu0
    %v9024 = vadd.f32 0.0, %v9023
    %v9025 = vpop.f32.mrb[0].mxu0
    %9026 = vmatprep.mubr.f32.mxu0 0.0
    %9027 = vmatmul.mubr.f32.gmra.mrb[0].mxu0 %v8949
    %v9028 = vpop.f32.mrb[0].mxu0
    %v9029 = vadd.f32 0.0, %v9028
    %v9030 = vpop.f32.mrb[0].mxu0
    %9031 = vdwg.mxu0
    %v9032 = vmul.f32 %v9024, 0.17677669
    %v9033 = vmul.f32 %v9029, 0.17677669
    %v9034 = vadd.f32 %v9032, %v122
    %v9035 = vadd.f32 %v9033, %v123
    %v9036 = vsel %vm501, %v9034, -inf
    %9037 = vmax.xlane.f32.xlu0 %v9036
    %v9038 = vpop.xlane.xlu0 %9037
    %v9039 = vsel %vm501, %v9035, -inf
    %9040 = vmax.xlane.f32.xlu0 %v9039
    %v9041 = vpop.xlane.xlu0 %9040
    %v9042 = vsub.f32 %v9034, %v9038
    %v9043 = vsub.f32 %v9035, %v9041
    %v9044 = vmul.f32 %v9042, 1.442695
    %v9045 = vpow.pop %v9044
    %v9046 = vmul.f32 %v9043, 1.442695
    %v9047 = vpow.pop %v9046
    %v9048 = vsel %vm501, %v9045, 0.0
    %9049 = vadd.xlane.f32.xlu0 %v9048
    %v9050 = vpop.xlane.xlu0 %9049
    %v9051 = vsel %vm501, %v9047, 0.0
    %9052 = vadd.xlane.f32.xlu0 %v9051
    %v9053 = vpop.xlane.xlu0 %9052
    %v9054 = vrcp.pop %v9050
    %v9055 = vmul.f32 %v9045, %v9054
    %v9056 = vrcp.pop %v9053
    %v9057 = vmul.f32 %v9047, %v9056
    %v9059 = vsel %vm501, %v9055, 0
    %v9062 = vsel %vm501, %v9057, 0
    %9064 = vmatprep.subr.mxu0 0.0
    %9065 = vmatpush1.msra.mxu0 %v8937
    %9066 = vmatprep.subr.mxu0 0.0
    %9067 = vmatpush1.msra.mxu0 %v8942
    %9068 = vmatprep.subr.mxu0 0.0
    %9069 = vmatpush1.msra.mxu0 0.0
    %9070 = vmatprep.subr.mxu0 0.0
    %9071 = vmatpush1.msra.mxu0 0.0
    %9072 = vmatprep.subr.mxu0 0.0
    %9073 = vmatpush1.msra.mxu0 0.0
    %9074 = vmatprep.subr.mxu0 0.0
    %9075 = vmatpush1.msra.mxu0 0.0
    %9076 = vmatprep.subr.mxu0 0.0
    %9077 = vmatpush1.msra.mxu0 0.0
    %9078 = vmatprep.subr.mxu0 0.0
    %9079 = vmatpush1.msra.mxu0 0.0
    %9080 = vmatprep.subr.mxu0 0.0
    %9081 = vmatpush1.msra.mxu0 0.0
    %9082 = vmatprep.subr.mxu0 0.0
    %9083 = vmatpush1.msra.mxu0 0.0
    %9084 = vmatprep.subr.mxu0 0.0
    %9085 = vmatpush1.msra.mxu0 0.0
    %9086 = vmatprep.subr.mxu0 0.0
    %9087 = vmatpush1.msra.mxu0 0.0
    %9088 = vmatprep.subr.mxu0 0.0
    %9089 = vmatpush1.msra.mxu0 0.0
    %9090 = vmatprep.subr.mxu0 0.0
    %9091 = vmatpush1.msra.mxu0 0.0
    %9092 = vmatprep.subr.mxu0 0.0
    %9093 = vmatpush1.msra.mxu0 0.0
    %9094 = vmatprep.subr.mxu0 0.0
    %9095 = vmatpush1.msra.mxu0 0.0
    %9096 = vmatprep.subr.mxu0 0.0
    %9097 = vmatpush1.msra.mxu0 0.0
    %9098 = vmatprep.subr.mxu0 0.0
    %9099 = vmatpush1.msra.mxu0 0.0
    %9100 = vmatprep.subr.mxu0 0.0
    %9101 = vmatpush1.msra.mxu0 0.0
    %9102 = vmatprep.subr.mxu0 0.0
    %9103 = vmatpush1.msra.mxu0 0.0
    %9104 = vmatprep.subr.mxu0 0.0
    %9105 = vmatpush1.msra.mxu0 0.0
    %9106 = vmatprep.subr.mxu0 0.0
    %9107 = vmatpush1.msra.mxu0 0.0
    %9108 = vmatprep.subr.mxu0 0.0
    %9109 = vmatpush1.msra.mxu0 0.0
    %9110 = vmatprep.subr.mxu0 0.0
    %9111 = vmatpush1.msra.mxu0 0.0
    %9112 = vmatprep.subr.mxu0 0.0
    %9113 = vmatpush1.msra.mxu0 0.0
    %9114 = vmatprep.subr.mxu0 0.0
    %9115 = vmatpush1.msra.mxu0 0.0
    %9116 = vmatprep.subr.mxu0 0.0
    %9117 = vmatpush1.msra.mxu0 0.0
    %9118 = vmatprep.subr.mxu0 0.0
    %9119 = vmatpush1.msra.mxu0 0.0
    %9120 = vmatprep.subr.mxu0 0.0
    %9121 = vmatpush1.msra.mxu0 0.0
    %9122 = vmatprep.subr.mxu0 0.0
    %9123 = vmatpush1.msra.mxu0 0.0
    %9124 = vmatprep.subr.mxu0 0.0
    %9125 = vmatpush1.msra.mxu0 0.0
    %9126 = vmatprep.subr.mxu0 0.0
    %9127 = vmatpush1.msra.mxu0 0.0
    %9128 = vmatprep.mubr.f32.mxu0 0.0
    %9129 = vmatmul.mubr.f32.gmra.mrb[0].mxu0 %v9059
    %v9130 = vpop.f32.mrb[0].mxu0
    %v9131 = vadd.f32 0.0, %v9130
    %v9132 = vpop.f32.mrb[0].mxu0
    %9133 = vmatprep.mubr.f32.mxu0 0.0
    %9134 = vmatmul.mubr.f32.gmra.mrb[0].mxu0 %v9062
    %v9135 = vpop.f32.mrb[0].mxu0
    %v9136 = vadd.f32 0.0, %v9135
    %v9137 = vpop.f32.mrb[0].mxu0
    %9138 = vdwg.mxu0
    %v9139 = vld [vmem:[#allocation2 + $0x318] sm:$0xff]
    %v9141 = vsel %vm409, %v9131, 0
    %v9144 = vsel %vm409, %v9136, 0
    %9146 = vmatprep.subr.mxu0 0.0
    %9147 = vmatpush1.msra.mxu0 %v9139
    %9148 = vmatprep.subr.mxu0 0.0
    %9149 = vmatpush1.msra.mxu0 0.0
    %9150 = vmatprep.subr.mxu0 0.0
    %9151 = vmatpush1.msra.mxu0 0.0
    %9152 = vmatprep.subr.mxu0 0.0
    %9153 = vmatpush1.msra.mxu0 0.0
    %9154 = vmatprep.subr.mxu0 0.0
    %9155 = vmatpush1.msra.mxu0 0.0
    %9156 = vmatprep.subr.mxu0 0.0
    %9157 = vmatpush1.msra.mxu0 0.0
    %9158 = vmatprep.subr.mxu0 0.0
    %9159 = vmatpush1.msra.mxu0 0.0
    %9160 = vmatprep.subr.mxu0 0.0
    %9161 = vmatpush1.msra.mxu0 0.0
    %9162 = vmatprep.subr.mxu0 0.0
    %9163 = vmatpush1.msra.mxu0 0.0
    %9164 = vmatprep.subr.mxu0 0.0
    %9165 = vmatpush1.msra.mxu0 0.0
    %9166 = vmatprep.subr.mxu0 0.0
    %9167 = vmatpush1.msra.mxu0 0.0
    %9168 = vmatprep.subr.mxu0 0.0
    %9169 = vmatpush1.msra.mxu0 0.0
    %9170 = vmatprep.subr.mxu0 0.0
    %9171 = vmatpush1.msra.mxu0 0.0
    %9172 = vmatprep.subr.mxu0 0.0
    %9173 = vmatpush1.msra.mxu0 0.0
    %9174 = vmatprep.subr.mxu0 0.0
    %9175 = vmatpush1.msra.mxu0 0.0
    %9176 = vmatprep.subr.mxu0 0.0
    %9177 = vmatpush1.msra.mxu0 0.0
    %9178 = vmatprep.subr.mxu0 0.0
    %9179 = vmatpush1.msra.mxu0 0.0
    %9180 = vmatprep.subr.mxu0 0.0
    %9181 = vmatpush1.msra.mxu0 0.0
    %9182 = vmatprep.subr.mxu0 0.0
    %9183 = vmatpush1.msra.mxu0 0.0
    %9184 = vmatprep.subr.mxu0 0.0
    %9185 = vmatpush1.msra.mxu0 0.0
    %9186 = vmatprep.subr.mxu0 0.0
    %9187 = vmatpush1.msra.mxu0 0.0
    %9188 = vmatprep.subr.mxu0 0.0
    %9189 = vmatpush1.msra.mxu0 0.0
    %9190 = vmatprep.subr.mxu0 0.0
    %9191 = vmatpush1.msra.mxu0 0.0
    %9192 = vmatprep.subr.mxu0 0.0
    %9193 = vmatpush1.msra.mxu0 0.0
    %9194 = vmatprep.subr.mxu0 0.0
    %9195 = vmatpush1.msra.mxu0 0.0
    %9196 = vmatprep.subr.mxu0 0.0
    %9197 = vmatpush1.msra.mxu0 0.0
    %9198 = vmatprep.subr.mxu0 0.0
    %9199 = vmatpush1.msra.mxu0 0.0
    %9200 = vmatprep.subr.mxu0 0.0
    %9201 = vmatpush1.msra.mxu0 0.0
    %9202 = vmatprep.subr.mxu0 0.0
    %9203 = vmatpush1.msra.mxu0 0.0
    %9204 = vmatprep.subr.mxu0 0.0
    %9205 = vmatpush1.msra.mxu0 0.0
    %9206 = vmatprep.subr.mxu0 0.0
    %9207 = vmatpush1.msra.mxu0 0.0
    %9208 = vmatprep.subr.mxu0 0.0
    %9209 = vmatpush1.msra.mxu0 0.0
    %9210 = vmatprep.mubr.f32.mxu0 0.0
    %9211 = vmatmul.mubr.f32.gmra.mrb[0].mxu0 %v9141
    %v9212 = vpop.f32.mrb[0].mxu0
    %v9213 = vadd.f32 0.0, %v9212
    %v9214 = vpop.f32.mrb[0].mxu0
    %9215 = vmatprep.mubr.f32.mxu0 0.0
    %9216 = vmatmul.mubr.f32.gmra.mrb[0].mxu0 %v9144
    %v9217 = vpop.f32.mrb[0].mxu0
    %v9218 = vadd.f32 0.0, %v9217
    %v9219 = vpop.f32.mrb[0].mxu0
    %9220 = vdwg.mxu0
    %v9221 = vadd.f32 %v8706, %v9213
    %v9222 = vadd.f32 %v8707, %v9218
    %v9223 = vadd.f32 %v7119, %v9221
    %v9224 = vadd.f32 %v7120, %v9222
    %v9225 = vld [vmem:[#allocation2 + $0x29a] sm:$0x1]
    %v9226 = vlaneseq
    %v9227 = vshrl.u32 %v9226, 7
    %v9228 = vsub.s32 0, %v9227
    %v9229 = vrot.slane %v9225, %v9228
    %v9230 = vadd.f32 %v9223, %v9229
    %v9231 = vadd.f32 %v9224, %v9229
    %v9232 = vld [vmem:[#allocation2 + $0x29b] sm:$0x1]
    %v9233 = vld [vmem:[#allocation2 + $0x29c] sm:$0x1]
    %v9234 = vsel %vm126, %v9230, 0.0
    %9235 = vadd.xlane.f32.xlu0 %v9234
    %v9236 = vpop.xlane.xlu0 %9235
    %v9237 = vsel %vm126, %v9231, 0.0
    %9238 = vadd.xlane.f32.xlu0 %v9237
    %v9239 = vpop.xlane.xlu0 %9238
    %v9240 = vmul.f32 %v9236, %v133
    %v9241 = vmul.f32 %v9239, %v133
    %v9242 = vsub.f32 %v9230, %v9240
    %v9243 = vsub.f32 %v9231, %v9241
    %v9244 = vmul.f32 %v9242, %v9242
    %v9245 = vmul.f32 %v9243, %v9243
    %v9246 = vsel %vm126, %v9244, 0.0
    %9247 = vadd.xlane.f32.xlu0 %v9246
    %v9248 = vpop.xlane.xlu0 %9247
    %v9249 = vsel %vm126, %v9245, 0.0
    %9250 = vadd.xlane.f32.xlu0 %v9249
    %v9251 = vpop.xlane.xlu0 %9250
    %v9252 = vmul.f32 %v9248, %v133
    %v9253 = vmul.f32 %v9251, %v133
    %v9254 = vadd.f32 %v9252, 1e-05
    %v9255 = vadd.f32 %v9253, 1e-05
    %v9256 = vrsqrt.pop %v9254
    %v9257 = vrsqrt.pop %v9255
    %v9258 = vmul.f32 %v9242, %v9256
    %v9259 = vmul.f32 %v9243, %v9257
    %v9260 = vlaneseq
    %v9261 = vshrl.u32 %v9260, 7
    %v9262 = vsub.s32 0, %v9261
    %v9263 = vrot.slane %v9232, %v9262
    %v9264 = vmul.f32 %v9258, %v9263
    %v9265 = vmul.f32 %v9259, %v9263
    %v9266 = vlaneseq
    %v9267 = vshrl.u32 %v9266, 7
    %v9268 = vsub.s32 0, %v9267
    %v9269 = vrot.slane %v9233, %v9268
    %v9270 = vadd.f32 %v9264, %v9269
    %v9271 = vadd.f32 %v9265, %v9269
    %v9272 = vld [vmem:[#allocation2 + $0x320] sm:$0xff]
    %v9273 = vld [vmem:[#allocation2 + $0x328] sm:$0xff]
    %v9274 = vld [vmem:[#allocation2 + $0x330] sm:$0xff]
    %v9275 = vld [vmem:[#allocation2 + $0x338] sm:$0xff]
    %v9276 = vld [vmem:[#allocation2 + $0x29e] sm:$0x1]
    %v9277 = vlaneseq
    %v9278 = vshrl.u32 %v9277, 7
    %v9279 = vsub.s32 0, %v9278
    %v9280 = vrot.slane %v9276, %v9279
    %v9282 = vsel %vm126, %v9270, 0
    %v9285 = vsel %vm126, %v9271, 0
    %9287 = vmatprep.subr.mxu0 0.0
    %9288 = vmatpush1.msra.mxu0 %v9272
    %9289 = vmatprep.subr.mxu0 0.0
    %9290 = vmatpush1.msra.mxu0 %v9273
    %9291 = vmatprep.subr.mxu0 0.0
    %9292 = vmatpush1.msra.mxu0 %v9274
    %9293 = vmatprep.subr.mxu0 0.0
    %9294 = vmatpush1.msra.mxu0 %v9275
    %9295 = vmatprep.subr.mxu0 0.0
    %9296 = vmatpush1.msra.mxu0 0.0
    %9297 = vmatprep.subr.mxu0 0.0
    %9298 = vmatpush1.msra.mxu0 0.0
    %9299 = vmatprep.subr.mxu0 0.0
    %9300 = vmatpush1.msra.mxu0 0.0
    %9301 = vmatprep.subr.mxu0 0.0
    %9302 = vmatpush1.msra.mxu0 0.0
    %9303 = vmatprep.subr.mxu0 0.0
    %9304 = vmatpush1.msra.mxu0 0.0
    %9305 = vmatprep.subr.mxu0 0.0
    %9306 = vmatpush1.msra.mxu0 0.0
    %9307 = vmatprep.subr.mxu0 0.0
    %9308 = vmatpush1.msra.mxu0 0.0
    %9309 = vmatprep.subr.mxu0 0.0
    %9310 = vmatpush1.msra.mxu0 0.0
    %9311 = vmatprep.subr.mxu0 0.0
    %9312 = vmatpush1.msra.mxu0 0.0
    %9313 = vmatprep.subr.mxu0 0.0
    %9314 = vmatpush1.msra.mxu0 0.0
    %9315 = vmatprep.subr.mxu0 0.0
    %9316 = vmatpush1.msra.mxu0 0.0
    %9317 = vmatprep.subr.mxu0 0.0
    %9318 = vmatpush1.msra.mxu0 0.0
    %9319 = vmatprep.subr.mxu0 0.0
    %9320 = vmatpush1.msra.mxu0 0.0
    %9321 = vmatprep.subr.mxu0 0.0
    %9322 = vmatpush1.msra.mxu0 0.0
    %9323 = vmatprep.subr.mxu0 0.0
    %9324 = vmatpush1.msra.mxu0 0.0
    %9325 = vmatprep.subr.mxu0 0.0
    %9326 = vmatpush1.msra.mxu0 0.0
    %9327 = vmatprep.subr.mxu0 0.0
    %9328 = vmatpush1.msra.mxu0 0.0
    %9329 = vmatprep.subr.mxu0 0.0
    %9330 = vmatpush1.msra.mxu0 0.0
    %9331 = vmatprep.subr.mxu0 0.0
    %9332 = vmatpush1.msra.mxu0 0.0
    %9333 = vmatprep.subr.mxu0 0.0
    %9334 = vmatpush1.msra.mxu0 0.0
    %9335 = vmatprep.subr.mxu0 0.0
    %9336 = vmatpush1.msra.mxu0 0.0
    %9337 = vmatprep.subr.mxu0 0.0
    %9338 = vmatpush1.msra.mxu0 0.0
    %9339 = vmatprep.subr.mxu0 0.0
    %9340 = vmatpush1.msra.mxu0 0.0
    %9341 = vmatprep.subr.mxu0 0.0
    %9342 = vmatpush1.msra.mxu0 0.0
    %9343 = vmatprep.subr.mxu0 0.0
    %9344 = vmatpush1.msra.mxu0 0.0
    %9345 = vmatprep.subr.mxu0 0.0
    %9346 = vmatpush1.msra.mxu0 0.0
    %9347 = vmatprep.subr.mxu0 0.0
    %9348 = vmatpush1.msra.mxu0 0.0
    %9349 = vmatprep.subr.mxu0 0.0
    %9350 = vmatpush1.msra.mxu0 0.0
    %9351 = vmatprep.mubr.f32.mxu0 0.0
    %9352 = vmatmul.mubr.f32.gmra.mrb[0].mxu0 %v9282
    %v9353 = vpop.f32.mrb[0].mxu0
    %v9354 = vadd.f32 %v9280, %v9353
    %v9355 = vpop.f32.mrb[0].mxu0
    %9356 = vmatprep.mubr.f32.mxu0 0.0
    %9357 = vmatmul.mubr.f32.gmra.mrb[0].mxu0 %v9285
    %v9358 = vpop.f32.mrb[0].mxu0
    %v9359 = vadd.f32 %v9280, %v9358
    %v9360 = vpop.f32.mrb[0].mxu0
    %9361 = vdwg.mxu0
    %v9362 = vmax.f32 %v9354, 0.0
    %v9363 = vmax.f32 %v9359, 0.0
    %v9364 = vld [vmem:[#allocation2 + $0x340] sm:$0xff]
    %v9365 = vld [vmem:[#allocation2 + $0x348] sm:$0xff]
    %v9366 = vld [vmem:[#allocation2 + $0x350] sm:$0xff]
    %v9367 = vld [vmem:[#allocation2 + $0x358] sm:$0xff]
    %9368 = vmatprep.subr.mxu0 0.0
    %9369 = vmatpush1.xpose.msra.mxu0 %v9364
    %9370 = vmatprep.subr.mxu0 0.0
    %9371 = vmatpush1.xpose.msra.mxu0 %v9365
    %9372 = vmatprep.subr.mxu0 0.0
    %9373 = vmatpush1.xpose.msra.mxu0 %v9366
    %9374 = vmatprep.subr.mxu0 0.0
    %9375 = vmatpush1.xpose.msra.mxu0 %v9367
    %9376 = vmatprep.subr.mxu0 0.0
    %9377 = vmatpush1.xpose.msra.mxu0 0.0
    %9378 = vmatprep.subr.mxu0 0.0
    %9379 = vmatpush1.xpose.msra.mxu0 0.0
    %9380 = vmatprep.subr.mxu0 0.0
    %9381 = vmatpush1.xpose.msra.mxu0 0.0
    %9382 = vmatprep.subr.mxu0 0.0
    %9383 = vmatpush1.xpose.msra.mxu0 0.0
    %9384 = vmatprep.subr.mxu0 0.0
    %9385 = vmatpush1.xpose.msra.mxu0 0.0
    %9386 = vmatprep.subr.mxu0 0.0
    %9387 = vmatpush1.xpose.msra.mxu0 0.0
    %9388 = vmatprep.subr.mxu0 0.0
    %9389 = vmatpush1.xpose.msra.mxu0 0.0
    %9390 = vmatprep.subr.mxu0 0.0
    %9391 = vmatpush1.xpose.msra.mxu0 0.0
    %9392 = vmatprep.subr.mxu0 0.0
    %9393 = vmatpush1.xpose.msra.mxu0 0.0
    %9394 = vmatprep.subr.mxu0 0.0
    %9395 = vmatpush1.xpose.msra.mxu0 0.0
    %9396 = vmatprep.subr.mxu0 0.0
    %9397 = vmatpush1.xpose.msra.mxu0 0.0
    %9398 = vmatprep.subr.mxu0 0.0
    %9399 = vmatpush1.xpose.msra.mxu0 0.0
    %9400 = vmatprep.subr.mxu0 0.0
    %9401 = vmatpush1.xpose.msra.mxu0 0.0
    %9402 = vmatprep.subr.mxu0 0.0
    %9403 = vmatpush1.xpose.msra.mxu0 0.0
    %9404 = vmatprep.subr.mxu0 0.0
    %9405 = vmatpush1.xpose.msra.mxu0 0.0
    %9406 = vmatprep.subr.mxu0 0.0
    %9407 = vmatpush1.xpose.msra.mxu0 0.0
    %9408 = vmatprep.subr.mxu0 0.0
    %9409 = vmatpush1.xpose.msra.mxu0 0.0
    %9410 = vmatprep.subr.mxu0 0.0
    %9411 = vmatpush1.xpose.msra.mxu0 0.0
    %9412 = vmatprep.subr.mxu0 0.0
    %9413 = vmatpush1.xpose.msra.mxu0 0.0
    %9414 = vmatprep.subr.mxu0 0.0
    %9415 = vmatpush1.xpose.msra.mxu0 0.0
    %9416 = vmatprep.subr.mxu0 0.0
    %9417 = vmatpush1.xpose.msra.mxu0 0.0
    %9418 = vmatprep.subr.mxu0 0.0
    %9419 = vmatpush1.xpose.msra.mxu0 0.0
    %9420 = vmatprep.subr.mxu0 0.0
    %9421 = vmatpush1.xpose.msra.mxu0 0.0
    %9422 = vmatprep.subr.mxu0 0.0
    %9423 = vmatpush1.xpose.msra.mxu0 0.0
    %9424 = vmatprep.subr.mxu0 0.0
    %9425 = vmatpush1.xpose.msra.mxu0 0.0
    %9426 = vmatprep.subr.mxu0 0.0
    %9427 = vmatpush1.xpose.msra.mxu0 0.0
    %9428 = vmatprep.subr.mxu0 0.0
    %9429 = vmatpush1.xpose.msra.mxu0 0.0
    %9430 = vmatprep.subr.mxu0 0.0
    %9431 = vmatpush1.xpose.msra.mxu0 0.0
    %9432 = vmatprep.mubr.f32.mxu0 0.0
    %9433 = vmatmul.mubr.f32.gmra.mrb[0].mxu0 %v9362
    %v9434 = vpop.f32.mrb[0].mxu0
    %v9435 = vadd.f32 0.0, %v9434
    %v9436 = vpop.f32.mrb[0].mxu0
    %9437 = vmatprep.mubr.f32.mxu0 0.0
    %9438 = vmatmul.mubr.f32.gmra.mrb[0].mxu0 %v9363
    %v9439 = vpop.f32.mrb[0].mxu0
    %v9440 = vadd.f32 0.0, %v9439
    %v9441 = vpop.f32.mrb[0].mxu0
    %9442 = vdwg.mxu0
    %v9443 = vadd.f32 %v9230, %v9435
    %v9444 = vadd.f32 %v9231, %v9440
    %v9445 = vld [vmem:[#allocation2 + $0x29d] sm:$0x1]
    %v9446 = vlaneseq
    %v9447 = vshrl.u32 %v9446, 7
    %v9448 = vsub.s32 0, %v9447
    %v9449 = vrot.slane %v9445, %v9448
    %v9450 = vadd.f32 %v9443, %v9449
    %v9451 = vadd.f32 %v9444, %v9449
    %v9452 = vld [vmem:[#allocation2 + $0x360] sm:$0x1]
    %v9453 = vld [vmem:[#allocation2 + $0x361] sm:$0x1]
    %v9454 = vsel %vm126, %v9450, 0.0
    %9455 = vadd.xlane.f32.xlu0 %v9454
    %v9456 = vpop.xlane.xlu0 %9455
    %v9457 = vsel %vm126, %v9451, 0.0
    %9458 = vadd.xlane.f32.xlu0 %v9457
    %v9459 = vpop.xlane.xlu0 %9458
    %v9460 = vmul.f32 %v9456, %v133
    %v9461 = vmul.f32 %v9459, %v133
    %v9462 = vsub.f32 %v9450, %v9460
    %v9463 = vsub.f32 %v9451, %v9461
    %v9464 = vmul.f32 %v9462, %v9462
    %v9465 = vmul.f32 %v9463, %v9463
    %v9466 = vsel %vm126, %v9464, 0.0
    %9467 = vadd.xlane.f32.xlu0 %v9466
    %v9468 = vpop.xlane.xlu0 %9467
    %v9469 = vsel %vm126, %v9465, 0.0
    %9470 = vadd.xlane.f32.xlu0 %v9469
    %v9471 = vpop.xlane.xlu0 %9470
    %v9472 = vmul.f32 %v9468, %v133
    %v9473 = vmul.f32 %v9471, %v133
    %v9474 = vadd.f32 %v9472, 1e-05
    %v9475 = vadd.f32 %v9473, 1e-05
    %v9476 = vrsqrt.pop %v9474
    %v9477 = vrsqrt.pop %v9475
    %v9478 = vmul.f32 %v9462, %v9476
    %v9479 = vmul.f32 %v9463, %v9477
    %v9480 = vlaneseq
    %v9481 = vshrl.u32 %v9480, 7
    %v9482 = vsub.s32 0, %v9481
    %v9483 = vrot.slane %v9452, %v9482
    %v9484 = vmul.f32 %v9478, %v9483
    %v9485 = vmul.f32 %v9479, %v9483
    %v9486 = vlaneseq
    %v9487 = vshrl.u32 %v9486, 7
    %v9488 = vsub.s32 0, %v9487
    %v9489 = vrot.slane %v9453, %v9488
    %v9490 = vadd.f32 %v9484, %v9489
    %v9491 = vadd.f32 %v9485, %v9489
    %v9492 = vld [vmem:[#allocation2 + $0x368] sm:$0xff]
    %v9493 = vld [vmem:[#allocation2 + $0x370] sm:$0xff]
    %v9494 = vld [vmem:[#allocation2 + $0x378] sm:$0xff]
    %v9495 = vld [vmem:[#allocation2 + $0x380] sm:$0xff]
    %v9496 = vld [vmem:[#allocation2 + $0x362] sm:$0x1]
    %v9497 = vlaneseq
    %v9498 = vshrl.u32 %v9497, 7
    %v9499 = vsub.s32 0, %v9498
    %v9500 = vrot.slane %v9496, %v9499
    %v9502 = vsel %vm126, %v9490, 0
    %v9505 = vsel %vm126, %v9491, 0
    %9507 = vmatprep.subr.mxu0 0.0
    %9508 = vmatpush1.msra.mxu0 %v9492
    %9509 = vmatprep.subr.mxu0 0.0
    %9510 = vmatpush1.msra.mxu0 %v9493
    %9511 = vmatprep.subr.mxu0 0.0
    %9512 = vmatpush1.msra.mxu0 %v9494
    %9513 = vmatprep.subr.mxu0 0.0
    %9514 = vmatpush1.msra.mxu0 %v9495
    %9515 = vmatprep.subr.mxu0 0.0
    %9516 = vmatpush1.msra.mxu0 0.0
    %9517 = vmatprep.subr.mxu0 0.0
    %9518 = vmatpush1.msra.mxu0 0.0
    %9519 = vmatprep.subr.mxu0 0.0
    %9520 = vmatpush1.msra.mxu0 0.0
    %9521 = vmatprep.subr.mxu0 0.0
    %9522 = vmatpush1.msra.mxu0 0.0
    %9523 = vmatprep.subr.mxu0 0.0
    %9524 = vmatpush1.msra.mxu0 0.0
    %9525 = vmatprep.subr.mxu0 0.0
    %9526 = vmatpush1.msra.mxu0 0.0
    %9527 = vmatprep.subr.mxu0 0.0
    %9528 = vmatpush1.msra.mxu0 0.0
    %9529 = vmatprep.subr.mxu0 0.0
    %9530 = vmatpush1.msra.mxu0 0.0
    %9531 = vmatprep.subr.mxu0 0.0
    %9532 = vmatpush1.msra.mxu0 0.0
    %9533 = vmatprep.subr.mxu0 0.0
    %9534 = vmatpush1.msra.mxu0 0.0
    %9535 = vmatprep.subr.mxu0 0.0
    %9536 = vmatpush1.msra.mxu0 0.0
    %9537 = vmatprep.subr.mxu0 0.0
    %9538 = vmatpush1.msra.mxu0 0.0
    %9539 = vmatprep.subr.mxu0 0.0
    %9540 = vmatpush1.msra.mxu0 0.0
    %9541 = vmatprep.subr.mxu0 0.0
    %9542 = vmatpush1.msra.mxu0 0.0
    %9543 = vmatprep.subr.mxu0 0.0
    %9544 = vmatpush1.msra.mxu0 0.0
    %9545 = vmatprep.subr.mxu0 0.0
    %9546 = vmatpush1.msra.mxu0 0.0
    %9547 = vmatprep.subr.mxu0 0.0
    %9548 = vmatpush1.msra.mxu0 0.0
    %9549 = vmatprep.subr.mxu0 0.0
    %9550 = vmatpush1.msra.mxu0 0.0
    %9551 = vmatprep.subr.mxu0 0.0
    %9552 = vmatpush1.msra.mxu0 0.0
    %9553 = vmatprep.subr.mxu0 0.0
    %9554 = vmatpush1.msra.mxu0 0.0
    %9555 = vmatprep.subr.mxu0 0.0
    %9556 = vmatpush1.msra.mxu0 0.0
    %9557 = vmatprep.subr.mxu0 0.0
    %9558 = vmatpush1.msra.mxu0 0.0
    %9559 = vmatprep.subr.mxu0 0.0
    %9560 = vmatpush1.msra.mxu0 0.0
    %9561 = vmatprep.subr.mxu0 0.0
    %9562 = vmatpush1.msra.mxu0 0.0
    %9563 = vmatprep.subr.mxu0 0.0
    %9564 = vmatpush1.msra.mxu0 0.0
    %9565 = vmatprep.subr.mxu0 0.0
    %9566 = vmatpush1.msra.mxu0 0.0
    %9567 = vmatprep.subr.mxu0 0.0
    %9568 = vmatpush1.msra.mxu0 0.0
    %9569 = vmatprep.subr.mxu0 0.0
    %9570 = vmatpush1.msra.mxu0 0.0
    %9571 = vmatprep.mubr.f32.mxu0 0.0
    %9572 = vmatmul.mubr.f32.gmra.mrb[0].mxu0 %v9502
    %v9573 = vpop.f32.mrb[0].mxu0
    %v9574 = vadd.f32 %v9500, %v9573
    %v9575 = vpop.f32.mrb[0].mxu0
    %9576 = vmatprep.mubr.f32.mxu0 0.0
    %9577 = vmatmul.mubr.f32.gmra.mrb[0].mxu0 %v9505
    %v9578 = vpop.f32.mrb[0].mxu0
    %v9579 = vadd.f32 %v9500, %v9578
    %v9580 = vpop.f32.mrb[0].mxu0
    %9581 = vdwg.mxu0
    %9582 = vst [vmem:[%s2] sm:$0xff] %v9574
    %9583 = vst [vmem:[%s2 + $0x8] sm:$0xff] %v9579
    // Predicated region
    $region14: #{forward.1} parent=1 // pred_check
      _
    $region15: #{forward.1} parent=1 // pred_check_branch
      %9585 = sbr.rel (0) target = $region17
    $region16: #{forward.1} parent=1 // pred_region
      _
    $region17: #{forward.1} parent=1 // pred_fallthru
      _
    // Predicated region
    $region18: #{forward.1} parent=1 // pred_check
      _
    $region19: #{forward.1} parent=1 // pred_check_branch
      %9587 = sbr.rel (0) target = $region21
    $region20: #{forward.1} parent=1 // pred_region
      _
    $region21: #{forward.1} parent=1 // pred_fallthru
      _
    %9588 = vsyncpa [#allocation3], 1

</llo_original>
